<compile_context>
chip_gen: v7x
topology: tpu7x:2x2x1
jax: 0.10.0
libtpu: 0.0.40
codegen_flags: <defaults>
</compile_context>

<pallas_src>
import numpy as np
import jax
import jax.numpy as jnp
from jax.experimental import pallas as pl
from jax.experimental.pallas import tpu as pltpu

NUM_GRADES = 16 - 1 - 4        # len(grade_dict) - drop_bottom_n - drop_top_n = 11
NEG_SLOPE = 0.2
BN_EPS = 1e-5

# MoonBoard geometry and the conv stack (C_in, C_out, stride) -- fixed by the model.
H0, W0, C0 = 18, 11, 3
_CONVS = ((3, 32, 2), (32, 64, 1), (64, 128, 2), (128, 256, 1))


def _out_dim(d, stride):       # Conv2d(kernel=3, padding=1)
    return (d - 1) // stride + 1


# ------------------------- fused Pallas kernel -------------------------

def _fused_kernel(x_ref,
                  sel1_ref, w1_ref, t1_ref,
                  sel2_ref, w2_ref, t2_ref,
                  sel3_ref, w3_ref, t3_ref,
                  sel4_ref, w4_ref, t4_ref,
                  sel5_ref, w5_ref, b5_ref,
                  o_ref):
    """Entire forward pass; everything VMEM-resident, activations stay in registers/VMEM."""

    def conv_block(act, sel_ref, w_ref, t_ref):
        # 3x3 conv (+ folded BN scale) == sum over kernel rows ki of
        #   (row-selection matmul) @ (banded weight matmul),
        # then per-channel shift (conv bias / folded BN) and LeakyReLU(0.2).
        m = sel_ref.shape[1]          # batch * OH
        n = w_ref.shape[2]            # OW * C_out
        acc = jnp.zeros((m, n), jnp.float32)
        for ki in range(3):
            rows = jnp.dot(sel_ref[ki], act, preferred_element_type=jnp.float32)
            acc = acc + jnp.dot(rows, w_ref[ki], preferred_element_type=jnp.float32)
        acc = acc + t_ref[...]
        return jnp.where(acc >= 0, acc, NEG_SLOPE * acc)

    a = x_ref[...]                                    # (N*18, 11*3)
    a = conv_block(a, sel1_ref, w1_ref, t1_ref)       # (N*9,  6*32)
    a = conv_block(a, sel2_ref, w2_ref, t2_ref)       # (N*9,  6*64)
    a = conv_block(a, sel3_ref, w3_ref, t3_ref)       # (N*5,  3*128)
    a = conv_block(a, sel4_ref, w4_ref, t4_ref)       # (N*5,  3*256)

    # Linear(256*5*3 -> 11) + Sigmoid, contracting over (h, w*C+c) via per-h row picks.
    n_batch = o_ref.shape[0]
    logits = jnp.zeros((n_batch, o_ref.shape[1]), jnp.float32)
    for h in range(sel5_ref.shape[0]):
        rows = jnp.dot(sel5_ref[h], a, preferred_element_type=jnp.float32)       # (N, 768)
        logits = logits + jnp.dot(rows, w5_ref[h], preferred_element_type=jnp.float32)
    logits = logits + b5_ref[...]
    o_ref[...] = 1.0 / (1.0 + jnp.exp(-logits))


# ------------------------- one-time parameter preparation -------------------------

def _banded_weight(w, scale, stride, w_in):
    # (3, W_in*C_in, OW*C_out): per kernel row ki, a block-banded matrix applying the
    # three kernel-column taps, the W-direction stride and the "same" padding in one GEMM.
    w = np.asarray(w, np.float32) * np.asarray(scale, np.float32)[:, None, None, None]
    c_out, c_in = w.shape[0], w.shape[1]
    ow = _out_dim(w_in, stride)
    out = np.zeros((3, w_in * c_in, ow * c_out), np.float32)
    for ki in range(3):
        for o in range(ow):
            for kj in range(3):
                wc = stride * o + kj - 1                       # input column (unpadded)
                if 0 <= wc < w_in:
                    out[ki, wc * c_in:(wc + 1) * c_in,
                        o * c_out:(o + 1) * c_out] = w[:, :, ki, kj].T
    return jnp.asarray(out)


def _row_selection(h_in, stride, batch):
    # (3, batch*OH, batch*H_in): per kernel row ki, picks input row stride*o + ki - 1
    # (zero rows implement the H padding); block-diagonal over the batch.
    oh = _out_dim(h_in, stride)
    out = np.zeros((3, batch * oh, batch * h_in), np.float32)
    for ki in range(3):
        for b in range(batch):
            for o in range(oh):
                h = stride * o + ki - 1
                if 0 <= h < h_in:
                    out[ki, b * oh + o, b * h_in + h] = 1.0
    return jnp.asarray(out)


def _bn_fold(bias, c):
    # BatchNorm2d at PyTorch init, eval mode: gamma=1, beta=0, running_mean=0, running_var=1.
    gamma = np.ones(c, np.float32)
    beta = np.zeros(c, np.float32)
    mean = np.zeros(c, np.float32)
    var = np.ones(c, np.float32)
    s = gamma / np.sqrt(var + BN_EPS)
    t = (np.asarray(bias, np.float32) - mean) * s + beta
    return s, t


def prepare_params(params, batch):
    """One-time (host-side) transform of PyTorch-layout params into kernel operands."""
    prep = {}
    h, w = H0, W0
    for idx, (c_in, c_out, stride) in enumerate(_CONVS, start=1):
        wt = params[f"w{idx}"]                         # (C_out, C_in, 3, 3)
        bias = params[f"b{idx}"]
        if idx == 1:                                   # b1 has no BatchNorm
            scale = np.ones(c_out, np.float32)
            shift = np.asarray(bias, np.float32)
        else:
            scale, shift = _bn_fold(bias, c_out)
        oh, ow = _out_dim(h, stride), _out_dim(w, stride)
        prep[f"sel{idx}"] = _row_selection(h, stride, batch)
        prep[f"w{idx}"] = _banded_weight(wt, scale, stride, w)
        prep[f"t{idx}"] = jnp.asarray(np.tile(shift, ow).reshape(1, ow * c_out))
        h, w = oh, ow
    # Final layer: spatial is (h, w) = (5, 3), channels = 256.
    c_last = _CONVS[-1][1]
    w5 = np.asarray(params["w5"], np.float32)                              # (11, c*h*w), NCHW flatten
    w5 = w5.reshape(NUM_GRADES, c_last, h, w).transpose(2, 3, 1, 0)        # (h, w, c, 11)
    prep["w5"] = jnp.asarray(w5.reshape(h, w * c_last, NUM_GRADES))        # (5, 768, 11)
    prep["b5"] = jnp.asarray(np.asarray(params["b5"], np.float32).reshape(1, NUM_GRADES))
    sel5 = np.zeros((h, batch, batch * h), np.float32)                     # picks row (n*5 + h)
    for hh in range(h):
        for b in range(batch):
            sel5[hh, b, b * h + hh] = 1.0
    prep["sel5"] = jnp.asarray(sel5)
    return prep


# ------------------------- forward -------------------------

def model_forward(x, prep):
    n = x.shape[0]
    # NCHW -> (N*H, W*C): rows = (n, h), lanes = (w, c).  One tiny XLA transpose of the input;
    # everything downstream stays in this channels-last layout inside the single fused kernel.
    xh = jnp.transpose(x, (0, 2, 3, 1)).reshape(n * H0, W0 * C0)
    vmem = pl.BlockSpec(memory_space=pltpu.MemorySpace.VMEM)
    return pl.pallas_call(
        _fused_kernel,
        out_shape=jax.ShapeDtypeStruct((n, NUM_GRADES), jnp.float32),
        in_specs=[vmem] * 16,
        out_specs=vmem,
    )(xh,
      prep["sel1"], prep["w1"], prep["t1"],
      prep["sel2"], prep["w2"], prep["t2"],
      prep["sel3"], prep["w3"], prep["t3"],
      prep["sel4"], prep["w4"], prep["t4"],
      prep["sel5"], prep["w5"], prep["b5"])


# ------------------------- deterministic params -------------------------

def _uniform(key, shape, fan_in):
    bound = 1.0 / float(np.sqrt(fan_in))
    return jax.random.uniform(key, shape, jnp.float32, -bound, bound)


def make_params(key):
    # PyTorch-layout parameters (Conv2d weights (C_out, C_in, 3, 3), biases, Linear (out, in)).
    ks = jax.random.split(key, 10)
    p = {}
    p["w1"] = _uniform(ks[0], (32, 3, 3, 3), 3 * 9)
    p["b1"] = _uniform(ks[1], (32,), 3 * 9)
    p["w2"] = _uniform(ks[2], (64, 32, 3, 3), 32 * 9)
    p["b2"] = _uniform(ks[3], (64,), 32 * 9)
    p["w3"] = _uniform(ks[4], (128, 64, 3, 3), 64 * 9)
    p["b3"] = _uniform(ks[5], (128,), 64 * 9)
    p["w4"] = _uniform(ks[6], (256, 128, 3, 3), 128 * 9)
    p["b4"] = _uniform(ks[7], (256,), 128 * 9)
    p["w5"] = _uniform(ks[8], (NUM_GRADES, 256 * 5 * 3), 256 * 5 * 3)
    p["b5"] = _uniform(ks[9], (NUM_GRADES,), 256 * 5 * 3)
    return p


if __name__ == "__main__":
    key = jax.random.PRNGKey(0)
    pkey, xkey = jax.random.split(key)
    params = make_params(pkey)
    prep = prepare_params(params, batch=2)        # one-time weight transform (host side)

    # MoonBoard-style input: NCHW (2, 3, 18, 11) -> after two stride-2 convs: 5x3 spatial.
    x = jax.random.normal(xkey, (2, C0, H0, W0), jnp.float32)
    fwd = jax.jit(model_forward)
    out = jax.block_until_ready(fwd(x, prep))

    assert out.shape == (2, NUM_GRADES), out.shape
    assert bool(jnp.all(jnp.isfinite(out)))
    print("KERNEL_OK")
</pallas_src>

<mosaic_0001>
module attributes {stable_mosaic.version = 11 : i64} {
  func.func @_fused_kernel(%arg0: memref<36x33xf32, #tpu.memory_space<vmem>>, %arg1: memref<3x18x36xf32, #tpu.memory_space<vmem>>, %arg2: memref<3x33x192xf32, #tpu.memory_space<vmem>>, %arg3: memref<1x192xf32, #tpu.memory_space<vmem>>, %arg4: memref<3x18x18xf32, #tpu.memory_space<vmem>>, %arg5: memref<3x192x384xf32, #tpu.memory_space<vmem>>, %arg6: memref<1x384xf32, #tpu.memory_space<vmem>>, %arg7: memref<3x10x18xf32, #tpu.memory_space<vmem>>, %arg8: memref<3x384x384xf32, #tpu.memory_space<vmem>>, %arg9: memref<1x384xf32, #tpu.memory_space<vmem>>, %arg10: memref<3x10x10xf32, #tpu.memory_space<vmem>>, %arg11: memref<3x384x768xf32, #tpu.memory_space<vmem>>, %arg12: memref<1x768xf32, #tpu.memory_space<vmem>>, %arg13: memref<5x2x10xf32, #tpu.memory_space<vmem>>, %arg14: memref<5x768x11xf32, #tpu.memory_space<vmem>>, %arg15: memref<1x11xf32, #tpu.memory_space<vmem>>, %arg16: memref<2x11xf32, #tpu.memory_space<vmem>>) attributes {dimension_semantics = [], scalar_prefetch = 0 : i64, scratch_operands = 0 : i64, tpu.core_type = #tpu.core_type<tc>} {
    %c0 = arith.constant 0 : index
    %c0_0 = arith.constant 0 : index
    %0 = vector.load %arg0[%c0, %c0_0] : memref<36x33xf32, #tpu.memory_space<vmem>>, vector<36x33xf32>
    %cst = arith.constant 0.000000e+00 : f32
    %1 = vector.broadcast %cst : f32 to vector<18x192xf32>
    %c0_1 = arith.constant 0 : index
    %c0_2 = arith.constant 0 : index
    %c0_3 = arith.constant 0 : index
    %2 = vector.load %arg1[%c0_1, %c0_2, %c0_3] : memref<3x18x36xf32, #tpu.memory_space<vmem>>, vector<1x18x36xf32>
    %3 = vector.shape_cast %2 : vector<1x18x36xf32> to vector<18x36xf32>
    %cst_4 = arith.constant dense<0.000000e+00> : vector<18x33xf32>
    %4 = tpu.matmul %3, %0, %cst_4 {dimension_numbers = #tpu.dot_dimension_numbers<[1], [0], [0], [1], [0, 0, 1, 1], [], []>} : vector<18x36xf32>, vector<36x33xf32>, vector<18x33xf32> -> vector<18x33xf32>
    %c0_5 = arith.constant 0 : index
    %c0_6 = arith.constant 0 : index
    %c0_7 = arith.constant 0 : index
    %5 = vector.load %arg2[%c0_5, %c0_6, %c0_7] : memref<3x33x192xf32, #tpu.memory_space<vmem>>, vector<1x33x192xf32>
    %6 = vector.shape_cast %5 : vector<1x33x192xf32> to vector<33x192xf32>
    %cst_8 = arith.constant dense<0.000000e+00> : vector<18x192xf32>
    %7 = tpu.matmul %4, %6, %cst_8 {dimension_numbers = #tpu.dot_dimension_numbers<[1], [0], [0], [1], [0, 0, 1, 1], [], []>} : vector<18x33xf32>, vector<33x192xf32>, vector<18x192xf32> -> vector<18x192xf32>
    %8 = arith.addf %1, %7 : vector<18x192xf32>
    %c1 = arith.constant 1 : index
    %c0_9 = arith.constant 0 : index
    %c0_10 = arith.constant 0 : index
    %9 = vector.load %arg1[%c1, %c0_9, %c0_10] : memref<3x18x36xf32, #tpu.memory_space<vmem>>, vector<1x18x36xf32>
    %10 = vector.shape_cast %9 : vector<1x18x36xf32> to vector<18x36xf32>
    %cst_11 = arith.constant dense<0.000000e+00> : vector<18x33xf32>
    %11 = tpu.matmul %10, %0, %cst_11 {dimension_numbers = #tpu.dot_dimension_numbers<[1], [0], [0], [1], [0, 0, 1, 1], [], []>} : vector<18x36xf32>, vector<36x33xf32>, vector<18x33xf32> -> vector<18x33xf32>
    %c1_12 = arith.constant 1 : index
    %c0_13 = arith.constant 0 : index
    %c0_14 = arith.constant 0 : index
    %12 = vector.load %arg2[%c1_12, %c0_13, %c0_14] : memref<3x33x192xf32, #tpu.memory_space<vmem>>, vector<1x33x192xf32>
    %13 = vector.shape_cast %12 : vector<1x33x192xf32> to vector<33x192xf32>
    %cst_15 = arith.constant dense<0.000000e+00> : vector<18x192xf32>
    %14 = tpu.matmul %11, %13, %cst_15 {dimension_numbers = #tpu.dot_dimension_numbers<[1], [0], [0], [1], [0, 0, 1, 1], [], []>} : vector<18x33xf32>, vector<33x192xf32>, vector<18x192xf32> -> vector<18x192xf32>
    %15 = arith.addf %8, %14 : vector<18x192xf32>
    %c2 = arith.constant 2 : index
    %c0_16 = arith.constant 0 : index
    %c0_17 = arith.constant 0 : index
    %16 = vector.load %arg1[%c2, %c0_16, %c0_17] : memref<3x18x36xf32, #tpu.memory_space<vmem>>, vector<1x18x36xf32>
    %17 = vector.shape_cast %16 : vector<1x18x36xf32> to vector<18x36xf32>
    %cst_18 = arith.constant dense<0.000000e+00> : vector<18x33xf32>
    %18 = tpu.matmul %17, %0, %cst_18 {dimension_numbers = #tpu.dot_dimension_numbers<[1], [0], [0], [1], [0, 0, 1, 1], [], []>} : vector<18x36xf32>, vector<36x33xf32>, vector<18x33xf32> -> vector<18x33xf32>
    %c2_19 = arith.constant 2 : index
    %c0_20 = arith.constant 0 : index
    %c0_21 = arith.constant 0 : index
    %19 = vector.load %arg2[%c2_19, %c0_20, %c0_21] : memref<3x33x192xf32, #tpu.memory_space<vmem>>, vector<1x33x192xf32>
    %20 = vector.shape_cast %19 : vector<1x33x192xf32> to vector<33x192xf32>
    %cst_22 = arith.constant dense<0.000000e+00> : vector<18x192xf32>
    %21 = tpu.matmul %18, %20, %cst_22 {dimension_numbers = #tpu.dot_dimension_numbers<[1], [0], [0], [1], [0, 0, 1, 1], [], []>} : vector<18x33xf32>, vector<33x192xf32>, vector<18x192xf32> -> vector<18x192xf32>
    %22 = arith.addf %15, %21 : vector<18x192xf32>
    %c0_23 = arith.constant 0 : index
    %c0_24 = arith.constant 0 : index
    %23 = vector.load %arg3[%c0_23, %c0_24] : memref<1x192xf32, #tpu.memory_space<vmem>>, vector<1x192xf32>
    %24 = vector.broadcast %23 : vector<1x192xf32> to vector<18x192xf32>
    %25 = arith.addf %22, %24 : vector<18x192xf32>
    %cst_25 = arith.constant 0.000000e+00 : f32
    %26 = vector.broadcast %cst_25 : f32 to vector<18x192xf32>
    %27 = arith.cmpf oge, %25, %26 : vector<18x192xf32>
    %cst_26 = arith.constant 2.000000e-01 : f32
    %28 = vector.broadcast %cst_26 : f32 to vector<18x192xf32>
    %29 = arith.mulf %28, %25 : vector<18x192xf32>
    %30 = arith.select %27, %25, %29 : vector<18x192xi1>, vector<18x192xf32>
    %cst_27 = arith.constant 0.000000e+00 : f32
    %31 = vector.broadcast %cst_27 : f32 to vector<18x384xf32>
    %c0_28 = arith.constant 0 : index
    %c0_29 = arith.constant 0 : index
    %c0_30 = arith.constant 0 : index
    %32 = vector.load %arg4[%c0_28, %c0_29, %c0_30] : memref<3x18x18xf32, #tpu.memory_space<vmem>>, vector<1x18x18xf32>
    %33 = vector.shape_cast %32 : vector<1x18x18xf32> to vector<18x18xf32>
    %cst_31 = arith.constant dense<0.000000e+00> : vector<18x192xf32>
    %34 = tpu.matmul %33, %30, %cst_31 {dimension_numbers = #tpu.dot_dimension_numbers<[1], [0], [0], [1], [0, 0, 1, 1], [], []>} : vector<18x18xf32>, vector<18x192xf32>, vector<18x192xf32> -> vector<18x192xf32>
    %c0_32 = arith.constant 0 : index
    %c0_33 = arith.constant 0 : index
    %c0_34 = arith.constant 0 : index
    %35 = vector.load %arg5[%c0_32, %c0_33, %c0_34] : memref<3x192x384xf32, #tpu.memory_space<vmem>>, vector<1x192x384xf32>
    %36 = vector.shape_cast %35 : vector<1x192x384xf32> to vector<192x384xf32>
    %cst_35 = arith.constant dense<0.000000e+00> : vector<18x384xf32>
    %37 = tpu.matmul %34, %36, %cst_35 {dimension_numbers = #tpu.dot_dimension_numbers<[1], [0], [0], [1], [0, 0, 1, 1], [], []>} : vector<18x192xf32>, vector<192x384xf32>, vector<18x384xf32> -> vector<18x384xf32>
    %38 = arith.addf %31, %37 : vector<18x384xf32>
    %c1_36 = arith.constant 1 : index
    %c0_37 = arith.constant 0 : index
    %c0_38 = arith.constant 0 : index
    %39 = vector.load %arg4[%c1_36, %c0_37, %c0_38] : memref<3x18x18xf32, #tpu.memory_space<vmem>>, vector<1x18x18xf32>
    %40 = vector.shape_cast %39 : vector<1x18x18xf32> to vector<18x18xf32>
    %cst_39 = arith.constant dense<0.000000e+00> : vector<18x192xf32>
    %41 = tpu.matmul %40, %30, %cst_39 {dimension_numbers = #tpu.dot_dimension_numbers<[1], [0], [0], [1], [0, 0, 1, 1], [], []>} : vector<18x18xf32>, vector<18x192xf32>, vector<18x192xf32> -> vector<18x192xf32>
    %c1_40 = arith.constant 1 : index
    %c0_41 = arith.constant 0 : index
    %c0_42 = arith.constant 0 : index
    %42 = vector.load %arg5[%c1_40, %c0_41, %c0_42] : memref<3x192x384xf32, #tpu.memory_space<vmem>>, vector<1x192x384xf32>
    %43 = vector.shape_cast %42 : vector<1x192x384xf32> to vector<192x384xf32>
    %cst_43 = arith.constant dense<0.000000e+00> : vector<18x384xf32>
    %44 = tpu.matmul %41, %43, %cst_43 {dimension_numbers = #tpu.dot_dimension_numbers<[1], [0], [0], [1], [0, 0, 1, 1], [], []>} : vector<18x192xf32>, vector<192x384xf32>, vector<18x384xf32> -> vector<18x384xf32>
    %45 = arith.addf %38, %44 : vector<18x384xf32>
    %c2_44 = arith.constant 2 : index
    %c0_45 = arith.constant 0 : index
    %c0_46 = arith.constant 0 : index
    %46 = vector.load %arg4[%c2_44, %c0_45, %c0_46] : memref<3x18x18xf32, #tpu.memory_space<vmem>>, vector<1x18x18xf32>
    %47 = vector.shape_cast %46 : vector<1x18x18xf32> to vector<18x18xf32>
    %cst_47 = arith.constant dense<0.000000e+00> : vector<18x192xf32>
    %48 = tpu.matmul %47, %30, %cst_47 {dimension_numbers = #tpu.dot_dimension_numbers<[1], [0], [0], [1], [0, 0, 1, 1], [], []>} : vector<18x18xf32>, vector<18x192xf32>, vector<18x192xf32> -> vector<18x192xf32>
    %c2_48 = arith.constant 2 : index
    %c0_49 = arith.constant 0 : index
    %c0_50 = arith.constant 0 : index
    %49 = vector.load %arg5[%c2_48, %c0_49, %c0_50] : memref<3x192x384xf32, #tpu.memory_space<vmem>>, vector<1x192x384xf32>
    %50 = vector.shape_cast %49 : vector<1x192x384xf32> to vector<192x384xf32>
    %cst_51 = arith.constant dense<0.000000e+00> : vector<18x384xf32>
    %51 = tpu.matmul %48, %50, %cst_51 {dimension_numbers = #tpu.dot_dimension_numbers<[1], [0], [0], [1], [0, 0, 1, 1], [], []>} : vector<18x192xf32>, vector<192x384xf32>, vector<18x384xf32> -> vector<18x384xf32>
    %52 = arith.addf %45, %51 : vector<18x384xf32>
    %c0_52 = arith.constant 0 : index
    %c0_53 = arith.constant 0 : index
    %53 = vector.load %arg6[%c0_52, %c0_53] : memref<1x384xf32, #tpu.memory_space<vmem>>, vector<1x384xf32>
    %54 = vector.broadcast %53 : vector<1x384xf32> to vector<18x384xf32>
    %55 = arith.addf %52, %54 : vector<18x384xf32>
    %cst_54 = arith.constant 0.000000e+00 : f32
    %56 = vector.broadcast %cst_54 : f32 to vector<18x384xf32>
    %57 = arith.cmpf oge, %55, %56 : vector<18x384xf32>
    %cst_55 = arith.constant 2.000000e-01 : f32
    %58 = vector.broadcast %cst_55 : f32 to vector<18x384xf32>
    %59 = arith.mulf %58, %55 : vector<18x384xf32>
    %60 = arith.select %57, %55, %59 : vector<18x384xi1>, vector<18x384xf32>
    %cst_56 = arith.constant 0.000000e+00 : f32
    %61 = vector.broadcast %cst_56 : f32 to vector<10x384xf32>
    %c0_57 = arith.constant 0 : index
    %c0_58 = arith.constant 0 : index
    %c0_59 = arith.constant 0 : index
    %62 = vector.load %arg7[%c0_57, %c0_58, %c0_59] : memref<3x10x18xf32, #tpu.memory_space<vmem>>, vector<1x10x18xf32>
    %63 = vector.shape_cast %62 : vector<1x10x18xf32> to vector<10x18xf32>
    %cst_60 = arith.constant dense<0.000000e+00> : vector<10x384xf32>
    %64 = tpu.matmul %63, %60, %cst_60 {dimension_numbers = #tpu.dot_dimension_numbers<[1], [0], [0], [1], [0, 0, 1, 1], [], []>} : vector<10x18xf32>, vector<18x384xf32>, vector<10x384xf32> -> vector<10x384xf32>
    %c0_61 = arith.constant 0 : index
    %c0_62 = arith.constant 0 : index
    %c0_63 = arith.constant 0 : index
    %65 = vector.load %arg8[%c0_61, %c0_62, %c0_63] : memref<3x384x384xf32, #tpu.memory_space<vmem>>, vector<1x384x384xf32>
    %66 = vector.shape_cast %65 : vector<1x384x384xf32> to vector<384x384xf32>
    %cst_64 = arith.constant dense<0.000000e+00> : vector<10x384xf32>
    %67 = tpu.matmul %64, %66, %cst_64 {dimension_numbers = #tpu.dot_dimension_numbers<[1], [0], [0], [1], [0, 0, 1, 1], [], []>} : vector<10x384xf32>, vector<384x384xf32>, vector<10x384xf32> -> vector<10x384xf32>
    %68 = arith.addf %61, %67 : vector<10x384xf32>
    %c1_65 = arith.constant 1 : index
    %c0_66 = arith.constant 0 : index
    %c0_67 = arith.constant 0 : index
    %69 = vector.load %arg7[%c1_65, %c0_66, %c0_67] : memref<3x10x18xf32, #tpu.memory_space<vmem>>, vector<1x10x18xf32>
    %70 = vector.shape_cast %69 : vector<1x10x18xf32> to vector<10x18xf32>
    %cst_68 = arith.constant dense<0.000000e+00> : vector<10x384xf32>
    %71 = tpu.matmul %70, %60, %cst_68 {dimension_numbers = #tpu.dot_dimension_numbers<[1], [0], [0], [1], [0, 0, 1, 1], [], []>} : vector<10x18xf32>, vector<18x384xf32>, vector<10x384xf32> -> vector<10x384xf32>
    %c1_69 = arith.constant 1 : index
    %c0_70 = arith.constant 0 : index
    %c0_71 = arith.constant 0 : index
    %72 = vector.load %arg8[%c1_69, %c0_70, %c0_71] : memref<3x384x384xf32, #tpu.memory_space<vmem>>, vector<1x384x384xf32>
    %73 = vector.shape_cast %72 : vector<1x384x384xf32> to vector<384x384xf32>
    %cst_72 = arith.constant dense<0.000000e+00> : vector<10x384xf32>
    %74 = tpu.matmul %71, %73, %cst_72 {dimension_numbers = #tpu.dot_dimension_numbers<[1], [0], [0], [1], [0, 0, 1, 1], [], []>} : vector<10x384xf32>, vector<384x384xf32>, vector<10x384xf32> -> vector<10x384xf32>
    %75 = arith.addf %68, %74 : vector<10x384xf32>
    %c2_73 = arith.constant 2 : index
    %c0_74 = arith.constant 0 : index
    %c0_75 = arith.constant 0 : index
    %76 = vector.load %arg7[%c2_73, %c0_74, %c0_75] : memref<3x10x18xf32, #tpu.memory_space<vmem>>, vector<1x10x18xf32>
    %77 = vector.shape_cast %76 : vector<1x10x18xf32> to vector<10x18xf32>
    %cst_76 = arith.constant dense<0.000000e+00> : vector<10x384xf32>
    %78 = tpu.matmul %77, %60, %cst_76 {dimension_numbers = #tpu.dot_dimension_numbers<[1], [0], [0], [1], [0, 0, 1, 1], [], []>} : vector<10x18xf32>, vector<18x384xf32>, vector<10x384xf32> -> vector<10x384xf32>
    %c2_77 = arith.constant 2 : index
    %c0_78 = arith.constant 0 : index
    %c0_79 = arith.constant 0 : index
    %79 = vector.load %arg8[%c2_77, %c0_78, %c0_79] : memref<3x384x384xf32, #tpu.memory_space<vmem>>, vector<1x384x384xf32>
    %80 = vector.shape_cast %79 : vector<1x384x384xf32> to vector<384x384xf32>
    %cst_80 = arith.constant dense<0.000000e+00> : vector<10x384xf32>
    %81 = tpu.matmul %78, %80, %cst_80 {dimension_numbers = #tpu.dot_dimension_numbers<[1], [0], [0], [1], [0, 0, 1, 1], [], []>} : vector<10x384xf32>, vector<384x384xf32>, vector<10x384xf32> -> vector<10x384xf32>
    %82 = arith.addf %75, %81 : vector<10x384xf32>
    %c0_81 = arith.constant 0 : index
    %c0_82 = arith.constant 0 : index
    %83 = vector.load %arg9[%c0_81, %c0_82] : memref<1x384xf32, #tpu.memory_space<vmem>>, vector<1x384xf32>
    %84 = vector.broadcast %83 : vector<1x384xf32> to vector<10x384xf32>
    %85 = arith.addf %82, %84 : vector<10x384xf32>
    %cst_83 = arith.constant 0.000000e+00 : f32
    %86 = vector.broadcast %cst_83 : f32 to vector<10x384xf32>
    %87 = arith.cmpf oge, %85, %86 : vector<10x384xf32>
    %cst_84 = arith.constant 2.000000e-01 : f32
    %88 = vector.broadcast %cst_84 : f32 to vector<10x384xf32>
    %89 = arith.mulf %88, %85 : vector<10x384xf32>
    %90 = arith.select %87, %85, %89 : vector<10x384xi1>, vector<10x384xf32>
    %cst_85 = arith.constant 0.000000e+00 : f32
    %91 = vector.broadcast %cst_85 : f32 to vector<10x768xf32>
    %c0_86 = arith.constant 0 : index
    %c0_87 = arith.constant 0 : index
    %c0_88 = arith.constant 0 : index
    %92 = vector.load %arg10[%c0_86, %c0_87, %c0_88] : memref<3x10x10xf32, #tpu.memory_space<vmem>>, vector<1x10x10xf32>
    %93 = vector.shape_cast %92 : vector<1x10x10xf32> to vector<10x10xf32>
    %cst_89 = arith.constant dense<0.000000e+00> : vector<10x384xf32>
    %94 = tpu.matmul %93, %90, %cst_89 {dimension_numbers = #tpu.dot_dimension_numbers<[1], [0], [0], [1], [0, 0, 1, 1], [], []>} : vector<10x10xf32>, vector<10x384xf32>, vector<10x384xf32> -> vector<10x384xf32>
    %c0_90 = arith.constant 0 : index
    %c0_91 = arith.constant 0 : index
    %c0_92 = arith.constant 0 : index
    %95 = vector.load %arg11[%c0_90, %c0_91, %c0_92] : memref<3x384x768xf32, #tpu.memory_space<vmem>>, vector<1x384x768xf32>
    %96 = vector.shape_cast %95 : vector<1x384x768xf32> to vector<384x768xf32>
    %cst_93 = arith.constant dense<0.000000e+00> : vector<10x768xf32>
    %97 = tpu.matmul %94, %96, %cst_93 {dimension_numbers = #tpu.dot_dimension_numbers<[1], [0], [0], [1], [0, 0, 1, 1], [], []>} : vector<10x384xf32>, vector<384x768xf32>, vector<10x768xf32> -> vector<10x768xf32>
    %98 = arith.addf %91, %97 : vector<10x768xf32>
    %c1_94 = arith.constant 1 : index
    %c0_95 = arith.constant 0 : index
    %c0_96 = arith.constant 0 : index
    %99 = vector.load %arg10[%c1_94, %c0_95, %c0_96] : memref<3x10x10xf32, #tpu.memory_space<vmem>>, vector<1x10x10xf32>
    %100 = vector.shape_cast %99 : vector<1x10x10xf32> to vector<10x10xf32>
    %cst_97 = arith.constant dense<0.000000e+00> : vector<10x384xf32>
    %101 = tpu.matmul %100, %90, %cst_97 {dimension_numbers = #tpu.dot_dimension_numbers<[1], [0], [0], [1], [0, 0, 1, 1], [], []>} : vector<10x10xf32>, vector<10x384xf32>, vector<10x384xf32> -> vector<10x384xf32>
    %c1_98 = arith.constant 1 : index
    %c0_99 = arith.constant 0 : index
    %c0_100 = arith.constant 0 : index
    %102 = vector.load %arg11[%c1_98, %c0_99, %c0_100] : memref<3x384x768xf32, #tpu.memory_space<vmem>>, vector<1x384x768xf32>
    %103 = vector.shape_cast %102 : vector<1x384x768xf32> to vector<384x768xf32>
    %cst_101 = arith.constant dense<0.000000e+00> : vector<10x768xf32>
    %104 = tpu.matmul %101, %103, %cst_101 {dimension_numbers = #tpu.dot_dimension_numbers<[1], [0], [0], [1], [0, 0, 1, 1], [], []>} : vector<10x384xf32>, vector<384x768xf32>, vector<10x768xf32> -> vector<10x768xf32>
    %105 = arith.addf %98, %104 : vector<10x768xf32>
    %c2_102 = arith.constant 2 : index
    %c0_103 = arith.constant 0 : index
    %c0_104 = arith.constant 0 : index
    %106 = vector.load %arg10[%c2_102, %c0_103, %c0_104] : memref<3x10x10xf32, #tpu.memory_space<vmem>>, vector<1x10x10xf32>
    %107 = vector.shape_cast %106 : vector<1x10x10xf32> to vector<10x10xf32>
    %cst_105 = arith.constant dense<0.000000e+00> : vector<10x384xf32>
    %108 = tpu.matmul %107, %90, %cst_105 {dimension_numbers = #tpu.dot_dimension_numbers<[1], [0], [0], [1], [0, 0, 1, 1], [], []>} : vector<10x10xf32>, vector<10x384xf32>, vector<10x384xf32> -> vector<10x384xf32>
    %c2_106 = arith.constant 2 : index
    %c0_107 = arith.constant 0 : index
    %c0_108 = arith.constant 0 : index
    %109 = vector.load %arg11[%c2_106, %c0_107, %c0_108] : memref<3x384x768xf32, #tpu.memory_space<vmem>>, vector<1x384x768xf32>
    %110 = vector.shape_cast %109 : vector<1x384x768xf32> to vector<384x768xf32>
    %cst_109 = arith.constant dense<0.000000e+00> : vector<10x768xf32>
    %111 = tpu.matmul %108, %110, %cst_109 {dimension_numbers = #tpu.dot_dimension_numbers<[1], [0], [0], [1], [0, 0, 1, 1], [], []>} : vector<10x384xf32>, vector<384x768xf32>, vector<10x768xf32> -> vector<10x768xf32>
    %112 = arith.addf %105, %111 : vector<10x768xf32>
    %c0_110 = arith.constant 0 : index
    %c0_111 = arith.constant 0 : index
    %113 = vector.load %arg12[%c0_110, %c0_111] : memref<1x768xf32, #tpu.memory_space<vmem>>, vector<1x768xf32>
    %114 = vector.broadcast %113 : vector<1x768xf32> to vector<10x768xf32>
    %115 = arith.addf %112, %114 : vector<10x768xf32>
    %cst_112 = arith.constant 0.000000e+00 : f32
    %116 = vector.broadcast %cst_112 : f32 to vector<10x768xf32>
    %117 = arith.cmpf oge, %115, %116 : vector<10x768xf32>
    %cst_113 = arith.constant 2.000000e-01 : f32
    %118 = vector.broadcast %cst_113 : f32 to vector<10x768xf32>
    %119 = arith.mulf %118, %115 : vector<10x768xf32>
    %120 = arith.select %117, %115, %119 : vector<10x768xi1>, vector<10x768xf32>
    %cst_114 = arith.constant 0.000000e+00 : f32
    %121 = vector.broadcast %cst_114 : f32 to vector<2x11xf32>
    %c0_115 = arith.constant 0 : index
    %c0_116 = arith.constant 0 : index
    %c0_117 = arith.constant 0 : index
    %122 = vector.load %arg13[%c0_115, %c0_116, %c0_117] : memref<5x2x10xf32, #tpu.memory_space<vmem>>, vector<1x2x10xf32>
    %123 = vector.shape_cast %122 : vector<1x2x10xf32> to vector<2x10xf32>
    %cst_118 = arith.constant dense<0.000000e+00> : vector<2x768xf32>
    %124 = tpu.matmul %123, %120, %cst_118 {dimension_numbers = #tpu.dot_dimension_numbers<[1], [0], [0], [1], [0, 0, 1, 1], [], []>} : vector<2x10xf32>, vector<10x768xf32>, vector<2x768xf32> -> vector<2x768xf32>
    %c0_119 = arith.constant 0 : index
    %c0_120 = arith.constant 0 : index
    %c0_121 = arith.constant 0 : index
    %125 = vector.load %arg14[%c0_119, %c0_120, %c0_121] : memref<5x768x11xf32, #tpu.memory_space<vmem>>, vector<1x768x11xf32>
    %126 = vector.shape_cast %125 : vector<1x768x11xf32> to vector<768x11xf32>
    %cst_122 = arith.constant dense<0.000000e+00> : vector<2x11xf32>
    %127 = tpu.matmul %124, %126, %cst_122 {dimension_numbers = #tpu.dot_dimension_numbers<[1], [0], [0], [1], [0, 0, 1, 1], [], []>} : vector<2x768xf32>, vector<768x11xf32>, vector<2x11xf32> -> vector<2x11xf32>
    %128 = arith.addf %121, %127 : vector<2x11xf32>
    %c1_123 = arith.constant 1 : index
    %c0_124 = arith.constant 0 : index
    %c0_125 = arith.constant 0 : index
    %129 = vector.load %arg13[%c1_123, %c0_124, %c0_125] : memref<5x2x10xf32, #tpu.memory_space<vmem>>, vector<1x2x10xf32>
    %130 = vector.shape_cast %129 : vector<1x2x10xf32> to vector<2x10xf32>
    %cst_126 = arith.constant dense<0.000000e+00> : vector<2x768xf32>
    %131 = tpu.matmul %130, %120, %cst_126 {dimension_numbers = #tpu.dot_dimension_numbers<[1], [0], [0], [1], [0, 0, 1, 1], [], []>} : vector<2x10xf32>, vector<10x768xf32>, vector<2x768xf32> -> vector<2x768xf32>
    %c1_127 = arith.constant 1 : index
    %c0_128 = arith.constant 0 : index
    %c0_129 = arith.constant 0 : index
    %132 = vector.load %arg14[%c1_127, %c0_128, %c0_129] : memref<5x768x11xf32, #tpu.memory_space<vmem>>, vector<1x768x11xf32>
    %133 = vector.shape_cast %132 : vector<1x768x11xf32> to vector<768x11xf32>
    %cst_130 = arith.constant dense<0.000000e+00> : vector<2x11xf32>
    %134 = tpu.matmul %131, %133, %cst_130 {dimension_numbers = #tpu.dot_dimension_numbers<[1], [0], [0], [1], [0, 0, 1, 1], [], []>} : vector<2x768xf32>, vector<768x11xf32>, vector<2x11xf32> -> vector<2x11xf32>
    %135 = arith.addf %128, %134 : vector<2x11xf32>
    %c2_131 = arith.constant 2 : index
    %c0_132 = arith.constant 0 : index
    %c0_133 = arith.constant 0 : index
    %136 = vector.load %arg13[%c2_131, %c0_132, %c0_133] : memref<5x2x10xf32, #tpu.memory_space<vmem>>, vector<1x2x10xf32>
    %137 = vector.shape_cast %136 : vector<1x2x10xf32> to vector<2x10xf32>
    %cst_134 = arith.constant dense<0.000000e+00> : vector<2x768xf32>
    %138 = tpu.matmul %137, %120, %cst_134 {dimension_numbers = #tpu.dot_dimension_numbers<[1], [0], [0], [1], [0, 0, 1, 1], [], []>} : vector<2x10xf32>, vector<10x768xf32>, vector<2x768xf32> -> vector<2x768xf32>
    %c2_135 = arith.constant 2 : index
    %c0_136 = arith.constant 0 : index
    %c0_137 = arith.constant 0 : index
    %139 = vector.load %arg14[%c2_135, %c0_136, %c0_137] : memref<5x768x11xf32, #tpu.memory_space<vmem>>, vector<1x768x11xf32>
    %140 = vector.shape_cast %139 : vector<1x768x11xf32> to vector<768x11xf32>
    %cst_138 = arith.constant dense<0.000000e+00> : vector<2x11xf32>
    %141 = tpu.matmul %138, %140, %cst_138 {dimension_numbers = #tpu.dot_dimension_numbers<[1], [0], [0], [1], [0, 0, 1, 1], [], []>} : vector<2x768xf32>, vector<768x11xf32>, vector<2x11xf32> -> vector<2x11xf32>
    %142 = arith.addf %135, %141 : vector<2x11xf32>
    %c3 = arith.constant 3 : index
    %c0_139 = arith.constant 0 : index
    %c0_140 = arith.constant 0 : index
    %143 = vector.load %arg13[%c3, %c0_139, %c0_140] : memref<5x2x10xf32, #tpu.memory_space<vmem>>, vector<1x2x10xf32>
    %144 = vector.shape_cast %143 : vector<1x2x10xf32> to vector<2x10xf32>
    %cst_141 = arith.constant dense<0.000000e+00> : vector<2x768xf32>
    %145 = tpu.matmul %144, %120, %cst_141 {dimension_numbers = #tpu.dot_dimension_numbers<[1], [0], [0], [1], [0, 0, 1, 1], [], []>} : vector<2x10xf32>, vector<10x768xf32>, vector<2x768xf32> -> vector<2x768xf32>
    %c3_142 = arith.constant 3 : index
    %c0_143 = arith.constant 0 : index
    %c0_144 = arith.constant 0 : index
    %146 = vector.load %arg14[%c3_142, %c0_143, %c0_144] : memref<5x768x11xf32, #tpu.memory_space<vmem>>, vector<1x768x11xf32>
    %147 = vector.shape_cast %146 : vector<1x768x11xf32> to vector<768x11xf32>
    %cst_145 = arith.constant dense<0.000000e+00> : vector<2x11xf32>
    %148 = tpu.matmul %145, %147, %cst_145 {dimension_numbers = #tpu.dot_dimension_numbers<[1], [0], [0], [1], [0, 0, 1, 1], [], []>} : vector<2x768xf32>, vector<768x11xf32>, vector<2x11xf32> -> vector<2x11xf32>
    %149 = arith.addf %142, %148 : vector<2x11xf32>
    %c4 = arith.constant 4 : index
    %c0_146 = arith.constant 0 : index
    %c0_147 = arith.constant 0 : index
    %150 = vector.load %arg13[%c4, %c0_146, %c0_147] : memref<5x2x10xf32, #tpu.memory_space<vmem>>, vector<1x2x10xf32>
    %151 = vector.shape_cast %150 : vector<1x2x10xf32> to vector<2x10xf32>
    %cst_148 = arith.constant dense<0.000000e+00> : vector<2x768xf32>
    %152 = tpu.matmul %151, %120, %cst_148 {dimension_numbers = #tpu.dot_dimension_numbers<[1], [0], [0], [1], [0, 0, 1, 1], [], []>} : vector<2x10xf32>, vector<10x768xf32>, vector<2x768xf32> -> vector<2x768xf32>
    %c4_149 = arith.constant 4 : index
    %c0_150 = arith.constant 0 : index
    %c0_151 = arith.constant 0 : index
    %153 = vector.load %arg14[%c4_149, %c0_150, %c0_151] : memref<5x768x11xf32, #tpu.memory_space<vmem>>, vector<1x768x11xf32>
    %154 = vector.shape_cast %153 : vector<1x768x11xf32> to vector<768x11xf32>
    %cst_152 = arith.constant dense<0.000000e+00> : vector<2x11xf32>
    %155 = tpu.matmul %152, %154, %cst_152 {dimension_numbers = #tpu.dot_dimension_numbers<[1], [0], [0], [1], [0, 0, 1, 1], [], []>} : vector<2x768xf32>, vector<768x11xf32>, vector<2x11xf32> -> vector<2x11xf32>
    %156 = arith.addf %149, %155 : vector<2x11xf32>
    %c0_153 = arith.constant 0 : index
    %c0_154 = arith.constant 0 : index
    %157 = vector.load %arg15[%c0_153, %c0_154] : memref<1x11xf32, #tpu.memory_space<vmem>>, vector<1x11xf32>
    %158 = vector.broadcast %157 : vector<1x11xf32> to vector<2x11xf32>
    %159 = arith.addf %156, %158 : vector<2x11xf32>
    %cst_155 = arith.constant 0.000000e+00 : f32
    %160 = vector.broadcast %cst_155 : f32 to vector<2x11xf32>
    %161 = arith.subf %160, %159 : vector<2x11xf32>
    %162 = math.exp %161 : vector<2x11xf32>
    %cst_156 = arith.constant 1.000000e+00 : f32
    %163 = vector.broadcast %cst_156 : f32 to vector<2x11xf32>
    %164 = arith.addf %163, %162 : vector<2x11xf32>
    %cst_157 = arith.constant 1.000000e+00 : f32
    %165 = vector.broadcast %cst_157 : f32 to vector<2x11xf32>
    %166 = arith.divf %165, %164 : vector<2x11xf32>
    %c0_158 = arith.constant 0 : index
    %c0_159 = arith.constant 0 : index
    %167 = vector.load %arg16[%c0_158, %c0_159] : memref<2x11xf32, #tpu.memory_space<vmem>>, vector<2x11xf32>
    tpu.vector_store %arg16[%c0_158, %c0_159], %166 {strides = array<i32>} : memref<2x11xf32, #tpu.memory_space<vmem>>, vector<2x11xf32>,
    return
  }
}

</mosaic_0001>

<llo_original>
// kernel: model_forward.1
$region0: #{model_forward.1}
  #allocation0 [shape = 'u32[]', space=smem, size = 0x4, offset = 0x4, fixed_abs, tag = 'smem constant byte address 0x4 - core index']
  #allocation1 [shape = 'u32[144,128]{1,0:T(1,128)}', space=vmem, size = 0x12000, scoped, tag = 'internal scratch']
  %s0 = inlined_call_operand.vmem [shape: f32[36,33], index: 0, kind: input, shape index: {}]
  %s1 = inlined_call_operand.vmem [shape: f32[3,18,36], index: 1, kind: input, shape index: {}]
  %s2 = inlined_call_operand.vmem [shape: f32[3,33,192], index: 2, kind: input, shape index: {}]
  %s3 = inlined_call_operand.vmem [shape: f32[1,192], index: 3, kind: input, shape index: {}]
  %s4 = inlined_call_operand.vmem [shape: f32[3,18,18], index: 4, kind: input, shape index: {}]
  %s5 = inlined_call_operand.hbm [shape: f32[3,192,384], index: 5, kind: input, shape index: {}]
  %s6 = inlined_call_operand.vmem [shape: f32[1,384], index: 6, kind: input, shape index: {}]
  %s7 = inlined_call_operand.vmem [shape: f32[3,10,18], index: 7, kind: input, shape index: {}]
  %s8 = inlined_call_operand.vmem [shape: f32[3,384,384], index: 8, kind: input, shape index: {}]
  %s9 = inlined_call_operand.vmem [shape: f32[1,384], index: 9, kind: input, shape index: {}]
  %s10 = inlined_call_operand.vmem [shape: f32[3,10,10], index: 10, kind: input, shape index: {}]
  %s11 = inlined_call_operand.hbm [shape: f32[3,384,768], index: 11, kind: input, shape index: {}]
  %s12 = inlined_call_operand.vmem [shape: f32[1,768], index: 12, kind: input, shape index: {}]
  %s13 = inlined_call_operand.vmem [shape: f32[5,2,10], index: 13, kind: input, shape index: {}]
  %s14 = inlined_call_operand.vmem [shape: f32[5,768,11], index: 14, kind: input, shape index: {}]
  %s15 = inlined_call_operand.vmem [shape: f32[1,11], index: 15, kind: input, shape index: {}]
  %s16 = inlined_call_operand.hbm [shape: f32[2,11], index: 16, kind: output, shape index: {}]
  %s17 = sld [smem:[#allocation0]]
  $region82: #{model_forward.1} parent=0
    _
  %s19 = ssub.s32 1, %s17
  %s20 = scalar_select 0, %s19, %s17
  $region1: #{model_forward.1} parent=0
    #allocation2 [shape = 'u8[884736]{0}', space=vmem, size = 0xd8000, scoped, tag = 'input window, operand 5, single buffered']
    #allocation3 [shape = 's32[1]{0}', space=sflag, size = 0x4, scoped, tag = 'scoped memory for model_forward.1']
    #allocation4 [shape = 's32[1]{0}', space=sflag, size = 0x4, scoped, tag = 'scoped memory for model_forward.1']
    #allocation5 [shape = 'u8[3538944]{0}', space=vmem, size = 0x360000, scoped, tag = 'input window, operand 11, single buffered']
    #allocation6 [shape = 's32[1]{0}', space=sflag, size = 0x4, scoped, tag = 'scoped memory for model_forward.1']
    #allocation7 [shape = 'u8[1024]{0}', space=vmem, size = 0x400, scoped, tag = 'output window, operand 0, single buffered']
    %21 = vsyncpa [#allocation3], 0
    %22 = vsyncpa [#allocation6], 0
    %23 = vsyncpa [#allocation4], 0
    // Predicated region
    $region2: #{model_forward.1} parent=1 // pred_check
      _
    $region3: #{model_forward.1} parent=1 // pred_check_branch
      %25 = sbr.rel (0) target = $region5
    $region4: #{model_forward.1} parent=1 // pred_region
      _
    $region5: #{model_forward.1} parent=1 // pred_fallthru
      _
    // Predicated region
    $region6: #{model_forward.1} parent=1 // pred_check
      _
    $region7: #{model_forward.1} parent=1 // pred_check_branch
      %27 = sbr.rel (0) target = $region9
    $region8: #{model_forward.1} parent=1 // pred_region
      _
    $region9: #{model_forward.1} parent=1 // pred_fallthru
      _
    // Predicated region
    $region10: #{model_forward.1} parent=1 // pred_check
      _
    $region11: #{model_forward.1} parent=1 // pred_check_branch
      %29 = sbr.rel (0) target = $region13
    $region12: #{model_forward.1} parent=1 // pred_region
      _
    $region13: #{model_forward.1} parent=1 // pred_fallthru
      _
    // Predicated region
    $region14: #{model_forward.1} parent=1 // pred_check
      _
    $region15: #{model_forward.1} parent=1 // pred_check_branch
      %31 = sbr.rel (0) target = $region17
    $region16: #{model_forward.1} parent=1 // pred_region
      _
    $region17: #{model_forward.1} parent=1 // pred_fallthru
      _
    // Predicated region
    $region18: #{model_forward.1} parent=1 // pred_check
      _
    $region19: #{model_forward.1} parent=1 // pred_check_branch
      %33 = sbr.rel (0) target = $region21
    $region20: #{model_forward.1} parent=1 // pred_region
      _
    $region21: #{model_forward.1} parent=1 // pred_fallthru
      _
    // Predicated region
    $region22: #{model_forward.1} parent=1 // pred_check
      _
    $region23: #{model_forward.1} parent=1 // pred_check_branch
      %35 = sbr.rel (0) target = $region25
    $region24: #{model_forward.1} parent=1 // pred_region
      %s37 = ssub.s32 27648, 27648
      %38 = vsyncadd [#allocation3], %s37
      %s39 = sshll.u32 [#allocation2], 4
      %s40 = int_to_ptr.vmem [resolvable:$true] %s39
      %45 = dma.hbm_to_vmem [thread:$0]  %s5, 27648, %s40, [#allocation3], 384, 384, 24
    $region25: #{model_forward.1} parent=1 // pred_fallthru
      _
    // Predicated region
    $region26: #{model_forward.1} parent=1 // pred_check
      _
    $region27: #{model_forward.1} parent=1 // pred_check_branch
      %47 = sbr.rel (0) target = $region29
    $region28: #{model_forward.1} parent=1 // pred_region
      _
    $region29: #{model_forward.1} parent=1 // pred_fallthru
      _
    // Predicated region
    $region30: #{model_forward.1} parent=1 // pred_check
      _
    $region31: #{model_forward.1} parent=1 // pred_check_branch
      %49 = sbr.rel (0) target = $region33
    $region32: #{model_forward.1} parent=1 // pred_region
      _
    $region33: #{model_forward.1} parent=1 // pred_fallthru
      _
    // Predicated region
    $region34: #{model_forward.1} parent=1 // pred_check
      _
    $region35: #{model_forward.1} parent=1 // pred_check_branch
      %51 = sbr.rel (0) target = $region37
    $region36: #{model_forward.1} parent=1 // pred_region
      _
    $region37: #{model_forward.1} parent=1 // pred_fallthru
      _
    // Predicated region
    $region38: #{model_forward.1} parent=1 // pred_check
      _
    $region39: #{model_forward.1} parent=1 // pred_check_branch
      %53 = sbr.rel (0) target = $region41
    $region40: #{model_forward.1} parent=1 // pred_region
      _
    $region41: #{model_forward.1} parent=1 // pred_fallthru
      _
    // Predicated region
    $region42: #{model_forward.1} parent=1 // pred_check
      _
    $region43: #{model_forward.1} parent=1 // pred_check_branch
      %55 = sbr.rel (0) target = $region45
    $region44: #{model_forward.1} parent=1 // pred_region
      _
    $region45: #{model_forward.1} parent=1 // pred_fallthru
      _
    // Predicated region
    $region46: #{model_forward.1} parent=1 // pred_check
      _
    $region47: #{model_forward.1} parent=1 // pred_check_branch
      %57 = sbr.rel (0) target = $region49
    $region48: #{model_forward.1} parent=1 // pred_region
      %s59 = ssub.s32 110592, 110592
      %60 = vsyncadd [#allocation6], %s59
      %s61 = sshll.u32 [#allocation5], 4
      %s62 = int_to_ptr.vmem [resolvable:$true] %s61
      %67 = dma.hbm_to_vmem [thread:$0]  %s11, 110592, %s62, [#allocation6], 768, 768, 48
    $region49: #{model_forward.1} parent=1 // pred_fallthru
      _
    // Predicated region
    $region50: #{model_forward.1} parent=1 // pred_check
      _
    $region51: #{model_forward.1} parent=1 // pred_check_branch
      %69 = sbr.rel (0) target = $region53
    $region52: #{model_forward.1} parent=1 // pred_region
      _
    $region53: #{model_forward.1} parent=1 // pred_fallthru
      _
    // Predicated region
    $region54: #{model_forward.1} parent=1 // pred_check
      _
    $region55: #{model_forward.1} parent=1 // pred_check_branch
      %71 = sbr.rel (0) target = $region57
    $region56: #{model_forward.1} parent=1 // pred_region
      _
    $region57: #{model_forward.1} parent=1 // pred_fallthru
      _
    // Predicated region
    $region58: #{model_forward.1} parent=1 // pred_check
      _
    $region59: #{model_forward.1} parent=1 // pred_check_branch
      %73 = sbr.rel (0) target = $region61
    $region60: #{model_forward.1} parent=1 // pred_region
      _
    $region61: #{model_forward.1} parent=1 // pred_fallthru
      _
    // Predicated region
    $region62: #{model_forward.1} parent=1 // pred_check
      _
    $region63: #{model_forward.1} parent=1 // pred_check_branch
      %75 = sbr.rel (0) target = $region65
    $region64: #{model_forward.1} parent=1 // pred_region
      _
    $region65: #{model_forward.1} parent=1 // pred_fallthru
      _
    // Predicated region
    $region66: #{model_forward.1} parent=1 // pred_check
      _
    $region67: #{model_forward.1} parent=1 // pred_check_branch
      %77 = sbr.rel (0) target = $region69
    $region68: #{model_forward.1} parent=1 // pred_region
      %78 = dma.done [#allocation3], 27648
    $region69: #{model_forward.1} parent=1 // pred_fallthru
      _
    // Predicated region
    $region70: #{model_forward.1} parent=1 // pred_check
      _
    $region71: #{model_forward.1} parent=1 // pred_check_branch
      %80 = sbr.rel (0) target = $region73
    $region72: #{model_forward.1} parent=1 // pred_region
      %81 = dma.done [#allocation6], 110592
    $region73: #{model_forward.1} parent=1 // pred_fallthru
      _
    %v82 = vld [vmem:[%s0] sm:$0xff]
    %v83 = vld [vmem:[%s0 + $0x8] sm:$0xff]
    %v84 = vld [vmem:[%s0 + $0x10] sm:$0xff]
    %v85 = vld [vmem:[%s0 + $0x18] sm:$0xff]
    %v86 = vld [vmem:[%s0 + $0x20] sm:$0xf]
    %v87 = vld [vmem:[%s1] sm:$0xff]
    %v88 = vld [vmem:[%s1 + $0x8] sm:$0xff]
    %v89 = vld [vmem:[%s1 + $0x10] sm:$0x3]
    %vm90 = vcmask 293888
    %v92 = vsel %vm90, %v87, 0
    %v95 = vsel %vm90, %v88, 0
    %v98 = vsel %vm90, %v89, 0
    %vm100 = vcmask 1043456
    %v102 = vsel %vm100, %v86, 0
    %104 = vmatprep.subr.mxu0 0.0
    %105 = vmatpush1.msra.mxu0 %v82
    %106 = vmatprep.subr.mxu0 0.0
    %107 = vmatpush1.msra.mxu0 %v83
    %108 = vmatprep.subr.mxu0 0.0
    %109 = vmatpush1.msra.mxu0 %v84
    %110 = vmatprep.subr.mxu0 0.0
    %111 = vmatpush1.msra.mxu0 %v85
    %112 = vmatprep.subr.mxu0 0.0
    %113 = vmatpush1.msra.mxu0 %v102
    %114 = vmatprep.subr.mxu0 0.0
    %115 = vmatpush1.msra.mxu0 0.0
    %116 = vmatprep.subr.mxu0 0.0
    %117 = vmatpush1.msra.mxu0 0.0
    %118 = vmatprep.subr.mxu0 0.0
    %119 = vmatpush1.msra.mxu0 0.0
    %120 = vmatprep.subr.mxu0 0.0
    %121 = vmatpush1.msra.mxu0 0.0
    %122 = vmatprep.subr.mxu0 0.0
    %123 = vmatpush1.msra.mxu0 0.0
    %124 = vmatprep.subr.mxu0 0.0
    %125 = vmatpush1.msra.mxu0 0.0
    %126 = vmatprep.subr.mxu0 0.0
    %127 = vmatpush1.msra.mxu0 0.0
    %128 = vmatprep.subr.mxu0 0.0
    %129 = vmatpush1.msra.mxu0 0.0
    %130 = vmatprep.subr.mxu0 0.0
    %131 = vmatpush1.msra.mxu0 0.0
    %132 = vmatprep.subr.mxu0 0.0
    %133 = vmatpush1.msra.mxu0 0.0
    %134 = vmatprep.subr.mxu0 0.0
    %135 = vmatpush1.msra.mxu0 0.0
    %136 = vmatprep.subr.mxu0 0.0
    %137 = vmatpush1.msra.mxu0 0.0
    %138 = vmatprep.subr.mxu0 0.0
    %139 = vmatpush1.msra.mxu0 0.0
    %140 = vmatprep.subr.mxu0 0.0
    %141 = vmatpush1.msra.mxu0 0.0
    %142 = vmatprep.subr.mxu0 0.0
    %143 = vmatpush1.msra.mxu0 0.0
    %144 = vmatprep.subr.mxu0 0.0
    %145 = vmatpush1.msra.mxu0 0.0
    %146 = vmatprep.subr.mxu0 0.0
    %147 = vmatpush1.msra.mxu0 0.0
    %148 = vmatprep.subr.mxu0 0.0
    %149 = vmatpush1.msra.mxu0 0.0
    %150 = vmatprep.subr.mxu0 0.0
    %151 = vmatpush1.msra.mxu0 0.0
    %152 = vmatprep.subr.mxu0 0.0
    %153 = vmatpush1.msra.mxu0 0.0
    %154 = vmatprep.subr.mxu0 0.0
    %155 = vmatpush1.msra.mxu0 0.0
    %156 = vmatprep.subr.mxu0 0.0
    %157 = vmatpush1.msra.mxu0 0.0
    %158 = vmatprep.subr.mxu0 0.0
    %159 = vmatpush1.msra.mxu0 0.0
    %160 = vmatprep.subr.mxu0 0.0
    %161 = vmatpush1.msra.mxu0 0.0
    %162 = vmatprep.subr.mxu0 0.0
    %163 = vmatpush1.msra.mxu0 0.0
    %164 = vmatprep.subr.mxu0 0.0
    %165 = vmatpush1.msra.mxu0 0.0
    %166 = vmatprep.subr.mxu0 0.0
    %167 = vmatpush1.msra.mxu0 0.0
    %168 = vmatprep.mubr.f32.mxu0 0.0
    %169 = vmatmul.mubr.f32.gmra.mrb[0].mxu0 %v92
    %v170 = vpop.f32.mrb[0].mxu0
    %v171 = vadd.f32 0.0, %v170
    %v172 = vpop.f32.mrb[0].mxu0
    %173 = vmatprep.mubr.f32.mxu0 0.0
    %174 = vmatmul.mubr.f32.gmra.mrb[0].mxu0 %v95
    %v175 = vpop.f32.mrb[0].mxu0
    %v176 = vadd.f32 0.0, %v175
    %v177 = vpop.f32.mrb[0].mxu0
    %178 = vmatprep.mubr.f32.mxu0 0.0
    %179 = vmatmul.mubr.f32.gmra.mrb[0].mxu0 %v98
    %v180 = vpop.f32.mrb[0].mxu0
    %v181 = vadd.f32 0.0, %v180
    %v182 = vpop.f32.mrb[0].mxu0
    %183 = vdwg.mxu0
    %v184 = vld [vmem:[%s2] sm:$0xff]
    %v185 = vld [vmem:[%s2 + $0x8] sm:$0xff]
    %v186 = vld [vmem:[%s2 + $0x10] sm:$0xff]
    %v187 = vld [vmem:[%s2 + $0x18] sm:$0xff]
    %v188 = vld [vmem:[%s2 + $0x20] sm:$0xff]
    %v189 = vld [vmem:[%s2 + $0x28] sm:$0xff]
    %v190 = vld [vmem:[%s2 + $0x30] sm:$0xff]
    %v191 = vld [vmem:[%s2 + $0x38] sm:$0xff]
    %v192 = vld [vmem:[%s2 + $0x40] sm:$0x1]
    %v193 = vld [vmem:[%s2 + $0x48] sm:$0x1]
    %s194 = scalar_lea.vmem %s1, 24
    %v195 = vld [vmem:[%s194] sm:$0xff]
    %v196 = vld [vmem:[%s194 + $0x8] sm:$0xff]
    %v197 = vld [vmem:[%s194 + $0x10] sm:$0x3]
    %v199 = vsel %vm90, %v195, 0
    %v202 = vsel %vm90, %v196, 0
    %v205 = vsel %vm90, %v197, 0
    %207 = vmatprep.subr.mxu0 0.0
    %208 = vmatpush1.msra.mxu0 %v82
    %209 = vmatprep.subr.mxu0 0.0
    %210 = vmatpush1.msra.mxu0 %v83
    %211 = vmatprep.subr.mxu0 0.0
    %212 = vmatpush1.msra.mxu0 %v84
    %213 = vmatprep.subr.mxu0 0.0
    %214 = vmatpush1.msra.mxu0 %v85
    %215 = vmatprep.subr.mxu0 0.0
    %216 = vmatpush1.msra.mxu0 %v102
    %217 = vmatprep.subr.mxu0 0.0
    %218 = vmatpush1.msra.mxu0 0.0
    %219 = vmatprep.subr.mxu0 0.0
    %220 = vmatpush1.msra.mxu0 0.0
    %221 = vmatprep.subr.mxu0 0.0
    %222 = vmatpush1.msra.mxu0 0.0
    %223 = vmatprep.subr.mxu0 0.0
    %224 = vmatpush1.msra.mxu0 0.0
    %225 = vmatprep.subr.mxu0 0.0
    %226 = vmatpush1.msra.mxu0 0.0
    %227 = vmatprep.subr.mxu0 0.0
    %228 = vmatpush1.msra.mxu0 0.0
    %229 = vmatprep.subr.mxu0 0.0
    %230 = vmatpush1.msra.mxu0 0.0
    %231 = vmatprep.subr.mxu0 0.0
    %232 = vmatpush1.msra.mxu0 0.0
    %233 = vmatprep.subr.mxu0 0.0
    %234 = vmatpush1.msra.mxu0 0.0
    %235 = vmatprep.subr.mxu0 0.0
    %236 = vmatpush1.msra.mxu0 0.0
    %237 = vmatprep.subr.mxu0 0.0
    %238 = vmatpush1.msra.mxu0 0.0
    %239 = vmatprep.subr.mxu0 0.0
    %240 = vmatpush1.msra.mxu0 0.0
    %241 = vmatprep.subr.mxu0 0.0
    %242 = vmatpush1.msra.mxu0 0.0
    %243 = vmatprep.subr.mxu0 0.0
    %244 = vmatpush1.msra.mxu0 0.0
    %245 = vmatprep.subr.mxu0 0.0
    %246 = vmatpush1.msra.mxu0 0.0
    %247 = vmatprep.subr.mxu0 0.0
    %248 = vmatpush1.msra.mxu0 0.0
    %249 = vmatprep.subr.mxu0 0.0
    %250 = vmatpush1.msra.mxu0 0.0
    %251 = vmatprep.subr.mxu0 0.0
    %252 = vmatpush1.msra.mxu0 0.0
    %253 = vmatprep.subr.mxu0 0.0
    %254 = vmatpush1.msra.mxu0 0.0
    %255 = vmatprep.subr.mxu0 0.0
    %256 = vmatpush1.msra.mxu0 0.0
    %257 = vmatprep.subr.mxu0 0.0
    %258 = vmatpush1.msra.mxu0 0.0
    %259 = vmatprep.subr.mxu0 0.0
    %260 = vmatpush1.msra.mxu0 0.0
    %261 = vmatprep.subr.mxu0 0.0
    %262 = vmatpush1.msra.mxu0 0.0
    %263 = vmatprep.subr.mxu0 0.0
    %264 = vmatpush1.msra.mxu0 0.0
    %265 = vmatprep.subr.mxu0 0.0
    %266 = vmatpush1.msra.mxu0 0.0
    %267 = vmatprep.subr.mxu0 0.0
    %268 = vmatpush1.msra.mxu0 0.0
    %269 = vmatprep.subr.mxu0 0.0
    %270 = vmatpush1.msra.mxu0 0.0
    %271 = vmatprep.mubr.f32.mxu0 0.0
    %272 = vmatmul.mubr.f32.gmra.mrb[0].mxu0 %v199
    %v273 = vpop.f32.mrb[0].mxu0
    %v274 = vadd.f32 0.0, %v273
    %v275 = vpop.f32.mrb[0].mxu0
    %276 = vmatprep.mubr.f32.mxu0 0.0
    %277 = vmatmul.mubr.f32.gmra.mrb[0].mxu0 %v202
    %v278 = vpop.f32.mrb[0].mxu0
    %v279 = vadd.f32 0.0, %v278
    %v280 = vpop.f32.mrb[0].mxu0
    %281 = vmatprep.mubr.f32.mxu0 0.0
    %282 = vmatmul.mubr.f32.gmra.mrb[0].mxu0 %v205
    %v283 = vpop.f32.mrb[0].mxu0
    %v284 = vadd.f32 0.0, %v283
    %v285 = vpop.f32.mrb[0].mxu0
    %286 = vdwg.mxu0
    %s287 = scalar_lea.vmem %s2, 80
    %v288 = vld [vmem:[%s287] sm:$0xff]
    %v289 = vld [vmem:[%s287 + $0x8] sm:$0xff]
    %v290 = vld [vmem:[%s287 + $0x10] sm:$0xff]
    %v291 = vld [vmem:[%s287 + $0x18] sm:$0xff]
    %v292 = vld [vmem:[%s287 + $0x20] sm:$0xff]
    %v293 = vld [vmem:[%s287 + $0x28] sm:$0xff]
    %v294 = vld [vmem:[%s287 + $0x30] sm:$0xff]
    %v295 = vld [vmem:[%s287 + $0x38] sm:$0xff]
    %v296 = vld [vmem:[%s287 + $0x40] sm:$0x1]
    %v297 = vld [vmem:[%s287 + $0x48] sm:$0x1]
    %vm298 = vcmask 269312
    %v300 = vsel %vm298, %v274, 0
    %v303 = vsel %vm298, %v279, 0
    %v306 = vsel %vm298, %v284, 0
    %vm308 = vcmask 1040384
    %v310 = vsel %vm308, %v296, 0
    %v313 = vsel %vm308, %v297, 0
    %315 = vmatprep.subr.mxu0 %v289
    %316 = vmatpush1.msra.mxu0 %v288
    %317 = vmatprep.subr.mxu0 %v291
    %318 = vmatpush1.msra.mxu0 %v290
    %319 = vmatprep.subr.mxu0 %v293
    %320 = vmatpush1.msra.mxu0 %v292
    %321 = vmatprep.subr.mxu0 %v295
    %322 = vmatpush1.msra.mxu0 %v294
    %323 = vmatprep.subr.mxu0 %v313
    %324 = vmatpush1.msra.mxu0 %v310
    %325 = vmatprep.subr.mxu0 0.0
    %326 = vmatpush1.msra.mxu0 0.0
    %327 = vmatprep.subr.mxu0 0.0
    %328 = vmatpush1.msra.mxu0 0.0
    %329 = vmatprep.subr.mxu0 0.0
    %330 = vmatpush1.msra.mxu0 0.0
    %331 = vmatprep.subr.mxu0 0.0
    %332 = vmatpush1.msra.mxu0 0.0
    %333 = vmatprep.subr.mxu0 0.0
    %334 = vmatpush1.msra.mxu0 0.0
    %335 = vmatprep.subr.mxu0 0.0
    %336 = vmatpush1.msra.mxu0 0.0
    %337 = vmatprep.subr.mxu0 0.0
    %338 = vmatpush1.msra.mxu0 0.0
    %339 = vmatprep.subr.mxu0 0.0
    %340 = vmatpush1.msra.mxu0 0.0
    %341 = vmatprep.subr.mxu0 0.0
    %342 = vmatpush1.msra.mxu0 0.0
    %343 = vmatprep.subr.mxu0 0.0
    %344 = vmatpush1.msra.mxu0 0.0
    %345 = vmatprep.subr.mxu0 0.0
    %346 = vmatpush1.msra.mxu0 0.0
    %347 = vmatprep.subr.mxu0 0.0
    %348 = vmatpush1.msra.mxu0 0.0
    %349 = vmatprep.subr.mxu0 0.0
    %350 = vmatpush1.msra.mxu0 0.0
    %351 = vmatprep.subr.mxu0 0.0
    %352 = vmatpush1.msra.mxu0 0.0
    %353 = vmatprep.subr.mxu0 0.0
    %354 = vmatpush1.msra.mxu0 0.0
    %355 = vmatprep.subr.mxu0 0.0
    %356 = vmatpush1.msra.mxu0 0.0
    %357 = vmatprep.subr.mxu0 0.0
    %358 = vmatpush1.msra.mxu0 0.0
    %359 = vmatprep.subr.mxu0 0.0
    %360 = vmatpush1.msra.mxu0 0.0
    %361 = vmatprep.subr.mxu0 0.0
    %362 = vmatpush1.msra.mxu0 0.0
    %363 = vmatprep.subr.mxu0 0.0
    %364 = vmatpush1.msra.mxu0 0.0
    %365 = vmatprep.subr.mxu0 0.0
    %366 = vmatpush1.msra.mxu0 0.0
    %367 = vmatprep.subr.mxu0 0.0
    %368 = vmatpush1.msra.mxu0 0.0
    %369 = vmatprep.subr.mxu0 0.0
    %370 = vmatpush1.msra.mxu0 0.0
    %371 = vmatprep.subr.mxu0 0.0
    %372 = vmatpush1.msra.mxu0 0.0
    %373 = vmatprep.subr.mxu0 0.0
    %374 = vmatpush1.msra.mxu0 0.0
    %375 = vmatprep.subr.mxu0 0.0
    %376 = vmatpush1.msra.mxu0 0.0
    %377 = vmatprep.subr.mxu0 0.0
    %378 = vmatpush1.msra.mxu0 0.0
    %379 = vmatprep.mubr.f32.mxu0 0.0
    %380 = vmatmul.mubr.f32.gmra.mrb[0].mxu0 %v300
    %v381 = vpop.f32.mrb[0].mxu0
    %v382 = vadd.f32 0.0, %v381
    %v383 = vpop.f32.mrb[0].mxu0
    %v384 = vadd.f32 0.0, %v383
    %385 = vmatprep.mubr.f32.mxu0 0.0
    %386 = vmatmul.mubr.f32.gmra.mrb[0].mxu0 %v303
    %v387 = vpop.f32.mrb[0].mxu0
    %v388 = vadd.f32 0.0, %v387
    %v389 = vpop.f32.mrb[0].mxu0
    %v390 = vadd.f32 0.0, %v389
    %391 = vmatprep.mubr.f32.mxu0 0.0
    %392 = vmatmul.mubr.f32.gmra.mrb[0].mxu0 %v306
    %v393 = vpop.f32.mrb[0].mxu0
    %v394 = vadd.f32 0.0, %v393
    %v395 = vpop.f32.mrb[0].mxu0
    %v396 = vadd.f32 0.0, %v395
    %397 = vdwg.mxu0
    %v399 = vsel %vm298, %v171, 0
    %v402 = vsel %vm298, %v176, 0
    %v405 = vsel %vm298, %v181, 0
    %v408 = vsel %vm308, %v192, 0
    %v411 = vsel %vm308, %v193, 0
    %413 = vmatprep.subr.mxu0 %v185
    %414 = vmatpush1.msra.mxu0 %v184
    %415 = vmatprep.subr.mxu0 %v187
    %416 = vmatpush1.msra.mxu0 %v186
    %417 = vmatprep.subr.mxu0 %v189
    %418 = vmatpush1.msra.mxu0 %v188
    %419 = vmatprep.subr.mxu0 %v191
    %420 = vmatpush1.msra.mxu0 %v190
    %421 = vmatprep.subr.mxu0 %v411
    %422 = vmatpush1.msra.mxu0 %v408
    %423 = vmatprep.subr.mxu0 0.0
    %424 = vmatpush1.msra.mxu0 0.0
    %425 = vmatprep.subr.mxu0 0.0
    %426 = vmatpush1.msra.mxu0 0.0
    %427 = vmatprep.subr.mxu0 0.0
    %428 = vmatpush1.msra.mxu0 0.0
    %429 = vmatprep.subr.mxu0 0.0
    %430 = vmatpush1.msra.mxu0 0.0
    %431 = vmatprep.subr.mxu0 0.0
    %432 = vmatpush1.msra.mxu0 0.0
    %433 = vmatprep.subr.mxu0 0.0
    %434 = vmatpush1.msra.mxu0 0.0
    %435 = vmatprep.subr.mxu0 0.0
    %436 = vmatpush1.msra.mxu0 0.0
    %437 = vmatprep.subr.mxu0 0.0
    %438 = vmatpush1.msra.mxu0 0.0
    %439 = vmatprep.subr.mxu0 0.0
    %440 = vmatpush1.msra.mxu0 0.0
    %441 = vmatprep.subr.mxu0 0.0
    %442 = vmatpush1.msra.mxu0 0.0
    %443 = vmatprep.subr.mxu0 0.0
    %444 = vmatpush1.msra.mxu0 0.0
    %445 = vmatprep.subr.mxu0 0.0
    %446 = vmatpush1.msra.mxu0 0.0
    %447 = vmatprep.subr.mxu0 0.0
    %448 = vmatpush1.msra.mxu0 0.0
    %449 = vmatprep.subr.mxu0 0.0
    %450 = vmatpush1.msra.mxu0 0.0
    %451 = vmatprep.subr.mxu0 0.0
    %452 = vmatpush1.msra.mxu0 0.0
    %453 = vmatprep.subr.mxu0 0.0
    %454 = vmatpush1.msra.mxu0 0.0
    %455 = vmatprep.subr.mxu0 0.0
    %456 = vmatpush1.msra.mxu0 0.0
    %457 = vmatprep.subr.mxu0 0.0
    %458 = vmatpush1.msra.mxu0 0.0
    %459 = vmatprep.subr.mxu0 0.0
    %460 = vmatpush1.msra.mxu0 0.0
    %461 = vmatprep.subr.mxu0 0.0
    %462 = vmatpush1.msra.mxu0 0.0
    %463 = vmatprep.subr.mxu0 0.0
    %464 = vmatpush1.msra.mxu0 0.0
    %465 = vmatprep.subr.mxu0 0.0
    %466 = vmatpush1.msra.mxu0 0.0
    %467 = vmatprep.subr.mxu0 0.0
    %468 = vmatpush1.msra.mxu0 0.0
    %469 = vmatprep.subr.mxu0 0.0
    %470 = vmatpush1.msra.mxu0 0.0
    %471 = vmatprep.subr.mxu0 0.0
    %472 = vmatpush1.msra.mxu0 0.0
    %473 = vmatprep.subr.mxu0 0.0
    %474 = vmatpush1.msra.mxu0 0.0
    %475 = vmatprep.subr.mxu0 0.0
    %476 = vmatpush1.msra.mxu0 0.0
    %477 = vmatprep.mubr.f32.mxu0 0.0
    %478 = vmatmul.mubr.f32.gmra.mrb[0].mxu0 %v399
    %v479 = vpop.f32.mrb[0].mxu0
    %v480 = vadd.f32 %v382, %v479
    %v481 = vpop.f32.mrb[0].mxu0
    %v482 = vadd.f32 %v384, %v481
    %483 = vmatprep.mubr.f32.mxu0 0.0
    %484 = vmatmul.mubr.f32.gmra.mrb[0].mxu0 %v402
    %v485 = vpop.f32.mrb[0].mxu0
    %v486 = vadd.f32 %v388, %v485
    %v487 = vpop.f32.mrb[0].mxu0
    %v488 = vadd.f32 %v390, %v487
    %489 = vmatprep.mubr.f32.mxu0 0.0
    %490 = vmatmul.mubr.f32.gmra.mrb[0].mxu0 %v405
    %v491 = vpop.f32.mrb[0].mxu0
    %v492 = vadd.f32 %v394, %v491
    %v493 = vpop.f32.mrb[0].mxu0
    %v494 = vadd.f32 %v396, %v493
    %495 = vdwg.mxu0
    %s496 = scalar_lea.vmem %s1, 48
    %v497 = vld [vmem:[%s496] sm:$0xff]
    %v498 = vld [vmem:[%s496 + $0x8] sm:$0xff]
    %v499 = vld [vmem:[%s496 + $0x10] sm:$0x3]
    %v501 = vsel %vm90, %v497, 0
    %v504 = vsel %vm90, %v498, 0
    %v507 = vsel %vm90, %v499, 0
    %509 = vmatprep.subr.mxu0 0.0
    %510 = vmatpush1.msra.mxu0 %v82
    %511 = vmatprep.subr.mxu0 0.0
    %512 = vmatpush1.msra.mxu0 %v83
    %513 = vmatprep.subr.mxu0 0.0
    %514 = vmatpush1.msra.mxu0 %v84
    %515 = vmatprep.subr.mxu0 0.0
    %516 = vmatpush1.msra.mxu0 %v85
    %517 = vmatprep.subr.mxu0 0.0
    %518 = vmatpush1.msra.mxu0 %v102
    %519 = vmatprep.subr.mxu0 0.0
    %520 = vmatpush1.msra.mxu0 0.0
    %521 = vmatprep.subr.mxu0 0.0
    %522 = vmatpush1.msra.mxu0 0.0
    %523 = vmatprep.subr.mxu0 0.0
    %524 = vmatpush1.msra.mxu0 0.0
    %525 = vmatprep.subr.mxu0 0.0
    %526 = vmatpush1.msra.mxu0 0.0
    %527 = vmatprep.subr.mxu0 0.0
    %528 = vmatpush1.msra.mxu0 0.0
    %529 = vmatprep.subr.mxu0 0.0
    %530 = vmatpush1.msra.mxu0 0.0
    %531 = vmatprep.subr.mxu0 0.0
    %532 = vmatpush1.msra.mxu0 0.0
    %533 = vmatprep.subr.mxu0 0.0
    %534 = vmatpush1.msra.mxu0 0.0
    %535 = vmatprep.subr.mxu0 0.0
    %536 = vmatpush1.msra.mxu0 0.0
    %537 = vmatprep.subr.mxu0 0.0
    %538 = vmatpush1.msra.mxu0 0.0
    %539 = vmatprep.subr.mxu0 0.0
    %540 = vmatpush1.msra.mxu0 0.0
    %541 = vmatprep.subr.mxu0 0.0
    %542 = vmatpush1.msra.mxu0 0.0
    %543 = vmatprep.subr.mxu0 0.0
    %544 = vmatpush1.msra.mxu0 0.0
    %545 = vmatprep.subr.mxu0 0.0
    %546 = vmatpush1.msra.mxu0 0.0
    %547 = vmatprep.subr.mxu0 0.0
    %548 = vmatpush1.msra.mxu0 0.0
    %549 = vmatprep.subr.mxu0 0.0
    %550 = vmatpush1.msra.mxu0 0.0
    %551 = vmatprep.subr.mxu0 0.0
    %552 = vmatpush1.msra.mxu0 0.0
    %553 = vmatprep.subr.mxu0 0.0
    %554 = vmatpush1.msra.mxu0 0.0
    %555 = vmatprep.subr.mxu0 0.0
    %556 = vmatpush1.msra.mxu0 0.0
    %557 = vmatprep.subr.mxu0 0.0
    %558 = vmatpush1.msra.mxu0 0.0
    %559 = vmatprep.subr.mxu0 0.0
    %560 = vmatpush1.msra.mxu0 0.0
    %561 = vmatprep.subr.mxu0 0.0
    %562 = vmatpush1.msra.mxu0 0.0
    %563 = vmatprep.subr.mxu0 0.0
    %564 = vmatpush1.msra.mxu0 0.0
    %565 = vmatprep.subr.mxu0 0.0
    %566 = vmatpush1.msra.mxu0 0.0
    %567 = vmatprep.subr.mxu0 0.0
    %568 = vmatpush1.msra.mxu0 0.0
    %569 = vmatprep.subr.mxu0 0.0
    %570 = vmatpush1.msra.mxu0 0.0
    %571 = vmatprep.subr.mxu0 0.0
    %572 = vmatpush1.msra.mxu0 0.0
    %573 = vmatprep.mubr.f32.mxu0 0.0
    %574 = vmatmul.mubr.f32.gmra.mrb[0].mxu0 %v501
    %v575 = vpop.f32.mrb[0].mxu0
    %v576 = vadd.f32 0.0, %v575
    %v577 = vpop.f32.mrb[0].mxu0
    %578 = vmatprep.mubr.f32.mxu0 0.0
    %579 = vmatmul.mubr.f32.gmra.mrb[0].mxu0 %v504
    %v580 = vpop.f32.mrb[0].mxu0
    %v581 = vadd.f32 0.0, %v580
    %v582 = vpop.f32.mrb[0].mxu0
    %583 = vmatprep.mubr.f32.mxu0 0.0
    %584 = vmatmul.mubr.f32.gmra.mrb[0].mxu0 %v507
    %v585 = vpop.f32.mrb[0].mxu0
    %v586 = vadd.f32 0.0, %v585
    %v587 = vpop.f32.mrb[0].mxu0
    %588 = vdwg.mxu0
    %s589 = scalar_lea.vmem %s2, 160
    %v590 = vld [vmem:[%s589] sm:$0xff]
    %v591 = vld [vmem:[%s589 + $0x8] sm:$0xff]
    %v592 = vld [vmem:[%s589 + $0x10] sm:$0xff]
    %v593 = vld [vmem:[%s589 + $0x18] sm:$0xff]
    %v594 = vld [vmem:[%s589 + $0x20] sm:$0xff]
    %v595 = vld [vmem:[%s589 + $0x28] sm:$0xff]
    %v596 = vld [vmem:[%s589 + $0x30] sm:$0xff]
    %v597 = vld [vmem:[%s589 + $0x38] sm:$0xff]
    %v598 = vld [vmem:[%s589 + $0x40] sm:$0x1]
    %v599 = vld [vmem:[%s589 + $0x48] sm:$0x1]
    %v601 = vsel %vm298, %v576, 0
    %v604 = vsel %vm298, %v581, 0
    %v607 = vsel %vm298, %v586, 0
    %v610 = vsel %vm308, %v598, 0
    %v613 = vsel %vm308, %v599, 0
    %615 = vmatprep.subr.mxu0 %v591
    %616 = vmatpush1.msra.mxu0 %v590
    %617 = vmatprep.subr.mxu0 %v593
    %618 = vmatpush1.msra.mxu0 %v592
    %619 = vmatprep.subr.mxu0 %v595
    %620 = vmatpush1.msra.mxu0 %v594
    %621 = vmatprep.subr.mxu0 %v597
    %622 = vmatpush1.msra.mxu0 %v596
    %623 = vmatprep.subr.mxu0 %v613
    %624 = vmatpush1.msra.mxu0 %v610
    %625 = vmatprep.subr.mxu0 0.0
    %626 = vmatpush1.msra.mxu0 0.0
    %627 = vmatprep.subr.mxu0 0.0
    %628 = vmatpush1.msra.mxu0 0.0
    %629 = vmatprep.subr.mxu0 0.0
    %630 = vmatpush1.msra.mxu0 0.0
    %631 = vmatprep.subr.mxu0 0.0
    %632 = vmatpush1.msra.mxu0 0.0
    %633 = vmatprep.subr.mxu0 0.0
    %634 = vmatpush1.msra.mxu0 0.0
    %635 = vmatprep.subr.mxu0 0.0
    %636 = vmatpush1.msra.mxu0 0.0
    %637 = vmatprep.subr.mxu0 0.0
    %638 = vmatpush1.msra.mxu0 0.0
    %639 = vmatprep.subr.mxu0 0.0
    %640 = vmatpush1.msra.mxu0 0.0
    %641 = vmatprep.subr.mxu0 0.0
    %642 = vmatpush1.msra.mxu0 0.0
    %643 = vmatprep.subr.mxu0 0.0
    %644 = vmatpush1.msra.mxu0 0.0
    %645 = vmatprep.subr.mxu0 0.0
    %646 = vmatpush1.msra.mxu0 0.0
    %647 = vmatprep.subr.mxu0 0.0
    %648 = vmatpush1.msra.mxu0 0.0
    %649 = vmatprep.subr.mxu0 0.0
    %650 = vmatpush1.msra.mxu0 0.0
    %651 = vmatprep.subr.mxu0 0.0
    %652 = vmatpush1.msra.mxu0 0.0
    %653 = vmatprep.subr.mxu0 0.0
    %654 = vmatpush1.msra.mxu0 0.0
    %655 = vmatprep.subr.mxu0 0.0
    %656 = vmatpush1.msra.mxu0 0.0
    %657 = vmatprep.subr.mxu0 0.0
    %658 = vmatpush1.msra.mxu0 0.0
    %659 = vmatprep.subr.mxu0 0.0
    %660 = vmatpush1.msra.mxu0 0.0
    %661 = vmatprep.subr.mxu0 0.0
    %662 = vmatpush1.msra.mxu0 0.0
    %663 = vmatprep.subr.mxu0 0.0
    %664 = vmatpush1.msra.mxu0 0.0
    %665 = vmatprep.subr.mxu0 0.0
    %666 = vmatpush1.msra.mxu0 0.0
    %667 = vmatprep.subr.mxu0 0.0
    %668 = vmatpush1.msra.mxu0 0.0
    %669 = vmatprep.subr.mxu0 0.0
    %670 = vmatpush1.msra.mxu0 0.0
    %671 = vmatprep.subr.mxu0 0.0
    %672 = vmatpush1.msra.mxu0 0.0
    %673 = vmatprep.subr.mxu0 0.0
    %674 = vmatpush1.msra.mxu0 0.0
    %675 = vmatprep.subr.mxu0 0.0
    %676 = vmatpush1.msra.mxu0 0.0
    %677 = vmatprep.subr.mxu0 0.0
    %678 = vmatpush1.msra.mxu0 0.0
    %679 = vmatprep.mubr.f32.mxu0 0.0
    %680 = vmatmul.mubr.f32.gmra.mrb[0].mxu0 %v601
    %v681 = vpop.f32.mrb[0].mxu0
    %v682 = vadd.f32 0.0, %v681
    %v683 = vpop.f32.mrb[0].mxu0
    %v684 = vadd.f32 0.0, %v683
    %685 = vmatprep.mubr.f32.mxu0 0.0
    %686 = vmatmul.mubr.f32.gmra.mrb[0].mxu0 %v604
    %v687 = vpop.f32.mrb[0].mxu0
    %v688 = vadd.f32 0.0, %v687
    %v689 = vpop.f32.mrb[0].mxu0
    %v690 = vadd.f32 0.0, %v689
    %691 = vmatprep.mubr.f32.mxu0 0.0
    %692 = vmatmul.mubr.f32.gmra.mrb[0].mxu0 %v607
    %v693 = vpop.f32.mrb[0].mxu0
    %v694 = vadd.f32 0.0, %v693
    %v695 = vpop.f32.mrb[0].mxu0
    %v696 = vadd.f32 0.0, %v695
    %697 = vdwg.mxu0
    %v698 = vadd.f32 %v480, %v682
    %v699 = vadd.f32 %v482, %v684
    %v700 = vadd.f32 %v486, %v688
    %v701 = vadd.f32 %v488, %v690
    %v702 = vadd.f32 %v492, %v694
    %v703 = vadd.f32 %v494, %v696
    %v704 = vld [vmem:[%s3] sm:$0x3]
    %v706 = vlaneseq
    %v707 = vshrl.u32 %v706, 7
    %v708 = vsub.s32 0, %v707
    %v709 = vrot.slane %v704, %v708
    %v710 = vlaneseq
    %v711 = vshrl.u32 %v710, 7
    %v712 = vsub.s32 1, %v711
    %v713 = vrot.slane %v704, %v712
    %v716 = vadd.f32 %v698, %v709
    %v717 = vadd.f32 %v699, %v713
    %v718 = vadd.f32 %v700, %v709
    %v719 = vadd.f32 %v701, %v713
    %v720 = vadd.f32 %v702, %v709
    %v721 = vadd.f32 %v703, %v713
    %vm722 = vcmp.ge.f32.partialorder %v716, 0.0
    %vm723 = vcmp.ge.f32.partialorder %v717, 0.0
    %vm724 = vcmp.ge.f32.partialorder %v718, 0.0
    %vm725 = vcmp.ge.f32.partialorder %v719, 0.0
    %vm726 = vcmp.ge.f32.partialorder %v720, 0.0
    %vm727 = vcmp.ge.f32.partialorder %v721, 0.0
    %v728 = vmul.f32 %v716, 0.2
    %v729 = vmul.f32 %v717, 0.2
    %v730 = vmul.f32 %v718, 0.2
    %v731 = vmul.f32 %v719, 0.2
    %v732 = vmul.f32 %v720, 0.2
    %v733 = vmul.f32 %v721, 0.2
    %v734 = vsel %vm722, %v716, %v728
    %v735 = vsel %vm723, %v717, %v729
    %v736 = vsel %vm724, %v718, %v730
    %v737 = vsel %vm725, %v719, %v731
    %v738 = vsel %vm726, %v720, %v732
    %v739 = vsel %vm727, %v721, %v733
    %v740 = vld [vmem:[%s4] sm:$0xff]
    %v741 = vld [vmem:[%s4 + $0x8] sm:$0xff]
    %v742 = vld [vmem:[%s4 + $0x10] sm:$0x3]
    %vm743 = vcmask 146432
    %v745 = vsel %vm743, %v740, 0
    %v748 = vsel %vm743, %v741, 0
    %v751 = vsel %vm743, %v742, 0
    %vm753 = vcmask 1041408
    %v755 = vsel %vm753, %v738, 0
    %v758 = vsel %vm753, %v739, 0
    %760 = vmatprep.subr.mxu0 %v735
    %761 = vmatpush1.msra.mxu0 %v734
    %762 = vmatprep.subr.mxu0 %v737
    %763 = vmatpush1.msra.mxu0 %v736
    %764 = vmatprep.subr.mxu0 %v758
    %765 = vmatpush1.msra.mxu0 %v755
    %766 = vmatprep.subr.mxu0 0.0
    %767 = vmatpush1.msra.mxu0 0.0
    %768 = vmatprep.subr.mxu0 0.0
    %769 = vmatpush1.msra.mxu0 0.0
    %770 = vmatprep.subr.mxu0 0.0
    %771 = vmatpush1.msra.mxu0 0.0
    %772 = vmatprep.subr.mxu0 0.0
    %773 = vmatpush1.msra.mxu0 0.0
    %774 = vmatprep.subr.mxu0 0.0
    %775 = vmatpush1.msra.mxu0 0.0
    %776 = vmatprep.subr.mxu0 0.0
    %777 = vmatpush1.msra.mxu0 0.0
    %778 = vmatprep.subr.mxu0 0.0
    %779 = vmatpush1.msra.mxu0 0.0
    %780 = vmatprep.subr.mxu0 0.0
    %781 = vmatpush1.msra.mxu0 0.0
    %782 = vmatprep.subr.mxu0 0.0
    %783 = vmatpush1.msra.mxu0 0.0
    %784 = vmatprep.subr.mxu0 0.0
    %785 = vmatpush1.msra.mxu0 0.0
    %786 = vmatprep.subr.mxu0 0.0
    %787 = vmatpush1.msra.mxu0 0.0
    %788 = vmatprep.subr.mxu0 0.0
    %789 = vmatpush1.msra.mxu0 0.0
    %790 = vmatprep.subr.mxu0 0.0
    %791 = vmatpush1.msra.mxu0 0.0
    %792 = vmatprep.subr.mxu0 0.0
    %793 = vmatpush1.msra.mxu0 0.0
    %794 = vmatprep.subr.mxu0 0.0
    %795 = vmatpush1.msra.mxu0 0.0
    %796 = vmatprep.subr.mxu0 0.0
    %797 = vmatpush1.msra.mxu0 0.0
    %798 = vmatprep.subr.mxu0 0.0
    %799 = vmatpush1.msra.mxu0 0.0
    %800 = vmatprep.subr.mxu0 0.0
    %801 = vmatpush1.msra.mxu0 0.0
    %802 = vmatprep.subr.mxu0 0.0
    %803 = vmatpush1.msra.mxu0 0.0
    %804 = vmatprep.subr.mxu0 0.0
    %805 = vmatpush1.msra.mxu0 0.0
    %806 = vmatprep.subr.mxu0 0.0
    %807 = vmatpush1.msra.mxu0 0.0
    %808 = vmatprep.subr.mxu0 0.0
    %809 = vmatpush1.msra.mxu0 0.0
    %810 = vmatprep.subr.mxu0 0.0
    %811 = vmatpush1.msra.mxu0 0.0
    %812 = vmatprep.subr.mxu0 0.0
    %813 = vmatpush1.msra.mxu0 0.0
    %814 = vmatprep.subr.mxu0 0.0
    %815 = vmatpush1.msra.mxu0 0.0
    %816 = vmatprep.subr.mxu0 0.0
    %817 = vmatpush1.msra.mxu0 0.0
    %818 = vmatprep.subr.mxu0 0.0
    %819 = vmatpush1.msra.mxu0 0.0
    %820 = vmatprep.subr.mxu0 0.0
    %821 = vmatpush1.msra.mxu0 0.0
    %822 = vmatprep.subr.mxu0 0.0
    %823 = vmatpush1.msra.mxu0 0.0
    %824 = vmatprep.mubr.f32.mxu0 0.0
    %825 = vmatmul.mubr.f32.gmra.mrb[0].mxu0 %v745
    %v826 = vpop.f32.mrb[0].mxu0
    %v827 = vadd.f32 0.0, %v826
    %v828 = vpop.f32.mrb[0].mxu0
    %v829 = vadd.f32 0.0, %v828
    %830 = vmatprep.mubr.f32.mxu0 0.0
    %831 = vmatmul.mubr.f32.gmra.mrb[0].mxu0 %v748
    %v832 = vpop.f32.mrb[0].mxu0
    %v833 = vadd.f32 0.0, %v832
    %v834 = vpop.f32.mrb[0].mxu0
    %v835 = vadd.f32 0.0, %v834
    %836 = vmatprep.mubr.f32.mxu0 0.0
    %837 = vmatmul.mubr.f32.gmra.mrb[0].mxu0 %v751
    %v838 = vpop.f32.mrb[0].mxu0
    %v839 = vadd.f32 0.0, %v838
    %v840 = vpop.f32.mrb[0].mxu0
    %v841 = vadd.f32 0.0, %v840
    %842 = vdwg.mxu0
    %v843 = vld [vmem:[#allocation2] sm:$0xff]
    %v844 = vld [vmem:[#allocation2 + $0x8] sm:$0xff]
    %v845 = vld [vmem:[#allocation2 + $0x10] sm:$0xff]
    %v846 = vld [vmem:[#allocation2 + $0x18] sm:$0xff]
    %v847 = vld [vmem:[#allocation2 + $0x20] sm:$0xff]
    %v848 = vld [vmem:[#allocation2 + $0x28] sm:$0xff]
    %v849 = vld [vmem:[#allocation2 + $0x30] sm:$0xff]
    %v850 = vld [vmem:[#allocation2 + $0x38] sm:$0xff]
    %v851 = vld [vmem:[#allocation2 + $0x40] sm:$0xff]
    %v852 = vld [vmem:[#allocation2 + $0x48] sm:$0xff]
    %v853 = vld [vmem:[#allocation2 + $0x50] sm:$0xff]
    %v854 = vld [vmem:[#allocation2 + $0x58] sm:$0xff]
    %v855 = vld [vmem:[#allocation2 + $0x60] sm:$0xff]
    %v856 = vld [vmem:[#allocation2 + $0x68] sm:$0xff]
    %v857 = vld [vmem:[#allocation2 + $0x70] sm:$0xff]
    %v858 = vld [vmem:[#allocation2 + $0x78] sm:$0xff]
    %v859 = vld [vmem:[#allocation2 + $0x80] sm:$0xff]
    %v860 = vld [vmem:[#allocation2 + $0x88] sm:$0xff]
    %v861 = vld [vmem:[#allocation2 + $0x90] sm:$0xff]
    %v862 = vld [vmem:[#allocation2 + $0x98] sm:$0xff]
    %v863 = vld [vmem:[#allocation2 + $0xa0] sm:$0xff]
    %v864 = vld [vmem:[#allocation2 + $0xa8] sm:$0xff]
    %v865 = vld [vmem:[#allocation2 + $0xb0] sm:$0xff]
    %v866 = vld [vmem:[#allocation2 + $0xb8] sm:$0xff]
    %v867 = vld [vmem:[#allocation2 + $0xc0] sm:$0xff]
    %v868 = vld [vmem:[#allocation2 + $0xc8] sm:$0xff]
    %v869 = vld [vmem:[#allocation2 + $0xd0] sm:$0xff]
    %v870 = vld [vmem:[#allocation2 + $0xd8] sm:$0xff]
    %v871 = vld [vmem:[#allocation2 + $0xe0] sm:$0xff]
    %v872 = vld [vmem:[#allocation2 + $0xe8] sm:$0xff]
    %v873 = vld [vmem:[#allocation2 + $0xf0] sm:$0xff]
    %v874 = vld [vmem:[#allocation2 + $0xf8] sm:$0xff]
    %v875 = vld [vmem:[#allocation2 + $0x100] sm:$0xff]
    %v876 = vld [vmem:[#allocation2 + $0x108] sm:$0xff]
    %v877 = vld [vmem:[#allocation2 + $0x110] sm:$0xff]
    %v878 = vld [vmem:[#allocation2 + $0x118] sm:$0xff]
    %v879 = vld [vmem:[#allocation2 + $0x120] sm:$0xff]
    %v880 = vld [vmem:[#allocation2 + $0x128] sm:$0xff]
    %v881 = vld [vmem:[#allocation2 + $0x130] sm:$0xff]
    %v882 = vld [vmem:[#allocation2 + $0x138] sm:$0xff]
    %v883 = vld [vmem:[#allocation2 + $0x140] sm:$0xff]
    %v884 = vld [vmem:[#allocation2 + $0x148] sm:$0xff]
    %v885 = vld [vmem:[#allocation2 + $0x150] sm:$0xff]
    %v886 = vld [vmem:[#allocation2 + $0x158] sm:$0xff]
    %v887 = vld [vmem:[#allocation2 + $0x160] sm:$0xff]
    %v888 = vld [vmem:[#allocation2 + $0x168] sm:$0xff]
    %v889 = vld [vmem:[#allocation2 + $0x170] sm:$0xff]
    %v890 = vld [vmem:[#allocation2 + $0x178] sm:$0xff]
    %v891 = vld [vmem:[#allocation2 + $0x180] sm:$0xff]
    %v892 = vld [vmem:[#allocation2 + $0x188] sm:$0xff]
    %v893 = vld [vmem:[#allocation2 + $0x190] sm:$0xff]
    %v894 = vld [vmem:[#allocation2 + $0x198] sm:$0xff]
    %v895 = vld [vmem:[#allocation2 + $0x1a0] sm:$0xff]
    %v896 = vld [vmem:[#allocation2 + $0x1a8] sm:$0xff]
    %v897 = vld [vmem:[#allocation2 + $0x1b0] sm:$0xff]
    %v898 = vld [vmem:[#allocation2 + $0x1b8] sm:$0xff]
    %v899 = vld [vmem:[#allocation2 + $0x1c0] sm:$0xff]
    %v900 = vld [vmem:[#allocation2 + $0x1c8] sm:$0xff]
    %v901 = vld [vmem:[#allocation2 + $0x1d0] sm:$0xff]
    %v902 = vld [vmem:[#allocation2 + $0x1d8] sm:$0xff]
    %v903 = vld [vmem:[#allocation2 + $0x1e0] sm:$0xff]
    %v904 = vld [vmem:[#allocation2 + $0x1e8] sm:$0xff]
    %v905 = vld [vmem:[#allocation2 + $0x1f0] sm:$0xff]
    %v906 = vld [vmem:[#allocation2 + $0x1f8] sm:$0xff]
    %v907 = vld [vmem:[#allocation2 + $0x200] sm:$0xff]
    %v908 = vld [vmem:[#allocation2 + $0x208] sm:$0xff]
    %v909 = vld [vmem:[#allocation2 + $0x210] sm:$0xff]
    %v910 = vld [vmem:[#allocation2 + $0x218] sm:$0xff]
    %v911 = vld [vmem:[#allocation2 + $0x220] sm:$0xff]
    %v912 = vld [vmem:[#allocation2 + $0x228] sm:$0xff]
    %v913 = vld [vmem:[#allocation2 + $0x230] sm:$0xff]
    %v914 = vld [vmem:[#allocation2 + $0x238] sm:$0xff]
    %s915 = scalar_lea.vmem %s4, 24
    %v916 = vld [vmem:[%s915] sm:$0xff]
    %v917 = vld [vmem:[%s915 + $0x8] sm:$0xff]
    %v918 = vld [vmem:[%s915 + $0x10] sm:$0x3]
    %v920 = vsel %vm743, %v916, 0
    %v923 = vsel %vm743, %v917, 0
    %v926 = vsel %vm743, %v918, 0
    %928 = vmatprep.subr.mxu0 %v735
    %929 = vmatpush1.msra.mxu0 %v734
    %930 = vmatprep.subr.mxu0 %v737
    %931 = vmatpush1.msra.mxu0 %v736
    %932 = vmatprep.subr.mxu0 %v758
    %933 = vmatpush1.msra.mxu0 %v755
    %934 = vmatprep.subr.mxu0 0.0
    %935 = vmatpush1.msra.mxu0 0.0
    %936 = vmatprep.subr.mxu0 0.0
    %937 = vmatpush1.msra.mxu0 0.0
    %938 = vmatprep.subr.mxu0 0.0
    %939 = vmatpush1.msra.mxu0 0.0
    %940 = vmatprep.subr.mxu0 0.0
    %941 = vmatpush1.msra.mxu0 0.0
    %942 = vmatprep.subr.mxu0 0.0
    %943 = vmatpush1.msra.mxu0 0.0
    %944 = vmatprep.subr.mxu0 0.0
    %945 = vmatpush1.msra.mxu0 0.0
    %946 = vmatprep.subr.mxu0 0.0
    %947 = vmatpush1.msra.mxu0 0.0
    %948 = vmatprep.subr.mxu0 0.0
    %949 = vmatpush1.msra.mxu0 0.0
    %950 = vmatprep.subr.mxu0 0.0
    %951 = vmatpush1.msra.mxu0 0.0
    %952 = vmatprep.subr.mxu0 0.0
    %953 = vmatpush1.msra.mxu0 0.0
    %954 = vmatprep.subr.mxu0 0.0
    %955 = vmatpush1.msra.mxu0 0.0
    %956 = vmatprep.subr.mxu0 0.0
    %957 = vmatpush1.msra.mxu0 0.0
    %958 = vmatprep.subr.mxu0 0.0
    %959 = vmatpush1.msra.mxu0 0.0
    %960 = vmatprep.subr.mxu0 0.0
    %961 = vmatpush1.msra.mxu0 0.0
    %962 = vmatprep.subr.mxu0 0.0
    %963 = vmatpush1.msra.mxu0 0.0
    %964 = vmatprep.subr.mxu0 0.0
    %965 = vmatpush1.msra.mxu0 0.0
    %966 = vmatprep.subr.mxu0 0.0
    %967 = vmatpush1.msra.mxu0 0.0
    %968 = vmatprep.subr.mxu0 0.0
    %969 = vmatpush1.msra.mxu0 0.0
    %970 = vmatprep.subr.mxu0 0.0
    %971 = vmatpush1.msra.mxu0 0.0
    %972 = vmatprep.subr.mxu0 0.0
    %973 = vmatpush1.msra.mxu0 0.0
    %974 = vmatprep.subr.mxu0 0.0
    %975 = vmatpush1.msra.mxu0 0.0
    %976 = vmatprep.subr.mxu0 0.0
    %977 = vmatpush1.msra.mxu0 0.0
    %978 = vmatprep.subr.mxu0 0.0
    %979 = vmatpush1.msra.mxu0 0.0
    %980 = vmatprep.subr.mxu0 0.0
    %981 = vmatpush1.msra.mxu0 0.0
    %982 = vmatprep.subr.mxu0 0.0
    %983 = vmatpush1.msra.mxu0 0.0
    %984 = vmatprep.subr.mxu0 0.0
    %985 = vmatpush1.msra.mxu0 0.0
    %986 = vmatprep.subr.mxu0 0.0
    %987 = vmatpush1.msra.mxu0 0.0
    %988 = vmatprep.subr.mxu0 0.0
    %989 = vmatpush1.msra.mxu0 0.0
    %990 = vmatprep.subr.mxu0 0.0
    %991 = vmatpush1.msra.mxu0 0.0
    %992 = vmatprep.mubr.f32.mxu0 0.0
    %993 = vmatmul.mubr.f32.gmra.mrb[0].mxu0 %v920
    %v994 = vpop.f32.mrb[0].mxu0
    %v995 = vadd.f32 0.0, %v994
    %v996 = vpop.f32.mrb[0].mxu0
    %v997 = vadd.f32 0.0, %v996
    %998 = vmatprep.mubr.f32.mxu0 0.0
    %999 = vmatmul.mubr.f32.gmra.mrb[0].mxu0 %v923
    %v1000 = vpop.f32.mrb[0].mxu0
    %v1001 = vadd.f32 0.0, %v1000
    %v1002 = vpop.f32.mrb[0].mxu0
    %v1003 = vadd.f32 0.0, %v1002
    %1004 = vmatprep.mubr.f32.mxu0 0.0
    %1005 = vmatmul.mubr.f32.gmra.mrb[0].mxu0 %v926
    %v1006 = vpop.f32.mrb[0].mxu0
    %v1007 = vadd.f32 0.0, %v1006
    %v1008 = vpop.f32.mrb[0].mxu0
    %v1009 = vadd.f32 0.0, %v1008
    %1010 = vdwg.mxu0
    %s1011 = scalar_lea.vmem [#allocation2], 576
    %v1012 = vld [vmem:[%s1011] sm:$0xff]
    %v1013 = vld [vmem:[%s1011 + $0x8] sm:$0xff]
    %v1014 = vld [vmem:[%s1011 + $0x10] sm:$0xff]
    %v1015 = vld [vmem:[%s1011 + $0x18] sm:$0xff]
    %v1016 = vld [vmem:[%s1011 + $0x20] sm:$0xff]
    %v1017 = vld [vmem:[%s1011 + $0x28] sm:$0xff]
    %v1018 = vld [vmem:[%s1011 + $0x30] sm:$0xff]
    %v1019 = vld [vmem:[%s1011 + $0x38] sm:$0xff]
    %v1020 = vld [vmem:[%s1011 + $0x40] sm:$0xff]
    %v1021 = vld [vmem:[%s1011 + $0x48] sm:$0xff]
    %v1022 = vld [vmem:[%s1011 + $0x50] sm:$0xff]
    %v1023 = vld [vmem:[%s1011 + $0x58] sm:$0xff]
    %v1024 = vld [vmem:[%s1011 + $0x60] sm:$0xff]
    %v1025 = vld [vmem:[%s1011 + $0x68] sm:$0xff]
    %v1026 = vld [vmem:[%s1011 + $0x70] sm:$0xff]
    %v1027 = vld [vmem:[%s1011 + $0x78] sm:$0xff]
    %v1028 = vld [vmem:[%s1011 + $0x80] sm:$0xff]
    %v1029 = vld [vmem:[%s1011 + $0x88] sm:$0xff]
    %v1030 = vld [vmem:[%s1011 + $0x90] sm:$0xff]
    %v1031 = vld [vmem:[%s1011 + $0x98] sm:$0xff]
    %v1032 = vld [vmem:[%s1011 + $0xa0] sm:$0xff]
    %v1033 = vld [vmem:[%s1011 + $0xa8] sm:$0xff]
    %v1034 = vld [vmem:[%s1011 + $0xb0] sm:$0xff]
    %v1035 = vld [vmem:[%s1011 + $0xb8] sm:$0xff]
    %v1036 = vld [vmem:[%s1011 + $0xc0] sm:$0xff]
    %v1037 = vld [vmem:[%s1011 + $0xc8] sm:$0xff]
    %v1038 = vld [vmem:[%s1011 + $0xd0] sm:$0xff]
    %v1039 = vld [vmem:[%s1011 + $0xd8] sm:$0xff]
    %v1040 = vld [vmem:[%s1011 + $0xe0] sm:$0xff]
    %v1041 = vld [vmem:[%s1011 + $0xe8] sm:$0xff]
    %v1042 = vld [vmem:[%s1011 + $0xf0] sm:$0xff]
    %v1043 = vld [vmem:[%s1011 + $0xf8] sm:$0xff]
    %v1044 = vld [vmem:[%s1011 + $0x100] sm:$0xff]
    %v1045 = vld [vmem:[%s1011 + $0x108] sm:$0xff]
    %v1046 = vld [vmem:[%s1011 + $0x110] sm:$0xff]
    %v1047 = vld [vmem:[%s1011 + $0x118] sm:$0xff]
    %v1048 = vld [vmem:[%s1011 + $0x120] sm:$0xff]
    %v1049 = vld [vmem:[%s1011 + $0x128] sm:$0xff]
    %v1050 = vld [vmem:[%s1011 + $0x130] sm:$0xff]
    %v1051 = vld [vmem:[%s1011 + $0x138] sm:$0xff]
    %v1052 = vld [vmem:[%s1011 + $0x140] sm:$0xff]
    %v1053 = vld [vmem:[%s1011 + $0x148] sm:$0xff]
    %v1054 = vld [vmem:[%s1011 + $0x150] sm:$0xff]
    %v1055 = vld [vmem:[%s1011 + $0x158] sm:$0xff]
    %v1056 = vld [vmem:[%s1011 + $0x160] sm:$0xff]
    %v1057 = vld [vmem:[%s1011 + $0x168] sm:$0xff]
    %v1058 = vld [vmem:[%s1011 + $0x170] sm:$0xff]
    %v1059 = vld [vmem:[%s1011 + $0x178] sm:$0xff]
    %v1060 = vld [vmem:[%s1011 + $0x180] sm:$0xff]
    %v1061 = vld [vmem:[%s1011 + $0x188] sm:$0xff]
    %v1062 = vld [vmem:[%s1011 + $0x190] sm:$0xff]
    %v1063 = vld [vmem:[%s1011 + $0x198] sm:$0xff]
    %v1064 = vld [vmem:[%s1011 + $0x1a0] sm:$0xff]
    %v1065 = vld [vmem:[%s1011 + $0x1a8] sm:$0xff]
    %v1066 = vld [vmem:[%s1011 + $0x1b0] sm:$0xff]
    %v1067 = vld [vmem:[%s1011 + $0x1b8] sm:$0xff]
    %v1068 = vld [vmem:[%s1011 + $0x1c0] sm:$0xff]
    %v1069 = vld [vmem:[%s1011 + $0x1c8] sm:$0xff]
    %v1070 = vld [vmem:[%s1011 + $0x1d0] sm:$0xff]
    %v1071 = vld [vmem:[%s1011 + $0x1d8] sm:$0xff]
    %v1072 = vld [vmem:[%s1011 + $0x1e0] sm:$0xff]
    %v1073 = vld [vmem:[%s1011 + $0x1e8] sm:$0xff]
    %v1074 = vld [vmem:[%s1011 + $0x1f0] sm:$0xff]
    %v1075 = vld [vmem:[%s1011 + $0x1f8] sm:$0xff]
    %v1076 = vld [vmem:[%s1011 + $0x200] sm:$0xff]
    %v1077 = vld [vmem:[%s1011 + $0x208] sm:$0xff]
    %v1078 = vld [vmem:[%s1011 + $0x210] sm:$0xff]
    %v1079 = vld [vmem:[%s1011 + $0x218] sm:$0xff]
    %v1080 = vld [vmem:[%s1011 + $0x220] sm:$0xff]
    %v1081 = vld [vmem:[%s1011 + $0x228] sm:$0xff]
    %v1082 = vld [vmem:[%s1011 + $0x230] sm:$0xff]
    %v1083 = vld [vmem:[%s1011 + $0x238] sm:$0xff]
    %vm1084 = vcmask 523264
    %v1086 = vsel %vm1084, %v997, 0
    %v1089 = vsel %vm1084, %v1003, 0
    %v1092 = vsel %vm1084, %v1009, 0
    %1094 = vmatprep.subr.mxu0 %v1013
    %1095 = vmatpush1.msra.mxu0 %v1012
    %1096 = vmatprep.subr.mxu0 %v1016
    %1097 = vmatpush1.msra.mxu0 %v1015
    %1098 = vmatprep.subr.mxu0 %v1019
    %1099 = vmatpush1.msra.mxu0 %v1018
    %1100 = vmatprep.subr.mxu0 %v1022
    %1101 = vmatpush1.msra.mxu0 %v1021
    %1102 = vmatprep.subr.mxu0 %v1025
    %1103 = vmatpush1.msra.mxu0 %v1024
    %1104 = vmatprep.subr.mxu0 %v1028
    %1105 = vmatpush1.msra.mxu0 %v1027
    %1106 = vmatprep.subr.mxu0 %v1031
    %1107 = vmatpush1.msra.mxu0 %v1030
    %1108 = vmatprep.subr.mxu0 %v1034
    %1109 = vmatpush1.msra.mxu0 %v1033
    %1110 = vmatprep.subr.mxu0 %v1037
    %1111 = vmatpush1.msra.mxu0 %v1036
    %1112 = vmatprep.subr.mxu0 %v1040
    %1113 = vmatpush1.msra.mxu0 %v1039
    %1114 = vmatprep.subr.mxu0 %v1043
    %1115 = vmatpush1.msra.mxu0 %v1042
    %1116 = vmatprep.subr.mxu0 %v1046
    %1117 = vmatpush1.msra.mxu0 %v1045
    %1118 = vmatprep.subr.mxu0 %v1049
    %1119 = vmatpush1.msra.mxu0 %v1048
    %1120 = vmatprep.subr.mxu0 %v1052
    %1121 = vmatpush1.msra.mxu0 %v1051
    %1122 = vmatprep.subr.mxu0 %v1055
    %1123 = vmatpush1.msra.mxu0 %v1054
    %1124 = vmatprep.subr.mxu0 %v1058
    %1125 = vmatpush1.msra.mxu0 %v1057
    %1126 = vmatprep.subr.mxu0 %v1061
    %1127 = vmatpush1.msra.mxu0 %v1060
    %1128 = vmatprep.subr.mxu0 %v1064
    %1129 = vmatpush1.msra.mxu0 %v1063
    %1130 = vmatprep.subr.mxu0 %v1067
    %1131 = vmatpush1.msra.mxu0 %v1066
    %1132 = vmatprep.subr.mxu0 %v1070
    %1133 = vmatpush1.msra.mxu0 %v1069
    %1134 = vmatprep.subr.mxu0 %v1073
    %1135 = vmatpush1.msra.mxu0 %v1072
    %1136 = vmatprep.subr.mxu0 %v1076
    %1137 = vmatpush1.msra.mxu0 %v1075
    %1138 = vmatprep.subr.mxu0 %v1079
    %1139 = vmatpush1.msra.mxu0 %v1078
    %1140 = vmatprep.subr.mxu0 %v1082
    %1141 = vmatpush1.msra.mxu0 %v1081
    %1142 = vmatprep.subr.mxu0 0.0
    %1143 = vmatpush1.msra.mxu0 0.0
    %1144 = vmatprep.subr.mxu0 0.0
    %1145 = vmatpush1.msra.mxu0 0.0
    %1146 = vmatprep.subr.mxu0 0.0
    %1147 = vmatpush1.msra.mxu0 0.0
    %1148 = vmatprep.subr.mxu0 0.0
    %1149 = vmatpush1.msra.mxu0 0.0
    %1150 = vmatprep.subr.mxu0 0.0
    %1151 = vmatpush1.msra.mxu0 0.0
    %1152 = vmatprep.subr.mxu0 0.0
    %1153 = vmatpush1.msra.mxu0 0.0
    %1154 = vmatprep.subr.mxu0 0.0
    %1155 = vmatpush1.msra.mxu0 0.0
    %1156 = vmatprep.subr.mxu0 0.0
    %1157 = vmatpush1.msra.mxu0 0.0
    %1158 = vmatprep.mubr.f32.mxu0 %v1086
    %1159 = vmatmul.mubr.f32.gmra.mrb[0].mxu0 %v995
    %v1160 = vpop.f32.mrb[0].mxu0
    %v1161 = vadd.f32 0.0, %v1160
    %v1162 = vpop.f32.mrb[0].mxu0
    %v1163 = vadd.f32 0.0, %v1162
    %1164 = vmatprep.mubr.f32.mxu0 %v1089
    %1165 = vmatmul.mubr.f32.gmra.mrb[0].mxu0 %v1001
    %v1166 = vpop.f32.mrb[0].mxu0
    %v1167 = vadd.f32 0.0, %v1166
    %v1168 = vpop.f32.mrb[0].mxu0
    %v1169 = vadd.f32 0.0, %v1168
    %1170 = vmatprep.mubr.f32.mxu0 %v1092
    %1171 = vmatmul.mubr.f32.gmra.mrb[0].mxu0 %v1007
    %v1172 = vpop.f32.mrb[0].mxu0
    %v1173 = vadd.f32 0.0, %v1172
    %v1174 = vpop.f32.mrb[0].mxu0
    %v1175 = vadd.f32 0.0, %v1174
    %1176 = vdwg.mxu0
    %1177 = vmatprep.subr.mxu0 0.0
    %1178 = vmatpush1.msra.mxu0 %v1014
    %1179 = vmatprep.subr.mxu0 0.0
    %1180 = vmatpush1.msra.mxu0 %v1017
    %1181 = vmatprep.subr.mxu0 0.0
    %1182 = vmatpush1.msra.mxu0 %v1020
    %1183 = vmatprep.subr.mxu0 0.0
    %1184 = vmatpush1.msra.mxu0 %v1023
    %1185 = vmatprep.subr.mxu0 0.0
    %1186 = vmatpush1.msra.mxu0 %v1026
    %1187 = vmatprep.subr.mxu0 0.0
    %1188 = vmatpush1.msra.mxu0 %v1029
    %1189 = vmatprep.subr.mxu0 0.0
    %1190 = vmatpush1.msra.mxu0 %v1032
    %1191 = vmatprep.subr.mxu0 0.0
    %1192 = vmatpush1.msra.mxu0 %v1035
    %1193 = vmatprep.subr.mxu0 0.0
    %1194 = vmatpush1.msra.mxu0 %v1038
    %1195 = vmatprep.subr.mxu0 0.0
    %1196 = vmatpush1.msra.mxu0 %v1041
    %1197 = vmatprep.subr.mxu0 0.0
    %1198 = vmatpush1.msra.mxu0 %v1044
    %1199 = vmatprep.subr.mxu0 0.0
    %1200 = vmatpush1.msra.mxu0 %v1047
    %1201 = vmatprep.subr.mxu0 0.0
    %1202 = vmatpush1.msra.mxu0 %v1050
    %1203 = vmatprep.subr.mxu0 0.0
    %1204 = vmatpush1.msra.mxu0 %v1053
    %1205 = vmatprep.subr.mxu0 0.0
    %1206 = vmatpush1.msra.mxu0 %v1056
    %1207 = vmatprep.subr.mxu0 0.0
    %1208 = vmatpush1.msra.mxu0 %v1059
    %1209 = vmatprep.subr.mxu0 0.0
    %1210 = vmatpush1.msra.mxu0 %v1062
    %1211 = vmatprep.subr.mxu0 0.0
    %1212 = vmatpush1.msra.mxu0 %v1065
    %1213 = vmatprep.subr.mxu0 0.0
    %1214 = vmatpush1.msra.mxu0 %v1068
    %1215 = vmatprep.subr.mxu0 0.0
    %1216 = vmatpush1.msra.mxu0 %v1071
    %1217 = vmatprep.subr.mxu0 0.0
    %1218 = vmatpush1.msra.mxu0 %v1074
    %1219 = vmatprep.subr.mxu0 0.0
    %1220 = vmatpush1.msra.mxu0 %v1077
    %1221 = vmatprep.subr.mxu0 0.0
    %1222 = vmatpush1.msra.mxu0 %v1080
    %1223 = vmatprep.subr.mxu0 0.0
    %1224 = vmatpush1.msra.mxu0 %v1083
    %1225 = vmatprep.subr.mxu0 0.0
    %1226 = vmatpush1.msra.mxu0 0.0
    %1227 = vmatprep.subr.mxu0 0.0
    %1228 = vmatpush1.msra.mxu0 0.0
    %1229 = vmatprep.subr.mxu0 0.0
    %1230 = vmatpush1.msra.mxu0 0.0
    %1231 = vmatprep.subr.mxu0 0.0
    %1232 = vmatpush1.msra.mxu0 0.0
    %1233 = vmatprep.subr.mxu0 0.0
    %1234 = vmatpush1.msra.mxu0 0.0
    %1235 = vmatprep.subr.mxu0 0.0
    %1236 = vmatpush1.msra.mxu0 0.0
    %1237 = vmatprep.subr.mxu0 0.0
    %1238 = vmatpush1.msra.mxu0 0.0
    %1239 = vmatprep.subr.mxu0 0.0
    %1240 = vmatpush1.msra.mxu0 0.0
    %1241 = vmatprep.mubr.f32.mxu0 %v1086
    %1242 = vmatmul.mubr.f32.gmra.mrb[0].mxu0 %v995
    %v1243 = vpop.f32.mrb[0].mxu0
    %v1244 = vadd.f32 0.0, %v1243
    %v1245 = vpop.f32.mrb[0].mxu0
    %1246 = vmatprep.mubr.f32.mxu0 %v1089
    %1247 = vmatmul.mubr.f32.gmra.mrb[0].mxu0 %v1001
    %v1248 = vpop.f32.mrb[0].mxu0
    %v1249 = vadd.f32 0.0, %v1248
    %v1250 = vpop.f32.mrb[0].mxu0
    %1251 = vmatprep.mubr.f32.mxu0 %v1092
    %1252 = vmatmul.mubr.f32.gmra.mrb[0].mxu0 %v1007
    %v1253 = vpop.f32.mrb[0].mxu0
    %v1254 = vadd.f32 0.0, %v1253
    %v1255 = vpop.f32.mrb[0].mxu0
    %1256 = vdwg.mxu0
    %v1258 = vsel %vm1084, %v829, 0
    %v1261 = vsel %vm1084, %v835, 0
    %v1264 = vsel %vm1084, %v841, 0
    %1266 = vmatprep.subr.mxu0 %v844
    %1267 = vmatpush1.msra.mxu0 %v843
    %1268 = vmatprep.subr.mxu0 %v847
    %1269 = vmatpush1.msra.mxu0 %v846
    %1270 = vmatprep.subr.mxu0 %v850
    %1271 = vmatpush1.msra.mxu0 %v849
    %1272 = vmatprep.subr.mxu0 %v853
    %1273 = vmatpush1.msra.mxu0 %v852
    %1274 = vmatprep.subr.mxu0 %v856
    %1275 = vmatpush1.msra.mxu0 %v855
    %1276 = vmatprep.subr.mxu0 %v859
    %1277 = vmatpush1.msra.mxu0 %v858
    %1278 = vmatprep.subr.mxu0 %v862
    %1279 = vmatpush1.msra.mxu0 %v861
    %1280 = vmatprep.subr.mxu0 %v865
    %1281 = vmatpush1.msra.mxu0 %v864
    %1282 = vmatprep.subr.mxu0 %v868
    %1283 = vmatpush1.msra.mxu0 %v867
    %1284 = vmatprep.subr.mxu0 %v871
    %1285 = vmatpush1.msra.mxu0 %v870
    %1286 = vmatprep.subr.mxu0 %v874
    %1287 = vmatpush1.msra.mxu0 %v873
    %1288 = vmatprep.subr.mxu0 %v877
    %1289 = vmatpush1.msra.mxu0 %v876
    %1290 = vmatprep.subr.mxu0 %v880
    %1291 = vmatpush1.msra.mxu0 %v879
    %1292 = vmatprep.subr.mxu0 %v883
    %1293 = vmatpush1.msra.mxu0 %v882
    %1294 = vmatprep.subr.mxu0 %v886
    %1295 = vmatpush1.msra.mxu0 %v885
    %1296 = vmatprep.subr.mxu0 %v889
    %1297 = vmatpush1.msra.mxu0 %v888
    %1298 = vmatprep.subr.mxu0 %v892
    %1299 = vmatpush1.msra.mxu0 %v891
    %1300 = vmatprep.subr.mxu0 %v895
    %1301 = vmatpush1.msra.mxu0 %v894
    %1302 = vmatprep.subr.mxu0 %v898
    %1303 = vmatpush1.msra.mxu0 %v897
    %1304 = vmatprep.subr.mxu0 %v901
    %1305 = vmatpush1.msra.mxu0 %v900
    %1306 = vmatprep.subr.mxu0 %v904
    %1307 = vmatpush1.msra.mxu0 %v903
    %1308 = vmatprep.subr.mxu0 %v907
    %1309 = vmatpush1.msra.mxu0 %v906
    %1310 = vmatprep.subr.mxu0 %v910
    %1311 = vmatpush1.msra.mxu0 %v909
    %1312 = vmatprep.subr.mxu0 %v913
    %1313 = vmatpush1.msra.mxu0 %v912
    %1314 = vmatprep.subr.mxu0 0.0
    %1315 = vmatpush1.msra.mxu0 0.0
    %1316 = vmatprep.subr.mxu0 0.0
    %1317 = vmatpush1.msra.mxu0 0.0
    %1318 = vmatprep.subr.mxu0 0.0
    %1319 = vmatpush1.msra.mxu0 0.0
    %1320 = vmatprep.subr.mxu0 0.0
    %1321 = vmatpush1.msra.mxu0 0.0
    %1322 = vmatprep.subr.mxu0 0.0
    %1323 = vmatpush1.msra.mxu0 0.0
    %1324 = vmatprep.subr.mxu0 0.0
    %1325 = vmatpush1.msra.mxu0 0.0
    %1326 = vmatprep.subr.mxu0 0.0
    %1327 = vmatpush1.msra.mxu0 0.0
    %1328 = vmatprep.subr.mxu0 0.0
    %1329 = vmatpush1.msra.mxu0 0.0
    %1330 = vmatprep.mubr.f32.mxu0 %v1258
    %1331 = vmatmul.mubr.f32.gmra.mrb[0].mxu0 %v827
    %v1332 = vpop.f32.mrb[0].mxu0
    %v1333 = vadd.f32 %v1161, %v1332
    %v1334 = vpop.f32.mrb[0].mxu0
    %v1335 = vadd.f32 %v1163, %v1334
    %1336 = vmatprep.mubr.f32.mxu0 %v1261
    %1337 = vmatmul.mubr.f32.gmra.mrb[0].mxu0 %v833
    %v1338 = vpop.f32.mrb[0].mxu0
    %v1339 = vadd.f32 %v1167, %v1338
    %v1340 = vpop.f32.mrb[0].mxu0
    %v1341 = vadd.f32 %v1169, %v1340
    %1342 = vmatprep.mubr.f32.mxu0 %v1264
    %1343 = vmatmul.mubr.f32.gmra.mrb[0].mxu0 %v839
    %v1344 = vpop.f32.mrb[0].mxu0
    %v1345 = vadd.f32 %v1173, %v1344
    %v1346 = vpop.f32.mrb[0].mxu0
    %v1347 = vadd.f32 %v1175, %v1346
    %1348 = vdwg.mxu0
    %1349 = vmatprep.subr.mxu0 0.0
    %1350 = vmatpush1.msra.mxu0 %v845
    %1351 = vmatprep.subr.mxu0 0.0
    %1352 = vmatpush1.msra.mxu0 %v848
    %1353 = vmatprep.subr.mxu0 0.0
    %1354 = vmatpush1.msra.mxu0 %v851
    %1355 = vmatprep.subr.mxu0 0.0
    %1356 = vmatpush1.msra.mxu0 %v854
    %1357 = vmatprep.subr.mxu0 0.0
    %1358 = vmatpush1.msra.mxu0 %v857
    %1359 = vmatprep.subr.mxu0 0.0
    %1360 = vmatpush1.msra.mxu0 %v860
    %1361 = vmatprep.subr.mxu0 0.0
    %1362 = vmatpush1.msra.mxu0 %v863
    %1363 = vmatprep.subr.mxu0 0.0
    %1364 = vmatpush1.msra.mxu0 %v866
    %1365 = vmatprep.subr.mxu0 0.0
    %1366 = vmatpush1.msra.mxu0 %v869
    %1367 = vmatprep.subr.mxu0 0.0
    %1368 = vmatpush1.msra.mxu0 %v872
    %1369 = vmatprep.subr.mxu0 0.0
    %1370 = vmatpush1.msra.mxu0 %v875
    %1371 = vmatprep.subr.mxu0 0.0
    %1372 = vmatpush1.msra.mxu0 %v878
    %1373 = vmatprep.subr.mxu0 0.0
    %1374 = vmatpush1.msra.mxu0 %v881
    %1375 = vmatprep.subr.mxu0 0.0
    %1376 = vmatpush1.msra.mxu0 %v884
    %1377 = vmatprep.subr.mxu0 0.0
    %1378 = vmatpush1.msra.mxu0 %v887
    %1379 = vmatprep.subr.mxu0 0.0
    %1380 = vmatpush1.msra.mxu0 %v890
    %1381 = vmatprep.subr.mxu0 0.0
    %1382 = vmatpush1.msra.mxu0 %v893
    %1383 = vmatprep.subr.mxu0 0.0
    %1384 = vmatpush1.msra.mxu0 %v896
    %1385 = vmatprep.subr.mxu0 0.0
    %1386 = vmatpush1.msra.mxu0 %v899
    %1387 = vmatprep.subr.mxu0 0.0
    %1388 = vmatpush1.msra.mxu0 %v902
    %1389 = vmatprep.subr.mxu0 0.0
    %1390 = vmatpush1.msra.mxu0 %v905
    %1391 = vmatprep.subr.mxu0 0.0
    %1392 = vmatpush1.msra.mxu0 %v908
    %1393 = vmatprep.subr.mxu0 0.0
    %1394 = vmatpush1.msra.mxu0 %v911
    %1395 = vmatprep.subr.mxu0 0.0
    %1396 = vmatpush1.msra.mxu0 %v914
    %1397 = vmatprep.subr.mxu0 0.0
    %1398 = vmatpush1.msra.mxu0 0.0
    %1399 = vmatprep.subr.mxu0 0.0
    %1400 = vmatpush1.msra.mxu0 0.0
    %1401 = vmatprep.subr.mxu0 0.0
    %1402 = vmatpush1.msra.mxu0 0.0
    %1403 = vmatprep.subr.mxu0 0.0
    %1404 = vmatpush1.msra.mxu0 0.0
    %1405 = vmatprep.subr.mxu0 0.0
    %1406 = vmatpush1.msra.mxu0 0.0
    %1407 = vmatprep.subr.mxu0 0.0
    %1408 = vmatpush1.msra.mxu0 0.0
    %1409 = vmatprep.subr.mxu0 0.0
    %1410 = vmatpush1.msra.mxu0 0.0
    %1411 = vmatprep.subr.mxu0 0.0
    %1412 = vmatpush1.msra.mxu0 0.0
    %1413 = vmatprep.mubr.f32.mxu0 %v1258
    %1414 = vmatmul.mubr.f32.gmra.mrb[0].mxu0 %v827
    %v1415 = vpop.f32.mrb[0].mxu0
    %v1416 = vadd.f32 %v1244, %v1415
    %v1417 = vpop.f32.mrb[0].mxu0
    %1418 = vmatprep.mubr.f32.mxu0 %v1261
    %1419 = vmatmul.mubr.f32.gmra.mrb[0].mxu0 %v833
    %v1420 = vpop.f32.mrb[0].mxu0
    %v1421 = vadd.f32 %v1249, %v1420
    %v1422 = vpop.f32.mrb[0].mxu0
    %1423 = vmatprep.mubr.f32.mxu0 %v1264
    %1424 = vmatmul.mubr.f32.gmra.mrb[0].mxu0 %v839
    %v1425 = vpop.f32.mrb[0].mxu0
    %v1426 = vadd.f32 %v1254, %v1425
    %v1427 = vpop.f32.mrb[0].mxu0
    %1428 = vdwg.mxu0
    %s1429 = scalar_lea.vmem %s4, 48
    %v1430 = vld [vmem:[%s1429] sm:$0xff]
    %v1431 = vld [vmem:[%s1429 + $0x8] sm:$0xff]
    %v1432 = vld [vmem:[%s1429 + $0x10] sm:$0x3]
    %v1434 = vsel %vm743, %v1430, 0
    %v1437 = vsel %vm743, %v1431, 0
    %v1440 = vsel %vm743, %v1432, 0
    %1442 = vmatprep.subr.mxu0 %v735
    %1443 = vmatpush1.msra.mxu0 %v734
    %1444 = vmatprep.subr.mxu0 %v737
    %1445 = vmatpush1.msra.mxu0 %v736
    %1446 = vmatprep.subr.mxu0 %v758
    %1447 = vmatpush1.msra.mxu0 %v755
    %1448 = vmatprep.subr.mxu0 0.0
    %1449 = vmatpush1.msra.mxu0 0.0
    %1450 = vmatprep.subr.mxu0 0.0
    %1451 = vmatpush1.msra.mxu0 0.0
    %1452 = vmatprep.subr.mxu0 0.0
    %1453 = vmatpush1.msra.mxu0 0.0
    %1454 = vmatprep.subr.mxu0 0.0
    %1455 = vmatpush1.msra.mxu0 0.0
    %1456 = vmatprep.subr.mxu0 0.0
    %1457 = vmatpush1.msra.mxu0 0.0
    %1458 = vmatprep.subr.mxu0 0.0
    %1459 = vmatpush1.msra.mxu0 0.0
    %1460 = vmatprep.subr.mxu0 0.0
    %1461 = vmatpush1.msra.mxu0 0.0
    %1462 = vmatprep.subr.mxu0 0.0
    %1463 = vmatpush1.msra.mxu0 0.0
    %1464 = vmatprep.subr.mxu0 0.0
    %1465 = vmatpush1.msra.mxu0 0.0
    %1466 = vmatprep.subr.mxu0 0.0
    %1467 = vmatpush1.msra.mxu0 0.0
    %1468 = vmatprep.subr.mxu0 0.0
    %1469 = vmatpush1.msra.mxu0 0.0
    %1470 = vmatprep.subr.mxu0 0.0
    %1471 = vmatpush1.msra.mxu0 0.0
    %1472 = vmatprep.subr.mxu0 0.0
    %1473 = vmatpush1.msra.mxu0 0.0
    %1474 = vmatprep.subr.mxu0 0.0
    %1475 = vmatpush1.msra.mxu0 0.0
    %1476 = vmatprep.subr.mxu0 0.0
    %1477 = vmatpush1.msra.mxu0 0.0
    %1478 = vmatprep.subr.mxu0 0.0
    %1479 = vmatpush1.msra.mxu0 0.0
    %1480 = vmatprep.subr.mxu0 0.0
    %1481 = vmatpush1.msra.mxu0 0.0
    %1482 = vmatprep.subr.mxu0 0.0
    %1483 = vmatpush1.msra.mxu0 0.0
    %1484 = vmatprep.subr.mxu0 0.0
    %1485 = vmatpush1.msra.mxu0 0.0
    %1486 = vmatprep.subr.mxu0 0.0
    %1487 = vmatpush1.msra.mxu0 0.0
    %1488 = vmatprep.subr.mxu0 0.0
    %1489 = vmatpush1.msra.mxu0 0.0
    %1490 = vmatprep.subr.mxu0 0.0
    %1491 = vmatpush1.msra.mxu0 0.0
    %1492 = vmatprep.subr.mxu0 0.0
    %1493 = vmatpush1.msra.mxu0 0.0
    %1494 = vmatprep.subr.mxu0 0.0
    %1495 = vmatpush1.msra.mxu0 0.0
    %1496 = vmatprep.subr.mxu0 0.0
    %1497 = vmatpush1.msra.mxu0 0.0
    %1498 = vmatprep.subr.mxu0 0.0
    %1499 = vmatpush1.msra.mxu0 0.0
    %1500 = vmatprep.subr.mxu0 0.0
    %1501 = vmatpush1.msra.mxu0 0.0
    %1502 = vmatprep.subr.mxu0 0.0
    %1503 = vmatpush1.msra.mxu0 0.0
    %1504 = vmatprep.subr.mxu0 0.0
    %1505 = vmatpush1.msra.mxu0 0.0
    %1506 = vmatprep.mubr.f32.mxu0 0.0
    %1507 = vmatmul.mubr.f32.gmra.mrb[0].mxu0 %v1434
    %v1508 = vpop.f32.mrb[0].mxu0
    %v1509 = vadd.f32 0.0, %v1508
    %v1510 = vpop.f32.mrb[0].mxu0
    %v1511 = vadd.f32 0.0, %v1510
    %1512 = vmatprep.mubr.f32.mxu0 0.0
    %1513 = vmatmul.mubr.f32.gmra.mrb[0].mxu0 %v1437
    %v1514 = vpop.f32.mrb[0].mxu0
    %v1515 = vadd.f32 0.0, %v1514
    %v1516 = vpop.f32.mrb[0].mxu0
    %v1517 = vadd.f32 0.0, %v1516
    %1518 = vmatprep.mubr.f32.mxu0 0.0
    %1519 = vmatmul.mubr.f32.gmra.mrb[0].mxu0 %v1440
    %v1520 = vpop.f32.mrb[0].mxu0
    %v1521 = vadd.f32 0.0, %v1520
    %v1522 = vpop.f32.mrb[0].mxu0
    %v1523 = vadd.f32 0.0, %v1522
    %1524 = vdwg.mxu0
    %s1525 = scalar_lea.vmem [#allocation2], 1152
    %v1526 = vld [vmem:[%s1525] sm:$0xff]
    %v1527 = vld [vmem:[%s1525 + $0x8] sm:$0xff]
    %v1528 = vld [vmem:[%s1525 + $0x10] sm:$0xff]
    %v1529 = vld [vmem:[%s1525 + $0x18] sm:$0xff]
    %v1530 = vld [vmem:[%s1525 + $0x20] sm:$0xff]
    %v1531 = vld [vmem:[%s1525 + $0x28] sm:$0xff]
    %v1532 = vld [vmem:[%s1525 + $0x30] sm:$0xff]
    %v1533 = vld [vmem:[%s1525 + $0x38] sm:$0xff]
    %v1534 = vld [vmem:[%s1525 + $0x40] sm:$0xff]
    %v1535 = vld [vmem:[%s1525 + $0x48] sm:$0xff]
    %v1536 = vld [vmem:[%s1525 + $0x50] sm:$0xff]
    %v1537 = vld [vmem:[%s1525 + $0x58] sm:$0xff]
    %v1538 = vld [vmem:[%s1525 + $0x60] sm:$0xff]
    %v1539 = vld [vmem:[%s1525 + $0x68] sm:$0xff]
    %v1540 = vld [vmem:[%s1525 + $0x70] sm:$0xff]
    %v1541 = vld [vmem:[%s1525 + $0x78] sm:$0xff]
    %v1542 = vld [vmem:[%s1525 + $0x80] sm:$0xff]
    %v1543 = vld [vmem:[%s1525 + $0x88] sm:$0xff]
    %v1544 = vld [vmem:[%s1525 + $0x90] sm:$0xff]
    %v1545 = vld [vmem:[%s1525 + $0x98] sm:$0xff]
    %v1546 = vld [vmem:[%s1525 + $0xa0] sm:$0xff]
    %v1547 = vld [vmem:[%s1525 + $0xa8] sm:$0xff]
    %v1548 = vld [vmem:[%s1525 + $0xb0] sm:$0xff]
    %v1549 = vld [vmem:[%s1525 + $0xb8] sm:$0xff]
    %v1550 = vld [vmem:[%s1525 + $0xc0] sm:$0xff]
    %v1551 = vld [vmem:[%s1525 + $0xc8] sm:$0xff]
    %v1552 = vld [vmem:[%s1525 + $0xd0] sm:$0xff]
    %v1553 = vld [vmem:[%s1525 + $0xd8] sm:$0xff]
    %v1554 = vld [vmem:[%s1525 + $0xe0] sm:$0xff]
    %v1555 = vld [vmem:[%s1525 + $0xe8] sm:$0xff]
    %v1556 = vld [vmem:[%s1525 + $0xf0] sm:$0xff]
    %v1557 = vld [vmem:[%s1525 + $0xf8] sm:$0xff]
    %v1558 = vld [vmem:[%s1525 + $0x100] sm:$0xff]
    %v1559 = vld [vmem:[%s1525 + $0x108] sm:$0xff]
    %v1560 = vld [vmem:[%s1525 + $0x110] sm:$0xff]
    %v1561 = vld [vmem:[%s1525 + $0x118] sm:$0xff]
    %v1562 = vld [vmem:[%s1525 + $0x120] sm:$0xff]
    %v1563 = vld [vmem:[%s1525 + $0x128] sm:$0xff]
    %v1564 = vld [vmem:[%s1525 + $0x130] sm:$0xff]
    %v1565 = vld [vmem:[%s1525 + $0x138] sm:$0xff]
    %v1566 = vld [vmem:[%s1525 + $0x140] sm:$0xff]
    %v1567 = vld [vmem:[%s1525 + $0x148] sm:$0xff]
    %v1568 = vld [vmem:[%s1525 + $0x150] sm:$0xff]
    %v1569 = vld [vmem:[%s1525 + $0x158] sm:$0xff]
    %v1570 = vld [vmem:[%s1525 + $0x160] sm:$0xff]
    %v1571 = vld [vmem:[%s1525 + $0x168] sm:$0xff]
    %v1572 = vld [vmem:[%s1525 + $0x170] sm:$0xff]
    %v1573 = vld [vmem:[%s1525 + $0x178] sm:$0xff]
    %v1574 = vld [vmem:[%s1525 + $0x180] sm:$0xff]
    %v1575 = vld [vmem:[%s1525 + $0x188] sm:$0xff]
    %v1576 = vld [vmem:[%s1525 + $0x190] sm:$0xff]
    %v1577 = vld [vmem:[%s1525 + $0x198] sm:$0xff]
    %v1578 = vld [vmem:[%s1525 + $0x1a0] sm:$0xff]
    %v1579 = vld [vmem:[%s1525 + $0x1a8] sm:$0xff]
    %v1580 = vld [vmem:[%s1525 + $0x1b0] sm:$0xff]
    %v1581 = vld [vmem:[%s1525 + $0x1b8] sm:$0xff]
    %v1582 = vld [vmem:[%s1525 + $0x1c0] sm:$0xff]
    %v1583 = vld [vmem:[%s1525 + $0x1c8] sm:$0xff]
    %v1584 = vld [vmem:[%s1525 + $0x1d0] sm:$0xff]
    %v1585 = vld [vmem:[%s1525 + $0x1d8] sm:$0xff]
    %v1586 = vld [vmem:[%s1525 + $0x1e0] sm:$0xff]
    %v1587 = vld [vmem:[%s1525 + $0x1e8] sm:$0xff]
    %v1588 = vld [vmem:[%s1525 + $0x1f0] sm:$0xff]
    %v1589 = vld [vmem:[%s1525 + $0x1f8] sm:$0xff]
    %v1590 = vld [vmem:[%s1525 + $0x200] sm:$0xff]
    %v1591 = vld [vmem:[%s1525 + $0x208] sm:$0xff]
    %v1592 = vld [vmem:[%s1525 + $0x210] sm:$0xff]
    %v1593 = vld [vmem:[%s1525 + $0x218] sm:$0xff]
    %v1594 = vld [vmem:[%s1525 + $0x220] sm:$0xff]
    %v1595 = vld [vmem:[%s1525 + $0x228] sm:$0xff]
    %v1596 = vld [vmem:[%s1525 + $0x230] sm:$0xff]
    %v1597 = vld [vmem:[%s1525 + $0x238] sm:$0xff]
    %v1599 = vsel %vm1084, %v1511, 0
    %v1602 = vsel %vm1084, %v1517, 0
    %v1605 = vsel %vm1084, %v1523, 0
    %1607 = vmatprep.subr.mxu0 %v1527
    %1608 = vmatpush1.msra.mxu0 %v1526
    %1609 = vmatprep.subr.mxu0 %v1530
    %1610 = vmatpush1.msra.mxu0 %v1529
    %1611 = vmatprep.subr.mxu0 %v1533
    %1612 = vmatpush1.msra.mxu0 %v1532
    %1613 = vmatprep.subr.mxu0 %v1536
    %1614 = vmatpush1.msra.mxu0 %v1535
    %1615 = vmatprep.subr.mxu0 %v1539
    %1616 = vmatpush1.msra.mxu0 %v1538
    %1617 = vmatprep.subr.mxu0 %v1542
    %1618 = vmatpush1.msra.mxu0 %v1541
    %1619 = vmatprep.subr.mxu0 %v1545
    %1620 = vmatpush1.msra.mxu0 %v1544
    %1621 = vmatprep.subr.mxu0 %v1548
    %1622 = vmatpush1.msra.mxu0 %v1547
    %1623 = vmatprep.subr.mxu0 %v1551
    %1624 = vmatpush1.msra.mxu0 %v1550
    %1625 = vmatprep.subr.mxu0 %v1554
    %1626 = vmatpush1.msra.mxu0 %v1553
    %1627 = vmatprep.subr.mxu0 %v1557
    %1628 = vmatpush1.msra.mxu0 %v1556
    %1629 = vmatprep.subr.mxu0 %v1560
    %1630 = vmatpush1.msra.mxu0 %v1559
    %1631 = vmatprep.subr.mxu0 %v1563
    %1632 = vmatpush1.msra.mxu0 %v1562
    %1633 = vmatprep.subr.mxu0 %v1566
    %1634 = vmatpush1.msra.mxu0 %v1565
    %1635 = vmatprep.subr.mxu0 %v1569
    %1636 = vmatpush1.msra.mxu0 %v1568
    %1637 = vmatprep.subr.mxu0 %v1572
    %1638 = vmatpush1.msra.mxu0 %v1571
    %1639 = vmatprep.subr.mxu0 %v1575
    %1640 = vmatpush1.msra.mxu0 %v1574
    %1641 = vmatprep.subr.mxu0 %v1578
    %1642 = vmatpush1.msra.mxu0 %v1577
    %1643 = vmatprep.subr.mxu0 %v1581
    %1644 = vmatpush1.msra.mxu0 %v1580
    %1645 = vmatprep.subr.mxu0 %v1584
    %1646 = vmatpush1.msra.mxu0 %v1583
    %1647 = vmatprep.subr.mxu0 %v1587
    %1648 = vmatpush1.msra.mxu0 %v1586
    %1649 = vmatprep.subr.mxu0 %v1590
    %1650 = vmatpush1.msra.mxu0 %v1589
    %1651 = vmatprep.subr.mxu0 %v1593
    %1652 = vmatpush1.msra.mxu0 %v1592
    %1653 = vmatprep.subr.mxu0 %v1596
    %1654 = vmatpush1.msra.mxu0 %v1595
    %1655 = vmatprep.subr.mxu0 0.0
    %1656 = vmatpush1.msra.mxu0 0.0
    %1657 = vmatprep.subr.mxu0 0.0
    %1658 = vmatpush1.msra.mxu0 0.0
    %1659 = vmatprep.subr.mxu0 0.0
    %1660 = vmatpush1.msra.mxu0 0.0
    %1661 = vmatprep.subr.mxu0 0.0
    %1662 = vmatpush1.msra.mxu0 0.0
    %1663 = vmatprep.subr.mxu0 0.0
    %1664 = vmatpush1.msra.mxu0 0.0
    %1665 = vmatprep.subr.mxu0 0.0
    %1666 = vmatpush1.msra.mxu0 0.0
    %1667 = vmatprep.subr.mxu0 0.0
    %1668 = vmatpush1.msra.mxu0 0.0
    %1669 = vmatprep.subr.mxu0 0.0
    %1670 = vmatpush1.msra.mxu0 0.0
    %1671 = vmatprep.mubr.f32.mxu0 %v1599
    %1672 = vmatmul.mubr.f32.gmra.mrb[0].mxu0 %v1509
    %v1673 = vpop.f32.mrb[0].mxu0
    %v1674 = vadd.f32 0.0, %v1673
    %v1675 = vpop.f32.mrb[0].mxu0
    %v1676 = vadd.f32 0.0, %v1675
    %1677 = vmatprep.mubr.f32.mxu0 %v1602
    %1678 = vmatmul.mubr.f32.gmra.mrb[0].mxu0 %v1515
    %v1679 = vpop.f32.mrb[0].mxu0
    %v1680 = vadd.f32 0.0, %v1679
    %v1681 = vpop.f32.mrb[0].mxu0
    %v1682 = vadd.f32 0.0, %v1681
    %1683 = vmatprep.mubr.f32.mxu0 %v1605
    %1684 = vmatmul.mubr.f32.gmra.mrb[0].mxu0 %v1521
    %v1685 = vpop.f32.mrb[0].mxu0
    %v1686 = vadd.f32 0.0, %v1685
    %v1687 = vpop.f32.mrb[0].mxu0
    %v1688 = vadd.f32 0.0, %v1687
    %1689 = vdwg.mxu0
    %1690 = vmatprep.subr.mxu0 0.0
    %1691 = vmatpush1.msra.mxu0 %v1528
    %1692 = vmatprep.subr.mxu0 0.0
    %1693 = vmatpush1.msra.mxu0 %v1531
    %1694 = vmatprep.subr.mxu0 0.0
    %1695 = vmatpush1.msra.mxu0 %v1534
    %1696 = vmatprep.subr.mxu0 0.0
    %1697 = vmatpush1.msra.mxu0 %v1537
    %1698 = vmatprep.subr.mxu0 0.0
    %1699 = vmatpush1.msra.mxu0 %v1540
    %1700 = vmatprep.subr.mxu0 0.0
    %1701 = vmatpush1.msra.mxu0 %v1543
    %1702 = vmatprep.subr.mxu0 0.0
    %1703 = vmatpush1.msra.mxu0 %v1546
    %1704 = vmatprep.subr.mxu0 0.0
    %1705 = vmatpush1.msra.mxu0 %v1549
    %1706 = vmatprep.subr.mxu0 0.0
    %1707 = vmatpush1.msra.mxu0 %v1552
    %1708 = vmatprep.subr.mxu0 0.0
    %1709 = vmatpush1.msra.mxu0 %v1555
    %1710 = vmatprep.subr.mxu0 0.0
    %1711 = vmatpush1.msra.mxu0 %v1558
    %1712 = vmatprep.subr.mxu0 0.0
    %1713 = vmatpush1.msra.mxu0 %v1561
    %1714 = vmatprep.subr.mxu0 0.0
    %1715 = vmatpush1.msra.mxu0 %v1564
    %1716 = vmatprep.subr.mxu0 0.0
    %1717 = vmatpush1.msra.mxu0 %v1567
    %1718 = vmatprep.subr.mxu0 0.0
    %1719 = vmatpush1.msra.mxu0 %v1570
    %1720 = vmatprep.subr.mxu0 0.0
    %1721 = vmatpush1.msra.mxu0 %v1573
    %1722 = vmatprep.subr.mxu0 0.0
    %1723 = vmatpush1.msra.mxu0 %v1576
    %1724 = vmatprep.subr.mxu0 0.0
    %1725 = vmatpush1.msra.mxu0 %v1579
    %1726 = vmatprep.subr.mxu0 0.0
    %1727 = vmatpush1.msra.mxu0 %v1582
    %1728 = vmatprep.subr.mxu0 0.0
    %1729 = vmatpush1.msra.mxu0 %v1585
    %1730 = vmatprep.subr.mxu0 0.0
    %1731 = vmatpush1.msra.mxu0 %v1588
    %1732 = vmatprep.subr.mxu0 0.0
    %1733 = vmatpush1.msra.mxu0 %v1591
    %1734 = vmatprep.subr.mxu0 0.0
    %1735 = vmatpush1.msra.mxu0 %v1594
    %1736 = vmatprep.subr.mxu0 0.0
    %1737 = vmatpush1.msra.mxu0 %v1597
    %1738 = vmatprep.subr.mxu0 0.0
    %1739 = vmatpush1.msra.mxu0 0.0
    %1740 = vmatprep.subr.mxu0 0.0
    %1741 = vmatpush1.msra.mxu0 0.0
    %1742 = vmatprep.subr.mxu0 0.0
    %1743 = vmatpush1.msra.mxu0 0.0
    %1744 = vmatprep.subr.mxu0 0.0
    %1745 = vmatpush1.msra.mxu0 0.0
    %1746 = vmatprep.subr.mxu0 0.0
    %1747 = vmatpush1.msra.mxu0 0.0
    %1748 = vmatprep.subr.mxu0 0.0
    %1749 = vmatpush1.msra.mxu0 0.0
    %1750 = vmatprep.subr.mxu0 0.0
    %1751 = vmatpush1.msra.mxu0 0.0
    %1752 = vmatprep.subr.mxu0 0.0
    %1753 = vmatpush1.msra.mxu0 0.0
    %1754 = vmatprep.mubr.f32.mxu0 %v1599
    %1755 = vmatmul.mubr.f32.gmra.mrb[0].mxu0 %v1509
    %v1756 = vpop.f32.mrb[0].mxu0
    %v1757 = vadd.f32 0.0, %v1756
    %v1758 = vpop.f32.mrb[0].mxu0
    %1759 = vmatprep.mubr.f32.mxu0 %v1602
    %1760 = vmatmul.mubr.f32.gmra.mrb[0].mxu0 %v1515
    %v1761 = vpop.f32.mrb[0].mxu0
    %v1762 = vadd.f32 0.0, %v1761
    %v1763 = vpop.f32.mrb[0].mxu0
    %1764 = vmatprep.mubr.f32.mxu0 %v1605
    %1765 = vmatmul.mubr.f32.gmra.mrb[0].mxu0 %v1521
    %v1766 = vpop.f32.mrb[0].mxu0
    %v1767 = vadd.f32 0.0, %v1766
    %v1768 = vpop.f32.mrb[0].mxu0
    %1769 = vdwg.mxu0
    %v1770 = vadd.f32 %v1333, %v1674
    %v1771 = vadd.f32 %v1335, %v1676
    %v1772 = vadd.f32 %v1416, %v1757
    %v1773 = vadd.f32 %v1339, %v1680
    %v1774 = vadd.f32 %v1341, %v1682
    %v1775 = vadd.f32 %v1421, %v1762
    %v1776 = vadd.f32 %v1345, %v1686
    %v1777 = vadd.f32 %v1347, %v1688
    %v1778 = vadd.f32 %v1426, %v1767
    %v1779 = vld [vmem:[%s6] sm:$0x7]
    %v1781 = vlaneseq
    %v1782 = vshrl.u32 %v1781, 7
    %v1783 = vsub.s32 0, %v1782
    %v1784 = vrot.slane %v1779, %v1783
    %v1785 = vlaneseq
    %v1786 = vshrl.u32 %v1785, 7
    %v1787 = vsub.s32 1, %v1786
    %v1788 = vrot.slane %v1779, %v1787
    %v1789 = vlaneseq
    %v1790 = vshrl.u32 %v1789, 7
    %v1791 = vsub.s32 2, %v1790
    %v1792 = vrot.slane %v1779, %v1791
    %v1796 = vadd.f32 %v1770, %v1784
    %v1797 = vadd.f32 %v1771, %v1788
    %v1798 = vadd.f32 %v1772, %v1792
    %v1799 = vadd.f32 %v1773, %v1784
    %v1800 = vadd.f32 %v1774, %v1788
    %v1801 = vadd.f32 %v1775, %v1792
    %v1802 = vadd.f32 %v1776, %v1784
    %v1803 = vadd.f32 %v1777, %v1788
    %v1804 = vadd.f32 %v1778, %v1792
    %vm1805 = vcmp.ge.f32.partialorder %v1796, 0.0
    %vm1806 = vcmp.ge.f32.partialorder %v1797, 0.0
    %vm1807 = vcmp.ge.f32.partialorder %v1798, 0.0
    %vm1808 = vcmp.ge.f32.partialorder %v1799, 0.0
    %vm1809 = vcmp.ge.f32.partialorder %v1800, 0.0
    %vm1810 = vcmp.ge.f32.partialorder %v1801, 0.0
    %vm1811 = vcmp.ge.f32.partialorder %v1802, 0.0
    %vm1812 = vcmp.ge.f32.partialorder %v1803, 0.0
    %vm1813 = vcmp.ge.f32.partialorder %v1804, 0.0
    %v1814 = vmul.f32 %v1796, 0.2
    %v1815 = vmul.f32 %v1797, 0.2
    %v1816 = vmul.f32 %v1798, 0.2
    %v1817 = vmul.f32 %v1799, 0.2
    %v1818 = vmul.f32 %v1800, 0.2
    %v1819 = vmul.f32 %v1801, 0.2
    %v1820 = vmul.f32 %v1802, 0.2
    %v1821 = vmul.f32 %v1803, 0.2
    %v1822 = vmul.f32 %v1804, 0.2
    %v1823 = vsel %vm1805, %v1796, %v1814
    %v1824 = vsel %vm1806, %v1797, %v1815
    %v1825 = vsel %vm1807, %v1798, %v1816
    %v1826 = vsel %vm1808, %v1799, %v1817
    %v1827 = vsel %vm1809, %v1800, %v1818
    %v1828 = vsel %vm1810, %v1801, %v1819
    %v1829 = vsel %vm1811, %v1802, %v1820
    %v1830 = vsel %vm1812, %v1803, %v1821
    %v1831 = vsel %vm1813, %v1804, %v1822
    %v1832 = vld [vmem:[%s7] sm:$0xff]
    %v1833 = vld [vmem:[%s7 + $0x8] sm:$0x3]
    %v1835 = vsel %vm743, %v1832, 0
    %v1838 = vsel %vm743, %v1833, 0
    %v1841 = vsel %vm753, %v1829, 0
    %v1844 = vsel %vm753, %v1830, 0
    %v1847 = vsel %vm753, %v1831, 0
    %1849 = vmatprep.subr.mxu0 %v1824
    %1850 = vmatpush1.msra.mxu0 %v1823
    %1851 = vmatprep.subr.mxu0 %v1827
    %1852 = vmatpush1.msra.mxu0 %v1826
    %1853 = vmatprep.subr.mxu0 %v1844
    %1854 = vmatpush1.msra.mxu0 %v1841
    %1855 = vmatprep.subr.mxu0 0.0
    %1856 = vmatpush1.msra.mxu0 0.0
    %1857 = vmatprep.subr.mxu0 0.0
    %1858 = vmatpush1.msra.mxu0 0.0
    %1859 = vmatprep.subr.mxu0 0.0
    %1860 = vmatpush1.msra.mxu0 0.0
    %1861 = vmatprep.subr.mxu0 0.0
    %1862 = vmatpush1.msra.mxu0 0.0
    %1863 = vmatprep.subr.mxu0 0.0
    %1864 = vmatpush1.msra.mxu0 0.0
    %1865 = vmatprep.subr.mxu0 0.0
    %1866 = vmatpush1.msra.mxu0 0.0
    %1867 = vmatprep.subr.mxu0 0.0
    %1868 = vmatpush1.msra.mxu0 0.0
    %1869 = vmatprep.subr.mxu0 0.0
    %1870 = vmatpush1.msra.mxu0 0.0
    %1871 = vmatprep.subr.mxu0 0.0
    %1872 = vmatpush1.msra.mxu0 0.0
    %1873 = vmatprep.subr.mxu0 0.0
    %1874 = vmatpush1.msra.mxu0 0.0
    %1875 = vmatprep.subr.mxu0 0.0
    %1876 = vmatpush1.msra.mxu0 0.0
    %1877 = vmatprep.subr.mxu0 0.0
    %1878 = vmatpush1.msra.mxu0 0.0
    %1879 = vmatprep.subr.mxu0 0.0
    %1880 = vmatpush1.msra.mxu0 0.0
    %1881 = vmatprep.subr.mxu0 0.0
    %1882 = vmatpush1.msra.mxu0 0.0
    %1883 = vmatprep.subr.mxu0 0.0
    %1884 = vmatpush1.msra.mxu0 0.0
    %1885 = vmatprep.subr.mxu0 0.0
    %1886 = vmatpush1.msra.mxu0 0.0
    %1887 = vmatprep.subr.mxu0 0.0
    %1888 = vmatpush1.msra.mxu0 0.0
    %1889 = vmatprep.subr.mxu0 0.0
    %1890 = vmatpush1.msra.mxu0 0.0
    %1891 = vmatprep.subr.mxu0 0.0
    %1892 = vmatpush1.msra.mxu0 0.0
    %1893 = vmatprep.subr.mxu0 0.0
    %1894 = vmatpush1.msra.mxu0 0.0
    %1895 = vmatprep.subr.mxu0 0.0
    %1896 = vmatpush1.msra.mxu0 0.0
    %1897 = vmatprep.subr.mxu0 0.0
    %1898 = vmatpush1.msra.mxu0 0.0
    %1899 = vmatprep.subr.mxu0 0.0
    %1900 = vmatpush1.msra.mxu0 0.0
    %1901 = vmatprep.subr.mxu0 0.0
    %1902 = vmatpush1.msra.mxu0 0.0
    %1903 = vmatprep.subr.mxu0 0.0
    %1904 = vmatpush1.msra.mxu0 0.0
    %1905 = vmatprep.subr.mxu0 0.0
    %1906 = vmatpush1.msra.mxu0 0.0
    %1907 = vmatprep.subr.mxu0 0.0
    %1908 = vmatpush1.msra.mxu0 0.0
    %1909 = vmatprep.subr.mxu0 0.0
    %1910 = vmatpush1.msra.mxu0 0.0
    %1911 = vmatprep.subr.mxu0 0.0
    %1912 = vmatpush1.msra.mxu0 0.0
    %1913 = vmatprep.mubr.f32.mxu0 0.0
    %1914 = vmatmul.mubr.f32.gmra.mrb[0].mxu0 %v1835
    %v1915 = vpop.f32.mrb[0].mxu0
    %v1916 = vadd.f32 0.0, %v1915
    %v1917 = vpop.f32.mrb[0].mxu0
    %v1918 = vadd.f32 0.0, %v1917
    %1919 = vmatprep.mubr.f32.mxu0 0.0
    %1920 = vmatmul.mubr.f32.gmra.mrb[0].mxu0 %v1838
    %v1921 = vpop.f32.mrb[0].mxu0
    %v1922 = vadd.f32 0.0, %v1921
    %v1923 = vpop.f32.mrb[0].mxu0
    %v1924 = vadd.f32 0.0, %v1923
    %1925 = vdwg.mxu0
    %1926 = vmatprep.subr.mxu0 0.0
    %1927 = vmatpush1.msra.mxu0 %v1825
    %1928 = vmatprep.subr.mxu0 0.0
    %1929 = vmatpush1.msra.mxu0 %v1828
    %1930 = vmatprep.subr.mxu0 0.0
    %1931 = vmatpush1.msra.mxu0 %v1847
    %1932 = vmatprep.subr.mxu0 0.0
    %1933 = vmatpush1.msra.mxu0 0.0
    %1934 = vmatprep.subr.mxu0 0.0
    %1935 = vmatpush1.msra.mxu0 0.0
    %1936 = vmatprep.subr.mxu0 0.0
    %1937 = vmatpush1.msra.mxu0 0.0
    %1938 = vmatprep.subr.mxu0 0.0
    %1939 = vmatpush1.msra.mxu0 0.0
    %1940 = vmatprep.subr.mxu0 0.0
    %1941 = vmatpush1.msra.mxu0 0.0
    %1942 = vmatprep.subr.mxu0 0.0
    %1943 = vmatpush1.msra.mxu0 0.0
    %1944 = vmatprep.subr.mxu0 0.0
    %1945 = vmatpush1.msra.mxu0 0.0
    %1946 = vmatprep.subr.mxu0 0.0
    %1947 = vmatpush1.msra.mxu0 0.0
    %1948 = vmatprep.subr.mxu0 0.0
    %1949 = vmatpush1.msra.mxu0 0.0
    %1950 = vmatprep.subr.mxu0 0.0
    %1951 = vmatpush1.msra.mxu0 0.0
    %1952 = vmatprep.subr.mxu0 0.0
    %1953 = vmatpush1.msra.mxu0 0.0
    %1954 = vmatprep.subr.mxu0 0.0
    %1955 = vmatpush1.msra.mxu0 0.0
    %1956 = vmatprep.subr.mxu0 0.0
    %1957 = vmatpush1.msra.mxu0 0.0
    %1958 = vmatprep.subr.mxu0 0.0
    %1959 = vmatpush1.msra.mxu0 0.0
    %1960 = vmatprep.subr.mxu0 0.0
    %1961 = vmatpush1.msra.mxu0 0.0
    %1962 = vmatprep.subr.mxu0 0.0
    %1963 = vmatpush1.msra.mxu0 0.0
    %1964 = vmatprep.subr.mxu0 0.0
    %1965 = vmatpush1.msra.mxu0 0.0
    %1966 = vmatprep.subr.mxu0 0.0
    %1967 = vmatpush1.msra.mxu0 0.0
    %1968 = vmatprep.subr.mxu0 0.0
    %1969 = vmatpush1.msra.mxu0 0.0
    %1970 = vmatprep.subr.mxu0 0.0
    %1971 = vmatpush1.msra.mxu0 0.0
    %1972 = vmatprep.subr.mxu0 0.0
    %1973 = vmatpush1.msra.mxu0 0.0
    %1974 = vmatprep.subr.mxu0 0.0
    %1975 = vmatpush1.msra.mxu0 0.0
    %1976 = vmatprep.subr.mxu0 0.0
    %1977 = vmatpush1.msra.mxu0 0.0
    %1978 = vmatprep.subr.mxu0 0.0
    %1979 = vmatpush1.msra.mxu0 0.0
    %1980 = vmatprep.subr.mxu0 0.0
    %1981 = vmatpush1.msra.mxu0 0.0
    %1982 = vmatprep.subr.mxu0 0.0
    %1983 = vmatpush1.msra.mxu0 0.0
    %1984 = vmatprep.subr.mxu0 0.0
    %1985 = vmatpush1.msra.mxu0 0.0
    %1986 = vmatprep.subr.mxu0 0.0
    %1987 = vmatpush1.msra.mxu0 0.0
    %1988 = vmatprep.subr.mxu0 0.0
    %1989 = vmatpush1.msra.mxu0 0.0
    %1990 = vmatprep.mubr.f32.mxu0 0.0
    %1991 = vmatmul.mubr.f32.gmra.mrb[0].mxu0 %v1835
    %v1992 = vpop.f32.mrb[0].mxu0
    %v1993 = vadd.f32 0.0, %v1992
    %v1994 = vpop.f32.mrb[0].mxu0
    %1995 = vmatprep.mubr.f32.mxu0 0.0
    %1996 = vmatmul.mubr.f32.gmra.mrb[0].mxu0 %v1838
    %v1997 = vpop.f32.mrb[0].mxu0
    %v1998 = vadd.f32 0.0, %v1997
    %v1999 = vpop.f32.mrb[0].mxu0
    %2000 = vdwg.mxu0
    %v2001 = vld [vmem:[%s8] sm:$0xff]
    %v2002 = vld [vmem:[%s8 + $0x8] sm:$0xff]
    %v2003 = vld [vmem:[%s8 + $0x10] sm:$0xff]
    %v2004 = vld [vmem:[%s8 + $0x18] sm:$0xff]
    %v2005 = vld [vmem:[%s8 + $0x20] sm:$0xff]
    %v2006 = vld [vmem:[%s8 + $0x28] sm:$0xff]
    %v2007 = vld [vmem:[%s8 + $0x30] sm:$0xff]
    %v2008 = vld [vmem:[%s8 + $0x38] sm:$0xff]
    %v2009 = vld [vmem:[%s8 + $0x40] sm:$0xff]
    %v2010 = vld [vmem:[%s8 + $0x48] sm:$0xff]
    %v2011 = vld [vmem:[%s8 + $0x50] sm:$0xff]
    %v2012 = vld [vmem:[%s8 + $0x58] sm:$0xff]
    %v2013 = vld [vmem:[%s8 + $0x60] sm:$0xff]
    %v2014 = vld [vmem:[%s8 + $0x68] sm:$0xff]
    %v2015 = vld [vmem:[%s8 + $0x70] sm:$0xff]
    %v2016 = vld [vmem:[%s8 + $0x78] sm:$0xff]
    %v2017 = vld [vmem:[%s8 + $0x80] sm:$0xff]
    %v2018 = vld [vmem:[%s8 + $0x88] sm:$0xff]
    %v2019 = vld [vmem:[%s8 + $0x90] sm:$0xff]
    %v2020 = vld [vmem:[%s8 + $0x98] sm:$0xff]
    %v2021 = vld [vmem:[%s8 + $0xa0] sm:$0xff]
    %v2022 = vld [vmem:[%s8 + $0xa8] sm:$0xff]
    %v2023 = vld [vmem:[%s8 + $0xb0] sm:$0xff]
    %v2024 = vld [vmem:[%s8 + $0xb8] sm:$0xff]
    %v2025 = vld [vmem:[%s8 + $0xc0] sm:$0xff]
    %v2026 = vld [vmem:[%s8 + $0xc8] sm:$0xff]
    %v2027 = vld [vmem:[%s8 + $0xd0] sm:$0xff]
    %v2028 = vld [vmem:[%s8 + $0xd8] sm:$0xff]
    %v2029 = vld [vmem:[%s8 + $0xe0] sm:$0xff]
    %v2030 = vld [vmem:[%s8 + $0xe8] sm:$0xff]
    %v2031 = vld [vmem:[%s8 + $0xf0] sm:$0xff]
    %v2032 = vld [vmem:[%s8 + $0xf8] sm:$0xff]
    %v2033 = vld [vmem:[%s8 + $0x100] sm:$0xff]
    %v2034 = vld [vmem:[%s8 + $0x108] sm:$0xff]
    %v2035 = vld [vmem:[%s8 + $0x110] sm:$0xff]
    %v2036 = vld [vmem:[%s8 + $0x118] sm:$0xff]
    %v2037 = vld [vmem:[%s8 + $0x120] sm:$0xff]
    %v2038 = vld [vmem:[%s8 + $0x128] sm:$0xff]
    %v2039 = vld [vmem:[%s8 + $0x130] sm:$0xff]
    %v2040 = vld [vmem:[%s8 + $0x138] sm:$0xff]
    %v2041 = vld [vmem:[%s8 + $0x140] sm:$0xff]
    %v2042 = vld [vmem:[%s8 + $0x148] sm:$0xff]
    %v2043 = vld [vmem:[%s8 + $0x150] sm:$0xff]
    %v2044 = vld [vmem:[%s8 + $0x158] sm:$0xff]
    %v2045 = vld [vmem:[%s8 + $0x160] sm:$0xff]
    %v2046 = vld [vmem:[%s8 + $0x168] sm:$0xff]
    %v2047 = vld [vmem:[%s8 + $0x170] sm:$0xff]
    %v2048 = vld [vmem:[%s8 + $0x178] sm:$0xff]
    %v2049 = vld [vmem:[%s8 + $0x180] sm:$0xff]
    %v2050 = vld [vmem:[%s8 + $0x188] sm:$0xff]
    %v2051 = vld [vmem:[%s8 + $0x190] sm:$0xff]
    %v2052 = vld [vmem:[%s8 + $0x198] sm:$0xff]
    %v2053 = vld [vmem:[%s8 + $0x1a0] sm:$0xff]
    %v2054 = vld [vmem:[%s8 + $0x1a8] sm:$0xff]
    %v2055 = vld [vmem:[%s8 + $0x1b0] sm:$0xff]
    %v2056 = vld [vmem:[%s8 + $0x1b8] sm:$0xff]
    %v2057 = vld [vmem:[%s8 + $0x1c0] sm:$0xff]
    %v2058 = vld [vmem:[%s8 + $0x1c8] sm:$0xff]
    %v2059 = vld [vmem:[%s8 + $0x1d0] sm:$0xff]
    %v2060 = vld [vmem:[%s8 + $0x1d8] sm:$0xff]
    %v2061 = vld [vmem:[%s8 + $0x1e0] sm:$0xff]
    %v2062 = vld [vmem:[%s8 + $0x1e8] sm:$0xff]
    %v2063 = vld [vmem:[%s8 + $0x1f0] sm:$0xff]
    %v2064 = vld [vmem:[%s8 + $0x1f8] sm:$0xff]
    %v2065 = vld [vmem:[%s8 + $0x200] sm:$0xff]
    %v2066 = vld [vmem:[%s8 + $0x208] sm:$0xff]
    %v2067 = vld [vmem:[%s8 + $0x210] sm:$0xff]
    %v2068 = vld [vmem:[%s8 + $0x218] sm:$0xff]
    %v2069 = vld [vmem:[%s8 + $0x220] sm:$0xff]
    %v2070 = vld [vmem:[%s8 + $0x228] sm:$0xff]
    %v2071 = vld [vmem:[%s8 + $0x230] sm:$0xff]
    %v2072 = vld [vmem:[%s8 + $0x238] sm:$0xff]
    %v2073 = vld [vmem:[%s8 + $0x240] sm:$0xff]
    %v2074 = vld [vmem:[%s8 + $0x248] sm:$0xff]
    %v2075 = vld [vmem:[%s8 + $0x250] sm:$0xff]
    %v2076 = vld [vmem:[%s8 + $0x258] sm:$0xff]
    %v2077 = vld [vmem:[%s8 + $0x260] sm:$0xff]
    %v2078 = vld [vmem:[%s8 + $0x268] sm:$0xff]
    %v2079 = vld [vmem:[%s8 + $0x270] sm:$0xff]
    %v2080 = vld [vmem:[%s8 + $0x278] sm:$0xff]
    %v2081 = vld [vmem:[%s8 + $0x280] sm:$0xff]
    %v2082 = vld [vmem:[%s8 + $0x288] sm:$0xff]
    %v2083 = vld [vmem:[%s8 + $0x290] sm:$0xff]
    %v2084 = vld [vmem:[%s8 + $0x298] sm:$0xff]
    %v2085 = vld [vmem:[%s8 + $0x2a0] sm:$0xff]
    %v2086 = vld [vmem:[%s8 + $0x2a8] sm:$0xff]
    %v2087 = vld [vmem:[%s8 + $0x2b0] sm:$0xff]
    %v2088 = vld [vmem:[%s8 + $0x2b8] sm:$0xff]
    %v2089 = vld [vmem:[%s8 + $0x2c0] sm:$0xff]
    %v2090 = vld [vmem:[%s8 + $0x2c8] sm:$0xff]
    %v2091 = vld [vmem:[%s8 + $0x2d0] sm:$0xff]
    %v2092 = vld [vmem:[%s8 + $0x2d8] sm:$0xff]
    %v2093 = vld [vmem:[%s8 + $0x2e0] sm:$0xff]
    %v2094 = vld [vmem:[%s8 + $0x2e8] sm:$0xff]
    %v2095 = vld [vmem:[%s8 + $0x2f0] sm:$0xff]
    %v2096 = vld [vmem:[%s8 + $0x2f8] sm:$0xff]
    %v2097 = vld [vmem:[%s8 + $0x300] sm:$0xff]
    %v2098 = vld [vmem:[%s8 + $0x308] sm:$0xff]
    %v2099 = vld [vmem:[%s8 + $0x310] sm:$0xff]
    %v2100 = vld [vmem:[%s8 + $0x318] sm:$0xff]
    %v2101 = vld [vmem:[%s8 + $0x320] sm:$0xff]
    %v2102 = vld [vmem:[%s8 + $0x328] sm:$0xff]
    %v2103 = vld [vmem:[%s8 + $0x330] sm:$0xff]
    %v2104 = vld [vmem:[%s8 + $0x338] sm:$0xff]
    %v2105 = vld [vmem:[%s8 + $0x340] sm:$0xff]
    %v2106 = vld [vmem:[%s8 + $0x348] sm:$0xff]
    %v2107 = vld [vmem:[%s8 + $0x350] sm:$0xff]
    %v2108 = vld [vmem:[%s8 + $0x358] sm:$0xff]
    %v2109 = vld [vmem:[%s8 + $0x360] sm:$0xff]
    %v2110 = vld [vmem:[%s8 + $0x368] sm:$0xff]
    %v2111 = vld [vmem:[%s8 + $0x370] sm:$0xff]
    %v2112 = vld [vmem:[%s8 + $0x378] sm:$0xff]
    %v2113 = vld [vmem:[%s8 + $0x380] sm:$0xff]
    %v2114 = vld [vmem:[%s8 + $0x388] sm:$0xff]
    %v2115 = vld [vmem:[%s8 + $0x390] sm:$0xff]
    %v2116 = vld [vmem:[%s8 + $0x398] sm:$0xff]
    %v2117 = vld [vmem:[%s8 + $0x3a0] sm:$0xff]
    %v2118 = vld [vmem:[%s8 + $0x3a8] sm:$0xff]
    %v2119 = vld [vmem:[%s8 + $0x3b0] sm:$0xff]
    %v2120 = vld [vmem:[%s8 + $0x3b8] sm:$0xff]
    %v2121 = vld [vmem:[%s8 + $0x3c0] sm:$0xff]
    %v2122 = vld [vmem:[%s8 + $0x3c8] sm:$0xff]
    %v2123 = vld [vmem:[%s8 + $0x3d0] sm:$0xff]
    %v2124 = vld [vmem:[%s8 + $0x3d8] sm:$0xff]
    %v2125 = vld [vmem:[%s8 + $0x3e0] sm:$0xff]
    %v2126 = vld [vmem:[%s8 + $0x3e8] sm:$0xff]
    %v2127 = vld [vmem:[%s8 + $0x3f0] sm:$0xff]
    %v2128 = vld [vmem:[%s8 + $0x3f8] sm:$0xff]
    %v2129 = vld [vmem:[%s8 + $0x400] sm:$0xff]
    %v2130 = vld [vmem:[%s8 + $0x408] sm:$0xff]
    %v2131 = vld [vmem:[%s8 + $0x410] sm:$0xff]
    %v2132 = vld [vmem:[%s8 + $0x418] sm:$0xff]
    %v2133 = vld [vmem:[%s8 + $0x420] sm:$0xff]
    %v2134 = vld [vmem:[%s8 + $0x428] sm:$0xff]
    %v2135 = vld [vmem:[%s8 + $0x430] sm:$0xff]
    %v2136 = vld [vmem:[%s8 + $0x438] sm:$0xff]
    %v2137 = vld [vmem:[%s8 + $0x440] sm:$0xff]
    %v2138 = vld [vmem:[%s8 + $0x448] sm:$0xff]
    %v2139 = vld [vmem:[%s8 + $0x450] sm:$0xff]
    %v2140 = vld [vmem:[%s8 + $0x458] sm:$0xff]
    %v2141 = vld [vmem:[%s8 + $0x460] sm:$0xff]
    %v2142 = vld [vmem:[%s8 + $0x468] sm:$0xff]
    %v2143 = vld [vmem:[%s8 + $0x470] sm:$0xff]
    %v2144 = vld [vmem:[%s8 + $0x478] sm:$0xff]
    %s2145 = scalar_lea.vmem %s7, 16
    %v2146 = vld [vmem:[%s2145] sm:$0xff]
    %v2147 = vld [vmem:[%s2145 + $0x8] sm:$0x3]
    %v2149 = vsel %vm743, %v2146, 0
    %v2152 = vsel %vm743, %v2147, 0
    %2154 = vmatprep.subr.mxu0 %v1824
    %2155 = vmatpush1.msra.mxu0 %v1823
    %2156 = vmatprep.subr.mxu0 %v1827
    %2157 = vmatpush1.msra.mxu0 %v1826
    %2158 = vmatprep.subr.mxu0 %v1844
    %2159 = vmatpush1.msra.mxu0 %v1841
    %2160 = vmatprep.subr.mxu0 0.0
    %2161 = vmatpush1.msra.mxu0 0.0
    %2162 = vmatprep.subr.mxu0 0.0
    %2163 = vmatpush1.msra.mxu0 0.0
    %2164 = vmatprep.subr.mxu0 0.0
    %2165 = vmatpush1.msra.mxu0 0.0
    %2166 = vmatprep.subr.mxu0 0.0
    %2167 = vmatpush1.msra.mxu0 0.0
    %2168 = vmatprep.subr.mxu0 0.0
    %2169 = vmatpush1.msra.mxu0 0.0
    %2170 = vmatprep.subr.mxu0 0.0
    %2171 = vmatpush1.msra.mxu0 0.0
    %2172 = vmatprep.subr.mxu0 0.0
    %2173 = vmatpush1.msra.mxu0 0.0
    %2174 = vmatprep.subr.mxu0 0.0
    %2175 = vmatpush1.msra.mxu0 0.0
    %2176 = vmatprep.subr.mxu0 0.0
    %2177 = vmatpush1.msra.mxu0 0.0
    %2178 = vmatprep.subr.mxu0 0.0
    %2179 = vmatpush1.msra.mxu0 0.0
    %2180 = vmatprep.subr.mxu0 0.0
    %2181 = vmatpush1.msra.mxu0 0.0
    %2182 = vmatprep.subr.mxu0 0.0
    %2183 = vmatpush1.msra.mxu0 0.0
    %2184 = vmatprep.subr.mxu0 0.0
    %2185 = vmatpush1.msra.mxu0 0.0
    %2186 = vmatprep.subr.mxu0 0.0
    %2187 = vmatpush1.msra.mxu0 0.0
    %2188 = vmatprep.subr.mxu0 0.0
    %2189 = vmatpush1.msra.mxu0 0.0
    %2190 = vmatprep.subr.mxu0 0.0
    %2191 = vmatpush1.msra.mxu0 0.0
    %2192 = vmatprep.subr.mxu0 0.0
    %2193 = vmatpush1.msra.mxu0 0.0
    %2194 = vmatprep.subr.mxu0 0.0
    %2195 = vmatpush1.msra.mxu0 0.0
    %2196 = vmatprep.subr.mxu0 0.0
    %2197 = vmatpush1.msra.mxu0 0.0
    %2198 = vmatprep.subr.mxu0 0.0
    %2199 = vmatpush1.msra.mxu0 0.0
    %2200 = vmatprep.subr.mxu0 0.0
    %2201 = vmatpush1.msra.mxu0 0.0
    %2202 = vmatprep.subr.mxu0 0.0
    %2203 = vmatpush1.msra.mxu0 0.0
    %2204 = vmatprep.subr.mxu0 0.0
    %2205 = vmatpush1.msra.mxu0 0.0
    %2206 = vmatprep.subr.mxu0 0.0
    %2207 = vmatpush1.msra.mxu0 0.0
    %2208 = vmatprep.subr.mxu0 0.0
    %2209 = vmatpush1.msra.mxu0 0.0
    %2210 = vmatprep.subr.mxu0 0.0
    %2211 = vmatpush1.msra.mxu0 0.0
    %2212 = vmatprep.subr.mxu0 0.0
    %2213 = vmatpush1.msra.mxu0 0.0
    %2214 = vmatprep.subr.mxu0 0.0
    %2215 = vmatpush1.msra.mxu0 0.0
    %2216 = vmatprep.subr.mxu0 0.0
    %2217 = vmatpush1.msra.mxu0 0.0
    %2218 = vmatprep.mubr.f32.mxu0 0.0
    %2219 = vmatmul.mubr.f32.gmra.mrb[0].mxu0 %v2149
    %v2220 = vpop.f32.mrb[0].mxu0
    %v2221 = vadd.f32 0.0, %v2220
    %v2222 = vpop.f32.mrb[0].mxu0
    %v2223 = vadd.f32 0.0, %v2222
    %2224 = vmatprep.mubr.f32.mxu0 0.0
    %2225 = vmatmul.mubr.f32.gmra.mrb[0].mxu0 %v2152
    %v2226 = vpop.f32.mrb[0].mxu0
    %v2227 = vadd.f32 0.0, %v2226
    %v2228 = vpop.f32.mrb[0].mxu0
    %v2229 = vadd.f32 0.0, %v2228
    %2230 = vdwg.mxu0
    %2231 = vmatprep.subr.mxu0 0.0
    %2232 = vmatpush1.msra.mxu0 %v1825
    %2233 = vmatprep.subr.mxu0 0.0
    %2234 = vmatpush1.msra.mxu0 %v1828
    %2235 = vmatprep.subr.mxu0 0.0
    %2236 = vmatpush1.msra.mxu0 %v1847
    %2237 = vmatprep.subr.mxu0 0.0
    %2238 = vmatpush1.msra.mxu0 0.0
    %2239 = vmatprep.subr.mxu0 0.0
    %2240 = vmatpush1.msra.mxu0 0.0
    %2241 = vmatprep.subr.mxu0 0.0
    %2242 = vmatpush1.msra.mxu0 0.0
    %2243 = vmatprep.subr.mxu0 0.0
    %2244 = vmatpush1.msra.mxu0 0.0
    %2245 = vmatprep.subr.mxu0 0.0
    %2246 = vmatpush1.msra.mxu0 0.0
    %2247 = vmatprep.subr.mxu0 0.0
    %2248 = vmatpush1.msra.mxu0 0.0
    %2249 = vmatprep.subr.mxu0 0.0
    %2250 = vmatpush1.msra.mxu0 0.0
    %2251 = vmatprep.subr.mxu0 0.0
    %2252 = vmatpush1.msra.mxu0 0.0
    %2253 = vmatprep.subr.mxu0 0.0
    %2254 = vmatpush1.msra.mxu0 0.0
    %2255 = vmatprep.subr.mxu0 0.0
    %2256 = vmatpush1.msra.mxu0 0.0
    %2257 = vmatprep.subr.mxu0 0.0
    %2258 = vmatpush1.msra.mxu0 0.0
    %2259 = vmatprep.subr.mxu0 0.0
    %2260 = vmatpush1.msra.mxu0 0.0
    %2261 = vmatprep.subr.mxu0 0.0
    %2262 = vmatpush1.msra.mxu0 0.0
    %2263 = vmatprep.subr.mxu0 0.0
    %2264 = vmatpush1.msra.mxu0 0.0
    %2265 = vmatprep.subr.mxu0 0.0
    %2266 = vmatpush1.msra.mxu0 0.0
    %2267 = vmatprep.subr.mxu0 0.0
    %2268 = vmatpush1.msra.mxu0 0.0
    %2269 = vmatprep.subr.mxu0 0.0
    %2270 = vmatpush1.msra.mxu0 0.0
    %2271 = vmatprep.subr.mxu0 0.0
    %2272 = vmatpush1.msra.mxu0 0.0
    %2273 = vmatprep.subr.mxu0 0.0
    %2274 = vmatpush1.msra.mxu0 0.0
    %2275 = vmatprep.subr.mxu0 0.0
    %2276 = vmatpush1.msra.mxu0 0.0
    %2277 = vmatprep.subr.mxu0 0.0
    %2278 = vmatpush1.msra.mxu0 0.0
    %2279 = vmatprep.subr.mxu0 0.0
    %2280 = vmatpush1.msra.mxu0 0.0
    %2281 = vmatprep.subr.mxu0 0.0
    %2282 = vmatpush1.msra.mxu0 0.0
    %2283 = vmatprep.subr.mxu0 0.0
    %2284 = vmatpush1.msra.mxu0 0.0
    %2285 = vmatprep.subr.mxu0 0.0
    %2286 = vmatpush1.msra.mxu0 0.0
    %2287 = vmatprep.subr.mxu0 0.0
    %2288 = vmatpush1.msra.mxu0 0.0
    %2289 = vmatprep.subr.mxu0 0.0
    %2290 = vmatpush1.msra.mxu0 0.0
    %2291 = vmatprep.subr.mxu0 0.0
    %2292 = vmatpush1.msra.mxu0 0.0
    %2293 = vmatprep.subr.mxu0 0.0
    %2294 = vmatpush1.msra.mxu0 0.0
    %2295 = vmatprep.mubr.f32.mxu0 0.0
    %2296 = vmatmul.mubr.f32.gmra.mrb[0].mxu0 %v2149
    %v2297 = vpop.f32.mrb[0].mxu0
    %v2298 = vadd.f32 0.0, %v2297
    %v2299 = vpop.f32.mrb[0].mxu0
    %2300 = vmatprep.mubr.f32.mxu0 0.0
    %2301 = vmatmul.mubr.f32.gmra.mrb[0].mxu0 %v2152
    %v2302 = vpop.f32.mrb[0].mxu0
    %v2303 = vadd.f32 0.0, %v2302
    %v2304 = vpop.f32.mrb[0].mxu0
    %2305 = vdwg.mxu0
    %s2306 = scalar_lea.vmem %s8, 1152
    %v2307 = vld [vmem:[%s2306] sm:$0xff]
    %v2308 = vld [vmem:[%s2306 + $0x8] sm:$0xff]
    %v2309 = vld [vmem:[%s2306 + $0x10] sm:$0xff]
    %v2310 = vld [vmem:[%s2306 + $0x18] sm:$0xff]
    %v2311 = vld [vmem:[%s2306 + $0x20] sm:$0xff]
    %v2312 = vld [vmem:[%s2306 + $0x28] sm:$0xff]
    %v2313 = vld [vmem:[%s2306 + $0x30] sm:$0xff]
    %v2314 = vld [vmem:[%s2306 + $0x38] sm:$0xff]
    %v2315 = vld [vmem:[%s2306 + $0x40] sm:$0xff]
    %v2316 = vld [vmem:[%s2306 + $0x48] sm:$0xff]
    %v2317 = vld [vmem:[%s2306 + $0x50] sm:$0xff]
    %v2318 = vld [vmem:[%s2306 + $0x58] sm:$0xff]
    %v2319 = vld [vmem:[%s2306 + $0x60] sm:$0xff]
    %v2320 = vld [vmem:[%s2306 + $0x68] sm:$0xff]
    %v2321 = vld [vmem:[%s2306 + $0x70] sm:$0xff]
    %v2322 = vld [vmem:[%s2306 + $0x78] sm:$0xff]
    %v2323 = vld [vmem:[%s2306 + $0x80] sm:$0xff]
    %v2324 = vld [vmem:[%s2306 + $0x88] sm:$0xff]
    %v2325 = vld [vmem:[%s2306 + $0x90] sm:$0xff]
    %v2326 = vld [vmem:[%s2306 + $0x98] sm:$0xff]
    %v2327 = vld [vmem:[%s2306 + $0xa0] sm:$0xff]
    %v2328 = vld [vmem:[%s2306 + $0xa8] sm:$0xff]
    %v2329 = vld [vmem:[%s2306 + $0xb0] sm:$0xff]
    %v2330 = vld [vmem:[%s2306 + $0xb8] sm:$0xff]
    %v2331 = vld [vmem:[%s2306 + $0xc0] sm:$0xff]
    %v2332 = vld [vmem:[%s2306 + $0xc8] sm:$0xff]
    %v2333 = vld [vmem:[%s2306 + $0xd0] sm:$0xff]
    %v2334 = vld [vmem:[%s2306 + $0xd8] sm:$0xff]
    %v2335 = vld [vmem:[%s2306 + $0xe0] sm:$0xff]
    %v2336 = vld [vmem:[%s2306 + $0xe8] sm:$0xff]
    %v2337 = vld [vmem:[%s2306 + $0xf0] sm:$0xff]
    %v2338 = vld [vmem:[%s2306 + $0xf8] sm:$0xff]
    %v2339 = vld [vmem:[%s2306 + $0x100] sm:$0xff]
    %v2340 = vld [vmem:[%s2306 + $0x108] sm:$0xff]
    %v2341 = vld [vmem:[%s2306 + $0x110] sm:$0xff]
    %v2342 = vld [vmem:[%s2306 + $0x118] sm:$0xff]
    %v2343 = vld [vmem:[%s2306 + $0x120] sm:$0xff]
    %v2344 = vld [vmem:[%s2306 + $0x128] sm:$0xff]
    %v2345 = vld [vmem:[%s2306 + $0x130] sm:$0xff]
    %v2346 = vld [vmem:[%s2306 + $0x138] sm:$0xff]
    %v2347 = vld [vmem:[%s2306 + $0x140] sm:$0xff]
    %v2348 = vld [vmem:[%s2306 + $0x148] sm:$0xff]
    %v2349 = vld [vmem:[%s2306 + $0x150] sm:$0xff]
    %v2350 = vld [vmem:[%s2306 + $0x158] sm:$0xff]
    %v2351 = vld [vmem:[%s2306 + $0x160] sm:$0xff]
    %v2352 = vld [vmem:[%s2306 + $0x168] sm:$0xff]
    %v2353 = vld [vmem:[%s2306 + $0x170] sm:$0xff]
    %v2354 = vld [vmem:[%s2306 + $0x178] sm:$0xff]
    %v2355 = vld [vmem:[%s2306 + $0x180] sm:$0xff]
    %v2356 = vld [vmem:[%s2306 + $0x188] sm:$0xff]
    %v2357 = vld [vmem:[%s2306 + $0x190] sm:$0xff]
    %v2358 = vld [vmem:[%s2306 + $0x198] sm:$0xff]
    %v2359 = vld [vmem:[%s2306 + $0x1a0] sm:$0xff]
    %v2360 = vld [vmem:[%s2306 + $0x1a8] sm:$0xff]
    %v2361 = vld [vmem:[%s2306 + $0x1b0] sm:$0xff]
    %v2362 = vld [vmem:[%s2306 + $0x1b8] sm:$0xff]
    %v2363 = vld [vmem:[%s2306 + $0x1c0] sm:$0xff]
    %v2364 = vld [vmem:[%s2306 + $0x1c8] sm:$0xff]
    %v2365 = vld [vmem:[%s2306 + $0x1d0] sm:$0xff]
    %v2366 = vld [vmem:[%s2306 + $0x1d8] sm:$0xff]
    %v2367 = vld [vmem:[%s2306 + $0x1e0] sm:$0xff]
    %v2368 = vld [vmem:[%s2306 + $0x1e8] sm:$0xff]
    %v2369 = vld [vmem:[%s2306 + $0x1f0] sm:$0xff]
    %v2370 = vld [vmem:[%s2306 + $0x1f8] sm:$0xff]
    %v2371 = vld [vmem:[%s2306 + $0x200] sm:$0xff]
    %v2372 = vld [vmem:[%s2306 + $0x208] sm:$0xff]
    %v2373 = vld [vmem:[%s2306 + $0x210] sm:$0xff]
    %v2374 = vld [vmem:[%s2306 + $0x218] sm:$0xff]
    %v2375 = vld [vmem:[%s2306 + $0x220] sm:$0xff]
    %v2376 = vld [vmem:[%s2306 + $0x228] sm:$0xff]
    %v2377 = vld [vmem:[%s2306 + $0x230] sm:$0xff]
    %v2378 = vld [vmem:[%s2306 + $0x238] sm:$0xff]
    %v2379 = vld [vmem:[%s2306 + $0x240] sm:$0xff]
    %v2380 = vld [vmem:[%s2306 + $0x248] sm:$0xff]
    %v2381 = vld [vmem:[%s2306 + $0x250] sm:$0xff]
    %v2382 = vld [vmem:[%s2306 + $0x258] sm:$0xff]
    %v2383 = vld [vmem:[%s2306 + $0x260] sm:$0xff]
    %v2384 = vld [vmem:[%s2306 + $0x268] sm:$0xff]
    %v2385 = vld [vmem:[%s2306 + $0x270] sm:$0xff]
    %v2386 = vld [vmem:[%s2306 + $0x278] sm:$0xff]
    %v2387 = vld [vmem:[%s2306 + $0x280] sm:$0xff]
    %v2388 = vld [vmem:[%s2306 + $0x288] sm:$0xff]
    %v2389 = vld [vmem:[%s2306 + $0x290] sm:$0xff]
    %v2390 = vld [vmem:[%s2306 + $0x298] sm:$0xff]
    %v2391 = vld [vmem:[%s2306 + $0x2a0] sm:$0xff]
    %v2392 = vld [vmem:[%s2306 + $0x2a8] sm:$0xff]
    %v2393 = vld [vmem:[%s2306 + $0x2b0] sm:$0xff]
    %v2394 = vld [vmem:[%s2306 + $0x2b8] sm:$0xff]
    %v2395 = vld [vmem:[%s2306 + $0x2c0] sm:$0xff]
    %v2396 = vld [vmem:[%s2306 + $0x2c8] sm:$0xff]
    %v2397 = vld [vmem:[%s2306 + $0x2d0] sm:$0xff]
    %v2398 = vld [vmem:[%s2306 + $0x2d8] sm:$0xff]
    %v2399 = vld [vmem:[%s2306 + $0x2e0] sm:$0xff]
    %v2400 = vld [vmem:[%s2306 + $0x2e8] sm:$0xff]
    %v2401 = vld [vmem:[%s2306 + $0x2f0] sm:$0xff]
    %v2402 = vld [vmem:[%s2306 + $0x2f8] sm:$0xff]
    %v2403 = vld [vmem:[%s2306 + $0x300] sm:$0xff]
    %v2404 = vld [vmem:[%s2306 + $0x308] sm:$0xff]
    %v2405 = vld [vmem:[%s2306 + $0x310] sm:$0xff]
    %v2406 = vld [vmem:[%s2306 + $0x318] sm:$0xff]
    %v2407 = vld [vmem:[%s2306 + $0x320] sm:$0xff]
    %v2408 = vld [vmem:[%s2306 + $0x328] sm:$0xff]
    %v2409 = vld [vmem:[%s2306 + $0x330] sm:$0xff]
    %v2410 = vld [vmem:[%s2306 + $0x338] sm:$0xff]
    %v2411 = vld [vmem:[%s2306 + $0x340] sm:$0xff]
    %v2412 = vld [vmem:[%s2306 + $0x348] sm:$0xff]
    %v2413 = vld [vmem:[%s2306 + $0x350] sm:$0xff]
    %v2414 = vld [vmem:[%s2306 + $0x358] sm:$0xff]
    %v2415 = vld [vmem:[%s2306 + $0x360] sm:$0xff]
    %v2416 = vld [vmem:[%s2306 + $0x368] sm:$0xff]
    %v2417 = vld [vmem:[%s2306 + $0x370] sm:$0xff]
    %v2418 = vld [vmem:[%s2306 + $0x378] sm:$0xff]
    %v2419 = vld [vmem:[%s2306 + $0x380] sm:$0xff]
    %v2420 = vld [vmem:[%s2306 + $0x388] sm:$0xff]
    %v2421 = vld [vmem:[%s2306 + $0x390] sm:$0xff]
    %v2422 = vld [vmem:[%s2306 + $0x398] sm:$0xff]
    %v2423 = vld [vmem:[%s2306 + $0x3a0] sm:$0xff]
    %v2424 = vld [vmem:[%s2306 + $0x3a8] sm:$0xff]
    %v2425 = vld [vmem:[%s2306 + $0x3b0] sm:$0xff]
    %v2426 = vld [vmem:[%s2306 + $0x3b8] sm:$0xff]
    %v2427 = vld [vmem:[%s2306 + $0x3c0] sm:$0xff]
    %v2428 = vld [vmem:[%s2306 + $0x3c8] sm:$0xff]
    %v2429 = vld [vmem:[%s2306 + $0x3d0] sm:$0xff]
    %v2430 = vld [vmem:[%s2306 + $0x3d8] sm:$0xff]
    %v2431 = vld [vmem:[%s2306 + $0x3e0] sm:$0xff]
    %v2432 = vld [vmem:[%s2306 + $0x3e8] sm:$0xff]
    %v2433 = vld [vmem:[%s2306 + $0x3f0] sm:$0xff]
    %v2434 = vld [vmem:[%s2306 + $0x3f8] sm:$0xff]
    %v2435 = vld [vmem:[%s2306 + $0x400] sm:$0xff]
    %v2436 = vld [vmem:[%s2306 + $0x408] sm:$0xff]
    %v2437 = vld [vmem:[%s2306 + $0x410] sm:$0xff]
    %v2438 = vld [vmem:[%s2306 + $0x418] sm:$0xff]
    %v2439 = vld [vmem:[%s2306 + $0x420] sm:$0xff]
    %v2440 = vld [vmem:[%s2306 + $0x428] sm:$0xff]
    %v2441 = vld [vmem:[%s2306 + $0x430] sm:$0xff]
    %v2442 = vld [vmem:[%s2306 + $0x438] sm:$0xff]
    %v2443 = vld [vmem:[%s2306 + $0x440] sm:$0xff]
    %v2444 = vld [vmem:[%s2306 + $0x448] sm:$0xff]
    %v2445 = vld [vmem:[%s2306 + $0x450] sm:$0xff]
    %v2446 = vld [vmem:[%s2306 + $0x458] sm:$0xff]
    %v2447 = vld [vmem:[%s2306 + $0x460] sm:$0xff]
    %v2448 = vld [vmem:[%s2306 + $0x468] sm:$0xff]
    %v2449 = vld [vmem:[%s2306 + $0x470] sm:$0xff]
    %v2450 = vld [vmem:[%s2306 + $0x478] sm:$0xff]
    %2451 = vmatprep.subr.mxu0 %v2308
    %2452 = vmatpush1.msra.mxu0 %v2307
    %2453 = vmatprep.subr.mxu0 %v2311
    %2454 = vmatpush1.msra.mxu0 %v2310
    %2455 = vmatprep.subr.mxu0 %v2314
    %2456 = vmatpush1.msra.mxu0 %v2313
    %2457 = vmatprep.subr.mxu0 %v2317
    %2458 = vmatpush1.msra.mxu0 %v2316
    %2459 = vmatprep.subr.mxu0 %v2320
    %2460 = vmatpush1.msra.mxu0 %v2319
    %2461 = vmatprep.subr.mxu0 %v2323
    %2462 = vmatpush1.msra.mxu0 %v2322
    %2463 = vmatprep.subr.mxu0 %v2326
    %2464 = vmatpush1.msra.mxu0 %v2325
    %2465 = vmatprep.subr.mxu0 %v2329
    %2466 = vmatpush1.msra.mxu0 %v2328
    %2467 = vmatprep.subr.mxu0 %v2332
    %2468 = vmatpush1.msra.mxu0 %v2331
    %2469 = vmatprep.subr.mxu0 %v2335
    %2470 = vmatpush1.msra.mxu0 %v2334
    %2471 = vmatprep.subr.mxu0 %v2338
    %2472 = vmatpush1.msra.mxu0 %v2337
    %2473 = vmatprep.subr.mxu0 %v2341
    %2474 = vmatpush1.msra.mxu0 %v2340
    %2475 = vmatprep.subr.mxu0 %v2344
    %2476 = vmatpush1.msra.mxu0 %v2343
    %2477 = vmatprep.subr.mxu0 %v2347
    %2478 = vmatpush1.msra.mxu0 %v2346
    %2479 = vmatprep.subr.mxu0 %v2350
    %2480 = vmatpush1.msra.mxu0 %v2349
    %2481 = vmatprep.subr.mxu0 %v2353
    %2482 = vmatpush1.msra.mxu0 %v2352
    %2483 = vmatprep.subr.mxu0 %v2356
    %2484 = vmatpush1.msra.mxu0 %v2355
    %2485 = vmatprep.subr.mxu0 %v2359
    %2486 = vmatpush1.msra.mxu0 %v2358
    %2487 = vmatprep.subr.mxu0 %v2362
    %2488 = vmatpush1.msra.mxu0 %v2361
    %2489 = vmatprep.subr.mxu0 %v2365
    %2490 = vmatpush1.msra.mxu0 %v2364
    %2491 = vmatprep.subr.mxu0 %v2368
    %2492 = vmatpush1.msra.mxu0 %v2367
    %2493 = vmatprep.subr.mxu0 %v2371
    %2494 = vmatpush1.msra.mxu0 %v2370
    %2495 = vmatprep.subr.mxu0 %v2374
    %2496 = vmatpush1.msra.mxu0 %v2373
    %2497 = vmatprep.subr.mxu0 %v2377
    %2498 = vmatpush1.msra.mxu0 %v2376
    %2499 = vmatprep.subr.mxu0 %v2380
    %2500 = vmatpush1.msra.mxu0 %v2379
    %2501 = vmatprep.subr.mxu0 %v2383
    %2502 = vmatpush1.msra.mxu0 %v2382
    %2503 = vmatprep.subr.mxu0 %v2386
    %2504 = vmatpush1.msra.mxu0 %v2385
    %2505 = vmatprep.subr.mxu0 %v2389
    %2506 = vmatpush1.msra.mxu0 %v2388
    %2507 = vmatprep.subr.mxu0 %v2392
    %2508 = vmatpush1.msra.mxu0 %v2391
    %2509 = vmatprep.subr.mxu0 %v2395
    %2510 = vmatpush1.msra.mxu0 %v2394
    %2511 = vmatprep.subr.mxu0 %v2398
    %2512 = vmatpush1.msra.mxu0 %v2397
    %2513 = vmatprep.subr.mxu0 %v2401
    %2514 = vmatpush1.msra.mxu0 %v2400
    %2515 = vmatprep.mubr.f32.mxu0 %v2223
    %2516 = vmatmul.mubr.f32.gmra.mrb[0].mxu0 %v2221
    %v2517 = vpop.f32.mrb[0].mxu0
    %v2518 = vadd.f32 0.0, %v2517
    %v2519 = vpop.f32.mrb[0].mxu0
    %v2520 = vadd.f32 0.0, %v2519
    %2521 = vmatprep.mubr.f32.mxu0 %v2229
    %2522 = vmatmul.mubr.f32.gmra.mrb[0].mxu0 %v2227
    %v2523 = vpop.f32.mrb[0].mxu0
    %v2524 = vadd.f32 0.0, %v2523
    %v2525 = vpop.f32.mrb[0].mxu0
    %v2526 = vadd.f32 0.0, %v2525
    %2527 = vdwg.mxu0
    %2528 = vmatprep.subr.mxu0 %v2404
    %2529 = vmatpush1.msra.mxu0 %v2403
    %2530 = vmatprep.subr.mxu0 %v2407
    %2531 = vmatpush1.msra.mxu0 %v2406
    %2532 = vmatprep.subr.mxu0 %v2410
    %2533 = vmatpush1.msra.mxu0 %v2409
    %2534 = vmatprep.subr.mxu0 %v2413
    %2535 = vmatpush1.msra.mxu0 %v2412
    %2536 = vmatprep.subr.mxu0 %v2416
    %2537 = vmatpush1.msra.mxu0 %v2415
    %2538 = vmatprep.subr.mxu0 %v2419
    %2539 = vmatpush1.msra.mxu0 %v2418
    %2540 = vmatprep.subr.mxu0 %v2422
    %2541 = vmatpush1.msra.mxu0 %v2421
    %2542 = vmatprep.subr.mxu0 %v2425
    %2543 = vmatpush1.msra.mxu0 %v2424
    %2544 = vmatprep.subr.mxu0 %v2428
    %2545 = vmatpush1.msra.mxu0 %v2427
    %2546 = vmatprep.subr.mxu0 %v2431
    %2547 = vmatpush1.msra.mxu0 %v2430
    %2548 = vmatprep.subr.mxu0 %v2434
    %2549 = vmatpush1.msra.mxu0 %v2433
    %2550 = vmatprep.subr.mxu0 %v2437
    %2551 = vmatpush1.msra.mxu0 %v2436
    %2552 = vmatprep.subr.mxu0 %v2440
    %2553 = vmatpush1.msra.mxu0 %v2439
    %2554 = vmatprep.subr.mxu0 %v2443
    %2555 = vmatpush1.msra.mxu0 %v2442
    %2556 = vmatprep.subr.mxu0 %v2446
    %2557 = vmatpush1.msra.mxu0 %v2445
    %2558 = vmatprep.subr.mxu0 %v2449
    %2559 = vmatpush1.msra.mxu0 %v2448
    %2560 = vmatprep.subr.mxu0 0.0
    %2561 = vmatpush1.msra.mxu0 0.0
    %2562 = vmatprep.subr.mxu0 0.0
    %2563 = vmatpush1.msra.mxu0 0.0
    %2564 = vmatprep.subr.mxu0 0.0
    %2565 = vmatpush1.msra.mxu0 0.0
    %2566 = vmatprep.subr.mxu0 0.0
    %2567 = vmatpush1.msra.mxu0 0.0
    %2568 = vmatprep.subr.mxu0 0.0
    %2569 = vmatpush1.msra.mxu0 0.0
    %2570 = vmatprep.subr.mxu0 0.0
    %2571 = vmatpush1.msra.mxu0 0.0
    %2572 = vmatprep.subr.mxu0 0.0
    %2573 = vmatpush1.msra.mxu0 0.0
    %2574 = vmatprep.subr.mxu0 0.0
    %2575 = vmatpush1.msra.mxu0 0.0
    %2576 = vmatprep.subr.mxu0 0.0
    %2577 = vmatpush1.msra.mxu0 0.0
    %2578 = vmatprep.subr.mxu0 0.0
    %2579 = vmatpush1.msra.mxu0 0.0
    %2580 = vmatprep.subr.mxu0 0.0
    %2581 = vmatpush1.msra.mxu0 0.0
    %2582 = vmatprep.subr.mxu0 0.0
    %2583 = vmatpush1.msra.mxu0 0.0
    %2584 = vmatprep.subr.mxu0 0.0
    %2585 = vmatpush1.msra.mxu0 0.0
    %2586 = vmatprep.subr.mxu0 0.0
    %2587 = vmatpush1.msra.mxu0 0.0
    %2588 = vmatprep.subr.mxu0 0.0
    %2589 = vmatpush1.msra.mxu0 0.0
    %2590 = vmatprep.subr.mxu0 0.0
    %2591 = vmatpush1.msra.mxu0 0.0
    %2592 = vmatprep.mubr.f32.mxu0 0.0
    %2593 = vmatmul.mubr.f32.gmra.mrb[0].mxu0 %v2298
    %v2594 = vpop.f32.mrb[0].mxu0
    %v2595 = vadd.f32 %v2518, %v2594
    %v2596 = vpop.f32.mrb[0].mxu0
    %v2597 = vadd.f32 %v2520, %v2596
    %2598 = vmatprep.mubr.f32.mxu0 0.0
    %2599 = vmatmul.mubr.f32.gmra.mrb[0].mxu0 %v2303
    %v2600 = vpop.f32.mrb[0].mxu0
    %v2601 = vadd.f32 %v2524, %v2600
    %v2602 = vpop.f32.mrb[0].mxu0
    %v2603 = vadd.f32 %v2526, %v2602
    %2604 = vdwg.mxu0
    %2605 = vmatprep.subr.mxu0 0.0
    %2606 = vmatpush1.msra.mxu0 %v2309
    %2607 = vmatprep.subr.mxu0 0.0
    %2608 = vmatpush1.msra.mxu0 %v2312
    %2609 = vmatprep.subr.mxu0 0.0
    %2610 = vmatpush1.msra.mxu0 %v2315
    %2611 = vmatprep.subr.mxu0 0.0
    %2612 = vmatpush1.msra.mxu0 %v2318
    %2613 = vmatprep.subr.mxu0 0.0
    %2614 = vmatpush1.msra.mxu0 %v2321
    %2615 = vmatprep.subr.mxu0 0.0
    %2616 = vmatpush1.msra.mxu0 %v2324
    %2617 = vmatprep.subr.mxu0 0.0
    %2618 = vmatpush1.msra.mxu0 %v2327
    %2619 = vmatprep.subr.mxu0 0.0
    %2620 = vmatpush1.msra.mxu0 %v2330
    %2621 = vmatprep.subr.mxu0 0.0
    %2622 = vmatpush1.msra.mxu0 %v2333
    %2623 = vmatprep.subr.mxu0 0.0
    %2624 = vmatpush1.msra.mxu0 %v2336
    %2625 = vmatprep.subr.mxu0 0.0
    %2626 = vmatpush1.msra.mxu0 %v2339
    %2627 = vmatprep.subr.mxu0 0.0
    %2628 = vmatpush1.msra.mxu0 %v2342
    %2629 = vmatprep.subr.mxu0 0.0
    %2630 = vmatpush1.msra.mxu0 %v2345
    %2631 = vmatprep.subr.mxu0 0.0
    %2632 = vmatpush1.msra.mxu0 %v2348
    %2633 = vmatprep.subr.mxu0 0.0
    %2634 = vmatpush1.msra.mxu0 %v2351
    %2635 = vmatprep.subr.mxu0 0.0
    %2636 = vmatpush1.msra.mxu0 %v2354
    %2637 = vmatprep.subr.mxu0 0.0
    %2638 = vmatpush1.msra.mxu0 %v2357
    %2639 = vmatprep.subr.mxu0 0.0
    %2640 = vmatpush1.msra.mxu0 %v2360
    %2641 = vmatprep.subr.mxu0 0.0
    %2642 = vmatpush1.msra.mxu0 %v2363
    %2643 = vmatprep.subr.mxu0 0.0
    %2644 = vmatpush1.msra.mxu0 %v2366
    %2645 = vmatprep.subr.mxu0 0.0
    %2646 = vmatpush1.msra.mxu0 %v2369
    %2647 = vmatprep.subr.mxu0 0.0
    %2648 = vmatpush1.msra.mxu0 %v2372
    %2649 = vmatprep.subr.mxu0 0.0
    %2650 = vmatpush1.msra.mxu0 %v2375
    %2651 = vmatprep.subr.mxu0 0.0
    %2652 = vmatpush1.msra.mxu0 %v2378
    %2653 = vmatprep.subr.mxu0 0.0
    %2654 = vmatpush1.msra.mxu0 %v2381
    %2655 = vmatprep.subr.mxu0 0.0
    %2656 = vmatpush1.msra.mxu0 %v2384
    %2657 = vmatprep.subr.mxu0 0.0
    %2658 = vmatpush1.msra.mxu0 %v2387
    %2659 = vmatprep.subr.mxu0 0.0
    %2660 = vmatpush1.msra.mxu0 %v2390
    %2661 = vmatprep.subr.mxu0 0.0
    %2662 = vmatpush1.msra.mxu0 %v2393
    %2663 = vmatprep.subr.mxu0 0.0
    %2664 = vmatpush1.msra.mxu0 %v2396
    %2665 = vmatprep.subr.mxu0 0.0
    %2666 = vmatpush1.msra.mxu0 %v2399
    %2667 = vmatprep.subr.mxu0 0.0
    %2668 = vmatpush1.msra.mxu0 %v2402
    %2669 = vmatprep.mubr.f32.mxu0 %v2223
    %2670 = vmatmul.mubr.f32.gmra.mrb[0].mxu0 %v2221
    %v2671 = vpop.f32.mrb[0].mxu0
    %v2672 = vadd.f32 0.0, %v2671
    %v2673 = vpop.f32.mrb[0].mxu0
    %2674 = vmatprep.mubr.f32.mxu0 %v2229
    %2675 = vmatmul.mubr.f32.gmra.mrb[0].mxu0 %v2227
    %v2676 = vpop.f32.mrb[0].mxu0
    %v2677 = vadd.f32 0.0, %v2676
    %v2678 = vpop.f32.mrb[0].mxu0
    %2679 = vdwg.mxu0
    %2680 = vmatprep.subr.mxu0 0.0
    %2681 = vmatpush1.msra.mxu0 %v2405
    %2682 = vmatprep.subr.mxu0 0.0
    %2683 = vmatpush1.msra.mxu0 %v2408
    %2684 = vmatprep.subr.mxu0 0.0
    %2685 = vmatpush1.msra.mxu0 %v2411
    %2686 = vmatprep.subr.mxu0 0.0
    %2687 = vmatpush1.msra.mxu0 %v2414
    %2688 = vmatprep.subr.mxu0 0.0
    %2689 = vmatpush1.msra.mxu0 %v2417
    %2690 = vmatprep.subr.mxu0 0.0
    %2691 = vmatpush1.msra.mxu0 %v2420
    %2692 = vmatprep.subr.mxu0 0.0
    %2693 = vmatpush1.msra.mxu0 %v2423
    %2694 = vmatprep.subr.mxu0 0.0
    %2695 = vmatpush1.msra.mxu0 %v2426
    %2696 = vmatprep.subr.mxu0 0.0
    %2697 = vmatpush1.msra.mxu0 %v2429
    %2698 = vmatprep.subr.mxu0 0.0
    %2699 = vmatpush1.msra.mxu0 %v2432
    %2700 = vmatprep.subr.mxu0 0.0
    %2701 = vmatpush1.msra.mxu0 %v2435
    %2702 = vmatprep.subr.mxu0 0.0
    %2703 = vmatpush1.msra.mxu0 %v2438
    %2704 = vmatprep.subr.mxu0 0.0
    %2705 = vmatpush1.msra.mxu0 %v2441
    %2706 = vmatprep.subr.mxu0 0.0
    %2707 = vmatpush1.msra.mxu0 %v2444
    %2708 = vmatprep.subr.mxu0 0.0
    %2709 = vmatpush1.msra.mxu0 %v2447
    %2710 = vmatprep.subr.mxu0 0.0
    %2711 = vmatpush1.msra.mxu0 %v2450
    %2712 = vmatprep.subr.mxu0 0.0
    %2713 = vmatpush1.msra.mxu0 0.0
    %2714 = vmatprep.subr.mxu0 0.0
    %2715 = vmatpush1.msra.mxu0 0.0
    %2716 = vmatprep.subr.mxu0 0.0
    %2717 = vmatpush1.msra.mxu0 0.0
    %2718 = vmatprep.subr.mxu0 0.0
    %2719 = vmatpush1.msra.mxu0 0.0
    %2720 = vmatprep.subr.mxu0 0.0
    %2721 = vmatpush1.msra.mxu0 0.0
    %2722 = vmatprep.subr.mxu0 0.0
    %2723 = vmatpush1.msra.mxu0 0.0
    %2724 = vmatprep.subr.mxu0 0.0
    %2725 = vmatpush1.msra.mxu0 0.0
    %2726 = vmatprep.subr.mxu0 0.0
    %2727 = vmatpush1.msra.mxu0 0.0
    %2728 = vmatprep.subr.mxu0 0.0
    %2729 = vmatpush1.msra.mxu0 0.0
    %2730 = vmatprep.subr.mxu0 0.0
    %2731 = vmatpush1.msra.mxu0 0.0
    %2732 = vmatprep.subr.mxu0 0.0
    %2733 = vmatpush1.msra.mxu0 0.0
    %2734 = vmatprep.subr.mxu0 0.0
    %2735 = vmatpush1.msra.mxu0 0.0
    %2736 = vmatprep.subr.mxu0 0.0
    %2737 = vmatpush1.msra.mxu0 0.0
    %2738 = vmatprep.subr.mxu0 0.0
    %2739 = vmatpush1.msra.mxu0 0.0
    %2740 = vmatprep.subr.mxu0 0.0
    %2741 = vmatpush1.msra.mxu0 0.0
    %2742 = vmatprep.subr.mxu0 0.0
    %2743 = vmatpush1.msra.mxu0 0.0
    %2744 = vmatprep.mubr.f32.mxu0 0.0
    %2745 = vmatmul.mubr.f32.gmra.mrb[0].mxu0 %v2298
    %v2746 = vpop.f32.mrb[0].mxu0
    %v2747 = vadd.f32 %v2672, %v2746
    %v2748 = vpop.f32.mrb[0].mxu0
    %2749 = vmatprep.mubr.f32.mxu0 0.0
    %2750 = vmatmul.mubr.f32.gmra.mrb[0].mxu0 %v2303
    %v2751 = vpop.f32.mrb[0].mxu0
    %v2752 = vadd.f32 %v2677, %v2751
    %v2753 = vpop.f32.mrb[0].mxu0
    %2754 = vdwg.mxu0
    %2755 = vmatprep.subr.mxu0 %v2002
    %2756 = vmatpush1.msra.mxu0 %v2001
    %2757 = vmatprep.subr.mxu0 %v2005
    %2758 = vmatpush1.msra.mxu0 %v2004
    %2759 = vmatprep.subr.mxu0 %v2008
    %2760 = vmatpush1.msra.mxu0 %v2007
    %2761 = vmatprep.subr.mxu0 %v2011
    %2762 = vmatpush1.msra.mxu0 %v2010
    %2763 = vmatprep.subr.mxu0 %v2014
    %2764 = vmatpush1.msra.mxu0 %v2013
    %2765 = vmatprep.subr.mxu0 %v2017
    %2766 = vmatpush1.msra.mxu0 %v2016
    %2767 = vmatprep.subr.mxu0 %v2020
    %2768 = vmatpush1.msra.mxu0 %v2019
    %2769 = vmatprep.subr.mxu0 %v2023
    %2770 = vmatpush1.msra.mxu0 %v2022
    %2771 = vmatprep.subr.mxu0 %v2026
    %2772 = vmatpush1.msra.mxu0 %v2025
    %2773 = vmatprep.subr.mxu0 %v2029
    %2774 = vmatpush1.msra.mxu0 %v2028
    %2775 = vmatprep.subr.mxu0 %v2032
    %2776 = vmatpush1.msra.mxu0 %v2031
    %2777 = vmatprep.subr.mxu0 %v2035
    %2778 = vmatpush1.msra.mxu0 %v2034
    %2779 = vmatprep.subr.mxu0 %v2038
    %2780 = vmatpush1.msra.mxu0 %v2037
    %2781 = vmatprep.subr.mxu0 %v2041
    %2782 = vmatpush1.msra.mxu0 %v2040
    %2783 = vmatprep.subr.mxu0 %v2044
    %2784 = vmatpush1.msra.mxu0 %v2043
    %2785 = vmatprep.subr.mxu0 %v2047
    %2786 = vmatpush1.msra.mxu0 %v2046
    %2787 = vmatprep.subr.mxu0 %v2050
    %2788 = vmatpush1.msra.mxu0 %v2049
    %2789 = vmatprep.subr.mxu0 %v2053
    %2790 = vmatpush1.msra.mxu0 %v2052
    %2791 = vmatprep.subr.mxu0 %v2056
    %2792 = vmatpush1.msra.mxu0 %v2055
    %2793 = vmatprep.subr.mxu0 %v2059
    %2794 = vmatpush1.msra.mxu0 %v2058
    %2795 = vmatprep.subr.mxu0 %v2062
    %2796 = vmatpush1.msra.mxu0 %v2061
    %2797 = vmatprep.subr.mxu0 %v2065
    %2798 = vmatpush1.msra.mxu0 %v2064
    %2799 = vmatprep.subr.mxu0 %v2068
    %2800 = vmatpush1.msra.mxu0 %v2067
    %2801 = vmatprep.subr.mxu0 %v2071
    %2802 = vmatpush1.msra.mxu0 %v2070
    %2803 = vmatprep.subr.mxu0 %v2074
    %2804 = vmatpush1.msra.mxu0 %v2073
    %2805 = vmatprep.subr.mxu0 %v2077
    %2806 = vmatpush1.msra.mxu0 %v2076
    %2807 = vmatprep.subr.mxu0 %v2080
    %2808 = vmatpush1.msra.mxu0 %v2079
    %2809 = vmatprep.subr.mxu0 %v2083
    %2810 = vmatpush1.msra.mxu0 %v2082
    %2811 = vmatprep.subr.mxu0 %v2086
    %2812 = vmatpush1.msra.mxu0 %v2085
    %2813 = vmatprep.subr.mxu0 %v2089
    %2814 = vmatpush1.msra.mxu0 %v2088
    %2815 = vmatprep.subr.mxu0 %v2092
    %2816 = vmatpush1.msra.mxu0 %v2091
    %2817 = vmatprep.subr.mxu0 %v2095
    %2818 = vmatpush1.msra.mxu0 %v2094
    %2819 = vmatprep.mubr.f32.mxu0 %v1918
    %2820 = vmatmul.mubr.f32.gmra.mrb[0].mxu0 %v1916
    %v2821 = vpop.f32.mrb[0].mxu0
    %v2822 = vadd.f32 %v2595, %v2821
    %v2823 = vpop.f32.mrb[0].mxu0
    %v2824 = vadd.f32 %v2597, %v2823
    %2825 = vmatprep.mubr.f32.mxu0 %v1924
    %2826 = vmatmul.mubr.f32.gmra.mrb[0].mxu0 %v1922
    %v2827 = vpop.f32.mrb[0].mxu0
    %v2828 = vadd.f32 %v2601, %v2827
    %v2829 = vpop.f32.mrb[0].mxu0
    %v2830 = vadd.f32 %v2603, %v2829
    %2831 = vdwg.mxu0
    %2832 = vmatprep.subr.mxu0 %v2098
    %2833 = vmatpush1.msra.mxu0 %v2097
    %2834 = vmatprep.subr.mxu0 %v2101
    %2835 = vmatpush1.msra.mxu0 %v2100
    %2836 = vmatprep.subr.mxu0 %v2104
    %2837 = vmatpush1.msra.mxu0 %v2103
    %2838 = vmatprep.subr.mxu0 %v2107
    %2839 = vmatpush1.msra.mxu0 %v2106
    %2840 = vmatprep.subr.mxu0 %v2110
    %2841 = vmatpush1.msra.mxu0 %v2109
    %2842 = vmatprep.subr.mxu0 %v2113
    %2843 = vmatpush1.msra.mxu0 %v2112
    %2844 = vmatprep.subr.mxu0 %v2116
    %2845 = vmatpush1.msra.mxu0 %v2115
    %2846 = vmatprep.subr.mxu0 %v2119
    %2847 = vmatpush1.msra.mxu0 %v2118
    %2848 = vmatprep.subr.mxu0 %v2122
    %2849 = vmatpush1.msra.mxu0 %v2121
    %2850 = vmatprep.subr.mxu0 %v2125
    %2851 = vmatpush1.msra.mxu0 %v2124
    %2852 = vmatprep.subr.mxu0 %v2128
    %2853 = vmatpush1.msra.mxu0 %v2127
    %2854 = vmatprep.subr.mxu0 %v2131
    %2855 = vmatpush1.msra.mxu0 %v2130
    %2856 = vmatprep.subr.mxu0 %v2134
    %2857 = vmatpush1.msra.mxu0 %v2133
    %2858 = vmatprep.subr.mxu0 %v2137
    %2859 = vmatpush1.msra.mxu0 %v2136
    %2860 = vmatprep.subr.mxu0 %v2140
    %2861 = vmatpush1.msra.mxu0 %v2139
    %2862 = vmatprep.subr.mxu0 %v2143
    %2863 = vmatpush1.msra.mxu0 %v2142
    %2864 = vmatprep.subr.mxu0 0.0
    %2865 = vmatpush1.msra.mxu0 0.0
    %2866 = vmatprep.subr.mxu0 0.0
    %2867 = vmatpush1.msra.mxu0 0.0
    %2868 = vmatprep.subr.mxu0 0.0
    %2869 = vmatpush1.msra.mxu0 0.0
    %2870 = vmatprep.subr.mxu0 0.0
    %2871 = vmatpush1.msra.mxu0 0.0
    %2872 = vmatprep.subr.mxu0 0.0
    %2873 = vmatpush1.msra.mxu0 0.0
    %2874 = vmatprep.subr.mxu0 0.0
    %2875 = vmatpush1.msra.mxu0 0.0
    %2876 = vmatprep.subr.mxu0 0.0
    %2877 = vmatpush1.msra.mxu0 0.0
    %2878 = vmatprep.subr.mxu0 0.0
    %2879 = vmatpush1.msra.mxu0 0.0
    %2880 = vmatprep.subr.mxu0 0.0
    %2881 = vmatpush1.msra.mxu0 0.0
    %2882 = vmatprep.subr.mxu0 0.0
    %2883 = vmatpush1.msra.mxu0 0.0
    %2884 = vmatprep.subr.mxu0 0.0
    %2885 = vmatpush1.msra.mxu0 0.0
    %2886 = vmatprep.subr.mxu0 0.0
    %2887 = vmatpush1.msra.mxu0 0.0
    %2888 = vmatprep.subr.mxu0 0.0
    %2889 = vmatpush1.msra.mxu0 0.0
    %2890 = vmatprep.subr.mxu0 0.0
    %2891 = vmatpush1.msra.mxu0 0.0
    %2892 = vmatprep.subr.mxu0 0.0
    %2893 = vmatpush1.msra.mxu0 0.0
    %2894 = vmatprep.subr.mxu0 0.0
    %2895 = vmatpush1.msra.mxu0 0.0
    %2896 = vmatprep.mubr.f32.mxu0 0.0
    %2897 = vmatmul.mubr.f32.gmra.mrb[0].mxu0 %v1993
    %v2898 = vpop.f32.mrb[0].mxu0
    %v2899 = vadd.f32 %v2822, %v2898
    %v2900 = vpop.f32.mrb[0].mxu0
    %v2901 = vadd.f32 %v2824, %v2900
    %2902 = vmatprep.mubr.f32.mxu0 0.0
    %2903 = vmatmul.mubr.f32.gmra.mrb[0].mxu0 %v1998
    %v2904 = vpop.f32.mrb[0].mxu0
    %v2905 = vadd.f32 %v2828, %v2904
    %v2906 = vpop.f32.mrb[0].mxu0
    %v2907 = vadd.f32 %v2830, %v2906
    %2908 = vdwg.mxu0
    %2909 = vmatprep.subr.mxu0 0.0
    %2910 = vmatpush1.msra.mxu0 %v2003
    %2911 = vmatprep.subr.mxu0 0.0
    %2912 = vmatpush1.msra.mxu0 %v2006
    %2913 = vmatprep.subr.mxu0 0.0
    %2914 = vmatpush1.msra.mxu0 %v2009
    %2915 = vmatprep.subr.mxu0 0.0
    %2916 = vmatpush1.msra.mxu0 %v2012
    %2917 = vmatprep.subr.mxu0 0.0
    %2918 = vmatpush1.msra.mxu0 %v2015
    %2919 = vmatprep.subr.mxu0 0.0
    %2920 = vmatpush1.msra.mxu0 %v2018
    %2921 = vmatprep.subr.mxu0 0.0
    %2922 = vmatpush1.msra.mxu0 %v2021
    %2923 = vmatprep.subr.mxu0 0.0
    %2924 = vmatpush1.msra.mxu0 %v2024
    %2925 = vmatprep.subr.mxu0 0.0
    %2926 = vmatpush1.msra.mxu0 %v2027
    %2927 = vmatprep.subr.mxu0 0.0
    %2928 = vmatpush1.msra.mxu0 %v2030
    %2929 = vmatprep.subr.mxu0 0.0
    %2930 = vmatpush1.msra.mxu0 %v2033
    %2931 = vmatprep.subr.mxu0 0.0
    %2932 = vmatpush1.msra.mxu0 %v2036
    %2933 = vmatprep.subr.mxu0 0.0
    %2934 = vmatpush1.msra.mxu0 %v2039
    %2935 = vmatprep.subr.mxu0 0.0
    %2936 = vmatpush1.msra.mxu0 %v2042
    %2937 = vmatprep.subr.mxu0 0.0
    %2938 = vmatpush1.msra.mxu0 %v2045
    %2939 = vmatprep.subr.mxu0 0.0
    %2940 = vmatpush1.msra.mxu0 %v2048
    %2941 = vmatprep.subr.mxu0 0.0
    %2942 = vmatpush1.msra.mxu0 %v2051
    %2943 = vmatprep.subr.mxu0 0.0
    %2944 = vmatpush1.msra.mxu0 %v2054
    %2945 = vmatprep.subr.mxu0 0.0
    %2946 = vmatpush1.msra.mxu0 %v2057
    %2947 = vmatprep.subr.mxu0 0.0
    %2948 = vmatpush1.msra.mxu0 %v2060
    %2949 = vmatprep.subr.mxu0 0.0
    %2950 = vmatpush1.msra.mxu0 %v2063
    %2951 = vmatprep.subr.mxu0 0.0
    %2952 = vmatpush1.msra.mxu0 %v2066
    %2953 = vmatprep.subr.mxu0 0.0
    %2954 = vmatpush1.msra.mxu0 %v2069
    %2955 = vmatprep.subr.mxu0 0.0
    %2956 = vmatpush1.msra.mxu0 %v2072
    %2957 = vmatprep.subr.mxu0 0.0
    %2958 = vmatpush1.msra.mxu0 %v2075
    %2959 = vmatprep.subr.mxu0 0.0
    %2960 = vmatpush1.msra.mxu0 %v2078
    %2961 = vmatprep.subr.mxu0 0.0
    %2962 = vmatpush1.msra.mxu0 %v2081
    %2963 = vmatprep.subr.mxu0 0.0
    %2964 = vmatpush1.msra.mxu0 %v2084
    %2965 = vmatprep.subr.mxu0 0.0
    %2966 = vmatpush1.msra.mxu0 %v2087
    %2967 = vmatprep.subr.mxu0 0.0
    %2968 = vmatpush1.msra.mxu0 %v2090
    %2969 = vmatprep.subr.mxu0 0.0
    %2970 = vmatpush1.msra.mxu0 %v2093
    %2971 = vmatprep.subr.mxu0 0.0
    %2972 = vmatpush1.msra.mxu0 %v2096
    %2973 = vmatprep.mubr.f32.mxu0 %v1918
    %2974 = vmatmul.mubr.f32.gmra.mrb[0].mxu0 %v1916
    %v2975 = vpop.f32.mrb[0].mxu0
    %v2976 = vadd.f32 %v2747, %v2975
    %v2977 = vpop.f32.mrb[0].mxu0
    %2978 = vmatprep.mubr.f32.mxu0 %v1924
    %2979 = vmatmul.mubr.f32.gmra.mrb[0].mxu0 %v1922
    %v2980 = vpop.f32.mrb[0].mxu0
    %v2981 = vadd.f32 %v2752, %v2980
    %v2982 = vpop.f32.mrb[0].mxu0
    %2983 = vdwg.mxu0
    %2984 = vmatprep.subr.mxu0 0.0
    %2985 = vmatpush1.msra.mxu0 %v2099
    %2986 = vmatprep.subr.mxu0 0.0
    %2987 = vmatpush1.msra.mxu0 %v2102
    %2988 = vmatprep.subr.mxu0 0.0
    %2989 = vmatpush1.msra.mxu0 %v2105
    %2990 = vmatprep.subr.mxu0 0.0
    %2991 = vmatpush1.msra.mxu0 %v2108
    %2992 = vmatprep.subr.mxu0 0.0
    %2993 = vmatpush1.msra.mxu0 %v2111
    %2994 = vmatprep.subr.mxu0 0.0
    %2995 = vmatpush1.msra.mxu0 %v2114
    %2996 = vmatprep.subr.mxu0 0.0
    %2997 = vmatpush1.msra.mxu0 %v2117
    %2998 = vmatprep.subr.mxu0 0.0
    %2999 = vmatpush1.msra.mxu0 %v2120
    %3000 = vmatprep.subr.mxu0 0.0
    %3001 = vmatpush1.msra.mxu0 %v2123
    %3002 = vmatprep.subr.mxu0 0.0
    %3003 = vmatpush1.msra.mxu0 %v2126
    %3004 = vmatprep.subr.mxu0 0.0
    %3005 = vmatpush1.msra.mxu0 %v2129
    %3006 = vmatprep.subr.mxu0 0.0
    %3007 = vmatpush1.msra.mxu0 %v2132
    %3008 = vmatprep.subr.mxu0 0.0
    %3009 = vmatpush1.msra.mxu0 %v2135
    %3010 = vmatprep.subr.mxu0 0.0
    %3011 = vmatpush1.msra.mxu0 %v2138
    %3012 = vmatprep.subr.mxu0 0.0
    %3013 = vmatpush1.msra.mxu0 %v2141
    %3014 = vmatprep.subr.mxu0 0.0
    %3015 = vmatpush1.msra.mxu0 %v2144
    %3016 = vmatprep.subr.mxu0 0.0
    %3017 = vmatpush1.msra.mxu0 0.0
    %3018 = vmatprep.subr.mxu0 0.0
    %3019 = vmatpush1.msra.mxu0 0.0
    %3020 = vmatprep.subr.mxu0 0.0
    %3021 = vmatpush1.msra.mxu0 0.0
    %3022 = vmatprep.subr.mxu0 0.0
    %3023 = vmatpush1.msra.mxu0 0.0
    %3024 = vmatprep.subr.mxu0 0.0
    %3025 = vmatpush1.msra.mxu0 0.0
    %3026 = vmatprep.subr.mxu0 0.0
    %3027 = vmatpush1.msra.mxu0 0.0
    %3028 = vmatprep.subr.mxu0 0.0
    %3029 = vmatpush1.msra.mxu0 0.0
    %3030 = vmatprep.subr.mxu0 0.0
    %3031 = vmatpush1.msra.mxu0 0.0
    %3032 = vmatprep.subr.mxu0 0.0
    %3033 = vmatpush1.msra.mxu0 0.0
    %3034 = vmatprep.subr.mxu0 0.0
    %3035 = vmatpush1.msra.mxu0 0.0
    %3036 = vmatprep.subr.mxu0 0.0
    %3037 = vmatpush1.msra.mxu0 0.0
    %3038 = vmatprep.subr.mxu0 0.0
    %3039 = vmatpush1.msra.mxu0 0.0
    %3040 = vmatprep.subr.mxu0 0.0
    %3041 = vmatpush1.msra.mxu0 0.0
    %3042 = vmatprep.subr.mxu0 0.0
    %3043 = vmatpush1.msra.mxu0 0.0
    %3044 = vmatprep.subr.mxu0 0.0
    %3045 = vmatpush1.msra.mxu0 0.0
    %3046 = vmatprep.subr.mxu0 0.0
    %3047 = vmatpush1.msra.mxu0 0.0
    %3048 = vmatprep.mubr.f32.mxu0 0.0
    %3049 = vmatmul.mubr.f32.gmra.mrb[0].mxu0 %v1993
    %v3050 = vpop.f32.mrb[0].mxu0
    %v3051 = vadd.f32 %v2976, %v3050
    %v3052 = vpop.f32.mrb[0].mxu0
    %3053 = vmatprep.mubr.f32.mxu0 0.0
    %3054 = vmatmul.mubr.f32.gmra.mrb[0].mxu0 %v1998
    %v3055 = vpop.f32.mrb[0].mxu0
    %v3056 = vadd.f32 %v2981, %v3055
    %v3057 = vpop.f32.mrb[0].mxu0
    %3058 = vdwg.mxu0
    %s3059 = scalar_lea.vmem %s7, 32
    %v3060 = vld [vmem:[%s3059] sm:$0xff]
    %v3061 = vld [vmem:[%s3059 + $0x8] sm:$0x3]
    %v3063 = vsel %vm743, %v3060, 0
    %v3066 = vsel %vm743, %v3061, 0
    %3068 = vmatprep.subr.mxu0 %v1824
    %3069 = vmatpush1.msra.mxu0 %v1823
    %3070 = vmatprep.subr.mxu0 %v1827
    %3071 = vmatpush1.msra.mxu0 %v1826
    %3072 = vmatprep.subr.mxu0 %v1844
    %3073 = vmatpush1.msra.mxu0 %v1841
    %3074 = vmatprep.subr.mxu0 0.0
    %3075 = vmatpush1.msra.mxu0 0.0
    %3076 = vmatprep.subr.mxu0 0.0
    %3077 = vmatpush1.msra.mxu0 0.0
    %3078 = vmatprep.subr.mxu0 0.0
    %3079 = vmatpush1.msra.mxu0 0.0
    %3080 = vmatprep.subr.mxu0 0.0
    %3081 = vmatpush1.msra.mxu0 0.0
    %3082 = vmatprep.subr.mxu0 0.0
    %3083 = vmatpush1.msra.mxu0 0.0
    %3084 = vmatprep.subr.mxu0 0.0
    %3085 = vmatpush1.msra.mxu0 0.0
    %3086 = vmatprep.subr.mxu0 0.0
    %3087 = vmatpush1.msra.mxu0 0.0
    %3088 = vmatprep.subr.mxu0 0.0
    %3089 = vmatpush1.msra.mxu0 0.0
    %3090 = vmatprep.subr.mxu0 0.0
    %3091 = vmatpush1.msra.mxu0 0.0
    %3092 = vmatprep.subr.mxu0 0.0
    %3093 = vmatpush1.msra.mxu0 0.0
    %3094 = vmatprep.subr.mxu0 0.0
    %3095 = vmatpush1.msra.mxu0 0.0
    %3096 = vmatprep.subr.mxu0 0.0
    %3097 = vmatpush1.msra.mxu0 0.0
    %3098 = vmatprep.subr.mxu0 0.0
    %3099 = vmatpush1.msra.mxu0 0.0
    %3100 = vmatprep.subr.mxu0 0.0
    %3101 = vmatpush1.msra.mxu0 0.0
    %3102 = vmatprep.subr.mxu0 0.0
    %3103 = vmatpush1.msra.mxu0 0.0
    %3104 = vmatprep.subr.mxu0 0.0
    %3105 = vmatpush1.msra.mxu0 0.0
    %3106 = vmatprep.subr.mxu0 0.0
    %3107 = vmatpush1.msra.mxu0 0.0
    %3108 = vmatprep.subr.mxu0 0.0
    %3109 = vmatpush1.msra.mxu0 0.0
    %3110 = vmatprep.subr.mxu0 0.0
    %3111 = vmatpush1.msra.mxu0 0.0
    %3112 = vmatprep.subr.mxu0 0.0
    %3113 = vmatpush1.msra.mxu0 0.0
    %3114 = vmatprep.subr.mxu0 0.0
    %3115 = vmatpush1.msra.mxu0 0.0
    %3116 = vmatprep.subr.mxu0 0.0
    %3117 = vmatpush1.msra.mxu0 0.0
    %3118 = vmatprep.subr.mxu0 0.0
    %3119 = vmatpush1.msra.mxu0 0.0
    %3120 = vmatprep.subr.mxu0 0.0
    %3121 = vmatpush1.msra.mxu0 0.0
    %3122 = vmatprep.subr.mxu0 0.0
    %3123 = vmatpush1.msra.mxu0 0.0
    %3124 = vmatprep.subr.mxu0 0.0
    %3125 = vmatpush1.msra.mxu0 0.0
    %3126 = vmatprep.subr.mxu0 0.0
    %3127 = vmatpush1.msra.mxu0 0.0
    %3128 = vmatprep.subr.mxu0 0.0
    %3129 = vmatpush1.msra.mxu0 0.0
    %3130 = vmatprep.subr.mxu0 0.0
    %3131 = vmatpush1.msra.mxu0 0.0
    %3132 = vmatprep.mubr.f32.mxu0 0.0
    %3133 = vmatmul.mubr.f32.gmra.mrb[0].mxu0 %v3063
    %v3134 = vpop.f32.mrb[0].mxu0
    %v3135 = vadd.f32 0.0, %v3134
    %v3136 = vpop.f32.mrb[0].mxu0
    %v3137 = vadd.f32 0.0, %v3136
    %3138 = vmatprep.mubr.f32.mxu0 0.0
    %3139 = vmatmul.mubr.f32.gmra.mrb[0].mxu0 %v3066
    %v3140 = vpop.f32.mrb[0].mxu0
    %v3141 = vadd.f32 0.0, %v3140
    %v3142 = vpop.f32.mrb[0].mxu0
    %v3143 = vadd.f32 0.0, %v3142
    %3144 = vdwg.mxu0
    %3145 = vmatprep.subr.mxu0 0.0
    %3146 = vmatpush1.msra.mxu0 %v1825
    %3147 = vmatprep.subr.mxu0 0.0
    %3148 = vmatpush1.msra.mxu0 %v1828
    %3149 = vmatprep.subr.mxu0 0.0
    %3150 = vmatpush1.msra.mxu0 %v1847
    %3151 = vmatprep.subr.mxu0 0.0
    %3152 = vmatpush1.msra.mxu0 0.0
    %3153 = vmatprep.subr.mxu0 0.0
    %3154 = vmatpush1.msra.mxu0 0.0
    %3155 = vmatprep.subr.mxu0 0.0
    %3156 = vmatpush1.msra.mxu0 0.0
    %3157 = vmatprep.subr.mxu0 0.0
    %3158 = vmatpush1.msra.mxu0 0.0
    %3159 = vmatprep.subr.mxu0 0.0
    %3160 = vmatpush1.msra.mxu0 0.0
    %3161 = vmatprep.subr.mxu0 0.0
    %3162 = vmatpush1.msra.mxu0 0.0
    %3163 = vmatprep.subr.mxu0 0.0
    %3164 = vmatpush1.msra.mxu0 0.0
    %3165 = vmatprep.subr.mxu0 0.0
    %3166 = vmatpush1.msra.mxu0 0.0
    %3167 = vmatprep.subr.mxu0 0.0
    %3168 = vmatpush1.msra.mxu0 0.0
    %3169 = vmatprep.subr.mxu0 0.0
    %3170 = vmatpush1.msra.mxu0 0.0
    %3171 = vmatprep.subr.mxu0 0.0
    %3172 = vmatpush1.msra.mxu0 0.0
    %3173 = vmatprep.subr.mxu0 0.0
    %3174 = vmatpush1.msra.mxu0 0.0
    %3175 = vmatprep.subr.mxu0 0.0
    %3176 = vmatpush1.msra.mxu0 0.0
    %3177 = vmatprep.subr.mxu0 0.0
    %3178 = vmatpush1.msra.mxu0 0.0
    %3179 = vmatprep.subr.mxu0 0.0
    %3180 = vmatpush1.msra.mxu0 0.0
    %3181 = vmatprep.subr.mxu0 0.0
    %3182 = vmatpush1.msra.mxu0 0.0
    %3183 = vmatprep.subr.mxu0 0.0
    %3184 = vmatpush1.msra.mxu0 0.0
    %3185 = vmatprep.subr.mxu0 0.0
    %3186 = vmatpush1.msra.mxu0 0.0
    %3187 = vmatprep.subr.mxu0 0.0
    %3188 = vmatpush1.msra.mxu0 0.0
    %3189 = vmatprep.subr.mxu0 0.0
    %3190 = vmatpush1.msra.mxu0 0.0
    %3191 = vmatprep.subr.mxu0 0.0
    %3192 = vmatpush1.msra.mxu0 0.0
    %3193 = vmatprep.subr.mxu0 0.0
    %3194 = vmatpush1.msra.mxu0 0.0
    %3195 = vmatprep.subr.mxu0 0.0
    %3196 = vmatpush1.msra.mxu0 0.0
    %3197 = vmatprep.subr.mxu0 0.0
    %3198 = vmatpush1.msra.mxu0 0.0
    %3199 = vmatprep.subr.mxu0 0.0
    %3200 = vmatpush1.msra.mxu0 0.0
    %3201 = vmatprep.subr.mxu0 0.0
    %3202 = vmatpush1.msra.mxu0 0.0
    %3203 = vmatprep.subr.mxu0 0.0
    %3204 = vmatpush1.msra.mxu0 0.0
    %3205 = vmatprep.subr.mxu0 0.0
    %3206 = vmatpush1.msra.mxu0 0.0
    %3207 = vmatprep.subr.mxu0 0.0
    %3208 = vmatpush1.msra.mxu0 0.0
    %3209 = vmatprep.mubr.f32.mxu0 0.0
    %3210 = vmatmul.mubr.f32.gmra.mrb[0].mxu0 %v3063
    %v3211 = vpop.f32.mrb[0].mxu0
    %v3212 = vadd.f32 0.0, %v3211
    %v3213 = vpop.f32.mrb[0].mxu0
    %3214 = vmatprep.mubr.f32.mxu0 0.0
    %3215 = vmatmul.mubr.f32.gmra.mrb[0].mxu0 %v3066
    %v3216 = vpop.f32.mrb[0].mxu0
    %v3217 = vadd.f32 0.0, %v3216
    %v3218 = vpop.f32.mrb[0].mxu0
    %3219 = vdwg.mxu0
    %s3220 = scalar_lea.vmem %s8, 2304
    %v3221 = vld [vmem:[%s3220] sm:$0xff]
    %v3222 = vld [vmem:[%s3220 + $0x8] sm:$0xff]
    %v3223 = vld [vmem:[%s3220 + $0x10] sm:$0xff]
    %v3224 = vld [vmem:[%s3220 + $0x18] sm:$0xff]
    %v3225 = vld [vmem:[%s3220 + $0x20] sm:$0xff]
    %v3226 = vld [vmem:[%s3220 + $0x28] sm:$0xff]
    %v3227 = vld [vmem:[%s3220 + $0x30] sm:$0xff]
    %v3228 = vld [vmem:[%s3220 + $0x38] sm:$0xff]
    %v3229 = vld [vmem:[%s3220 + $0x40] sm:$0xff]
    %v3230 = vld [vmem:[%s3220 + $0x48] sm:$0xff]
    %v3231 = vld [vmem:[%s3220 + $0x50] sm:$0xff]
    %v3232 = vld [vmem:[%s3220 + $0x58] sm:$0xff]
    %v3233 = vld [vmem:[%s3220 + $0x60] sm:$0xff]
    %v3234 = vld [vmem:[%s3220 + $0x68] sm:$0xff]
    %v3235 = vld [vmem:[%s3220 + $0x70] sm:$0xff]
    %v3236 = vld [vmem:[%s3220 + $0x78] sm:$0xff]
    %v3237 = vld [vmem:[%s3220 + $0x80] sm:$0xff]
    %v3238 = vld [vmem:[%s3220 + $0x88] sm:$0xff]
    %v3239 = vld [vmem:[%s3220 + $0x90] sm:$0xff]
    %v3240 = vld [vmem:[%s3220 + $0x98] sm:$0xff]
    %v3241 = vld [vmem:[%s3220 + $0xa0] sm:$0xff]
    %v3242 = vld [vmem:[%s3220 + $0xa8] sm:$0xff]
    %v3243 = vld [vmem:[%s3220 + $0xb0] sm:$0xff]
    %v3244 = vld [vmem:[%s3220 + $0xb8] sm:$0xff]
    %v3245 = vld [vmem:[%s3220 + $0xc0] sm:$0xff]
    %v3246 = vld [vmem:[%s3220 + $0xc8] sm:$0xff]
    %v3247 = vld [vmem:[%s3220 + $0xd0] sm:$0xff]
    %v3248 = vld [vmem:[%s3220 + $0xd8] sm:$0xff]
    %v3249 = vld [vmem:[%s3220 + $0xe0] sm:$0xff]
    %v3250 = vld [vmem:[%s3220 + $0xe8] sm:$0xff]
    %v3251 = vld [vmem:[%s3220 + $0xf0] sm:$0xff]
    %v3252 = vld [vmem:[%s3220 + $0xf8] sm:$0xff]
    %v3253 = vld [vmem:[%s3220 + $0x100] sm:$0xff]
    %v3254 = vld [vmem:[%s3220 + $0x108] sm:$0xff]
    %v3255 = vld [vmem:[%s3220 + $0x110] sm:$0xff]
    %v3256 = vld [vmem:[%s3220 + $0x118] sm:$0xff]
    %v3257 = vld [vmem:[%s3220 + $0x120] sm:$0xff]
    %v3258 = vld [vmem:[%s3220 + $0x128] sm:$0xff]
    %v3259 = vld [vmem:[%s3220 + $0x130] sm:$0xff]
    %v3260 = vld [vmem:[%s3220 + $0x138] sm:$0xff]
    %v3261 = vld [vmem:[%s3220 + $0x140] sm:$0xff]
    %v3262 = vld [vmem:[%s3220 + $0x148] sm:$0xff]
    %v3263 = vld [vmem:[%s3220 + $0x150] sm:$0xff]
    %v3264 = vld [vmem:[%s3220 + $0x158] sm:$0xff]
    %v3265 = vld [vmem:[%s3220 + $0x160] sm:$0xff]
    %v3266 = vld [vmem:[%s3220 + $0x168] sm:$0xff]
    %v3267 = vld [vmem:[%s3220 + $0x170] sm:$0xff]
    %v3268 = vld [vmem:[%s3220 + $0x178] sm:$0xff]
    %v3269 = vld [vmem:[%s3220 + $0x180] sm:$0xff]
    %v3270 = vld [vmem:[%s3220 + $0x188] sm:$0xff]
    %v3271 = vld [vmem:[%s3220 + $0x190] sm:$0xff]
    %v3272 = vld [vmem:[%s3220 + $0x198] sm:$0xff]
    %v3273 = vld [vmem:[%s3220 + $0x1a0] sm:$0xff]
    %v3274 = vld [vmem:[%s3220 + $0x1a8] sm:$0xff]
    %v3275 = vld [vmem:[%s3220 + $0x1b0] sm:$0xff]
    %v3276 = vld [vmem:[%s3220 + $0x1b8] sm:$0xff]
    %v3277 = vld [vmem:[%s3220 + $0x1c0] sm:$0xff]
    %v3278 = vld [vmem:[%s3220 + $0x1c8] sm:$0xff]
    %v3279 = vld [vmem:[%s3220 + $0x1d0] sm:$0xff]
    %v3280 = vld [vmem:[%s3220 + $0x1d8] sm:$0xff]
    %v3281 = vld [vmem:[%s3220 + $0x1e0] sm:$0xff]
    %v3282 = vld [vmem:[%s3220 + $0x1e8] sm:$0xff]
    %v3283 = vld [vmem:[%s3220 + $0x1f0] sm:$0xff]
    %v3284 = vld [vmem:[%s3220 + $0x1f8] sm:$0xff]
    %v3285 = vld [vmem:[%s3220 + $0x200] sm:$0xff]
    %v3286 = vld [vmem:[%s3220 + $0x208] sm:$0xff]
    %v3287 = vld [vmem:[%s3220 + $0x210] sm:$0xff]
    %v3288 = vld [vmem:[%s3220 + $0x218] sm:$0xff]
    %v3289 = vld [vmem:[%s3220 + $0x220] sm:$0xff]
    %v3290 = vld [vmem:[%s3220 + $0x228] sm:$0xff]
    %v3291 = vld [vmem:[%s3220 + $0x230] sm:$0xff]
    %v3292 = vld [vmem:[%s3220 + $0x238] sm:$0xff]
    %v3293 = vld [vmem:[%s3220 + $0x240] sm:$0xff]
    %v3294 = vld [vmem:[%s3220 + $0x248] sm:$0xff]
    %v3295 = vld [vmem:[%s3220 + $0x250] sm:$0xff]
    %v3296 = vld [vmem:[%s3220 + $0x258] sm:$0xff]
    %v3297 = vld [vmem:[%s3220 + $0x260] sm:$0xff]
    %v3298 = vld [vmem:[%s3220 + $0x268] sm:$0xff]
    %v3299 = vld [vmem:[%s3220 + $0x270] sm:$0xff]
    %v3300 = vld [vmem:[%s3220 + $0x278] sm:$0xff]
    %v3301 = vld [vmem:[%s3220 + $0x280] sm:$0xff]
    %v3302 = vld [vmem:[%s3220 + $0x288] sm:$0xff]
    %v3303 = vld [vmem:[%s3220 + $0x290] sm:$0xff]
    %v3304 = vld [vmem:[%s3220 + $0x298] sm:$0xff]
    %v3305 = vld [vmem:[%s3220 + $0x2a0] sm:$0xff]
    %v3306 = vld [vmem:[%s3220 + $0x2a8] sm:$0xff]
    %v3307 = vld [vmem:[%s3220 + $0x2b0] sm:$0xff]
    %v3308 = vld [vmem:[%s3220 + $0x2b8] sm:$0xff]
    %v3309 = vld [vmem:[%s3220 + $0x2c0] sm:$0xff]
    %v3310 = vld [vmem:[%s3220 + $0x2c8] sm:$0xff]
    %v3311 = vld [vmem:[%s3220 + $0x2d0] sm:$0xff]
    %v3312 = vld [vmem:[%s3220 + $0x2d8] sm:$0xff]
    %v3313 = vld [vmem:[%s3220 + $0x2e0] sm:$0xff]
    %v3314 = vld [vmem:[%s3220 + $0x2e8] sm:$0xff]
    %v3315 = vld [vmem:[%s3220 + $0x2f0] sm:$0xff]
    %v3316 = vld [vmem:[%s3220 + $0x2f8] sm:$0xff]
    %v3317 = vld [vmem:[%s3220 + $0x300] sm:$0xff]
    %v3318 = vld [vmem:[%s3220 + $0x308] sm:$0xff]
    %v3319 = vld [vmem:[%s3220 + $0x310] sm:$0xff]
    %v3320 = vld [vmem:[%s3220 + $0x318] sm:$0xff]
    %v3321 = vld [vmem:[%s3220 + $0x320] sm:$0xff]
    %v3322 = vld [vmem:[%s3220 + $0x328] sm:$0xff]
    %v3323 = vld [vmem:[%s3220 + $0x330] sm:$0xff]
    %v3324 = vld [vmem:[%s3220 + $0x338] sm:$0xff]
    %v3325 = vld [vmem:[%s3220 + $0x340] sm:$0xff]
    %v3326 = vld [vmem:[%s3220 + $0x348] sm:$0xff]
    %v3327 = vld [vmem:[%s3220 + $0x350] sm:$0xff]
    %v3328 = vld [vmem:[%s3220 + $0x358] sm:$0xff]
    %v3329 = vld [vmem:[%s3220 + $0x360] sm:$0xff]
    %v3330 = vld [vmem:[%s3220 + $0x368] sm:$0xff]
    %v3331 = vld [vmem:[%s3220 + $0x370] sm:$0xff]
    %v3332 = vld [vmem:[%s3220 + $0x378] sm:$0xff]
    %v3333 = vld [vmem:[%s3220 + $0x380] sm:$0xff]
    %v3334 = vld [vmem:[%s3220 + $0x388] sm:$0xff]
    %v3335 = vld [vmem:[%s3220 + $0x390] sm:$0xff]
    %v3336 = vld [vmem:[%s3220 + $0x398] sm:$0xff]
    %v3337 = vld [vmem:[%s3220 + $0x3a0] sm:$0xff]
    %v3338 = vld [vmem:[%s3220 + $0x3a8] sm:$0xff]
    %v3339 = vld [vmem:[%s3220 + $0x3b0] sm:$0xff]
    %v3340 = vld [vmem:[%s3220 + $0x3b8] sm:$0xff]
    %v3341 = vld [vmem:[%s3220 + $0x3c0] sm:$0xff]
    %v3342 = vld [vmem:[%s3220 + $0x3c8] sm:$0xff]
    %v3343 = vld [vmem:[%s3220 + $0x3d0] sm:$0xff]
    %v3344 = vld [vmem:[%s3220 + $0x3d8] sm:$0xff]
    %v3345 = vld [vmem:[%s3220 + $0x3e0] sm:$0xff]
    %v3346 = vld [vmem:[%s3220 + $0x3e8] sm:$0xff]
    %v3347 = vld [vmem:[%s3220 + $0x3f0] sm:$0xff]
    %v3348 = vld [vmem:[%s3220 + $0x3f8] sm:$0xff]
    %v3349 = vld [vmem:[%s3220 + $0x400] sm:$0xff]
    %v3350 = vld [vmem:[%s3220 + $0x408] sm:$0xff]
    %v3351 = vld [vmem:[%s3220 + $0x410] sm:$0xff]
    %v3352 = vld [vmem:[%s3220 + $0x418] sm:$0xff]
    %v3353 = vld [vmem:[%s3220 + $0x420] sm:$0xff]
    %v3354 = vld [vmem:[%s3220 + $0x428] sm:$0xff]
    %v3355 = vld [vmem:[%s3220 + $0x430] sm:$0xff]
    %v3356 = vld [vmem:[%s3220 + $0x438] sm:$0xff]
    %v3357 = vld [vmem:[%s3220 + $0x440] sm:$0xff]
    %v3358 = vld [vmem:[%s3220 + $0x448] sm:$0xff]
    %v3359 = vld [vmem:[%s3220 + $0x450] sm:$0xff]
    %v3360 = vld [vmem:[%s3220 + $0x458] sm:$0xff]
    %v3361 = vld [vmem:[%s3220 + $0x460] sm:$0xff]
    %v3362 = vld [vmem:[%s3220 + $0x468] sm:$0xff]
    %v3363 = vld [vmem:[%s3220 + $0x470] sm:$0xff]
    %v3364 = vld [vmem:[%s3220 + $0x478] sm:$0xff]
    %3365 = vmatprep.subr.mxu0 %v3222
    %3366 = vmatpush1.msra.mxu0 %v3221
    %3367 = vmatprep.subr.mxu0 %v3225
    %3368 = vmatpush1.msra.mxu0 %v3224
    %3369 = vmatprep.subr.mxu0 %v3228
    %3370 = vmatpush1.msra.mxu0 %v3227
    %3371 = vmatprep.subr.mxu0 %v3231
    %3372 = vmatpush1.msra.mxu0 %v3230
    %3373 = vmatprep.subr.mxu0 %v3234
    %3374 = vmatpush1.msra.mxu0 %v3233
    %3375 = vmatprep.subr.mxu0 %v3237
    %3376 = vmatpush1.msra.mxu0 %v3236
    %3377 = vmatprep.subr.mxu0 %v3240
    %3378 = vmatpush1.msra.mxu0 %v3239
    %3379 = vmatprep.subr.mxu0 %v3243
    %3380 = vmatpush1.msra.mxu0 %v3242
    %3381 = vmatprep.subr.mxu0 %v3246
    %3382 = vmatpush1.msra.mxu0 %v3245
    %3383 = vmatprep.subr.mxu0 %v3249
    %3384 = vmatpush1.msra.mxu0 %v3248
    %3385 = vmatprep.subr.mxu0 %v3252
    %3386 = vmatpush1.msra.mxu0 %v3251
    %3387 = vmatprep.subr.mxu0 %v3255
    %3388 = vmatpush1.msra.mxu0 %v3254
    %3389 = vmatprep.subr.mxu0 %v3258
    %3390 = vmatpush1.msra.mxu0 %v3257
    %3391 = vmatprep.subr.mxu0 %v3261
    %3392 = vmatpush1.msra.mxu0 %v3260
    %3393 = vmatprep.subr.mxu0 %v3264
    %3394 = vmatpush1.msra.mxu0 %v3263
    %3395 = vmatprep.subr.mxu0 %v3267
    %3396 = vmatpush1.msra.mxu0 %v3266
    %3397 = vmatprep.subr.mxu0 %v3270
    %3398 = vmatpush1.msra.mxu0 %v3269
    %3399 = vmatprep.subr.mxu0 %v3273
    %3400 = vmatpush1.msra.mxu0 %v3272
    %3401 = vmatprep.subr.mxu0 %v3276
    %3402 = vmatpush1.msra.mxu0 %v3275
    %3403 = vmatprep.subr.mxu0 %v3279
    %3404 = vmatpush1.msra.mxu0 %v3278
    %3405 = vmatprep.subr.mxu0 %v3282
    %3406 = vmatpush1.msra.mxu0 %v3281
    %3407 = vmatprep.subr.mxu0 %v3285
    %3408 = vmatpush1.msra.mxu0 %v3284
    %3409 = vmatprep.subr.mxu0 %v3288
    %3410 = vmatpush1.msra.mxu0 %v3287
    %3411 = vmatprep.subr.mxu0 %v3291
    %3412 = vmatpush1.msra.mxu0 %v3290
    %3413 = vmatprep.subr.mxu0 %v3294
    %3414 = vmatpush1.msra.mxu0 %v3293
    %3415 = vmatprep.subr.mxu0 %v3297
    %3416 = vmatpush1.msra.mxu0 %v3296
    %3417 = vmatprep.subr.mxu0 %v3300
    %3418 = vmatpush1.msra.mxu0 %v3299
    %3419 = vmatprep.subr.mxu0 %v3303
    %3420 = vmatpush1.msra.mxu0 %v3302
    %3421 = vmatprep.subr.mxu0 %v3306
    %3422 = vmatpush1.msra.mxu0 %v3305
    %3423 = vmatprep.subr.mxu0 %v3309
    %3424 = vmatpush1.msra.mxu0 %v3308
    %3425 = vmatprep.subr.mxu0 %v3312
    %3426 = vmatpush1.msra.mxu0 %v3311
    %3427 = vmatprep.subr.mxu0 %v3315
    %3428 = vmatpush1.msra.mxu0 %v3314
    %3429 = vmatprep.mubr.f32.mxu0 %v3137
    %3430 = vmatmul.mubr.f32.gmra.mrb[0].mxu0 %v3135
    %v3431 = vpop.f32.mrb[0].mxu0
    %v3432 = vadd.f32 0.0, %v3431
    %v3433 = vpop.f32.mrb[0].mxu0
    %v3434 = vadd.f32 0.0, %v3433
    %3435 = vmatprep.mubr.f32.mxu0 %v3143
    %3436 = vmatmul.mubr.f32.gmra.mrb[0].mxu0 %v3141
    %v3437 = vpop.f32.mrb[0].mxu0
    %v3438 = vadd.f32 0.0, %v3437
    %v3439 = vpop.f32.mrb[0].mxu0
    %v3440 = vadd.f32 0.0, %v3439
    %3441 = vdwg.mxu0
    %3442 = vmatprep.subr.mxu0 %v3318
    %3443 = vmatpush1.msra.mxu0 %v3317
    %3444 = vmatprep.subr.mxu0 %v3321
    %3445 = vmatpush1.msra.mxu0 %v3320
    %3446 = vmatprep.subr.mxu0 %v3324
    %3447 = vmatpush1.msra.mxu0 %v3323
    %3448 = vmatprep.subr.mxu0 %v3327
    %3449 = vmatpush1.msra.mxu0 %v3326
    %3450 = vmatprep.subr.mxu0 %v3330
    %3451 = vmatpush1.msra.mxu0 %v3329
    %3452 = vmatprep.subr.mxu0 %v3333
    %3453 = vmatpush1.msra.mxu0 %v3332
    %3454 = vmatprep.subr.mxu0 %v3336
    %3455 = vmatpush1.msra.mxu0 %v3335
    %3456 = vmatprep.subr.mxu0 %v3339
    %3457 = vmatpush1.msra.mxu0 %v3338
    %3458 = vmatprep.subr.mxu0 %v3342
    %3459 = vmatpush1.msra.mxu0 %v3341
    %3460 = vmatprep.subr.mxu0 %v3345
    %3461 = vmatpush1.msra.mxu0 %v3344
    %3462 = vmatprep.subr.mxu0 %v3348
    %3463 = vmatpush1.msra.mxu0 %v3347
    %3464 = vmatprep.subr.mxu0 %v3351
    %3465 = vmatpush1.msra.mxu0 %v3350
    %3466 = vmatprep.subr.mxu0 %v3354
    %3467 = vmatpush1.msra.mxu0 %v3353
    %3468 = vmatprep.subr.mxu0 %v3357
    %3469 = vmatpush1.msra.mxu0 %v3356
    %3470 = vmatprep.subr.mxu0 %v3360
    %3471 = vmatpush1.msra.mxu0 %v3359
    %3472 = vmatprep.subr.mxu0 %v3363
    %3473 = vmatpush1.msra.mxu0 %v3362
    %3474 = vmatprep.subr.mxu0 0.0
    %3475 = vmatpush1.msra.mxu0 0.0
    %3476 = vmatprep.subr.mxu0 0.0
    %3477 = vmatpush1.msra.mxu0 0.0
    %3478 = vmatprep.subr.mxu0 0.0
    %3479 = vmatpush1.msra.mxu0 0.0
    %3480 = vmatprep.subr.mxu0 0.0
    %3481 = vmatpush1.msra.mxu0 0.0
    %3482 = vmatprep.subr.mxu0 0.0
    %3483 = vmatpush1.msra.mxu0 0.0
    %3484 = vmatprep.subr.mxu0 0.0
    %3485 = vmatpush1.msra.mxu0 0.0
    %3486 = vmatprep.subr.mxu0 0.0
    %3487 = vmatpush1.msra.mxu0 0.0
    %3488 = vmatprep.subr.mxu0 0.0
    %3489 = vmatpush1.msra.mxu0 0.0
    %3490 = vmatprep.subr.mxu0 0.0
    %3491 = vmatpush1.msra.mxu0 0.0
    %3492 = vmatprep.subr.mxu0 0.0
    %3493 = vmatpush1.msra.mxu0 0.0
    %3494 = vmatprep.subr.mxu0 0.0
    %3495 = vmatpush1.msra.mxu0 0.0
    %3496 = vmatprep.subr.mxu0 0.0
    %3497 = vmatpush1.msra.mxu0 0.0
    %3498 = vmatprep.subr.mxu0 0.0
    %3499 = vmatpush1.msra.mxu0 0.0
    %3500 = vmatprep.subr.mxu0 0.0
    %3501 = vmatpush1.msra.mxu0 0.0
    %3502 = vmatprep.subr.mxu0 0.0
    %3503 = vmatpush1.msra.mxu0 0.0
    %3504 = vmatprep.subr.mxu0 0.0
    %3505 = vmatpush1.msra.mxu0 0.0
    %3506 = vmatprep.mubr.f32.mxu0 0.0
    %3507 = vmatmul.mubr.f32.gmra.mrb[0].mxu0 %v3212
    %v3508 = vpop.f32.mrb[0].mxu0
    %v3509 = vadd.f32 %v3432, %v3508
    %v3510 = vpop.f32.mrb[0].mxu0
    %v3511 = vadd.f32 %v3434, %v3510
    %3512 = vmatprep.mubr.f32.mxu0 0.0
    %3513 = vmatmul.mubr.f32.gmra.mrb[0].mxu0 %v3217
    %v3514 = vpop.f32.mrb[0].mxu0
    %v3515 = vadd.f32 %v3438, %v3514
    %v3516 = vpop.f32.mrb[0].mxu0
    %v3517 = vadd.f32 %v3440, %v3516
    %3518 = vdwg.mxu0
    %3519 = vmatprep.subr.mxu0 0.0
    %3520 = vmatpush1.msra.mxu0 %v3223
    %3521 = vmatprep.subr.mxu0 0.0
    %3522 = vmatpush1.msra.mxu0 %v3226
    %3523 = vmatprep.subr.mxu0 0.0
    %3524 = vmatpush1.msra.mxu0 %v3229
    %3525 = vmatprep.subr.mxu0 0.0
    %3526 = vmatpush1.msra.mxu0 %v3232
    %3527 = vmatprep.subr.mxu0 0.0
    %3528 = vmatpush1.msra.mxu0 %v3235
    %3529 = vmatprep.subr.mxu0 0.0
    %3530 = vmatpush1.msra.mxu0 %v3238
    %3531 = vmatprep.subr.mxu0 0.0
    %3532 = vmatpush1.msra.mxu0 %v3241
    %3533 = vmatprep.subr.mxu0 0.0
    %3534 = vmatpush1.msra.mxu0 %v3244
    %3535 = vmatprep.subr.mxu0 0.0
    %3536 = vmatpush1.msra.mxu0 %v3247
    %3537 = vmatprep.subr.mxu0 0.0
    %3538 = vmatpush1.msra.mxu0 %v3250
    %3539 = vmatprep.subr.mxu0 0.0
    %3540 = vmatpush1.msra.mxu0 %v3253
    %3541 = vmatprep.subr.mxu0 0.0
    %3542 = vmatpush1.msra.mxu0 %v3256
    %3543 = vmatprep.subr.mxu0 0.0
    %3544 = vmatpush1.msra.mxu0 %v3259
    %3545 = vmatprep.subr.mxu0 0.0
    %3546 = vmatpush1.msra.mxu0 %v3262
    %3547 = vmatprep.subr.mxu0 0.0
    %3548 = vmatpush1.msra.mxu0 %v3265
    %3549 = vmatprep.subr.mxu0 0.0
    %3550 = vmatpush1.msra.mxu0 %v3268
    %3551 = vmatprep.subr.mxu0 0.0
    %3552 = vmatpush1.msra.mxu0 %v3271
    %3553 = vmatprep.subr.mxu0 0.0
    %3554 = vmatpush1.msra.mxu0 %v3274
    %3555 = vmatprep.subr.mxu0 0.0
    %3556 = vmatpush1.msra.mxu0 %v3277
    %3557 = vmatprep.subr.mxu0 0.0
    %3558 = vmatpush1.msra.mxu0 %v3280
    %3559 = vmatprep.subr.mxu0 0.0
    %3560 = vmatpush1.msra.mxu0 %v3283
    %3561 = vmatprep.subr.mxu0 0.0
    %3562 = vmatpush1.msra.mxu0 %v3286
    %3563 = vmatprep.subr.mxu0 0.0
    %3564 = vmatpush1.msra.mxu0 %v3289
    %3565 = vmatprep.subr.mxu0 0.0
    %3566 = vmatpush1.msra.mxu0 %v3292
    %3567 = vmatprep.subr.mxu0 0.0
    %3568 = vmatpush1.msra.mxu0 %v3295
    %3569 = vmatprep.subr.mxu0 0.0
    %3570 = vmatpush1.msra.mxu0 %v3298
    %3571 = vmatprep.subr.mxu0 0.0
    %3572 = vmatpush1.msra.mxu0 %v3301
    %3573 = vmatprep.subr.mxu0 0.0
    %3574 = vmatpush1.msra.mxu0 %v3304
    %3575 = vmatprep.subr.mxu0 0.0
    %3576 = vmatpush1.msra.mxu0 %v3307
    %3577 = vmatprep.subr.mxu0 0.0
    %3578 = vmatpush1.msra.mxu0 %v3310
    %3579 = vmatprep.subr.mxu0 0.0
    %3580 = vmatpush1.msra.mxu0 %v3313
    %3581 = vmatprep.subr.mxu0 0.0
    %3582 = vmatpush1.msra.mxu0 %v3316
    %3583 = vmatprep.mubr.f32.mxu0 %v3137
    %3584 = vmatmul.mubr.f32.gmra.mrb[0].mxu0 %v3135
    %v3585 = vpop.f32.mrb[0].mxu0
    %v3586 = vadd.f32 0.0, %v3585
    %v3587 = vpop.f32.mrb[0].mxu0
    %3588 = vmatprep.mubr.f32.mxu0 %v3143
    %3589 = vmatmul.mubr.f32.gmra.mrb[0].mxu0 %v3141
    %v3590 = vpop.f32.mrb[0].mxu0
    %v3591 = vadd.f32 0.0, %v3590
    %v3592 = vpop.f32.mrb[0].mxu0
    %3593 = vdwg.mxu0
    %3594 = vmatprep.subr.mxu0 0.0
    %3595 = vmatpush1.msra.mxu0 %v3319
    %3596 = vmatprep.subr.mxu0 0.0
    %3597 = vmatpush1.msra.mxu0 %v3322
    %3598 = vmatprep.subr.mxu0 0.0
    %3599 = vmatpush1.msra.mxu0 %v3325
    %3600 = vmatprep.subr.mxu0 0.0
    %3601 = vmatpush1.msra.mxu0 %v3328
    %3602 = vmatprep.subr.mxu0 0.0
    %3603 = vmatpush1.msra.mxu0 %v3331
    %3604 = vmatprep.subr.mxu0 0.0
    %3605 = vmatpush1.msra.mxu0 %v3334
    %3606 = vmatprep.subr.mxu0 0.0
    %3607 = vmatpush1.msra.mxu0 %v3337
    %3608 = vmatprep.subr.mxu0 0.0
    %3609 = vmatpush1.msra.mxu0 %v3340
    %3610 = vmatprep.subr.mxu0 0.0
    %3611 = vmatpush1.msra.mxu0 %v3343
    %3612 = vmatprep.subr.mxu0 0.0
    %3613 = vmatpush1.msra.mxu0 %v3346
    %3614 = vmatprep.subr.mxu0 0.0
    %3615 = vmatpush1.msra.mxu0 %v3349
    %3616 = vmatprep.subr.mxu0 0.0
    %3617 = vmatpush1.msra.mxu0 %v3352
    %3618 = vmatprep.subr.mxu0 0.0
    %3619 = vmatpush1.msra.mxu0 %v3355
    %3620 = vmatprep.subr.mxu0 0.0
    %3621 = vmatpush1.msra.mxu0 %v3358
    %3622 = vmatprep.subr.mxu0 0.0
    %3623 = vmatpush1.msra.mxu0 %v3361
    %3624 = vmatprep.subr.mxu0 0.0
    %3625 = vmatpush1.msra.mxu0 %v3364
    %3626 = vmatprep.subr.mxu0 0.0
    %3627 = vmatpush1.msra.mxu0 0.0
    %3628 = vmatprep.subr.mxu0 0.0
    %3629 = vmatpush1.msra.mxu0 0.0
    %3630 = vmatprep.subr.mxu0 0.0
    %3631 = vmatpush1.msra.mxu0 0.0
    %3632 = vmatprep.subr.mxu0 0.0
    %3633 = vmatpush1.msra.mxu0 0.0
    %3634 = vmatprep.subr.mxu0 0.0
    %3635 = vmatpush1.msra.mxu0 0.0
    %3636 = vmatprep.subr.mxu0 0.0
    %3637 = vmatpush1.msra.mxu0 0.0
    %3638 = vmatprep.subr.mxu0 0.0
    %3639 = vmatpush1.msra.mxu0 0.0
    %3640 = vmatprep.subr.mxu0 0.0
    %3641 = vmatpush1.msra.mxu0 0.0
    %3642 = vmatprep.subr.mxu0 0.0
    %3643 = vmatpush1.msra.mxu0 0.0
    %3644 = vmatprep.subr.mxu0 0.0
    %3645 = vmatpush1.msra.mxu0 0.0
    %3646 = vmatprep.subr.mxu0 0.0
    %3647 = vmatpush1.msra.mxu0 0.0
    %3648 = vmatprep.subr.mxu0 0.0
    %3649 = vmatpush1.msra.mxu0 0.0
    %3650 = vmatprep.subr.mxu0 0.0
    %3651 = vmatpush1.msra.mxu0 0.0
    %3652 = vmatprep.subr.mxu0 0.0
    %3653 = vmatpush1.msra.mxu0 0.0
    %3654 = vmatprep.subr.mxu0 0.0
    %3655 = vmatpush1.msra.mxu0 0.0
    %3656 = vmatprep.subr.mxu0 0.0
    %3657 = vmatpush1.msra.mxu0 0.0
    %3658 = vmatprep.mubr.f32.mxu0 0.0
    %3659 = vmatmul.mubr.f32.gmra.mrb[0].mxu0 %v3212
    %v3660 = vpop.f32.mrb[0].mxu0
    %v3661 = vadd.f32 %v3586, %v3660
    %v3662 = vpop.f32.mrb[0].mxu0
    %3663 = vmatprep.mubr.f32.mxu0 0.0
    %3664 = vmatmul.mubr.f32.gmra.mrb[0].mxu0 %v3217
    %v3665 = vpop.f32.mrb[0].mxu0
    %v3666 = vadd.f32 %v3591, %v3665
    %v3667 = vpop.f32.mrb[0].mxu0
    %3668 = vdwg.mxu0
    %v3669 = vadd.f32 %v2899, %v3509
    %v3670 = vadd.f32 %v2901, %v3511
    %v3671 = vadd.f32 %v3051, %v3661
    %v3672 = vadd.f32 %v2905, %v3515
    %v3673 = vadd.f32 %v2907, %v3517
    %v3674 = vadd.f32 %v3056, %v3666
    %v3675 = vld [vmem:[%s9] sm:$0x7]
    %v3677 = vlaneseq
    %v3678 = vshrl.u32 %v3677, 7
    %v3679 = vsub.s32 0, %v3678
    %v3680 = vrot.slane %v3675, %v3679
    %v3681 = vlaneseq
    %v3682 = vshrl.u32 %v3681, 7
    %v3683 = vsub.s32 1, %v3682
    %v3684 = vrot.slane %v3675, %v3683
    %v3685 = vlaneseq
    %v3686 = vshrl.u32 %v3685, 7
    %v3687 = vsub.s32 2, %v3686
    %v3688 = vrot.slane %v3675, %v3687
    %v3692 = vadd.f32 %v3669, %v3680
    %v3693 = vadd.f32 %v3670, %v3684
    %v3694 = vadd.f32 %v3671, %v3688
    %v3695 = vadd.f32 %v3672, %v3680
    %v3696 = vadd.f32 %v3673, %v3684
    %v3697 = vadd.f32 %v3674, %v3688
    %vm3698 = vcmp.ge.f32.partialorder %v3692, 0.0
    %vm3699 = vcmp.ge.f32.partialorder %v3693, 0.0
    %vm3700 = vcmp.ge.f32.partialorder %v3694, 0.0
    %vm3701 = vcmp.ge.f32.partialorder %v3695, 0.0
    %vm3702 = vcmp.ge.f32.partialorder %v3696, 0.0
    %vm3703 = vcmp.ge.f32.partialorder %v3697, 0.0
    %v3704 = vmul.f32 %v3692, 0.2
    %v3705 = vmul.f32 %v3693, 0.2
    %v3706 = vmul.f32 %v3694, 0.2
    %v3707 = vmul.f32 %v3695, 0.2
    %v3708 = vmul.f32 %v3696, 0.2
    %v3709 = vmul.f32 %v3697, 0.2
    %v3710 = vsel %vm3698, %v3692, %v3704
    %v3711 = vsel %vm3699, %v3693, %v3705
    %v3712 = vsel %vm3700, %v3694, %v3706
    %v3713 = vsel %vm3701, %v3695, %v3707
    %v3714 = vsel %vm3702, %v3696, %v3708
    %v3715 = vsel %vm3703, %v3697, %v3709
    %v3716 = vld [vmem:[%s10] sm:$0xff]
    %v3717 = vld [vmem:[%s10 + $0x8] sm:$0x3]
    %vm3718 = vcmask 80896
    %v3720 = vsel %vm3718, %v3716, 0
    %v3723 = vsel %vm3718, %v3717, 0
    %v3726 = vsel %vm753, %v3713, 0
    %v3729 = vsel %vm753, %v3714, 0
    %v3732 = vsel %vm753, %v3715, 0
    %3734 = vmatprep.subr.mxu0 %v3711
    %3735 = vmatpush1.msra.mxu0 %v3710
    %3736 = vmatprep.subr.mxu0 %v3729
    %3737 = vmatpush1.msra.mxu0 %v3726
    %3738 = vmatprep.subr.mxu0 0.0
    %3739 = vmatpush1.msra.mxu0 0.0
    %3740 = vmatprep.subr.mxu0 0.0
    %3741 = vmatpush1.msra.mxu0 0.0
    %3742 = vmatprep.subr.mxu0 0.0
    %3743 = vmatpush1.msra.mxu0 0.0
    %3744 = vmatprep.subr.mxu0 0.0
    %3745 = vmatpush1.msra.mxu0 0.0
    %3746 = vmatprep.subr.mxu0 0.0
    %3747 = vmatpush1.msra.mxu0 0.0
    %3748 = vmatprep.subr.mxu0 0.0
    %3749 = vmatpush1.msra.mxu0 0.0
    %3750 = vmatprep.subr.mxu0 0.0
    %3751 = vmatpush1.msra.mxu0 0.0
    %3752 = vmatprep.subr.mxu0 0.0
    %3753 = vmatpush1.msra.mxu0 0.0
    %3754 = vmatprep.subr.mxu0 0.0
    %3755 = vmatpush1.msra.mxu0 0.0
    %3756 = vmatprep.subr.mxu0 0.0
    %3757 = vmatpush1.msra.mxu0 0.0
    %3758 = vmatprep.subr.mxu0 0.0
    %3759 = vmatpush1.msra.mxu0 0.0
    %3760 = vmatprep.subr.mxu0 0.0
    %3761 = vmatpush1.msra.mxu0 0.0
    %3762 = vmatprep.subr.mxu0 0.0
    %3763 = vmatpush1.msra.mxu0 0.0
    %3764 = vmatprep.subr.mxu0 0.0
    %3765 = vmatpush1.msra.mxu0 0.0
    %3766 = vmatprep.subr.mxu0 0.0
    %3767 = vmatpush1.msra.mxu0 0.0
    %3768 = vmatprep.subr.mxu0 0.0
    %3769 = vmatpush1.msra.mxu0 0.0
    %3770 = vmatprep.subr.mxu0 0.0
    %3771 = vmatpush1.msra.mxu0 0.0
    %3772 = vmatprep.subr.mxu0 0.0
    %3773 = vmatpush1.msra.mxu0 0.0
    %3774 = vmatprep.subr.mxu0 0.0
    %3775 = vmatpush1.msra.mxu0 0.0
    %3776 = vmatprep.subr.mxu0 0.0
    %3777 = vmatpush1.msra.mxu0 0.0
    %3778 = vmatprep.subr.mxu0 0.0
    %3779 = vmatpush1.msra.mxu0 0.0
    %3780 = vmatprep.subr.mxu0 0.0
    %3781 = vmatpush1.msra.mxu0 0.0
    %3782 = vmatprep.subr.mxu0 0.0
    %3783 = vmatpush1.msra.mxu0 0.0
    %3784 = vmatprep.subr.mxu0 0.0
    %3785 = vmatpush1.msra.mxu0 0.0
    %3786 = vmatprep.subr.mxu0 0.0
    %3787 = vmatpush1.msra.mxu0 0.0
    %3788 = vmatprep.subr.mxu0 0.0
    %3789 = vmatpush1.msra.mxu0 0.0
    %3790 = vmatprep.subr.mxu0 0.0
    %3791 = vmatpush1.msra.mxu0 0.0
    %3792 = vmatprep.subr.mxu0 0.0
    %3793 = vmatpush1.msra.mxu0 0.0
    %3794 = vmatprep.subr.mxu0 0.0
    %3795 = vmatpush1.msra.mxu0 0.0
    %3796 = vmatprep.subr.mxu0 0.0
    %3797 = vmatpush1.msra.mxu0 0.0
    %3798 = vmatprep.mubr.f32.mxu0 0.0
    %3799 = vmatmul.mubr.f32.gmra.mrb[0].mxu0 %v3720
    %v3800 = vpop.f32.mrb[0].mxu0
    %v3801 = vadd.f32 0.0, %v3800
    %v3802 = vpop.f32.mrb[0].mxu0
    %v3803 = vadd.f32 0.0, %v3802
    %3804 = vmatprep.mubr.f32.mxu0 0.0
    %3805 = vmatmul.mubr.f32.gmra.mrb[0].mxu0 %v3723
    %v3806 = vpop.f32.mrb[0].mxu0
    %v3807 = vadd.f32 0.0, %v3806
    %v3808 = vpop.f32.mrb[0].mxu0
    %v3809 = vadd.f32 0.0, %v3808
    %3810 = vdwg.mxu0
    %3811 = vmatprep.subr.mxu0 0.0
    %3812 = vmatpush1.msra.mxu0 %v3712
    %3813 = vmatprep.subr.mxu0 0.0
    %3814 = vmatpush1.msra.mxu0 %v3732
    %3815 = vmatprep.subr.mxu0 0.0
    %3816 = vmatpush1.msra.mxu0 0.0
    %3817 = vmatprep.subr.mxu0 0.0
    %3818 = vmatpush1.msra.mxu0 0.0
    %3819 = vmatprep.subr.mxu0 0.0
    %3820 = vmatpush1.msra.mxu0 0.0
    %3821 = vmatprep.subr.mxu0 0.0
    %3822 = vmatpush1.msra.mxu0 0.0
    %3823 = vmatprep.subr.mxu0 0.0
    %3824 = vmatpush1.msra.mxu0 0.0
    %3825 = vmatprep.subr.mxu0 0.0
    %3826 = vmatpush1.msra.mxu0 0.0
    %3827 = vmatprep.subr.mxu0 0.0
    %3828 = vmatpush1.msra.mxu0 0.0
    %3829 = vmatprep.subr.mxu0 0.0
    %3830 = vmatpush1.msra.mxu0 0.0
    %3831 = vmatprep.subr.mxu0 0.0
    %3832 = vmatpush1.msra.mxu0 0.0
    %3833 = vmatprep.subr.mxu0 0.0
    %3834 = vmatpush1.msra.mxu0 0.0
    %3835 = vmatprep.subr.mxu0 0.0
    %3836 = vmatpush1.msra.mxu0 0.0
    %3837 = vmatprep.subr.mxu0 0.0
    %3838 = vmatpush1.msra.mxu0 0.0
    %3839 = vmatprep.subr.mxu0 0.0
    %3840 = vmatpush1.msra.mxu0 0.0
    %3841 = vmatprep.subr.mxu0 0.0
    %3842 = vmatpush1.msra.mxu0 0.0
    %3843 = vmatprep.subr.mxu0 0.0
    %3844 = vmatpush1.msra.mxu0 0.0
    %3845 = vmatprep.subr.mxu0 0.0
    %3846 = vmatpush1.msra.mxu0 0.0
    %3847 = vmatprep.subr.mxu0 0.0
    %3848 = vmatpush1.msra.mxu0 0.0
    %3849 = vmatprep.subr.mxu0 0.0
    %3850 = vmatpush1.msra.mxu0 0.0
    %3851 = vmatprep.subr.mxu0 0.0
    %3852 = vmatpush1.msra.mxu0 0.0
    %3853 = vmatprep.subr.mxu0 0.0
    %3854 = vmatpush1.msra.mxu0 0.0
    %3855 = vmatprep.subr.mxu0 0.0
    %3856 = vmatpush1.msra.mxu0 0.0
    %3857 = vmatprep.subr.mxu0 0.0
    %3858 = vmatpush1.msra.mxu0 0.0
    %3859 = vmatprep.subr.mxu0 0.0
    %3860 = vmatpush1.msra.mxu0 0.0
    %3861 = vmatprep.subr.mxu0 0.0
    %3862 = vmatpush1.msra.mxu0 0.0
    %3863 = vmatprep.subr.mxu0 0.0
    %3864 = vmatpush1.msra.mxu0 0.0
    %3865 = vmatprep.subr.mxu0 0.0
    %3866 = vmatpush1.msra.mxu0 0.0
    %3867 = vmatprep.subr.mxu0 0.0
    %3868 = vmatpush1.msra.mxu0 0.0
    %3869 = vmatprep.subr.mxu0 0.0
    %3870 = vmatpush1.msra.mxu0 0.0
    %3871 = vmatprep.subr.mxu0 0.0
    %3872 = vmatpush1.msra.mxu0 0.0
    %3873 = vmatprep.subr.mxu0 0.0
    %3874 = vmatpush1.msra.mxu0 0.0
    %3875 = vmatprep.mubr.f32.mxu0 0.0
    %3876 = vmatmul.mubr.f32.gmra.mrb[0].mxu0 %v3720
    %v3877 = vpop.f32.mrb[0].mxu0
    %v3878 = vadd.f32 0.0, %v3877
    %v3879 = vpop.f32.mrb[0].mxu0
    %3880 = vmatprep.mubr.f32.mxu0 0.0
    %3881 = vmatmul.mubr.f32.gmra.mrb[0].mxu0 %v3723
    %v3882 = vpop.f32.mrb[0].mxu0
    %v3883 = vadd.f32 0.0, %v3882
    %v3884 = vpop.f32.mrb[0].mxu0
    %3885 = vdwg.mxu0
    %v3886 = vld [vmem:[#allocation5] sm:$0xff]
    %v3887 = vld [vmem:[#allocation5 + $0x8] sm:$0xff]
    %v3888 = vld [vmem:[#allocation5 + $0x10] sm:$0xff]
    %v3889 = vld [vmem:[#allocation5 + $0x18] sm:$0xff]
    %v3890 = vld [vmem:[#allocation5 + $0x20] sm:$0xff]
    %v3891 = vld [vmem:[#allocation5 + $0x28] sm:$0xff]
    %v3892 = vld [vmem:[#allocation5 + $0x30] sm:$0xff]
    %v3893 = vld [vmem:[#allocation5 + $0x38] sm:$0xff]
    %v3894 = vld [vmem:[#allocation5 + $0x40] sm:$0xff]
    %v3895 = vld [vmem:[#allocation5 + $0x48] sm:$0xff]
    %v3896 = vld [vmem:[#allocation5 + $0x50] sm:$0xff]
    %v3897 = vld [vmem:[#allocation5 + $0x58] sm:$0xff]
    %v3898 = vld [vmem:[#allocation5 + $0x60] sm:$0xff]
    %v3899 = vld [vmem:[#allocation5 + $0x68] sm:$0xff]
    %v3900 = vld [vmem:[#allocation5 + $0x70] sm:$0xff]
    %v3901 = vld [vmem:[#allocation5 + $0x78] sm:$0xff]
    %v3902 = vld [vmem:[#allocation5 + $0x80] sm:$0xff]
    %v3903 = vld [vmem:[#allocation5 + $0x88] sm:$0xff]
    %v3904 = vld [vmem:[#allocation5 + $0x90] sm:$0xff]
    %v3905 = vld [vmem:[#allocation5 + $0x98] sm:$0xff]
    %v3906 = vld [vmem:[#allocation5 + $0xa0] sm:$0xff]
    %v3907 = vld [vmem:[#allocation5 + $0xa8] sm:$0xff]
    %v3908 = vld [vmem:[#allocation5 + $0xb0] sm:$0xff]
    %v3909 = vld [vmem:[#allocation5 + $0xb8] sm:$0xff]
    %v3910 = vld [vmem:[#allocation5 + $0xc0] sm:$0xff]
    %v3911 = vld [vmem:[#allocation5 + $0xc8] sm:$0xff]
    %v3912 = vld [vmem:[#allocation5 + $0xd0] sm:$0xff]
    %v3913 = vld [vmem:[#allocation5 + $0xd8] sm:$0xff]
    %v3914 = vld [vmem:[#allocation5 + $0xe0] sm:$0xff]
    %v3915 = vld [vmem:[#allocation5 + $0xe8] sm:$0xff]
    %v3916 = vld [vmem:[#allocation5 + $0xf0] sm:$0xff]
    %v3917 = vld [vmem:[#allocation5 + $0xf8] sm:$0xff]
    %v3918 = vld [vmem:[#allocation5 + $0x100] sm:$0xff]
    %v3919 = vld [vmem:[#allocation5 + $0x108] sm:$0xff]
    %v3920 = vld [vmem:[#allocation5 + $0x110] sm:$0xff]
    %v3921 = vld [vmem:[#allocation5 + $0x118] sm:$0xff]
    %v3922 = vld [vmem:[#allocation5 + $0x120] sm:$0xff]
    %v3923 = vld [vmem:[#allocation5 + $0x128] sm:$0xff]
    %v3924 = vld [vmem:[#allocation5 + $0x130] sm:$0xff]
    %v3925 = vld [vmem:[#allocation5 + $0x138] sm:$0xff]
    %v3926 = vld [vmem:[#allocation5 + $0x140] sm:$0xff]
    %v3927 = vld [vmem:[#allocation5 + $0x148] sm:$0xff]
    %v3928 = vld [vmem:[#allocation5 + $0x150] sm:$0xff]
    %v3929 = vld [vmem:[#allocation5 + $0x158] sm:$0xff]
    %v3930 = vld [vmem:[#allocation5 + $0x160] sm:$0xff]
    %v3931 = vld [vmem:[#allocation5 + $0x168] sm:$0xff]
    %v3932 = vld [vmem:[#allocation5 + $0x170] sm:$0xff]
    %v3933 = vld [vmem:[#allocation5 + $0x178] sm:$0xff]
    %v3934 = vld [vmem:[#allocation5 + $0x180] sm:$0xff]
    %v3935 = vld [vmem:[#allocation5 + $0x188] sm:$0xff]
    %v3936 = vld [vmem:[#allocation5 + $0x190] sm:$0xff]
    %v3937 = vld [vmem:[#allocation5 + $0x198] sm:$0xff]
    %v3938 = vld [vmem:[#allocation5 + $0x1a0] sm:$0xff]
    %v3939 = vld [vmem:[#allocation5 + $0x1a8] sm:$0xff]
    %v3940 = vld [vmem:[#allocation5 + $0x1b0] sm:$0xff]
    %v3941 = vld [vmem:[#allocation5 + $0x1b8] sm:$0xff]
    %v3942 = vld [vmem:[#allocation5 + $0x1c0] sm:$0xff]
    %v3943 = vld [vmem:[#allocation5 + $0x1c8] sm:$0xff]
    %v3944 = vld [vmem:[#allocation5 + $0x1d0] sm:$0xff]
    %v3945 = vld [vmem:[#allocation5 + $0x1d8] sm:$0xff]
    %v3946 = vld [vmem:[#allocation5 + $0x1e0] sm:$0xff]
    %v3947 = vld [vmem:[#allocation5 + $0x1e8] sm:$0xff]
    %v3948 = vld [vmem:[#allocation5 + $0x1f0] sm:$0xff]
    %v3949 = vld [vmem:[#allocation5 + $0x1f8] sm:$0xff]
    %v3950 = vld [vmem:[#allocation5 + $0x200] sm:$0xff]
    %v3951 = vld [vmem:[#allocation5 + $0x208] sm:$0xff]
    %v3952 = vld [vmem:[#allocation5 + $0x210] sm:$0xff]
    %v3953 = vld [vmem:[#allocation5 + $0x218] sm:$0xff]
    %v3954 = vld [vmem:[#allocation5 + $0x220] sm:$0xff]
    %v3955 = vld [vmem:[#allocation5 + $0x228] sm:$0xff]
    %v3956 = vld [vmem:[#allocation5 + $0x230] sm:$0xff]
    %v3957 = vld [vmem:[#allocation5 + $0x238] sm:$0xff]
    %v3958 = vld [vmem:[#allocation5 + $0x240] sm:$0xff]
    %v3959 = vld [vmem:[#allocation5 + $0x248] sm:$0xff]
    %v3960 = vld [vmem:[#allocation5 + $0x250] sm:$0xff]
    %v3961 = vld [vmem:[#allocation5 + $0x258] sm:$0xff]
    %v3962 = vld [vmem:[#allocation5 + $0x260] sm:$0xff]
    %v3963 = vld [vmem:[#allocation5 + $0x268] sm:$0xff]
    %v3964 = vld [vmem:[#allocation5 + $0x270] sm:$0xff]
    %v3965 = vld [vmem:[#allocation5 + $0x278] sm:$0xff]
    %v3966 = vld [vmem:[#allocation5 + $0x280] sm:$0xff]
    %v3967 = vld [vmem:[#allocation5 + $0x288] sm:$0xff]
    %v3968 = vld [vmem:[#allocation5 + $0x290] sm:$0xff]
    %v3969 = vld [vmem:[#allocation5 + $0x298] sm:$0xff]
    %v3970 = vld [vmem:[#allocation5 + $0x2a0] sm:$0xff]
    %v3971 = vld [vmem:[#allocation5 + $0x2a8] sm:$0xff]
    %v3972 = vld [vmem:[#allocation5 + $0x2b0] sm:$0xff]
    %v3973 = vld [vmem:[#allocation5 + $0x2b8] sm:$0xff]
    %v3974 = vld [vmem:[#allocation5 + $0x2c0] sm:$0xff]
    %v3975 = vld [vmem:[#allocation5 + $0x2c8] sm:$0xff]
    %v3976 = vld [vmem:[#allocation5 + $0x2d0] sm:$0xff]
    %v3977 = vld [vmem:[#allocation5 + $0x2d8] sm:$0xff]
    %v3978 = vld [vmem:[#allocation5 + $0x2e0] sm:$0xff]
    %v3979 = vld [vmem:[#allocation5 + $0x2e8] sm:$0xff]
    %v3980 = vld [vmem:[#allocation5 + $0x2f0] sm:$0xff]
    %v3981 = vld [vmem:[#allocation5 + $0x2f8] sm:$0xff]
    %v3982 = vld [vmem:[#allocation5 + $0x300] sm:$0xff]
    %v3983 = vld [vmem:[#allocation5 + $0x308] sm:$0xff]
    %v3984 = vld [vmem:[#allocation5 + $0x310] sm:$0xff]
    %v3985 = vld [vmem:[#allocation5 + $0x318] sm:$0xff]
    %v3986 = vld [vmem:[#allocation5 + $0x320] sm:$0xff]
    %v3987 = vld [vmem:[#allocation5 + $0x328] sm:$0xff]
    %v3988 = vld [vmem:[#allocation5 + $0x330] sm:$0xff]
    %v3989 = vld [vmem:[#allocation5 + $0x338] sm:$0xff]
    %v3990 = vld [vmem:[#allocation5 + $0x340] sm:$0xff]
    %v3991 = vld [vmem:[#allocation5 + $0x348] sm:$0xff]
    %v3992 = vld [vmem:[#allocation5 + $0x350] sm:$0xff]
    %v3993 = vld [vmem:[#allocation5 + $0x358] sm:$0xff]
    %v3994 = vld [vmem:[#allocation5 + $0x360] sm:$0xff]
    %v3995 = vld [vmem:[#allocation5 + $0x368] sm:$0xff]
    %v3996 = vld [vmem:[#allocation5 + $0x370] sm:$0xff]
    %v3997 = vld [vmem:[#allocation5 + $0x378] sm:$0xff]
    %v3998 = vld [vmem:[#allocation5 + $0x380] sm:$0xff]
    %v3999 = vld [vmem:[#allocation5 + $0x388] sm:$0xff]
    %v4000 = vld [vmem:[#allocation5 + $0x390] sm:$0xff]
    %v4001 = vld [vmem:[#allocation5 + $0x398] sm:$0xff]
    %v4002 = vld [vmem:[#allocation5 + $0x3a0] sm:$0xff]
    %v4003 = vld [vmem:[#allocation5 + $0x3a8] sm:$0xff]
    %v4004 = vld [vmem:[#allocation5 + $0x3b0] sm:$0xff]
    %v4005 = vld [vmem:[#allocation5 + $0x3b8] sm:$0xff]
    %v4006 = vld [vmem:[#allocation5 + $0x3c0] sm:$0xff]
    %v4007 = vld [vmem:[#allocation5 + $0x3c8] sm:$0xff]
    %v4008 = vld [vmem:[#allocation5 + $0x3d0] sm:$0xff]
    %v4009 = vld [vmem:[#allocation5 + $0x3d8] sm:$0xff]
    %v4010 = vld [vmem:[#allocation5 + $0x3e0] sm:$0xff]
    %v4011 = vld [vmem:[#allocation5 + $0x3e8] sm:$0xff]
    %v4012 = vld [vmem:[#allocation5 + $0x3f0] sm:$0xff]
    %v4013 = vld [vmem:[#allocation5 + $0x3f8] sm:$0xff]
    %v4014 = vld [vmem:[#allocation5 + $0x400] sm:$0xff]
    %v4015 = vld [vmem:[#allocation5 + $0x408] sm:$0xff]
    %v4016 = vld [vmem:[#allocation5 + $0x410] sm:$0xff]
    %v4017 = vld [vmem:[#allocation5 + $0x418] sm:$0xff]
    %v4018 = vld [vmem:[#allocation5 + $0x420] sm:$0xff]
    %v4019 = vld [vmem:[#allocation5 + $0x428] sm:$0xff]
    %v4020 = vld [vmem:[#allocation5 + $0x430] sm:$0xff]
    %v4021 = vld [vmem:[#allocation5 + $0x438] sm:$0xff]
    %v4022 = vld [vmem:[#allocation5 + $0x440] sm:$0xff]
    %v4023 = vld [vmem:[#allocation5 + $0x448] sm:$0xff]
    %v4024 = vld [vmem:[#allocation5 + $0x450] sm:$0xff]
    %v4025 = vld [vmem:[#allocation5 + $0x458] sm:$0xff]
    %v4026 = vld [vmem:[#allocation5 + $0x460] sm:$0xff]
    %v4027 = vld [vmem:[#allocation5 + $0x468] sm:$0xff]
    %v4028 = vld [vmem:[#allocation5 + $0x470] sm:$0xff]
    %v4029 = vld [vmem:[#allocation5 + $0x478] sm:$0xff]
    %v4030 = vld [vmem:[#allocation5 + $0x480] sm:$0xff]
    %v4031 = vld [vmem:[#allocation5 + $0x488] sm:$0xff]
    %v4032 = vld [vmem:[#allocation5 + $0x490] sm:$0xff]
    %v4033 = vld [vmem:[#allocation5 + $0x498] sm:$0xff]
    %v4034 = vld [vmem:[#allocation5 + $0x4a0] sm:$0xff]
    %v4035 = vld [vmem:[#allocation5 + $0x4a8] sm:$0xff]
    %v4036 = vld [vmem:[#allocation5 + $0x4b0] sm:$0xff]
    %v4037 = vld [vmem:[#allocation5 + $0x4b8] sm:$0xff]
    %v4038 = vld [vmem:[#allocation5 + $0x4c0] sm:$0xff]
    %v4039 = vld [vmem:[#allocation5 + $0x4c8] sm:$0xff]
    %v4040 = vld [vmem:[#allocation5 + $0x4d0] sm:$0xff]
    %v4041 = vld [vmem:[#allocation5 + $0x4d8] sm:$0xff]
    %v4042 = vld [vmem:[#allocation5 + $0x4e0] sm:$0xff]
    %v4043 = vld [vmem:[#allocation5 + $0x4e8] sm:$0xff]
    %v4044 = vld [vmem:[#allocation5 + $0x4f0] sm:$0xff]
    %v4045 = vld [vmem:[#allocation5 + $0x4f8] sm:$0xff]
    %v4046 = vld [vmem:[#allocation5 + $0x500] sm:$0xff]
    %v4047 = vld [vmem:[#allocation5 + $0x508] sm:$0xff]
    %v4048 = vld [vmem:[#allocation5 + $0x510] sm:$0xff]
    %v4049 = vld [vmem:[#allocation5 + $0x518] sm:$0xff]
    %v4050 = vld [vmem:[#allocation5 + $0x520] sm:$0xff]
    %v4051 = vld [vmem:[#allocation5 + $0x528] sm:$0xff]
    %v4052 = vld [vmem:[#allocation5 + $0x530] sm:$0xff]
    %v4053 = vld [vmem:[#allocation5 + $0x538] sm:$0xff]
    %v4054 = vld [vmem:[#allocation5 + $0x540] sm:$0xff]
    %v4055 = vld [vmem:[#allocation5 + $0x548] sm:$0xff]
    %v4056 = vld [vmem:[#allocation5 + $0x550] sm:$0xff]
    %v4057 = vld [vmem:[#allocation5 + $0x558] sm:$0xff]
    %v4058 = vld [vmem:[#allocation5 + $0x560] sm:$0xff]
    %v4059 = vld [vmem:[#allocation5 + $0x568] sm:$0xff]
    %v4060 = vld [vmem:[#allocation5 + $0x570] sm:$0xff]
    %v4061 = vld [vmem:[#allocation5 + $0x578] sm:$0xff]
    %v4062 = vld [vmem:[#allocation5 + $0x580] sm:$0xff]
    %v4063 = vld [vmem:[#allocation5 + $0x588] sm:$0xff]
    %v4064 = vld [vmem:[#allocation5 + $0x590] sm:$0xff]
    %v4065 = vld [vmem:[#allocation5 + $0x598] sm:$0xff]
    %v4066 = vld [vmem:[#allocation5 + $0x5a0] sm:$0xff]
    %v4067 = vld [vmem:[#allocation5 + $0x5a8] sm:$0xff]
    %v4068 = vld [vmem:[#allocation5 + $0x5b0] sm:$0xff]
    %v4069 = vld [vmem:[#allocation5 + $0x5b8] sm:$0xff]
    %v4070 = vld [vmem:[#allocation5 + $0x5c0] sm:$0xff]
    %v4071 = vld [vmem:[#allocation5 + $0x5c8] sm:$0xff]
    %v4072 = vld [vmem:[#allocation5 + $0x5d0] sm:$0xff]
    %v4073 = vld [vmem:[#allocation5 + $0x5d8] sm:$0xff]
    %v4074 = vld [vmem:[#allocation5 + $0x5e0] sm:$0xff]
    %v4075 = vld [vmem:[#allocation5 + $0x5e8] sm:$0xff]
    %v4076 = vld [vmem:[#allocation5 + $0x5f0] sm:$0xff]
    %v4077 = vld [vmem:[#allocation5 + $0x5f8] sm:$0xff]
    %v4078 = vld [vmem:[#allocation5 + $0x600] sm:$0xff]
    %v4079 = vld [vmem:[#allocation5 + $0x608] sm:$0xff]
    %v4080 = vld [vmem:[#allocation5 + $0x610] sm:$0xff]
    %v4081 = vld [vmem:[#allocation5 + $0x618] sm:$0xff]
    %v4082 = vld [vmem:[#allocation5 + $0x620] sm:$0xff]
    %v4083 = vld [vmem:[#allocation5 + $0x628] sm:$0xff]
    %v4084 = vld [vmem:[#allocation5 + $0x630] sm:$0xff]
    %v4085 = vld [vmem:[#allocation5 + $0x638] sm:$0xff]
    %v4086 = vld [vmem:[#allocation5 + $0x640] sm:$0xff]
    %v4087 = vld [vmem:[#allocation5 + $0x648] sm:$0xff]
    %v4088 = vld [vmem:[#allocation5 + $0x650] sm:$0xff]
    %v4089 = vld [vmem:[#allocation5 + $0x658] sm:$0xff]
    %v4090 = vld [vmem:[#allocation5 + $0x660] sm:$0xff]
    %v4091 = vld [vmem:[#allocation5 + $0x668] sm:$0xff]
    %v4092 = vld [vmem:[#allocation5 + $0x670] sm:$0xff]
    %v4093 = vld [vmem:[#allocation5 + $0x678] sm:$0xff]
    %v4094 = vld [vmem:[#allocation5 + $0x680] sm:$0xff]
    %v4095 = vld [vmem:[#allocation5 + $0x688] sm:$0xff]
    %v4096 = vld [vmem:[#allocation5 + $0x690] sm:$0xff]
    %v4097 = vld [vmem:[#allocation5 + $0x698] sm:$0xff]
    %v4098 = vld [vmem:[#allocation5 + $0x6a0] sm:$0xff]
    %v4099 = vld [vmem:[#allocation5 + $0x6a8] sm:$0xff]
    %v4100 = vld [vmem:[#allocation5 + $0x6b0] sm:$0xff]
    %v4101 = vld [vmem:[#allocation5 + $0x6b8] sm:$0xff]
    %v4102 = vld [vmem:[#allocation5 + $0x6c0] sm:$0xff]
    %v4103 = vld [vmem:[#allocation5 + $0x6c8] sm:$0xff]
    %v4104 = vld [vmem:[#allocation5 + $0x6d0] sm:$0xff]
    %v4105 = vld [vmem:[#allocation5 + $0x6d8] sm:$0xff]
    %v4106 = vld [vmem:[#allocation5 + $0x6e0] sm:$0xff]
    %v4107 = vld [vmem:[#allocation5 + $0x6e8] sm:$0xff]
    %v4108 = vld [vmem:[#allocation5 + $0x6f0] sm:$0xff]
    %v4109 = vld [vmem:[#allocation5 + $0x6f8] sm:$0xff]
    %v4110 = vld [vmem:[#allocation5 + $0x700] sm:$0xff]
    %v4111 = vld [vmem:[#allocation5 + $0x708] sm:$0xff]
    %v4112 = vld [vmem:[#allocation5 + $0x710] sm:$0xff]
    %v4113 = vld [vmem:[#allocation5 + $0x718] sm:$0xff]
    %v4114 = vld [vmem:[#allocation5 + $0x720] sm:$0xff]
    %v4115 = vld [vmem:[#allocation5 + $0x728] sm:$0xff]
    %v4116 = vld [vmem:[#allocation5 + $0x730] sm:$0xff]
    %v4117 = vld [vmem:[#allocation5 + $0x738] sm:$0xff]
    %v4118 = vld [vmem:[#allocation5 + $0x740] sm:$0xff]
    %v4119 = vld [vmem:[#allocation5 + $0x748] sm:$0xff]
    %v4120 = vld [vmem:[#allocation5 + $0x750] sm:$0xff]
    %v4121 = vld [vmem:[#allocation5 + $0x758] sm:$0xff]
    %v4122 = vld [vmem:[#allocation5 + $0x760] sm:$0xff]
    %v4123 = vld [vmem:[#allocation5 + $0x768] sm:$0xff]
    %v4124 = vld [vmem:[#allocation5 + $0x770] sm:$0xff]
    %v4125 = vld [vmem:[#allocation5 + $0x778] sm:$0xff]
    %v4126 = vld [vmem:[#allocation5 + $0x780] sm:$0xff]
    %v4127 = vld [vmem:[#allocation5 + $0x788] sm:$0xff]
    %v4128 = vld [vmem:[#allocation5 + $0x790] sm:$0xff]
    %v4129 = vld [vmem:[#allocation5 + $0x798] sm:$0xff]
    %v4130 = vld [vmem:[#allocation5 + $0x7a0] sm:$0xff]
    %v4131 = vld [vmem:[#allocation5 + $0x7a8] sm:$0xff]
    %v4132 = vld [vmem:[#allocation5 + $0x7b0] sm:$0xff]
    %v4133 = vld [vmem:[#allocation5 + $0x7b8] sm:$0xff]
    %v4134 = vld [vmem:[#allocation5 + $0x7c0] sm:$0xff]
    %v4135 = vld [vmem:[#allocation5 + $0x7c8] sm:$0xff]
    %v4136 = vld [vmem:[#allocation5 + $0x7d0] sm:$0xff]
    %v4137 = vld [vmem:[#allocation5 + $0x7d8] sm:$0xff]
    %v4138 = vld [vmem:[#allocation5 + $0x7e0] sm:$0xff]
    %v4139 = vld [vmem:[#allocation5 + $0x7e8] sm:$0xff]
    %v4140 = vld [vmem:[#allocation5 + $0x7f0] sm:$0xff]
    %v4141 = vld [vmem:[#allocation5 + $0x7f8] sm:$0xff]
    %v4142 = vld [vmem:[#allocation5 + $0x800] sm:$0xff]
    %v4143 = vld [vmem:[#allocation5 + $0x808] sm:$0xff]
    %v4144 = vld [vmem:[#allocation5 + $0x810] sm:$0xff]
    %v4145 = vld [vmem:[#allocation5 + $0x818] sm:$0xff]
    %v4146 = vld [vmem:[#allocation5 + $0x820] sm:$0xff]
    %v4147 = vld [vmem:[#allocation5 + $0x828] sm:$0xff]
    %v4148 = vld [vmem:[#allocation5 + $0x830] sm:$0xff]
    %v4149 = vld [vmem:[#allocation5 + $0x838] sm:$0xff]
    %v4150 = vld [vmem:[#allocation5 + $0x840] sm:$0xff]
    %v4151 = vld [vmem:[#allocation5 + $0x848] sm:$0xff]
    %v4152 = vld [vmem:[#allocation5 + $0x850] sm:$0xff]
    %v4153 = vld [vmem:[#allocation5 + $0x858] sm:$0xff]
    %v4154 = vld [vmem:[#allocation5 + $0x860] sm:$0xff]
    %v4155 = vld [vmem:[#allocation5 + $0x868] sm:$0xff]
    %v4156 = vld [vmem:[#allocation5 + $0x870] sm:$0xff]
    %v4157 = vld [vmem:[#allocation5 + $0x878] sm:$0xff]
    %v4158 = vld [vmem:[#allocation5 + $0x880] sm:$0xff]
    %v4159 = vld [vmem:[#allocation5 + $0x888] sm:$0xff]
    %v4160 = vld [vmem:[#allocation5 + $0x890] sm:$0xff]
    %v4161 = vld [vmem:[#allocation5 + $0x898] sm:$0xff]
    %v4162 = vld [vmem:[#allocation5 + $0x8a0] sm:$0xff]
    %v4163 = vld [vmem:[#allocation5 + $0x8a8] sm:$0xff]
    %v4164 = vld [vmem:[#allocation5 + $0x8b0] sm:$0xff]
    %v4165 = vld [vmem:[#allocation5 + $0x8b8] sm:$0xff]
    %v4166 = vld [vmem:[#allocation5 + $0x8c0] sm:$0xff]
    %v4167 = vld [vmem:[#allocation5 + $0x8c8] sm:$0xff]
    %v4168 = vld [vmem:[#allocation5 + $0x8d0] sm:$0xff]
    %v4169 = vld [vmem:[#allocation5 + $0x8d8] sm:$0xff]
    %v4170 = vld [vmem:[#allocation5 + $0x8e0] sm:$0xff]
    %v4171 = vld [vmem:[#allocation5 + $0x8e8] sm:$0xff]
    %v4172 = vld [vmem:[#allocation5 + $0x8f0] sm:$0xff]
    %v4173 = vld [vmem:[#allocation5 + $0x8f8] sm:$0xff]
    %s4174 = scalar_lea.vmem %s10, 16
    %v4175 = vld [vmem:[%s4174] sm:$0xff]
    %v4176 = vld [vmem:[%s4174 + $0x8] sm:$0x3]
    %v4178 = vsel %vm3718, %v4175, 0
    %v4181 = vsel %vm3718, %v4176, 0
    %4183 = vmatprep.subr.mxu0 %v3711
    %4184 = vmatpush1.msra.mxu0 %v3710
    %4185 = vmatprep.subr.mxu0 %v3729
    %4186 = vmatpush1.msra.mxu0 %v3726
    %4187 = vmatprep.subr.mxu0 0.0
    %4188 = vmatpush1.msra.mxu0 0.0
    %4189 = vmatprep.subr.mxu0 0.0
    %4190 = vmatpush1.msra.mxu0 0.0
    %4191 = vmatprep.subr.mxu0 0.0
    %4192 = vmatpush1.msra.mxu0 0.0
    %4193 = vmatprep.subr.mxu0 0.0
    %4194 = vmatpush1.msra.mxu0 0.0
    %4195 = vmatprep.subr.mxu0 0.0
    %4196 = vmatpush1.msra.mxu0 0.0
    %4197 = vmatprep.subr.mxu0 0.0
    %4198 = vmatpush1.msra.mxu0 0.0
    %4199 = vmatprep.subr.mxu0 0.0
    %4200 = vmatpush1.msra.mxu0 0.0
    %4201 = vmatprep.subr.mxu0 0.0
    %4202 = vmatpush1.msra.mxu0 0.0
    %4203 = vmatprep.subr.mxu0 0.0
    %4204 = vmatpush1.msra.mxu0 0.0
    %4205 = vmatprep.subr.mxu0 0.0
    %4206 = vmatpush1.msra.mxu0 0.0
    %4207 = vmatprep.subr.mxu0 0.0
    %4208 = vmatpush1.msra.mxu0 0.0
    %4209 = vmatprep.subr.mxu0 0.0
    %4210 = vmatpush1.msra.mxu0 0.0
    %4211 = vmatprep.subr.mxu0 0.0
    %4212 = vmatpush1.msra.mxu0 0.0
    %4213 = vmatprep.subr.mxu0 0.0
    %4214 = vmatpush1.msra.mxu0 0.0
    %4215 = vmatprep.subr.mxu0 0.0
    %4216 = vmatpush1.msra.mxu0 0.0
    %4217 = vmatprep.subr.mxu0 0.0
    %4218 = vmatpush1.msra.mxu0 0.0
    %4219 = vmatprep.subr.mxu0 0.0
    %4220 = vmatpush1.msra.mxu0 0.0
    %4221 = vmatprep.subr.mxu0 0.0
    %4222 = vmatpush1.msra.mxu0 0.0
    %4223 = vmatprep.subr.mxu0 0.0
    %4224 = vmatpush1.msra.mxu0 0.0
    %4225 = vmatprep.subr.mxu0 0.0
    %4226 = vmatpush1.msra.mxu0 0.0
    %4227 = vmatprep.subr.mxu0 0.0
    %4228 = vmatpush1.msra.mxu0 0.0
    %4229 = vmatprep.subr.mxu0 0.0
    %4230 = vmatpush1.msra.mxu0 0.0
    %4231 = vmatprep.subr.mxu0 0.0
    %4232 = vmatpush1.msra.mxu0 0.0
    %4233 = vmatprep.subr.mxu0 0.0
    %4234 = vmatpush1.msra.mxu0 0.0
    %4235 = vmatprep.subr.mxu0 0.0
    %4236 = vmatpush1.msra.mxu0 0.0
    %4237 = vmatprep.subr.mxu0 0.0
    %4238 = vmatpush1.msra.mxu0 0.0
    %4239 = vmatprep.subr.mxu0 0.0
    %4240 = vmatpush1.msra.mxu0 0.0
    %4241 = vmatprep.subr.mxu0 0.0
    %4242 = vmatpush1.msra.mxu0 0.0
    %4243 = vmatprep.subr.mxu0 0.0
    %4244 = vmatpush1.msra.mxu0 0.0
    %4245 = vmatprep.subr.mxu0 0.0
    %4246 = vmatpush1.msra.mxu0 0.0
    %4247 = vmatprep.mubr.f32.mxu0 0.0
    %4248 = vmatmul.mubr.f32.gmra.mrb[0].mxu0 %v4178
    %v4249 = vpop.f32.mrb[0].mxu0
    %v4250 = vadd.f32 0.0, %v4249
    %v4251 = vpop.f32.mrb[0].mxu0
    %v4252 = vadd.f32 0.0, %v4251
    %4253 = vmatprep.mubr.f32.mxu0 0.0
    %4254 = vmatmul.mubr.f32.gmra.mrb[0].mxu0 %v4181
    %v4255 = vpop.f32.mrb[0].mxu0
    %v4256 = vadd.f32 0.0, %v4255
    %v4257 = vpop.f32.mrb[0].mxu0
    %v4258 = vadd.f32 0.0, %v4257
    %4259 = vdwg.mxu0
    %4260 = vmatprep.subr.mxu0 0.0
    %4261 = vmatpush1.msra.mxu0 %v3712
    %4262 = vmatprep.subr.mxu0 0.0
    %4263 = vmatpush1.msra.mxu0 %v3732
    %4264 = vmatprep.subr.mxu0 0.0
    %4265 = vmatpush1.msra.mxu0 0.0
    %4266 = vmatprep.subr.mxu0 0.0
    %4267 = vmatpush1.msra.mxu0 0.0
    %4268 = vmatprep.subr.mxu0 0.0
    %4269 = vmatpush1.msra.mxu0 0.0
    %4270 = vmatprep.subr.mxu0 0.0
    %4271 = vmatpush1.msra.mxu0 0.0
    %4272 = vmatprep.subr.mxu0 0.0
    %4273 = vmatpush1.msra.mxu0 0.0
    %4274 = vmatprep.subr.mxu0 0.0
    %4275 = vmatpush1.msra.mxu0 0.0
    %4276 = vmatprep.subr.mxu0 0.0
    %4277 = vmatpush1.msra.mxu0 0.0
    %4278 = vmatprep.subr.mxu0 0.0
    %4279 = vmatpush1.msra.mxu0 0.0
    %4280 = vmatprep.subr.mxu0 0.0
    %4281 = vmatpush1.msra.mxu0 0.0
    %4282 = vmatprep.subr.mxu0 0.0
    %4283 = vmatpush1.msra.mxu0 0.0
    %4284 = vmatprep.subr.mxu0 0.0
    %4285 = vmatpush1.msra.mxu0 0.0
    %4286 = vmatprep.subr.mxu0 0.0
    %4287 = vmatpush1.msra.mxu0 0.0
    %4288 = vmatprep.subr.mxu0 0.0
    %4289 = vmatpush1.msra.mxu0 0.0
    %4290 = vmatprep.subr.mxu0 0.0
    %4291 = vmatpush1.msra.mxu0 0.0
    %4292 = vmatprep.subr.mxu0 0.0
    %4293 = vmatpush1.msra.mxu0 0.0
    %4294 = vmatprep.subr.mxu0 0.0
    %4295 = vmatpush1.msra.mxu0 0.0
    %4296 = vmatprep.subr.mxu0 0.0
    %4297 = vmatpush1.msra.mxu0 0.0
    %4298 = vmatprep.subr.mxu0 0.0
    %4299 = vmatpush1.msra.mxu0 0.0
    %4300 = vmatprep.subr.mxu0 0.0
    %4301 = vmatpush1.msra.mxu0 0.0
    %4302 = vmatprep.subr.mxu0 0.0
    %4303 = vmatpush1.msra.mxu0 0.0
    %4304 = vmatprep.subr.mxu0 0.0
    %4305 = vmatpush1.msra.mxu0 0.0
    %4306 = vmatprep.subr.mxu0 0.0
    %4307 = vmatpush1.msra.mxu0 0.0
    %4308 = vmatprep.subr.mxu0 0.0
    %4309 = vmatpush1.msra.mxu0 0.0
    %4310 = vmatprep.subr.mxu0 0.0
    %4311 = vmatpush1.msra.mxu0 0.0
    %4312 = vmatprep.subr.mxu0 0.0
    %4313 = vmatpush1.msra.mxu0 0.0
    %4314 = vmatprep.subr.mxu0 0.0
    %4315 = vmatpush1.msra.mxu0 0.0
    %4316 = vmatprep.subr.mxu0 0.0
    %4317 = vmatpush1.msra.mxu0 0.0
    %4318 = vmatprep.subr.mxu0 0.0
    %4319 = vmatpush1.msra.mxu0 0.0
    %4320 = vmatprep.subr.mxu0 0.0
    %4321 = vmatpush1.msra.mxu0 0.0
    %4322 = vmatprep.subr.mxu0 0.0
    %4323 = vmatpush1.msra.mxu0 0.0
    %4324 = vmatprep.mubr.f32.mxu0 0.0
    %4325 = vmatmul.mubr.f32.gmra.mrb[0].mxu0 %v4178
    %v4326 = vpop.f32.mrb[0].mxu0
    %v4327 = vadd.f32 0.0, %v4326
    %v4328 = vpop.f32.mrb[0].mxu0
    %4329 = vmatprep.mubr.f32.mxu0 0.0
    %4330 = vmatmul.mubr.f32.gmra.mrb[0].mxu0 %v4181
    %v4331 = vpop.f32.mrb[0].mxu0
    %v4332 = vadd.f32 0.0, %v4331
    %v4333 = vpop.f32.mrb[0].mxu0
    %4334 = vdwg.mxu0
    %s4335 = scalar_lea.vmem [#allocation5], 2304
    %v4336 = vld [vmem:[%s4335] sm:$0xff]
    %v4337 = vld [vmem:[%s4335 + $0x8] sm:$0xff]
    %v4338 = vld [vmem:[%s4335 + $0x10] sm:$0xff]
    %v4339 = vld [vmem:[%s4335 + $0x18] sm:$0xff]
    %v4340 = vld [vmem:[%s4335 + $0x20] sm:$0xff]
    %v4341 = vld [vmem:[%s4335 + $0x28] sm:$0xff]
    %v4342 = vld [vmem:[%s4335 + $0x30] sm:$0xff]
    %v4343 = vld [vmem:[%s4335 + $0x38] sm:$0xff]
    %v4344 = vld [vmem:[%s4335 + $0x40] sm:$0xff]
    %v4345 = vld [vmem:[%s4335 + $0x48] sm:$0xff]
    %v4346 = vld [vmem:[%s4335 + $0x50] sm:$0xff]
    %v4347 = vld [vmem:[%s4335 + $0x58] sm:$0xff]
    %v4348 = vld [vmem:[%s4335 + $0x60] sm:$0xff]
    %v4349 = vld [vmem:[%s4335 + $0x68] sm:$0xff]
    %v4350 = vld [vmem:[%s4335 + $0x70] sm:$0xff]
    %v4351 = vld [vmem:[%s4335 + $0x78] sm:$0xff]
    %v4352 = vld [vmem:[%s4335 + $0x80] sm:$0xff]
    %v4353 = vld [vmem:[%s4335 + $0x88] sm:$0xff]
    %v4354 = vld [vmem:[%s4335 + $0x90] sm:$0xff]
    %v4355 = vld [vmem:[%s4335 + $0x98] sm:$0xff]
    %v4356 = vld [vmem:[%s4335 + $0xa0] sm:$0xff]
    %v4357 = vld [vmem:[%s4335 + $0xa8] sm:$0xff]
    %v4358 = vld [vmem:[%s4335 + $0xb0] sm:$0xff]
    %v4359 = vld [vmem:[%s4335 + $0xb8] sm:$0xff]
    %v4360 = vld [vmem:[%s4335 + $0xc0] sm:$0xff]
    %v4361 = vld [vmem:[%s4335 + $0xc8] sm:$0xff]
    %v4362 = vld [vmem:[%s4335 + $0xd0] sm:$0xff]
    %v4363 = vld [vmem:[%s4335 + $0xd8] sm:$0xff]
    %v4364 = vld [vmem:[%s4335 + $0xe0] sm:$0xff]
    %v4365 = vld [vmem:[%s4335 + $0xe8] sm:$0xff]
    %v4366 = vld [vmem:[%s4335 + $0xf0] sm:$0xff]
    %v4367 = vld [vmem:[%s4335 + $0xf8] sm:$0xff]
    %v4368 = vld [vmem:[%s4335 + $0x100] sm:$0xff]
    %v4369 = vld [vmem:[%s4335 + $0x108] sm:$0xff]
    %v4370 = vld [vmem:[%s4335 + $0x110] sm:$0xff]
    %v4371 = vld [vmem:[%s4335 + $0x118] sm:$0xff]
    %v4372 = vld [vmem:[%s4335 + $0x120] sm:$0xff]
    %v4373 = vld [vmem:[%s4335 + $0x128] sm:$0xff]
    %v4374 = vld [vmem:[%s4335 + $0x130] sm:$0xff]
    %v4375 = vld [vmem:[%s4335 + $0x138] sm:$0xff]
    %v4376 = vld [vmem:[%s4335 + $0x140] sm:$0xff]
    %v4377 = vld [vmem:[%s4335 + $0x148] sm:$0xff]
    %v4378 = vld [vmem:[%s4335 + $0x150] sm:$0xff]
    %v4379 = vld [vmem:[%s4335 + $0x158] sm:$0xff]
    %v4380 = vld [vmem:[%s4335 + $0x160] sm:$0xff]
    %v4381 = vld [vmem:[%s4335 + $0x168] sm:$0xff]
    %v4382 = vld [vmem:[%s4335 + $0x170] sm:$0xff]
    %v4383 = vld [vmem:[%s4335 + $0x178] sm:$0xff]
    %v4384 = vld [vmem:[%s4335 + $0x180] sm:$0xff]
    %v4385 = vld [vmem:[%s4335 + $0x188] sm:$0xff]
    %v4386 = vld [vmem:[%s4335 + $0x190] sm:$0xff]
    %v4387 = vld [vmem:[%s4335 + $0x198] sm:$0xff]
    %v4388 = vld [vmem:[%s4335 + $0x1a0] sm:$0xff]
    %v4389 = vld [vmem:[%s4335 + $0x1a8] sm:$0xff]
    %v4390 = vld [vmem:[%s4335 + $0x1b0] sm:$0xff]
    %v4391 = vld [vmem:[%s4335 + $0x1b8] sm:$0xff]
    %v4392 = vld [vmem:[%s4335 + $0x1c0] sm:$0xff]
    %v4393 = vld [vmem:[%s4335 + $0x1c8] sm:$0xff]
    %v4394 = vld [vmem:[%s4335 + $0x1d0] sm:$0xff]
    %v4395 = vld [vmem:[%s4335 + $0x1d8] sm:$0xff]
    %v4396 = vld [vmem:[%s4335 + $0x1e0] sm:$0xff]
    %v4397 = vld [vmem:[%s4335 + $0x1e8] sm:$0xff]
    %v4398 = vld [vmem:[%s4335 + $0x1f0] sm:$0xff]
    %v4399 = vld [vmem:[%s4335 + $0x1f8] sm:$0xff]
    %v4400 = vld [vmem:[%s4335 + $0x200] sm:$0xff]
    %v4401 = vld [vmem:[%s4335 + $0x208] sm:$0xff]
    %v4402 = vld [vmem:[%s4335 + $0x210] sm:$0xff]
    %v4403 = vld [vmem:[%s4335 + $0x218] sm:$0xff]
    %v4404 = vld [vmem:[%s4335 + $0x220] sm:$0xff]
    %v4405 = vld [vmem:[%s4335 + $0x228] sm:$0xff]
    %v4406 = vld [vmem:[%s4335 + $0x230] sm:$0xff]
    %v4407 = vld [vmem:[%s4335 + $0x238] sm:$0xff]
    %v4408 = vld [vmem:[%s4335 + $0x240] sm:$0xff]
    %v4409 = vld [vmem:[%s4335 + $0x248] sm:$0xff]
    %v4410 = vld [vmem:[%s4335 + $0x250] sm:$0xff]
    %v4411 = vld [vmem:[%s4335 + $0x258] sm:$0xff]
    %v4412 = vld [vmem:[%s4335 + $0x260] sm:$0xff]
    %v4413 = vld [vmem:[%s4335 + $0x268] sm:$0xff]
    %v4414 = vld [vmem:[%s4335 + $0x270] sm:$0xff]
    %v4415 = vld [vmem:[%s4335 + $0x278] sm:$0xff]
    %v4416 = vld [vmem:[%s4335 + $0x280] sm:$0xff]
    %v4417 = vld [vmem:[%s4335 + $0x288] sm:$0xff]
    %v4418 = vld [vmem:[%s4335 + $0x290] sm:$0xff]
    %v4419 = vld [vmem:[%s4335 + $0x298] sm:$0xff]
    %v4420 = vld [vmem:[%s4335 + $0x2a0] sm:$0xff]
    %v4421 = vld [vmem:[%s4335 + $0x2a8] sm:$0xff]
    %v4422 = vld [vmem:[%s4335 + $0x2b0] sm:$0xff]
    %v4423 = vld [vmem:[%s4335 + $0x2b8] sm:$0xff]
    %v4424 = vld [vmem:[%s4335 + $0x2c0] sm:$0xff]
    %v4425 = vld [vmem:[%s4335 + $0x2c8] sm:$0xff]
    %v4426 = vld [vmem:[%s4335 + $0x2d0] sm:$0xff]
    %v4427 = vld [vmem:[%s4335 + $0x2d8] sm:$0xff]
    %v4428 = vld [vmem:[%s4335 + $0x2e0] sm:$0xff]
    %v4429 = vld [vmem:[%s4335 + $0x2e8] sm:$0xff]
    %v4430 = vld [vmem:[%s4335 + $0x2f0] sm:$0xff]
    %v4431 = vld [vmem:[%s4335 + $0x2f8] sm:$0xff]
    %v4432 = vld [vmem:[%s4335 + $0x300] sm:$0xff]
    %v4433 = vld [vmem:[%s4335 + $0x308] sm:$0xff]
    %v4434 = vld [vmem:[%s4335 + $0x310] sm:$0xff]
    %v4435 = vld [vmem:[%s4335 + $0x318] sm:$0xff]
    %v4436 = vld [vmem:[%s4335 + $0x320] sm:$0xff]
    %v4437 = vld [vmem:[%s4335 + $0x328] sm:$0xff]
    %v4438 = vld [vmem:[%s4335 + $0x330] sm:$0xff]
    %v4439 = vld [vmem:[%s4335 + $0x338] sm:$0xff]
    %v4440 = vld [vmem:[%s4335 + $0x340] sm:$0xff]
    %v4441 = vld [vmem:[%s4335 + $0x348] sm:$0xff]
    %v4442 = vld [vmem:[%s4335 + $0x350] sm:$0xff]
    %v4443 = vld [vmem:[%s4335 + $0x358] sm:$0xff]
    %v4444 = vld [vmem:[%s4335 + $0x360] sm:$0xff]
    %v4445 = vld [vmem:[%s4335 + $0x368] sm:$0xff]
    %v4446 = vld [vmem:[%s4335 + $0x370] sm:$0xff]
    %v4447 = vld [vmem:[%s4335 + $0x378] sm:$0xff]
    %v4448 = vld [vmem:[%s4335 + $0x380] sm:$0xff]
    %v4449 = vld [vmem:[%s4335 + $0x388] sm:$0xff]
    %v4450 = vld [vmem:[%s4335 + $0x390] sm:$0xff]
    %v4451 = vld [vmem:[%s4335 + $0x398] sm:$0xff]
    %v4452 = vld [vmem:[%s4335 + $0x3a0] sm:$0xff]
    %v4453 = vld [vmem:[%s4335 + $0x3a8] sm:$0xff]
    %v4454 = vld [vmem:[%s4335 + $0x3b0] sm:$0xff]
    %v4455 = vld [vmem:[%s4335 + $0x3b8] sm:$0xff]
    %v4456 = vld [vmem:[%s4335 + $0x3c0] sm:$0xff]
    %v4457 = vld [vmem:[%s4335 + $0x3c8] sm:$0xff]
    %v4458 = vld [vmem:[%s4335 + $0x3d0] sm:$0xff]
    %v4459 = vld [vmem:[%s4335 + $0x3d8] sm:$0xff]
    %v4460 = vld [vmem:[%s4335 + $0x3e0] sm:$0xff]
    %v4461 = vld [vmem:[%s4335 + $0x3e8] sm:$0xff]
    %v4462 = vld [vmem:[%s4335 + $0x3f0] sm:$0xff]
    %v4463 = vld [vmem:[%s4335 + $0x3f8] sm:$0xff]
    %v4464 = vld [vmem:[%s4335 + $0x400] sm:$0xff]
    %v4465 = vld [vmem:[%s4335 + $0x408] sm:$0xff]
    %v4466 = vld [vmem:[%s4335 + $0x410] sm:$0xff]
    %v4467 = vld [vmem:[%s4335 + $0x418] sm:$0xff]
    %v4468 = vld [vmem:[%s4335 + $0x420] sm:$0xff]
    %v4469 = vld [vmem:[%s4335 + $0x428] sm:$0xff]
    %v4470 = vld [vmem:[%s4335 + $0x430] sm:$0xff]
    %v4471 = vld [vmem:[%s4335 + $0x438] sm:$0xff]
    %v4472 = vld [vmem:[%s4335 + $0x440] sm:$0xff]
    %v4473 = vld [vmem:[%s4335 + $0x448] sm:$0xff]
    %v4474 = vld [vmem:[%s4335 + $0x450] sm:$0xff]
    %v4475 = vld [vmem:[%s4335 + $0x458] sm:$0xff]
    %v4476 = vld [vmem:[%s4335 + $0x460] sm:$0xff]
    %v4477 = vld [vmem:[%s4335 + $0x468] sm:$0xff]
    %v4478 = vld [vmem:[%s4335 + $0x470] sm:$0xff]
    %v4479 = vld [vmem:[%s4335 + $0x478] sm:$0xff]
    %v4480 = vld [vmem:[%s4335 + $0x480] sm:$0xff]
    %v4481 = vld [vmem:[%s4335 + $0x488] sm:$0xff]
    %v4482 = vld [vmem:[%s4335 + $0x490] sm:$0xff]
    %v4483 = vld [vmem:[%s4335 + $0x498] sm:$0xff]
    %v4484 = vld [vmem:[%s4335 + $0x4a0] sm:$0xff]
    %v4485 = vld [vmem:[%s4335 + $0x4a8] sm:$0xff]
    %v4486 = vld [vmem:[%s4335 + $0x4b0] sm:$0xff]
    %v4487 = vld [vmem:[%s4335 + $0x4b8] sm:$0xff]
    %v4488 = vld [vmem:[%s4335 + $0x4c0] sm:$0xff]
    %v4489 = vld [vmem:[%s4335 + $0x4c8] sm:$0xff]
    %v4490 = vld [vmem:[%s4335 + $0x4d0] sm:$0xff]
    %v4491 = vld [vmem:[%s4335 + $0x4d8] sm:$0xff]
    %v4492 = vld [vmem:[%s4335 + $0x4e0] sm:$0xff]
    %v4493 = vld [vmem:[%s4335 + $0x4e8] sm:$0xff]
    %v4494 = vld [vmem:[%s4335 + $0x4f0] sm:$0xff]
    %v4495 = vld [vmem:[%s4335 + $0x4f8] sm:$0xff]
    %v4496 = vld [vmem:[%s4335 + $0x500] sm:$0xff]
    %v4497 = vld [vmem:[%s4335 + $0x508] sm:$0xff]
    %v4498 = vld [vmem:[%s4335 + $0x510] sm:$0xff]
    %v4499 = vld [vmem:[%s4335 + $0x518] sm:$0xff]
    %v4500 = vld [vmem:[%s4335 + $0x520] sm:$0xff]
    %v4501 = vld [vmem:[%s4335 + $0x528] sm:$0xff]
    %v4502 = vld [vmem:[%s4335 + $0x530] sm:$0xff]
    %v4503 = vld [vmem:[%s4335 + $0x538] sm:$0xff]
    %v4504 = vld [vmem:[%s4335 + $0x540] sm:$0xff]
    %v4505 = vld [vmem:[%s4335 + $0x548] sm:$0xff]
    %v4506 = vld [vmem:[%s4335 + $0x550] sm:$0xff]
    %v4507 = vld [vmem:[%s4335 + $0x558] sm:$0xff]
    %v4508 = vld [vmem:[%s4335 + $0x560] sm:$0xff]
    %v4509 = vld [vmem:[%s4335 + $0x568] sm:$0xff]
    %v4510 = vld [vmem:[%s4335 + $0x570] sm:$0xff]
    %v4511 = vld [vmem:[%s4335 + $0x578] sm:$0xff]
    %v4512 = vld [vmem:[%s4335 + $0x580] sm:$0xff]
    %v4513 = vld [vmem:[%s4335 + $0x588] sm:$0xff]
    %v4514 = vld [vmem:[%s4335 + $0x590] sm:$0xff]
    %v4515 = vld [vmem:[%s4335 + $0x598] sm:$0xff]
    %v4516 = vld [vmem:[%s4335 + $0x5a0] sm:$0xff]
    %v4517 = vld [vmem:[%s4335 + $0x5a8] sm:$0xff]
    %v4518 = vld [vmem:[%s4335 + $0x5b0] sm:$0xff]
    %v4519 = vld [vmem:[%s4335 + $0x5b8] sm:$0xff]
    %v4520 = vld [vmem:[%s4335 + $0x5c0] sm:$0xff]
    %v4521 = vld [vmem:[%s4335 + $0x5c8] sm:$0xff]
    %v4522 = vld [vmem:[%s4335 + $0x5d0] sm:$0xff]
    %v4523 = vld [vmem:[%s4335 + $0x5d8] sm:$0xff]
    %v4524 = vld [vmem:[%s4335 + $0x5e0] sm:$0xff]
    %v4525 = vld [vmem:[%s4335 + $0x5e8] sm:$0xff]
    %v4526 = vld [vmem:[%s4335 + $0x5f0] sm:$0xff]
    %v4527 = vld [vmem:[%s4335 + $0x5f8] sm:$0xff]
    %v4528 = vld [vmem:[%s4335 + $0x600] sm:$0xff]
    %v4529 = vld [vmem:[%s4335 + $0x608] sm:$0xff]
    %v4530 = vld [vmem:[%s4335 + $0x610] sm:$0xff]
    %v4531 = vld [vmem:[%s4335 + $0x618] sm:$0xff]
    %v4532 = vld [vmem:[%s4335 + $0x620] sm:$0xff]
    %v4533 = vld [vmem:[%s4335 + $0x628] sm:$0xff]
    %v4534 = vld [vmem:[%s4335 + $0x630] sm:$0xff]
    %v4535 = vld [vmem:[%s4335 + $0x638] sm:$0xff]
    %v4536 = vld [vmem:[%s4335 + $0x640] sm:$0xff]
    %v4537 = vld [vmem:[%s4335 + $0x648] sm:$0xff]
    %v4538 = vld [vmem:[%s4335 + $0x650] sm:$0xff]
    %v4539 = vld [vmem:[%s4335 + $0x658] sm:$0xff]
    %v4540 = vld [vmem:[%s4335 + $0x660] sm:$0xff]
    %v4541 = vld [vmem:[%s4335 + $0x668] sm:$0xff]
    %v4542 = vld [vmem:[%s4335 + $0x670] sm:$0xff]
    %v4543 = vld [vmem:[%s4335 + $0x678] sm:$0xff]
    %v4544 = vld [vmem:[%s4335 + $0x680] sm:$0xff]
    %v4545 = vld [vmem:[%s4335 + $0x688] sm:$0xff]
    %v4546 = vld [vmem:[%s4335 + $0x690] sm:$0xff]
    %v4547 = vld [vmem:[%s4335 + $0x698] sm:$0xff]
    %v4548 = vld [vmem:[%s4335 + $0x6a0] sm:$0xff]
    %v4549 = vld [vmem:[%s4335 + $0x6a8] sm:$0xff]
    %v4550 = vld [vmem:[%s4335 + $0x6b0] sm:$0xff]
    %v4551 = vld [vmem:[%s4335 + $0x6b8] sm:$0xff]
    %v4552 = vld [vmem:[%s4335 + $0x6c0] sm:$0xff]
    %v4553 = vld [vmem:[%s4335 + $0x6c8] sm:$0xff]
    %v4554 = vld [vmem:[%s4335 + $0x6d0] sm:$0xff]
    %v4555 = vld [vmem:[%s4335 + $0x6d8] sm:$0xff]
    %v4556 = vld [vmem:[%s4335 + $0x6e0] sm:$0xff]
    %v4557 = vld [vmem:[%s4335 + $0x6e8] sm:$0xff]
    %v4558 = vld [vmem:[%s4335 + $0x6f0] sm:$0xff]
    %v4559 = vld [vmem:[%s4335 + $0x6f8] sm:$0xff]
    %v4560 = vld [vmem:[%s4335 + $0x700] sm:$0xff]
    %v4561 = vld [vmem:[%s4335 + $0x708] sm:$0xff]
    %v4562 = vld [vmem:[%s4335 + $0x710] sm:$0xff]
    %v4563 = vld [vmem:[%s4335 + $0x718] sm:$0xff]
    %v4564 = vld [vmem:[%s4335 + $0x720] sm:$0xff]
    %v4565 = vld [vmem:[%s4335 + $0x728] sm:$0xff]
    %v4566 = vld [vmem:[%s4335 + $0x730] sm:$0xff]
    %v4567 = vld [vmem:[%s4335 + $0x738] sm:$0xff]
    %v4568 = vld [vmem:[%s4335 + $0x740] sm:$0xff]
    %v4569 = vld [vmem:[%s4335 + $0x748] sm:$0xff]
    %v4570 = vld [vmem:[%s4335 + $0x750] sm:$0xff]
    %v4571 = vld [vmem:[%s4335 + $0x758] sm:$0xff]
    %v4572 = vld [vmem:[%s4335 + $0x760] sm:$0xff]
    %v4573 = vld [vmem:[%s4335 + $0x768] sm:$0xff]
    %v4574 = vld [vmem:[%s4335 + $0x770] sm:$0xff]
    %v4575 = vld [vmem:[%s4335 + $0x778] sm:$0xff]
    %v4576 = vld [vmem:[%s4335 + $0x780] sm:$0xff]
    %v4577 = vld [vmem:[%s4335 + $0x788] sm:$0xff]
    %v4578 = vld [vmem:[%s4335 + $0x790] sm:$0xff]
    %v4579 = vld [vmem:[%s4335 + $0x798] sm:$0xff]
    %v4580 = vld [vmem:[%s4335 + $0x7a0] sm:$0xff]
    %v4581 = vld [vmem:[%s4335 + $0x7a8] sm:$0xff]
    %v4582 = vld [vmem:[%s4335 + $0x7b0] sm:$0xff]
    %v4583 = vld [vmem:[%s4335 + $0x7b8] sm:$0xff]
    %v4584 = vld [vmem:[%s4335 + $0x7c0] sm:$0xff]
    %v4585 = vld [vmem:[%s4335 + $0x7c8] sm:$0xff]
    %v4586 = vld [vmem:[%s4335 + $0x7d0] sm:$0xff]
    %v4587 = vld [vmem:[%s4335 + $0x7d8] sm:$0xff]
    %v4588 = vld [vmem:[%s4335 + $0x7e0] sm:$0xff]
    %v4589 = vld [vmem:[%s4335 + $0x7e8] sm:$0xff]
    %v4590 = vld [vmem:[%s4335 + $0x7f0] sm:$0xff]
    %v4591 = vld [vmem:[%s4335 + $0x7f8] sm:$0xff]
    %v4592 = vld [vmem:[%s4335 + $0x800] sm:$0xff]
    %v4593 = vld [vmem:[%s4335 + $0x808] sm:$0xff]
    %v4594 = vld [vmem:[%s4335 + $0x810] sm:$0xff]
    %v4595 = vld [vmem:[%s4335 + $0x818] sm:$0xff]
    %v4596 = vld [vmem:[%s4335 + $0x820] sm:$0xff]
    %v4597 = vld [vmem:[%s4335 + $0x828] sm:$0xff]
    %v4598 = vld [vmem:[%s4335 + $0x830] sm:$0xff]
    %v4599 = vld [vmem:[%s4335 + $0x838] sm:$0xff]
    %v4600 = vld [vmem:[%s4335 + $0x840] sm:$0xff]
    %v4601 = vld [vmem:[%s4335 + $0x848] sm:$0xff]
    %v4602 = vld [vmem:[%s4335 + $0x850] sm:$0xff]
    %v4603 = vld [vmem:[%s4335 + $0x858] sm:$0xff]
    %v4604 = vld [vmem:[%s4335 + $0x860] sm:$0xff]
    %v4605 = vld [vmem:[%s4335 + $0x868] sm:$0xff]
    %v4606 = vld [vmem:[%s4335 + $0x870] sm:$0xff]
    %v4607 = vld [vmem:[%s4335 + $0x878] sm:$0xff]
    %v4608 = vld [vmem:[%s4335 + $0x880] sm:$0xff]
    %v4609 = vld [vmem:[%s4335 + $0x888] sm:$0xff]
    %v4610 = vld [vmem:[%s4335 + $0x890] sm:$0xff]
    %v4611 = vld [vmem:[%s4335 + $0x898] sm:$0xff]
    %v4612 = vld [vmem:[%s4335 + $0x8a0] sm:$0xff]
    %v4613 = vld [vmem:[%s4335 + $0x8a8] sm:$0xff]
    %v4614 = vld [vmem:[%s4335 + $0x8b0] sm:$0xff]
    %v4615 = vld [vmem:[%s4335 + $0x8b8] sm:$0xff]
    %v4616 = vld [vmem:[%s4335 + $0x8c0] sm:$0xff]
    %v4617 = vld [vmem:[%s4335 + $0x8c8] sm:$0xff]
    %v4618 = vld [vmem:[%s4335 + $0x8d0] sm:$0xff]
    %v4619 = vld [vmem:[%s4335 + $0x8d8] sm:$0xff]
    %v4620 = vld [vmem:[%s4335 + $0x8e0] sm:$0xff]
    %v4621 = vld [vmem:[%s4335 + $0x8e8] sm:$0xff]
    %v4622 = vld [vmem:[%s4335 + $0x8f0] sm:$0xff]
    %v4623 = vld [vmem:[%s4335 + $0x8f8] sm:$0xff]
    %4624 = vmatprep.subr.mxu0 %v4337
    %4625 = vmatpush1.msra.mxu0 %v4336
    %4626 = vmatprep.subr.mxu0 %v4343
    %4627 = vmatpush1.msra.mxu0 %v4342
    %4628 = vmatprep.subr.mxu0 %v4349
    %4629 = vmatpush1.msra.mxu0 %v4348
    %4630 = vmatprep.subr.mxu0 %v4355
    %4631 = vmatpush1.msra.mxu0 %v4354
    %4632 = vmatprep.subr.mxu0 %v4361
    %4633 = vmatpush1.msra.mxu0 %v4360
    %4634 = vmatprep.subr.mxu0 %v4367
    %4635 = vmatpush1.msra.mxu0 %v4366
    %4636 = vmatprep.subr.mxu0 %v4373
    %4637 = vmatpush1.msra.mxu0 %v4372
    %4638 = vmatprep.subr.mxu0 %v4379
    %4639 = vmatpush1.msra.mxu0 %v4378
    %4640 = vmatprep.subr.mxu0 %v4385
    %4641 = vmatpush1.msra.mxu0 %v4384
    %4642 = vmatprep.subr.mxu0 %v4391
    %4643 = vmatpush1.msra.mxu0 %v4390
    %4644 = vmatprep.subr.mxu0 %v4397
    %4645 = vmatpush1.msra.mxu0 %v4396
    %4646 = vmatprep.subr.mxu0 %v4403
    %4647 = vmatpush1.msra.mxu0 %v4402
    %4648 = vmatprep.subr.mxu0 %v4409
    %4649 = vmatpush1.msra.mxu0 %v4408
    %4650 = vmatprep.subr.mxu0 %v4415
    %4651 = vmatpush1.msra.mxu0 %v4414
    %4652 = vmatprep.subr.mxu0 %v4421
    %4653 = vmatpush1.msra.mxu0 %v4420
    %4654 = vmatprep.subr.mxu0 %v4427
    %4655 = vmatpush1.msra.mxu0 %v4426
    %4656 = vmatprep.subr.mxu0 %v4433
    %4657 = vmatpush1.msra.mxu0 %v4432
    %4658 = vmatprep.subr.mxu0 %v4439
    %4659 = vmatpush1.msra.mxu0 %v4438
    %4660 = vmatprep.subr.mxu0 %v4445
    %4661 = vmatpush1.msra.mxu0 %v4444
    %4662 = vmatprep.subr.mxu0 %v4451
    %4663 = vmatpush1.msra.mxu0 %v4450
    %4664 = vmatprep.subr.mxu0 %v4457
    %4665 = vmatpush1.msra.mxu0 %v4456
    %4666 = vmatprep.subr.mxu0 %v4463
    %4667 = vmatpush1.msra.mxu0 %v4462
    %4668 = vmatprep.subr.mxu0 %v4469
    %4669 = vmatpush1.msra.mxu0 %v4468
    %4670 = vmatprep.subr.mxu0 %v4475
    %4671 = vmatpush1.msra.mxu0 %v4474
    %4672 = vmatprep.subr.mxu0 %v4481
    %4673 = vmatpush1.msra.mxu0 %v4480
    %4674 = vmatprep.subr.mxu0 %v4487
    %4675 = vmatpush1.msra.mxu0 %v4486
    %4676 = vmatprep.subr.mxu0 %v4493
    %4677 = vmatpush1.msra.mxu0 %v4492
    %4678 = vmatprep.subr.mxu0 %v4499
    %4679 = vmatpush1.msra.mxu0 %v4498
    %4680 = vmatprep.subr.mxu0 %v4505
    %4681 = vmatpush1.msra.mxu0 %v4504
    %4682 = vmatprep.subr.mxu0 %v4511
    %4683 = vmatpush1.msra.mxu0 %v4510
    %4684 = vmatprep.subr.mxu0 %v4517
    %4685 = vmatpush1.msra.mxu0 %v4516
    %4686 = vmatprep.subr.mxu0 %v4523
    %4687 = vmatpush1.msra.mxu0 %v4522
    %4688 = vmatprep.mubr.f32.mxu0 %v4252
    %4689 = vmatmul.mubr.f32.gmra.mrb[0].mxu0 %v4250
    %v4690 = vpop.f32.mrb[0].mxu0
    %v4691 = vadd.f32 0.0, %v4690
    %v4692 = vpop.f32.mrb[0].mxu0
    %v4693 = vadd.f32 0.0, %v4692
    %4694 = vmatprep.mubr.f32.mxu0 %v4258
    %4695 = vmatmul.mubr.f32.gmra.mrb[0].mxu0 %v4256
    %v4696 = vpop.f32.mrb[0].mxu0
    %v4697 = vadd.f32 0.0, %v4696
    %v4698 = vpop.f32.mrb[0].mxu0
    %v4699 = vadd.f32 0.0, %v4698
    %4700 = vdwg.mxu0
    %4701 = vmatprep.subr.mxu0 %v4529
    %4702 = vmatpush1.msra.mxu0 %v4528
    %4703 = vmatprep.subr.mxu0 %v4535
    %4704 = vmatpush1.msra.mxu0 %v4534
    %4705 = vmatprep.subr.mxu0 %v4541
    %4706 = vmatpush1.msra.mxu0 %v4540
    %4707 = vmatprep.subr.mxu0 %v4547
    %4708 = vmatpush1.msra.mxu0 %v4546
    %4709 = vmatprep.subr.mxu0 %v4553
    %4710 = vmatpush1.msra.mxu0 %v4552
    %4711 = vmatprep.subr.mxu0 %v4559
    %4712 = vmatpush1.msra.mxu0 %v4558
    %4713 = vmatprep.subr.mxu0 %v4565
    %4714 = vmatpush1.msra.mxu0 %v4564
    %4715 = vmatprep.subr.mxu0 %v4571
    %4716 = vmatpush1.msra.mxu0 %v4570
    %4717 = vmatprep.subr.mxu0 %v4577
    %4718 = vmatpush1.msra.mxu0 %v4576
    %4719 = vmatprep.subr.mxu0 %v4583
    %4720 = vmatpush1.msra.mxu0 %v4582
    %4721 = vmatprep.subr.mxu0 %v4589
    %4722 = vmatpush1.msra.mxu0 %v4588
    %4723 = vmatprep.subr.mxu0 %v4595
    %4724 = vmatpush1.msra.mxu0 %v4594
    %4725 = vmatprep.subr.mxu0 %v4601
    %4726 = vmatpush1.msra.mxu0 %v4600
    %4727 = vmatprep.subr.mxu0 %v4607
    %4728 = vmatpush1.msra.mxu0 %v4606
    %4729 = vmatprep.subr.mxu0 %v4613
    %4730 = vmatpush1.msra.mxu0 %v4612
    %4731 = vmatprep.subr.mxu0 %v4619
    %4732 = vmatpush1.msra.mxu0 %v4618
    %4733 = vmatprep.subr.mxu0 0.0
    %4734 = vmatpush1.msra.mxu0 0.0
    %4735 = vmatprep.subr.mxu0 0.0
    %4736 = vmatpush1.msra.mxu0 0.0
    %4737 = vmatprep.subr.mxu0 0.0
    %4738 = vmatpush1.msra.mxu0 0.0
    %4739 = vmatprep.subr.mxu0 0.0
    %4740 = vmatpush1.msra.mxu0 0.0
    %4741 = vmatprep.subr.mxu0 0.0
    %4742 = vmatpush1.msra.mxu0 0.0
    %4743 = vmatprep.subr.mxu0 0.0
    %4744 = vmatpush1.msra.mxu0 0.0
    %4745 = vmatprep.subr.mxu0 0.0
    %4746 = vmatpush1.msra.mxu0 0.0
    %4747 = vmatprep.subr.mxu0 0.0
    %4748 = vmatpush1.msra.mxu0 0.0
    %4749 = vmatprep.subr.mxu0 0.0
    %4750 = vmatpush1.msra.mxu0 0.0
    %4751 = vmatprep.subr.mxu0 0.0
    %4752 = vmatpush1.msra.mxu0 0.0
    %4753 = vmatprep.subr.mxu0 0.0
    %4754 = vmatpush1.msra.mxu0 0.0
    %4755 = vmatprep.subr.mxu0 0.0
    %4756 = vmatpush1.msra.mxu0 0.0
    %4757 = vmatprep.subr.mxu0 0.0
    %4758 = vmatpush1.msra.mxu0 0.0
    %4759 = vmatprep.subr.mxu0 0.0
    %4760 = vmatpush1.msra.mxu0 0.0
    %4761 = vmatprep.subr.mxu0 0.0
    %4762 = vmatpush1.msra.mxu0 0.0
    %4763 = vmatprep.subr.mxu0 0.0
    %4764 = vmatpush1.msra.mxu0 0.0
    %4765 = vmatprep.mubr.f32.mxu0 0.0
    %4766 = vmatmul.mubr.f32.gmra.mrb[0].mxu0 %v4327
    %v4767 = vpop.f32.mrb[0].mxu0
    %v4768 = vadd.f32 %v4691, %v4767
    %v4769 = vpop.f32.mrb[0].mxu0
    %v4770 = vadd.f32 %v4693, %v4769
    %4771 = vmatprep.mubr.f32.mxu0 0.0
    %4772 = vmatmul.mubr.f32.gmra.mrb[0].mxu0 %v4332
    %v4773 = vpop.f32.mrb[0].mxu0
    %v4774 = vadd.f32 %v4697, %v4773
    %v4775 = vpop.f32.mrb[0].mxu0
    %v4776 = vadd.f32 %v4699, %v4775
    %4777 = vdwg.mxu0
    %4778 = vmatprep.subr.mxu0 %v4339
    %4779 = vmatpush1.msra.mxu0 %v4338
    %4780 = vmatprep.subr.mxu0 %v4345
    %4781 = vmatpush1.msra.mxu0 %v4344
    %4782 = vmatprep.subr.mxu0 %v4351
    %4783 = vmatpush1.msra.mxu0 %v4350
    %4784 = vmatprep.subr.mxu0 %v4357
    %4785 = vmatpush1.msra.mxu0 %v4356
    %4786 = vmatprep.subr.mxu0 %v4363
    %4787 = vmatpush1.msra.mxu0 %v4362
    %4788 = vmatprep.subr.mxu0 %v4369
    %4789 = vmatpush1.msra.mxu0 %v4368
    %4790 = vmatprep.subr.mxu0 %v4375
    %4791 = vmatpush1.msra.mxu0 %v4374
    %4792 = vmatprep.subr.mxu0 %v4381
    %4793 = vmatpush1.msra.mxu0 %v4380
    %4794 = vmatprep.subr.mxu0 %v4387
    %4795 = vmatpush1.msra.mxu0 %v4386
    %4796 = vmatprep.subr.mxu0 %v4393
    %4797 = vmatpush1.msra.mxu0 %v4392
    %4798 = vmatprep.subr.mxu0 %v4399
    %4799 = vmatpush1.msra.mxu0 %v4398
    %4800 = vmatprep.subr.mxu0 %v4405
    %4801 = vmatpush1.msra.mxu0 %v4404
    %4802 = vmatprep.subr.mxu0 %v4411
    %4803 = vmatpush1.msra.mxu0 %v4410
    %4804 = vmatprep.subr.mxu0 %v4417
    %4805 = vmatpush1.msra.mxu0 %v4416
    %4806 = vmatprep.subr.mxu0 %v4423
    %4807 = vmatpush1.msra.mxu0 %v4422
    %4808 = vmatprep.subr.mxu0 %v4429
    %4809 = vmatpush1.msra.mxu0 %v4428
    %4810 = vmatprep.subr.mxu0 %v4435
    %4811 = vmatpush1.msra.mxu0 %v4434
    %4812 = vmatprep.subr.mxu0 %v4441
    %4813 = vmatpush1.msra.mxu0 %v4440
    %4814 = vmatprep.subr.mxu0 %v4447
    %4815 = vmatpush1.msra.mxu0 %v4446
    %4816 = vmatprep.subr.mxu0 %v4453
    %4817 = vmatpush1.msra.mxu0 %v4452
    %4818 = vmatprep.subr.mxu0 %v4459
    %4819 = vmatpush1.msra.mxu0 %v4458
    %4820 = vmatprep.subr.mxu0 %v4465
    %4821 = vmatpush1.msra.mxu0 %v4464
    %4822 = vmatprep.subr.mxu0 %v4471
    %4823 = vmatpush1.msra.mxu0 %v4470
    %4824 = vmatprep.subr.mxu0 %v4477
    %4825 = vmatpush1.msra.mxu0 %v4476
    %4826 = vmatprep.subr.mxu0 %v4483
    %4827 = vmatpush1.msra.mxu0 %v4482
    %4828 = vmatprep.subr.mxu0 %v4489
    %4829 = vmatpush1.msra.mxu0 %v4488
    %4830 = vmatprep.subr.mxu0 %v4495
    %4831 = vmatpush1.msra.mxu0 %v4494
    %4832 = vmatprep.subr.mxu0 %v4501
    %4833 = vmatpush1.msra.mxu0 %v4500
    %4834 = vmatprep.subr.mxu0 %v4507
    %4835 = vmatpush1.msra.mxu0 %v4506
    %4836 = vmatprep.subr.mxu0 %v4513
    %4837 = vmatpush1.msra.mxu0 %v4512
    %4838 = vmatprep.subr.mxu0 %v4519
    %4839 = vmatpush1.msra.mxu0 %v4518
    %4840 = vmatprep.subr.mxu0 %v4525
    %4841 = vmatpush1.msra.mxu0 %v4524
    %4842 = vmatprep.mubr.f32.mxu0 %v4252
    %4843 = vmatmul.mubr.f32.gmra.mrb[0].mxu0 %v4250
    %v4844 = vpop.f32.mrb[0].mxu0
    %v4845 = vadd.f32 0.0, %v4844
    %v4846 = vpop.f32.mrb[0].mxu0
    %v4847 = vadd.f32 0.0, %v4846
    %4848 = vmatprep.mubr.f32.mxu0 %v4258
    %4849 = vmatmul.mubr.f32.gmra.mrb[0].mxu0 %v4256
    %v4850 = vpop.f32.mrb[0].mxu0
    %v4851 = vadd.f32 0.0, %v4850
    %v4852 = vpop.f32.mrb[0].mxu0
    %v4853 = vadd.f32 0.0, %v4852
    %4854 = vdwg.mxu0
    %4855 = vmatprep.subr.mxu0 %v4531
    %4856 = vmatpush1.msra.mxu0 %v4530
    %4857 = vmatprep.subr.mxu0 %v4537
    %4858 = vmatpush1.msra.mxu0 %v4536
    %4859 = vmatprep.subr.mxu0 %v4543
    %4860 = vmatpush1.msra.mxu0 %v4542
    %4861 = vmatprep.subr.mxu0 %v4549
    %4862 = vmatpush1.msra.mxu0 %v4548
    %4863 = vmatprep.subr.mxu0 %v4555
    %4864 = vmatpush1.msra.mxu0 %v4554
    %4865 = vmatprep.subr.mxu0 %v4561
    %4866 = vmatpush1.msra.mxu0 %v4560
    %4867 = vmatprep.subr.mxu0 %v4567
    %4868 = vmatpush1.msra.mxu0 %v4566
    %4869 = vmatprep.subr.mxu0 %v4573
    %4870 = vmatpush1.msra.mxu0 %v4572
    %4871 = vmatprep.subr.mxu0 %v4579
    %4872 = vmatpush1.msra.mxu0 %v4578
    %4873 = vmatprep.subr.mxu0 %v4585
    %4874 = vmatpush1.msra.mxu0 %v4584
    %4875 = vmatprep.subr.mxu0 %v4591
    %4876 = vmatpush1.msra.mxu0 %v4590
    %4877 = vmatprep.subr.mxu0 %v4597
    %4878 = vmatpush1.msra.mxu0 %v4596
    %4879 = vmatprep.subr.mxu0 %v4603
    %4880 = vmatpush1.msra.mxu0 %v4602
    %4881 = vmatprep.subr.mxu0 %v4609
    %4882 = vmatpush1.msra.mxu0 %v4608
    %4883 = vmatprep.subr.mxu0 %v4615
    %4884 = vmatpush1.msra.mxu0 %v4614
    %4885 = vmatprep.subr.mxu0 %v4621
    %4886 = vmatpush1.msra.mxu0 %v4620
    %4887 = vmatprep.subr.mxu0 0.0
    %4888 = vmatpush1.msra.mxu0 0.0
    %4889 = vmatprep.subr.mxu0 0.0
    %4890 = vmatpush1.msra.mxu0 0.0
    %4891 = vmatprep.subr.mxu0 0.0
    %4892 = vmatpush1.msra.mxu0 0.0
    %4893 = vmatprep.subr.mxu0 0.0
    %4894 = vmatpush1.msra.mxu0 0.0
    %4895 = vmatprep.subr.mxu0 0.0
    %4896 = vmatpush1.msra.mxu0 0.0
    %4897 = vmatprep.subr.mxu0 0.0
    %4898 = vmatpush1.msra.mxu0 0.0
    %4899 = vmatprep.subr.mxu0 0.0
    %4900 = vmatpush1.msra.mxu0 0.0
    %4901 = vmatprep.subr.mxu0 0.0
    %4902 = vmatpush1.msra.mxu0 0.0
    %4903 = vmatprep.subr.mxu0 0.0
    %4904 = vmatpush1.msra.mxu0 0.0
    %4905 = vmatprep.subr.mxu0 0.0
    %4906 = vmatpush1.msra.mxu0 0.0
    %4907 = vmatprep.subr.mxu0 0.0
    %4908 = vmatpush1.msra.mxu0 0.0
    %4909 = vmatprep.subr.mxu0 0.0
    %4910 = vmatpush1.msra.mxu0 0.0
    %4911 = vmatprep.subr.mxu0 0.0
    %4912 = vmatpush1.msra.mxu0 0.0
    %4913 = vmatprep.subr.mxu0 0.0
    %4914 = vmatpush1.msra.mxu0 0.0
    %4915 = vmatprep.subr.mxu0 0.0
    %4916 = vmatpush1.msra.mxu0 0.0
    %4917 = vmatprep.subr.mxu0 0.0
    %4918 = vmatpush1.msra.mxu0 0.0
    %4919 = vmatprep.mubr.f32.mxu0 0.0
    %4920 = vmatmul.mubr.f32.gmra.mrb[0].mxu0 %v4327
    %v4921 = vpop.f32.mrb[0].mxu0
    %v4922 = vadd.f32 %v4845, %v4921
    %v4923 = vpop.f32.mrb[0].mxu0
    %v4924 = vadd.f32 %v4847, %v4923
    %4925 = vmatprep.mubr.f32.mxu0 0.0
    %4926 = vmatmul.mubr.f32.gmra.mrb[0].mxu0 %v4332
    %v4927 = vpop.f32.mrb[0].mxu0
    %v4928 = vadd.f32 %v4851, %v4927
    %v4929 = vpop.f32.mrb[0].mxu0
    %v4930 = vadd.f32 %v4853, %v4929
    %4931 = vdwg.mxu0
    %4932 = vmatprep.subr.mxu0 %v4341
    %4933 = vmatpush1.msra.mxu0 %v4340
    %4934 = vmatprep.subr.mxu0 %v4347
    %4935 = vmatpush1.msra.mxu0 %v4346
    %4936 = vmatprep.subr.mxu0 %v4353
    %4937 = vmatpush1.msra.mxu0 %v4352
    %4938 = vmatprep.subr.mxu0 %v4359
    %4939 = vmatpush1.msra.mxu0 %v4358
    %4940 = vmatprep.subr.mxu0 %v4365
    %4941 = vmatpush1.msra.mxu0 %v4364
    %4942 = vmatprep.subr.mxu0 %v4371
    %4943 = vmatpush1.msra.mxu0 %v4370
    %4944 = vmatprep.subr.mxu0 %v4377
    %4945 = vmatpush1.msra.mxu0 %v4376
    %4946 = vmatprep.subr.mxu0 %v4383
    %4947 = vmatpush1.msra.mxu0 %v4382
    %4948 = vmatprep.subr.mxu0 %v4389
    %4949 = vmatpush1.msra.mxu0 %v4388
    %4950 = vmatprep.subr.mxu0 %v4395
    %4951 = vmatpush1.msra.mxu0 %v4394
    %4952 = vmatprep.subr.mxu0 %v4401
    %4953 = vmatpush1.msra.mxu0 %v4400
    %4954 = vmatprep.subr.mxu0 %v4407
    %4955 = vmatpush1.msra.mxu0 %v4406
    %4956 = vmatprep.subr.mxu0 %v4413
    %4957 = vmatpush1.msra.mxu0 %v4412
    %4958 = vmatprep.subr.mxu0 %v4419
    %4959 = vmatpush1.msra.mxu0 %v4418
    %4960 = vmatprep.subr.mxu0 %v4425
    %4961 = vmatpush1.msra.mxu0 %v4424
    %4962 = vmatprep.subr.mxu0 %v4431
    %4963 = vmatpush1.msra.mxu0 %v4430
    %4964 = vmatprep.subr.mxu0 %v4437
    %4965 = vmatpush1.msra.mxu0 %v4436
    %4966 = vmatprep.subr.mxu0 %v4443
    %4967 = vmatpush1.msra.mxu0 %v4442
    %4968 = vmatprep.subr.mxu0 %v4449
    %4969 = vmatpush1.msra.mxu0 %v4448
    %4970 = vmatprep.subr.mxu0 %v4455
    %4971 = vmatpush1.msra.mxu0 %v4454
    %4972 = vmatprep.subr.mxu0 %v4461
    %4973 = vmatpush1.msra.mxu0 %v4460
    %4974 = vmatprep.subr.mxu0 %v4467
    %4975 = vmatpush1.msra.mxu0 %v4466
    %4976 = vmatprep.subr.mxu0 %v4473
    %4977 = vmatpush1.msra.mxu0 %v4472
    %4978 = vmatprep.subr.mxu0 %v4479
    %4979 = vmatpush1.msra.mxu0 %v4478
    %4980 = vmatprep.subr.mxu0 %v4485
    %4981 = vmatpush1.msra.mxu0 %v4484
    %4982 = vmatprep.subr.mxu0 %v4491
    %4983 = vmatpush1.msra.mxu0 %v4490
    %4984 = vmatprep.subr.mxu0 %v4497
    %4985 = vmatpush1.msra.mxu0 %v4496
    %4986 = vmatprep.subr.mxu0 %v4503
    %4987 = vmatpush1.msra.mxu0 %v4502
    %4988 = vmatprep.subr.mxu0 %v4509
    %4989 = vmatpush1.msra.mxu0 %v4508
    %4990 = vmatprep.subr.mxu0 %v4515
    %4991 = vmatpush1.msra.mxu0 %v4514
    %4992 = vmatprep.subr.mxu0 %v4521
    %4993 = vmatpush1.msra.mxu0 %v4520
    %4994 = vmatprep.subr.mxu0 %v4527
    %4995 = vmatpush1.msra.mxu0 %v4526
    %4996 = vmatprep.mubr.f32.mxu0 %v4252
    %4997 = vmatmul.mubr.f32.gmra.mrb[0].mxu0 %v4250
    %v4998 = vpop.f32.mrb[0].mxu0
    %v4999 = vadd.f32 0.0, %v4998
    %v5000 = vpop.f32.mrb[0].mxu0
    %v5001 = vadd.f32 0.0, %v5000
    %5002 = vmatprep.mubr.f32.mxu0 %v4258
    %5003 = vmatmul.mubr.f32.gmra.mrb[0].mxu0 %v4256
    %v5004 = vpop.f32.mrb[0].mxu0
    %v5005 = vadd.f32 0.0, %v5004
    %v5006 = vpop.f32.mrb[0].mxu0
    %v5007 = vadd.f32 0.0, %v5006
    %5008 = vdwg.mxu0
    %5009 = vmatprep.subr.mxu0 %v4533
    %5010 = vmatpush1.msra.mxu0 %v4532
    %5011 = vmatprep.subr.mxu0 %v4539
    %5012 = vmatpush1.msra.mxu0 %v4538
    %5013 = vmatprep.subr.mxu0 %v4545
    %5014 = vmatpush1.msra.mxu0 %v4544
    %5015 = vmatprep.subr.mxu0 %v4551
    %5016 = vmatpush1.msra.mxu0 %v4550
    %5017 = vmatprep.subr.mxu0 %v4557
    %5018 = vmatpush1.msra.mxu0 %v4556
    %5019 = vmatprep.subr.mxu0 %v4563
    %5020 = vmatpush1.msra.mxu0 %v4562
    %5021 = vmatprep.subr.mxu0 %v4569
    %5022 = vmatpush1.msra.mxu0 %v4568
    %5023 = vmatprep.subr.mxu0 %v4575
    %5024 = vmatpush1.msra.mxu0 %v4574
    %5025 = vmatprep.subr.mxu0 %v4581
    %5026 = vmatpush1.msra.mxu0 %v4580
    %5027 = vmatprep.subr.mxu0 %v4587
    %5028 = vmatpush1.msra.mxu0 %v4586
    %5029 = vmatprep.subr.mxu0 %v4593
    %5030 = vmatpush1.msra.mxu0 %v4592
    %5031 = vmatprep.subr.mxu0 %v4599
    %5032 = vmatpush1.msra.mxu0 %v4598
    %5033 = vmatprep.subr.mxu0 %v4605
    %5034 = vmatpush1.msra.mxu0 %v4604
    %5035 = vmatprep.subr.mxu0 %v4611
    %5036 = vmatpush1.msra.mxu0 %v4610
    %5037 = vmatprep.subr.mxu0 %v4617
    %5038 = vmatpush1.msra.mxu0 %v4616
    %5039 = vmatprep.subr.mxu0 %v4623
    %5040 = vmatpush1.msra.mxu0 %v4622
    %5041 = vmatprep.subr.mxu0 0.0
    %5042 = vmatpush1.msra.mxu0 0.0
    %5043 = vmatprep.subr.mxu0 0.0
    %5044 = vmatpush1.msra.mxu0 0.0
    %5045 = vmatprep.subr.mxu0 0.0
    %5046 = vmatpush1.msra.mxu0 0.0
    %5047 = vmatprep.subr.mxu0 0.0
    %5048 = vmatpush1.msra.mxu0 0.0
    %5049 = vmatprep.subr.mxu0 0.0
    %5050 = vmatpush1.msra.mxu0 0.0
    %5051 = vmatprep.subr.mxu0 0.0
    %5052 = vmatpush1.msra.mxu0 0.0
    %5053 = vmatprep.subr.mxu0 0.0
    %5054 = vmatpush1.msra.mxu0 0.0
    %5055 = vmatprep.subr.mxu0 0.0
    %5056 = vmatpush1.msra.mxu0 0.0
    %5057 = vmatprep.subr.mxu0 0.0
    %5058 = vmatpush1.msra.mxu0 0.0
    %5059 = vmatprep.subr.mxu0 0.0
    %5060 = vmatpush1.msra.mxu0 0.0
    %5061 = vmatprep.subr.mxu0 0.0
    %5062 = vmatpush1.msra.mxu0 0.0
    %5063 = vmatprep.subr.mxu0 0.0
    %5064 = vmatpush1.msra.mxu0 0.0
    %5065 = vmatprep.subr.mxu0 0.0
    %5066 = vmatpush1.msra.mxu0 0.0
    %5067 = vmatprep.subr.mxu0 0.0
    %5068 = vmatpush1.msra.mxu0 0.0
    %5069 = vmatprep.subr.mxu0 0.0
    %5070 = vmatpush1.msra.mxu0 0.0
    %5071 = vmatprep.subr.mxu0 0.0
    %5072 = vmatpush1.msra.mxu0 0.0
    %5073 = vmatprep.mubr.f32.mxu0 0.0
    %5074 = vmatmul.mubr.f32.gmra.mrb[0].mxu0 %v4327
    %v5075 = vpop.f32.mrb[0].mxu0
    %v5076 = vadd.f32 %v4999, %v5075
    %v5077 = vpop.f32.mrb[0].mxu0
    %v5078 = vadd.f32 %v5001, %v5077
    %5079 = vmatprep.mubr.f32.mxu0 0.0
    %5080 = vmatmul.mubr.f32.gmra.mrb[0].mxu0 %v4332
    %v5081 = vpop.f32.mrb[0].mxu0
    %v5082 = vadd.f32 %v5005, %v5081
    %v5083 = vpop.f32.mrb[0].mxu0
    %v5084 = vadd.f32 %v5007, %v5083
    %5085 = vdwg.mxu0
    %5086 = vmatprep.subr.mxu0 %v3887
    %5087 = vmatpush1.msra.mxu0 %v3886
    %5088 = vmatprep.subr.mxu0 %v3893
    %5089 = vmatpush1.msra.mxu0 %v3892
    %5090 = vmatprep.subr.mxu0 %v3899
    %5091 = vmatpush1.msra.mxu0 %v3898
    %5092 = vmatprep.subr.mxu0 %v3905
    %5093 = vmatpush1.msra.mxu0 %v3904
    %5094 = vmatprep.subr.mxu0 %v3911
    %5095 = vmatpush1.msra.mxu0 %v3910
    %5096 = vmatprep.subr.mxu0 %v3917
    %5097 = vmatpush1.msra.mxu0 %v3916
    %5098 = vmatprep.subr.mxu0 %v3923
    %5099 = vmatpush1.msra.mxu0 %v3922
    %5100 = vmatprep.subr.mxu0 %v3929
    %5101 = vmatpush1.msra.mxu0 %v3928
    %5102 = vmatprep.subr.mxu0 %v3935
    %5103 = vmatpush1.msra.mxu0 %v3934
    %5104 = vmatprep.subr.mxu0 %v3941
    %5105 = vmatpush1.msra.mxu0 %v3940
    %5106 = vmatprep.subr.mxu0 %v3947
    %5107 = vmatpush1.msra.mxu0 %v3946
    %5108 = vmatprep.subr.mxu0 %v3953
    %5109 = vmatpush1.msra.mxu0 %v3952
    %5110 = vmatprep.subr.mxu0 %v3959
    %5111 = vmatpush1.msra.mxu0 %v3958
    %5112 = vmatprep.subr.mxu0 %v3965
    %5113 = vmatpush1.msra.mxu0 %v3964
    %5114 = vmatprep.subr.mxu0 %v3971
    %5115 = vmatpush1.msra.mxu0 %v3970
    %5116 = vmatprep.subr.mxu0 %v3977
    %5117 = vmatpush1.msra.mxu0 %v3976
    %5118 = vmatprep.subr.mxu0 %v3983
    %5119 = vmatpush1.msra.mxu0 %v3982
    %5120 = vmatprep.subr.mxu0 %v3989
    %5121 = vmatpush1.msra.mxu0 %v3988
    %5122 = vmatprep.subr.mxu0 %v3995
    %5123 = vmatpush1.msra.mxu0 %v3994
    %5124 = vmatprep.subr.mxu0 %v4001
    %5125 = vmatpush1.msra.mxu0 %v4000
    %5126 = vmatprep.subr.mxu0 %v4007
    %5127 = vmatpush1.msra.mxu0 %v4006
    %5128 = vmatprep.subr.mxu0 %v4013
    %5129 = vmatpush1.msra.mxu0 %v4012
    %5130 = vmatprep.subr.mxu0 %v4019
    %5131 = vmatpush1.msra.mxu0 %v4018
    %5132 = vmatprep.subr.mxu0 %v4025
    %5133 = vmatpush1.msra.mxu0 %v4024
    %5134 = vmatprep.subr.mxu0 %v4031
    %5135 = vmatpush1.msra.mxu0 %v4030
    %5136 = vmatprep.subr.mxu0 %v4037
    %5137 = vmatpush1.msra.mxu0 %v4036
    %5138 = vmatprep.subr.mxu0 %v4043
    %5139 = vmatpush1.msra.mxu0 %v4042
    %5140 = vmatprep.subr.mxu0 %v4049
    %5141 = vmatpush1.msra.mxu0 %v4048
    %5142 = vmatprep.subr.mxu0 %v4055
    %5143 = vmatpush1.msra.mxu0 %v4054
    %5144 = vmatprep.subr.mxu0 %v4061
    %5145 = vmatpush1.msra.mxu0 %v4060
    %5146 = vmatprep.subr.mxu0 %v4067
    %5147 = vmatpush1.msra.mxu0 %v4066
    %5148 = vmatprep.subr.mxu0 %v4073
    %5149 = vmatpush1.msra.mxu0 %v4072
    %5150 = vmatprep.mubr.f32.mxu0 %v3803
    %5151 = vmatmul.mubr.f32.gmra.mrb[0].mxu0 %v3801
    %v5152 = vpop.f32.mrb[0].mxu0
    %v5153 = vadd.f32 %v4768, %v5152
    %v5154 = vpop.f32.mrb[0].mxu0
    %v5155 = vadd.f32 %v4770, %v5154
    %5156 = vmatprep.mubr.f32.mxu0 %v3809
    %5157 = vmatmul.mubr.f32.gmra.mrb[0].mxu0 %v3807
    %v5158 = vpop.f32.mrb[0].mxu0
    %v5159 = vadd.f32 %v4774, %v5158
    %v5160 = vpop.f32.mrb[0].mxu0
    %v5161 = vadd.f32 %v4776, %v5160
    %5162 = vdwg.mxu0
    %5163 = vmatprep.subr.mxu0 %v4079
    %5164 = vmatpush1.msra.mxu0 %v4078
    %5165 = vmatprep.subr.mxu0 %v4085
    %5166 = vmatpush1.msra.mxu0 %v4084
    %5167 = vmatprep.subr.mxu0 %v4091
    %5168 = vmatpush1.msra.mxu0 %v4090
    %5169 = vmatprep.subr.mxu0 %v4097
    %5170 = vmatpush1.msra.mxu0 %v4096
    %5171 = vmatprep.subr.mxu0 %v4103
    %5172 = vmatpush1.msra.mxu0 %v4102
    %5173 = vmatprep.subr.mxu0 %v4109
    %5174 = vmatpush1.msra.mxu0 %v4108
    %5175 = vmatprep.subr.mxu0 %v4115
    %5176 = vmatpush1.msra.mxu0 %v4114
    %5177 = vmatprep.subr.mxu0 %v4121
    %5178 = vmatpush1.msra.mxu0 %v4120
    %5179 = vmatprep.subr.mxu0 %v4127
    %5180 = vmatpush1.msra.mxu0 %v4126
    %5181 = vmatprep.subr.mxu0 %v4133
    %5182 = vmatpush1.msra.mxu0 %v4132
    %5183 = vmatprep.subr.mxu0 %v4139
    %5184 = vmatpush1.msra.mxu0 %v4138
    %5185 = vmatprep.subr.mxu0 %v4145
    %5186 = vmatpush1.msra.mxu0 %v4144
    %5187 = vmatprep.subr.mxu0 %v4151
    %5188 = vmatpush1.msra.mxu0 %v4150
    %5189 = vmatprep.subr.mxu0 %v4157
    %5190 = vmatpush1.msra.mxu0 %v4156
    %5191 = vmatprep.subr.mxu0 %v4163
    %5192 = vmatpush1.msra.mxu0 %v4162
    %5193 = vmatprep.subr.mxu0 %v4169
    %5194 = vmatpush1.msra.mxu0 %v4168
    %5195 = vmatprep.subr.mxu0 0.0
    %5196 = vmatpush1.msra.mxu0 0.0
    %5197 = vmatprep.subr.mxu0 0.0
    %5198 = vmatpush1.msra.mxu0 0.0
    %5199 = vmatprep.subr.mxu0 0.0
    %5200 = vmatpush1.msra.mxu0 0.0
    %5201 = vmatprep.subr.mxu0 0.0
    %5202 = vmatpush1.msra.mxu0 0.0
    %5203 = vmatprep.subr.mxu0 0.0
    %5204 = vmatpush1.msra.mxu0 0.0
    %5205 = vmatprep.subr.mxu0 0.0
    %5206 = vmatpush1.msra.mxu0 0.0
    %5207 = vmatprep.subr.mxu0 0.0
    %5208 = vmatpush1.msra.mxu0 0.0
    %5209 = vmatprep.subr.mxu0 0.0
    %5210 = vmatpush1.msra.mxu0 0.0
    %5211 = vmatprep.subr.mxu0 0.0
    %5212 = vmatpush1.msra.mxu0 0.0
    %5213 = vmatprep.subr.mxu0 0.0
    %5214 = vmatpush1.msra.mxu0 0.0
    %5215 = vmatprep.subr.mxu0 0.0
    %5216 = vmatpush1.msra.mxu0 0.0
    %5217 = vmatprep.subr.mxu0 0.0
    %5218 = vmatpush1.msra.mxu0 0.0
    %5219 = vmatprep.subr.mxu0 0.0
    %5220 = vmatpush1.msra.mxu0 0.0
    %5221 = vmatprep.subr.mxu0 0.0
    %5222 = vmatpush1.msra.mxu0 0.0
    %5223 = vmatprep.subr.mxu0 0.0
    %5224 = vmatpush1.msra.mxu0 0.0
    %5225 = vmatprep.subr.mxu0 0.0
    %5226 = vmatpush1.msra.mxu0 0.0
    %5227 = vmatprep.mubr.f32.mxu0 0.0
    %5228 = vmatmul.mubr.f32.gmra.mrb[0].mxu0 %v3878
    %v5229 = vpop.f32.mrb[0].mxu0
    %v5230 = vadd.f32 %v5153, %v5229
    %v5231 = vpop.f32.mrb[0].mxu0
    %v5232 = vadd.f32 %v5155, %v5231
    %5233 = vmatprep.mubr.f32.mxu0 0.0
    %5234 = vmatmul.mubr.f32.gmra.mrb[0].mxu0 %v3883
    %v5235 = vpop.f32.mrb[0].mxu0
    %v5236 = vadd.f32 %v5159, %v5235
    %v5237 = vpop.f32.mrb[0].mxu0
    %v5238 = vadd.f32 %v5161, %v5237
    %5239 = vdwg.mxu0
    %5240 = vmatprep.subr.mxu0 %v3889
    %5241 = vmatpush1.msra.mxu0 %v3888
    %5242 = vmatprep.subr.mxu0 %v3895
    %5243 = vmatpush1.msra.mxu0 %v3894
    %5244 = vmatprep.subr.mxu0 %v3901
    %5245 = vmatpush1.msra.mxu0 %v3900
    %5246 = vmatprep.subr.mxu0 %v3907
    %5247 = vmatpush1.msra.mxu0 %v3906
    %5248 = vmatprep.subr.mxu0 %v3913
    %5249 = vmatpush1.msra.mxu0 %v3912
    %5250 = vmatprep.subr.mxu0 %v3919
    %5251 = vmatpush1.msra.mxu0 %v3918
    %5252 = vmatprep.subr.mxu0 %v3925
    %5253 = vmatpush1.msra.mxu0 %v3924
    %5254 = vmatprep.subr.mxu0 %v3931
    %5255 = vmatpush1.msra.mxu0 %v3930
    %5256 = vmatprep.subr.mxu0 %v3937
    %5257 = vmatpush1.msra.mxu0 %v3936
    %5258 = vmatprep.subr.mxu0 %v3943
    %5259 = vmatpush1.msra.mxu0 %v3942
    %5260 = vmatprep.subr.mxu0 %v3949
    %5261 = vmatpush1.msra.mxu0 %v3948
    %5262 = vmatprep.subr.mxu0 %v3955
    %5263 = vmatpush1.msra.mxu0 %v3954
    %5264 = vmatprep.subr.mxu0 %v3961
    %5265 = vmatpush1.msra.mxu0 %v3960
    %5266 = vmatprep.subr.mxu0 %v3967
    %5267 = vmatpush1.msra.mxu0 %v3966
    %5268 = vmatprep.subr.mxu0 %v3973
    %5269 = vmatpush1.msra.mxu0 %v3972
    %5270 = vmatprep.subr.mxu0 %v3979
    %5271 = vmatpush1.msra.mxu0 %v3978
    %5272 = vmatprep.subr.mxu0 %v3985
    %5273 = vmatpush1.msra.mxu0 %v3984
    %5274 = vmatprep.subr.mxu0 %v3991
    %5275 = vmatpush1.msra.mxu0 %v3990
    %5276 = vmatprep.subr.mxu0 %v3997
    %5277 = vmatpush1.msra.mxu0 %v3996
    %5278 = vmatprep.subr.mxu0 %v4003
    %5279 = vmatpush1.msra.mxu0 %v4002
    %5280 = vmatprep.subr.mxu0 %v4009
    %5281 = vmatpush1.msra.mxu0 %v4008
    %5282 = vmatprep.subr.mxu0 %v4015
    %5283 = vmatpush1.msra.mxu0 %v4014
    %5284 = vmatprep.subr.mxu0 %v4021
    %5285 = vmatpush1.msra.mxu0 %v4020
    %5286 = vmatprep.subr.mxu0 %v4027
    %5287 = vmatpush1.msra.mxu0 %v4026
    %5288 = vmatprep.subr.mxu0 %v4033
    %5289 = vmatpush1.msra.mxu0 %v4032
    %5290 = vmatprep.subr.mxu0 %v4039
    %5291 = vmatpush1.msra.mxu0 %v4038
    %5292 = vmatprep.subr.mxu0 %v4045
    %5293 = vmatpush1.msra.mxu0 %v4044
    %5294 = vmatprep.subr.mxu0 %v4051
    %5295 = vmatpush1.msra.mxu0 %v4050
    %5296 = vmatprep.subr.mxu0 %v4057
    %5297 = vmatpush1.msra.mxu0 %v4056
    %5298 = vmatprep.subr.mxu0 %v4063
    %5299 = vmatpush1.msra.mxu0 %v4062
    %5300 = vmatprep.subr.mxu0 %v4069
    %5301 = vmatpush1.msra.mxu0 %v4068
    %5302 = vmatprep.subr.mxu0 %v4075
    %5303 = vmatpush1.msra.mxu0 %v4074
    %5304 = vmatprep.mubr.f32.mxu0 %v3803
    %5305 = vmatmul.mubr.f32.gmra.mrb[0].mxu0 %v3801
    %v5306 = vpop.f32.mrb[0].mxu0
    %v5307 = vadd.f32 %v4922, %v5306
    %v5308 = vpop.f32.mrb[0].mxu0
    %v5309 = vadd.f32 %v4924, %v5308
    %5310 = vmatprep.mubr.f32.mxu0 %v3809
    %5311 = vmatmul.mubr.f32.gmra.mrb[0].mxu0 %v3807
    %v5312 = vpop.f32.mrb[0].mxu0
    %v5313 = vadd.f32 %v4928, %v5312
    %v5314 = vpop.f32.mrb[0].mxu0
    %v5315 = vadd.f32 %v4930, %v5314
    %5316 = vdwg.mxu0
    %5317 = vmatprep.subr.mxu0 %v4081
    %5318 = vmatpush1.msra.mxu0 %v4080
    %5319 = vmatprep.subr.mxu0 %v4087
    %5320 = vmatpush1.msra.mxu0 %v4086
    %5321 = vmatprep.subr.mxu0 %v4093
    %5322 = vmatpush1.msra.mxu0 %v4092
    %5323 = vmatprep.subr.mxu0 %v4099
    %5324 = vmatpush1.msra.mxu0 %v4098
    %5325 = vmatprep.subr.mxu0 %v4105
    %5326 = vmatpush1.msra.mxu0 %v4104
    %5327 = vmatprep.subr.mxu0 %v4111
    %5328 = vmatpush1.msra.mxu0 %v4110
    %5329 = vmatprep.subr.mxu0 %v4117
    %5330 = vmatpush1.msra.mxu0 %v4116
    %5331 = vmatprep.subr.mxu0 %v4123
    %5332 = vmatpush1.msra.mxu0 %v4122
    %5333 = vmatprep.subr.mxu0 %v4129
    %5334 = vmatpush1.msra.mxu0 %v4128
    %5335 = vmatprep.subr.mxu0 %v4135
    %5336 = vmatpush1.msra.mxu0 %v4134
    %5337 = vmatprep.subr.mxu0 %v4141
    %5338 = vmatpush1.msra.mxu0 %v4140
    %5339 = vmatprep.subr.mxu0 %v4147
    %5340 = vmatpush1.msra.mxu0 %v4146
    %5341 = vmatprep.subr.mxu0 %v4153
    %5342 = vmatpush1.msra.mxu0 %v4152
    %5343 = vmatprep.subr.mxu0 %v4159
    %5344 = vmatpush1.msra.mxu0 %v4158
    %5345 = vmatprep.subr.mxu0 %v4165
    %5346 = vmatpush1.msra.mxu0 %v4164
    %5347 = vmatprep.subr.mxu0 %v4171
    %5348 = vmatpush1.msra.mxu0 %v4170
    %5349 = vmatprep.subr.mxu0 0.0
    %5350 = vmatpush1.msra.mxu0 0.0
    %5351 = vmatprep.subr.mxu0 0.0
    %5352 = vmatpush1.msra.mxu0 0.0
    %5353 = vmatprep.subr.mxu0 0.0
    %5354 = vmatpush1.msra.mxu0 0.0
    %5355 = vmatprep.subr.mxu0 0.0
    %5356 = vmatpush1.msra.mxu0 0.0
    %5357 = vmatprep.subr.mxu0 0.0
    %5358 = vmatpush1.msra.mxu0 0.0
    %5359 = vmatprep.subr.mxu0 0.0
    %5360 = vmatpush1.msra.mxu0 0.0
    %5361 = vmatprep.subr.mxu0 0.0
    %5362 = vmatpush1.msra.mxu0 0.0
    %5363 = vmatprep.subr.mxu0 0.0
    %5364 = vmatpush1.msra.mxu0 0.0
    %5365 = vmatprep.subr.mxu0 0.0
    %5366 = vmatpush1.msra.mxu0 0.0
    %5367 = vmatprep.subr.mxu0 0.0
    %5368 = vmatpush1.msra.mxu0 0.0
    %5369 = vmatprep.subr.mxu0 0.0
    %5370 = vmatpush1.msra.mxu0 0.0
    %5371 = vmatprep.subr.mxu0 0.0
    %5372 = vmatpush1.msra.mxu0 0.0
    %5373 = vmatprep.subr.mxu0 0.0
    %5374 = vmatpush1.msra.mxu0 0.0
    %5375 = vmatprep.subr.mxu0 0.0
    %5376 = vmatpush1.msra.mxu0 0.0
    %5377 = vmatprep.subr.mxu0 0.0
    %5378 = vmatpush1.msra.mxu0 0.0
    %5379 = vmatprep.subr.mxu0 0.0
    %5380 = vmatpush1.msra.mxu0 0.0
    %5381 = vmatprep.mubr.f32.mxu0 0.0
    %5382 = vmatmul.mubr.f32.gmra.mrb[0].mxu0 %v3878
    %v5383 = vpop.f32.mrb[0].mxu0
    %v5384 = vadd.f32 %v5307, %v5383
    %v5385 = vpop.f32.mrb[0].mxu0
    %v5386 = vadd.f32 %v5309, %v5385
    %5387 = vmatprep.mubr.f32.mxu0 0.0
    %5388 = vmatmul.mubr.f32.gmra.mrb[0].mxu0 %v3883
    %v5389 = vpop.f32.mrb[0].mxu0
    %v5390 = vadd.f32 %v5313, %v5389
    %v5391 = vpop.f32.mrb[0].mxu0
    %v5392 = vadd.f32 %v5315, %v5391
    %5393 = vdwg.mxu0
    %5394 = vmatprep.subr.mxu0 %v3891
    %5395 = vmatpush1.msra.mxu0 %v3890
    %5396 = vmatprep.subr.mxu0 %v3897
    %5397 = vmatpush1.msra.mxu0 %v3896
    %5398 = vmatprep.subr.mxu0 %v3903
    %5399 = vmatpush1.msra.mxu0 %v3902
    %5400 = vmatprep.subr.mxu0 %v3909
    %5401 = vmatpush1.msra.mxu0 %v3908
    %5402 = vmatprep.subr.mxu0 %v3915
    %5403 = vmatpush1.msra.mxu0 %v3914
    %5404 = vmatprep.subr.mxu0 %v3921
    %5405 = vmatpush1.msra.mxu0 %v3920
    %5406 = vmatprep.subr.mxu0 %v3927
    %5407 = vmatpush1.msra.mxu0 %v3926
    %5408 = vmatprep.subr.mxu0 %v3933
    %5409 = vmatpush1.msra.mxu0 %v3932
    %5410 = vmatprep.subr.mxu0 %v3939
    %5411 = vmatpush1.msra.mxu0 %v3938
    %5412 = vmatprep.subr.mxu0 %v3945
    %5413 = vmatpush1.msra.mxu0 %v3944
    %5414 = vmatprep.subr.mxu0 %v3951
    %5415 = vmatpush1.msra.mxu0 %v3950
    %5416 = vmatprep.subr.mxu0 %v3957
    %5417 = vmatpush1.msra.mxu0 %v3956
    %5418 = vmatprep.subr.mxu0 %v3963
    %5419 = vmatpush1.msra.mxu0 %v3962
    %5420 = vmatprep.subr.mxu0 %v3969
    %5421 = vmatpush1.msra.mxu0 %v3968
    %5422 = vmatprep.subr.mxu0 %v3975
    %5423 = vmatpush1.msra.mxu0 %v3974
    %5424 = vmatprep.subr.mxu0 %v3981
    %5425 = vmatpush1.msra.mxu0 %v3980
    %5426 = vmatprep.subr.mxu0 %v3987
    %5427 = vmatpush1.msra.mxu0 %v3986
    %5428 = vmatprep.subr.mxu0 %v3993
    %5429 = vmatpush1.msra.mxu0 %v3992
    %5430 = vmatprep.subr.mxu0 %v3999
    %5431 = vmatpush1.msra.mxu0 %v3998
    %5432 = vmatprep.subr.mxu0 %v4005
    %5433 = vmatpush1.msra.mxu0 %v4004
    %5434 = vmatprep.subr.mxu0 %v4011
    %5435 = vmatpush1.msra.mxu0 %v4010
    %5436 = vmatprep.subr.mxu0 %v4017
    %5437 = vmatpush1.msra.mxu0 %v4016
    %5438 = vmatprep.subr.mxu0 %v4023
    %5439 = vmatpush1.msra.mxu0 %v4022
    %5440 = vmatprep.subr.mxu0 %v4029
    %5441 = vmatpush1.msra.mxu0 %v4028
    %5442 = vmatprep.subr.mxu0 %v4035
    %5443 = vmatpush1.msra.mxu0 %v4034
    %5444 = vmatprep.subr.mxu0 %v4041
    %5445 = vmatpush1.msra.mxu0 %v4040
    %5446 = vmatprep.subr.mxu0 %v4047
    %5447 = vmatpush1.msra.mxu0 %v4046
    %5448 = vmatprep.subr.mxu0 %v4053
    %5449 = vmatpush1.msra.mxu0 %v4052
    %5450 = vmatprep.subr.mxu0 %v4059
    %5451 = vmatpush1.msra.mxu0 %v4058
    %5452 = vmatprep.subr.mxu0 %v4065
    %5453 = vmatpush1.msra.mxu0 %v4064
    %5454 = vmatprep.subr.mxu0 %v4071
    %5455 = vmatpush1.msra.mxu0 %v4070
    %5456 = vmatprep.subr.mxu0 %v4077
    %5457 = vmatpush1.msra.mxu0 %v4076
    %5458 = vmatprep.mubr.f32.mxu0 %v3803
    %5459 = vmatmul.mubr.f32.gmra.mrb[0].mxu0 %v3801
    %v5460 = vpop.f32.mrb[0].mxu0
    %v5461 = vadd.f32 %v5076, %v5460
    %v5462 = vpop.f32.mrb[0].mxu0
    %v5463 = vadd.f32 %v5078, %v5462
    %5464 = vmatprep.mubr.f32.mxu0 %v3809
    %5465 = vmatmul.mubr.f32.gmra.mrb[0].mxu0 %v3807
    %v5466 = vpop.f32.mrb[0].mxu0
    %v5467 = vadd.f32 %v5082, %v5466
    %v5468 = vpop.f32.mrb[0].mxu0
    %v5469 = vadd.f32 %v5084, %v5468
    %5470 = vdwg.mxu0
    %5471 = vmatprep.subr.mxu0 %v4083
    %5472 = vmatpush1.msra.mxu0 %v4082
    %5473 = vmatprep.subr.mxu0 %v4089
    %5474 = vmatpush1.msra.mxu0 %v4088
    %5475 = vmatprep.subr.mxu0 %v4095
    %5476 = vmatpush1.msra.mxu0 %v4094
    %5477 = vmatprep.subr.mxu0 %v4101
    %5478 = vmatpush1.msra.mxu0 %v4100
    %5479 = vmatprep.subr.mxu0 %v4107
    %5480 = vmatpush1.msra.mxu0 %v4106
    %5481 = vmatprep.subr.mxu0 %v4113
    %5482 = vmatpush1.msra.mxu0 %v4112
    %5483 = vmatprep.subr.mxu0 %v4119
    %5484 = vmatpush1.msra.mxu0 %v4118
    %5485 = vmatprep.subr.mxu0 %v4125
    %5486 = vmatpush1.msra.mxu0 %v4124
    %5487 = vmatprep.subr.mxu0 %v4131
    %5488 = vmatpush1.msra.mxu0 %v4130
    %5489 = vmatprep.subr.mxu0 %v4137
    %5490 = vmatpush1.msra.mxu0 %v4136
    %5491 = vmatprep.subr.mxu0 %v4143
    %5492 = vmatpush1.msra.mxu0 %v4142
    %5493 = vmatprep.subr.mxu0 %v4149
    %5494 = vmatpush1.msra.mxu0 %v4148
    %5495 = vmatprep.subr.mxu0 %v4155
    %5496 = vmatpush1.msra.mxu0 %v4154
    %5497 = vmatprep.subr.mxu0 %v4161
    %5498 = vmatpush1.msra.mxu0 %v4160
    %5499 = vmatprep.subr.mxu0 %v4167
    %5500 = vmatpush1.msra.mxu0 %v4166
    %5501 = vmatprep.subr.mxu0 %v4173
    %5502 = vmatpush1.msra.mxu0 %v4172
    %5503 = vmatprep.subr.mxu0 0.0
    %5504 = vmatpush1.msra.mxu0 0.0
    %5505 = vmatprep.subr.mxu0 0.0
    %5506 = vmatpush1.msra.mxu0 0.0
    %5507 = vmatprep.subr.mxu0 0.0
    %5508 = vmatpush1.msra.mxu0 0.0
    %5509 = vmatprep.subr.mxu0 0.0
    %5510 = vmatpush1.msra.mxu0 0.0
    %5511 = vmatprep.subr.mxu0 0.0
    %5512 = vmatpush1.msra.mxu0 0.0
    %5513 = vmatprep.subr.mxu0 0.0
    %5514 = vmatpush1.msra.mxu0 0.0
    %5515 = vmatprep.subr.mxu0 0.0
    %5516 = vmatpush1.msra.mxu0 0.0
    %5517 = vmatprep.subr.mxu0 0.0
    %5518 = vmatpush1.msra.mxu0 0.0
    %5519 = vmatprep.subr.mxu0 0.0
    %5520 = vmatpush1.msra.mxu0 0.0
    %5521 = vmatprep.subr.mxu0 0.0
    %5522 = vmatpush1.msra.mxu0 0.0
    %5523 = vmatprep.subr.mxu0 0.0
    %5524 = vmatpush1.msra.mxu0 0.0
    %5525 = vmatprep.subr.mxu0 0.0
    %5526 = vmatpush1.msra.mxu0 0.0
    %5527 = vmatprep.subr.mxu0 0.0
    %5528 = vmatpush1.msra.mxu0 0.0
    %5529 = vmatprep.subr.mxu0 0.0
    %5530 = vmatpush1.msra.mxu0 0.0
    %5531 = vmatprep.subr.mxu0 0.0
    %5532 = vmatpush1.msra.mxu0 0.0
    %5533 = vmatprep.subr.mxu0 0.0
    %5534 = vmatpush1.msra.mxu0 0.0
    %5535 = vmatprep.mubr.f32.mxu0 0.0
    %5536 = vmatmul.mubr.f32.gmra.mrb[0].mxu0 %v3878
    %v5537 = vpop.f32.mrb[0].mxu0
    %v5538 = vadd.f32 %v5461, %v5537
    %v5539 = vpop.f32.mrb[0].mxu0
    %v5540 = vadd.f32 %v5463, %v5539
    %5541 = vmatprep.mubr.f32.mxu0 0.0
    %5542 = vmatmul.mubr.f32.gmra.mrb[0].mxu0 %v3883
    %v5543 = vpop.f32.mrb[0].mxu0
    %v5544 = vadd.f32 %v5467, %v5543
    %v5545 = vpop.f32.mrb[0].mxu0
    %v5546 = vadd.f32 %v5469, %v5545
    %5547 = vdwg.mxu0
    %s5548 = scalar_lea.vmem %s10, 32
    %v5549 = vld [vmem:[%s5548] sm:$0xff]
    %v5550 = vld [vmem:[%s5548 + $0x8] sm:$0x3]
    %v5552 = vsel %vm3718, %v5549, 0
    %v5555 = vsel %vm3718, %v5550, 0
    %5557 = vmatprep.subr.mxu0 %v3711
    %5558 = vmatpush1.msra.mxu0 %v3710
    %5559 = vmatprep.subr.mxu0 %v3729
    %5560 = vmatpush1.msra.mxu0 %v3726
    %5561 = vmatprep.subr.mxu0 0.0
    %5562 = vmatpush1.msra.mxu0 0.0
    %5563 = vmatprep.subr.mxu0 0.0
    %5564 = vmatpush1.msra.mxu0 0.0
    %5565 = vmatprep.subr.mxu0 0.0
    %5566 = vmatpush1.msra.mxu0 0.0
    %5567 = vmatprep.subr.mxu0 0.0
    %5568 = vmatpush1.msra.mxu0 0.0
    %5569 = vmatprep.subr.mxu0 0.0
    %5570 = vmatpush1.msra.mxu0 0.0
    %5571 = vmatprep.subr.mxu0 0.0
    %5572 = vmatpush1.msra.mxu0 0.0
    %5573 = vmatprep.subr.mxu0 0.0
    %5574 = vmatpush1.msra.mxu0 0.0
    %5575 = vmatprep.subr.mxu0 0.0
    %5576 = vmatpush1.msra.mxu0 0.0
    %5577 = vmatprep.subr.mxu0 0.0
    %5578 = vmatpush1.msra.mxu0 0.0
    %5579 = vmatprep.subr.mxu0 0.0
    %5580 = vmatpush1.msra.mxu0 0.0
    %5581 = vmatprep.subr.mxu0 0.0
    %5582 = vmatpush1.msra.mxu0 0.0
    %5583 = vmatprep.subr.mxu0 0.0
    %5584 = vmatpush1.msra.mxu0 0.0
    %5585 = vmatprep.subr.mxu0 0.0
    %5586 = vmatpush1.msra.mxu0 0.0
    %5587 = vmatprep.subr.mxu0 0.0
    %5588 = vmatpush1.msra.mxu0 0.0
    %5589 = vmatprep.subr.mxu0 0.0
    %5590 = vmatpush1.msra.mxu0 0.0
    %5591 = vmatprep.subr.mxu0 0.0
    %5592 = vmatpush1.msra.mxu0 0.0
    %5593 = vmatprep.subr.mxu0 0.0
    %5594 = vmatpush1.msra.mxu0 0.0
    %5595 = vmatprep.subr.mxu0 0.0
    %5596 = vmatpush1.msra.mxu0 0.0
    %5597 = vmatprep.subr.mxu0 0.0
    %5598 = vmatpush1.msra.mxu0 0.0
    %5599 = vmatprep.subr.mxu0 0.0
    %5600 = vmatpush1.msra.mxu0 0.0
    %5601 = vmatprep.subr.mxu0 0.0
    %5602 = vmatpush1.msra.mxu0 0.0
    %5603 = vmatprep.subr.mxu0 0.0
    %5604 = vmatpush1.msra.mxu0 0.0
    %5605 = vmatprep.subr.mxu0 0.0
    %5606 = vmatpush1.msra.mxu0 0.0
    %5607 = vmatprep.subr.mxu0 0.0
    %5608 = vmatpush1.msra.mxu0 0.0
    %5609 = vmatprep.subr.mxu0 0.0
    %5610 = vmatpush1.msra.mxu0 0.0
    %5611 = vmatprep.subr.mxu0 0.0
    %5612 = vmatpush1.msra.mxu0 0.0
    %5613 = vmatprep.subr.mxu0 0.0
    %5614 = vmatpush1.msra.mxu0 0.0
    %5615 = vmatprep.subr.mxu0 0.0
    %5616 = vmatpush1.msra.mxu0 0.0
    %5617 = vmatprep.subr.mxu0 0.0
    %5618 = vmatpush1.msra.mxu0 0.0
    %5619 = vmatprep.subr.mxu0 0.0
    %5620 = vmatpush1.msra.mxu0 0.0
    %5621 = vmatprep.mubr.f32.mxu0 0.0
    %5622 = vmatmul.mubr.f32.gmra.mrb[0].mxu0 %v5552
    %v5623 = vpop.f32.mrb[0].mxu0
    %v5624 = vadd.f32 0.0, %v5623
    %v5625 = vpop.f32.mrb[0].mxu0
    %v5626 = vadd.f32 0.0, %v5625
    %5627 = vmatprep.mubr.f32.mxu0 0.0
    %5628 = vmatmul.mubr.f32.gmra.mrb[0].mxu0 %v5555
    %v5629 = vpop.f32.mrb[0].mxu0
    %v5630 = vadd.f32 0.0, %v5629
    %v5631 = vpop.f32.mrb[0].mxu0
    %v5632 = vadd.f32 0.0, %v5631
    %5633 = vdwg.mxu0
    %5634 = vmatprep.subr.mxu0 0.0
    %5635 = vmatpush1.msra.mxu0 %v3712
    %5636 = vmatprep.subr.mxu0 0.0
    %5637 = vmatpush1.msra.mxu0 %v3732
    %5638 = vmatprep.subr.mxu0 0.0
    %5639 = vmatpush1.msra.mxu0 0.0
    %5640 = vmatprep.subr.mxu0 0.0
    %5641 = vmatpush1.msra.mxu0 0.0
    %5642 = vmatprep.subr.mxu0 0.0
    %5643 = vmatpush1.msra.mxu0 0.0
    %5644 = vmatprep.subr.mxu0 0.0
    %5645 = vmatpush1.msra.mxu0 0.0
    %5646 = vmatprep.subr.mxu0 0.0
    %5647 = vmatpush1.msra.mxu0 0.0
    %5648 = vmatprep.subr.mxu0 0.0
    %5649 = vmatpush1.msra.mxu0 0.0
    %5650 = vmatprep.subr.mxu0 0.0
    %5651 = vmatpush1.msra.mxu0 0.0
    %5652 = vmatprep.subr.mxu0 0.0
    %5653 = vmatpush1.msra.mxu0 0.0
    %5654 = vmatprep.subr.mxu0 0.0
    %5655 = vmatpush1.msra.mxu0 0.0
    %5656 = vmatprep.subr.mxu0 0.0
    %5657 = vmatpush1.msra.mxu0 0.0
    %5658 = vmatprep.subr.mxu0 0.0
    %5659 = vmatpush1.msra.mxu0 0.0
    %5660 = vmatprep.subr.mxu0 0.0
    %5661 = vmatpush1.msra.mxu0 0.0
    %5662 = vmatprep.subr.mxu0 0.0
    %5663 = vmatpush1.msra.mxu0 0.0
    %5664 = vmatprep.subr.mxu0 0.0
    %5665 = vmatpush1.msra.mxu0 0.0
    %5666 = vmatprep.subr.mxu0 0.0
    %5667 = vmatpush1.msra.mxu0 0.0
    %5668 = vmatprep.subr.mxu0 0.0
    %5669 = vmatpush1.msra.mxu0 0.0
    %5670 = vmatprep.subr.mxu0 0.0
    %5671 = vmatpush1.msra.mxu0 0.0
    %5672 = vmatprep.subr.mxu0 0.0
    %5673 = vmatpush1.msra.mxu0 0.0
    %5674 = vmatprep.subr.mxu0 0.0
    %5675 = vmatpush1.msra.mxu0 0.0
    %5676 = vmatprep.subr.mxu0 0.0
    %5677 = vmatpush1.msra.mxu0 0.0
    %5678 = vmatprep.subr.mxu0 0.0
    %5679 = vmatpush1.msra.mxu0 0.0
    %5680 = vmatprep.subr.mxu0 0.0
    %5681 = vmatpush1.msra.mxu0 0.0
    %5682 = vmatprep.subr.mxu0 0.0
    %5683 = vmatpush1.msra.mxu0 0.0
    %5684 = vmatprep.subr.mxu0 0.0
    %5685 = vmatpush1.msra.mxu0 0.0
    %5686 = vmatprep.subr.mxu0 0.0
    %5687 = vmatpush1.msra.mxu0 0.0
    %5688 = vmatprep.subr.mxu0 0.0
    %5689 = vmatpush1.msra.mxu0 0.0
    %5690 = vmatprep.subr.mxu0 0.0
    %5691 = vmatpush1.msra.mxu0 0.0
    %5692 = vmatprep.subr.mxu0 0.0
    %5693 = vmatpush1.msra.mxu0 0.0
    %5694 = vmatprep.subr.mxu0 0.0
    %5695 = vmatpush1.msra.mxu0 0.0
    %5696 = vmatprep.subr.mxu0 0.0
    %5697 = vmatpush1.msra.mxu0 0.0
    %5698 = vmatprep.mubr.f32.mxu0 0.0
    %5699 = vmatmul.mubr.f32.gmra.mrb[0].mxu0 %v5552
    %v5700 = vpop.f32.mrb[0].mxu0
    %v5701 = vadd.f32 0.0, %v5700
    %v5702 = vpop.f32.mrb[0].mxu0
    %5703 = vmatprep.mubr.f32.mxu0 0.0
    %5704 = vmatmul.mubr.f32.gmra.mrb[0].mxu0 %v5555
    %v5705 = vpop.f32.mrb[0].mxu0
    %v5706 = vadd.f32 0.0, %v5705
    %v5707 = vpop.f32.mrb[0].mxu0
    %5708 = vdwg.mxu0
    %s5709 = scalar_lea.vmem [#allocation5], 4608
    %v5710 = vld [vmem:[%s5709] sm:$0xff]
    %v5711 = vld [vmem:[%s5709 + $0x8] sm:$0xff]
    %v5712 = vld [vmem:[%s5709 + $0x10] sm:$0xff]
    %v5713 = vld [vmem:[%s5709 + $0x18] sm:$0xff]
    %v5714 = vld [vmem:[%s5709 + $0x20] sm:$0xff]
    %v5715 = vld [vmem:[%s5709 + $0x28] sm:$0xff]
    %v5716 = vld [vmem:[%s5709 + $0x30] sm:$0xff]
    %v5717 = vld [vmem:[%s5709 + $0x38] sm:$0xff]
    %v5718 = vld [vmem:[%s5709 + $0x40] sm:$0xff]
    %v5719 = vld [vmem:[%s5709 + $0x48] sm:$0xff]
    %v5720 = vld [vmem:[%s5709 + $0x50] sm:$0xff]
    %v5721 = vld [vmem:[%s5709 + $0x58] sm:$0xff]
    %v5722 = vld [vmem:[%s5709 + $0x60] sm:$0xff]
    %v5723 = vld [vmem:[%s5709 + $0x68] sm:$0xff]
    %v5724 = vld [vmem:[%s5709 + $0x70] sm:$0xff]
    %v5725 = vld [vmem:[%s5709 + $0x78] sm:$0xff]
    %v5726 = vld [vmem:[%s5709 + $0x80] sm:$0xff]
    %v5727 = vld [vmem:[%s5709 + $0x88] sm:$0xff]
    %v5728 = vld [vmem:[%s5709 + $0x90] sm:$0xff]
    %v5729 = vld [vmem:[%s5709 + $0x98] sm:$0xff]
    %v5730 = vld [vmem:[%s5709 + $0xa0] sm:$0xff]
    %v5731 = vld [vmem:[%s5709 + $0xa8] sm:$0xff]
    %v5732 = vld [vmem:[%s5709 + $0xb0] sm:$0xff]
    %v5733 = vld [vmem:[%s5709 + $0xb8] sm:$0xff]
    %v5734 = vld [vmem:[%s5709 + $0xc0] sm:$0xff]
    %v5735 = vld [vmem:[%s5709 + $0xc8] sm:$0xff]
    %v5736 = vld [vmem:[%s5709 + $0xd0] sm:$0xff]
    %v5737 = vld [vmem:[%s5709 + $0xd8] sm:$0xff]
    %v5738 = vld [vmem:[%s5709 + $0xe0] sm:$0xff]
    %v5739 = vld [vmem:[%s5709 + $0xe8] sm:$0xff]
    %v5740 = vld [vmem:[%s5709 + $0xf0] sm:$0xff]
    %v5741 = vld [vmem:[%s5709 + $0xf8] sm:$0xff]
    %v5742 = vld [vmem:[%s5709 + $0x100] sm:$0xff]
    %v5743 = vld [vmem:[%s5709 + $0x108] sm:$0xff]
    %v5744 = vld [vmem:[%s5709 + $0x110] sm:$0xff]
    %v5745 = vld [vmem:[%s5709 + $0x118] sm:$0xff]
    %v5746 = vld [vmem:[%s5709 + $0x120] sm:$0xff]
    %v5747 = vld [vmem:[%s5709 + $0x128] sm:$0xff]
    %v5748 = vld [vmem:[%s5709 + $0x130] sm:$0xff]
    %v5749 = vld [vmem:[%s5709 + $0x138] sm:$0xff]
    %v5750 = vld [vmem:[%s5709 + $0x140] sm:$0xff]
    %v5751 = vld [vmem:[%s5709 + $0x148] sm:$0xff]
    %v5752 = vld [vmem:[%s5709 + $0x150] sm:$0xff]
    %v5753 = vld [vmem:[%s5709 + $0x158] sm:$0xff]
    %v5754 = vld [vmem:[%s5709 + $0x160] sm:$0xff]
    %v5755 = vld [vmem:[%s5709 + $0x168] sm:$0xff]
    %v5756 = vld [vmem:[%s5709 + $0x170] sm:$0xff]
    %v5757 = vld [vmem:[%s5709 + $0x178] sm:$0xff]
    %v5758 = vld [vmem:[%s5709 + $0x180] sm:$0xff]
    %v5759 = vld [vmem:[%s5709 + $0x188] sm:$0xff]
    %v5760 = vld [vmem:[%s5709 + $0x190] sm:$0xff]
    %v5761 = vld [vmem:[%s5709 + $0x198] sm:$0xff]
    %v5762 = vld [vmem:[%s5709 + $0x1a0] sm:$0xff]
    %v5763 = vld [vmem:[%s5709 + $0x1a8] sm:$0xff]
    %v5764 = vld [vmem:[%s5709 + $0x1b0] sm:$0xff]
    %v5765 = vld [vmem:[%s5709 + $0x1b8] sm:$0xff]
    %v5766 = vld [vmem:[%s5709 + $0x1c0] sm:$0xff]
    %v5767 = vld [vmem:[%s5709 + $0x1c8] sm:$0xff]
    %v5768 = vld [vmem:[%s5709 + $0x1d0] sm:$0xff]
    %v5769 = vld [vmem:[%s5709 + $0x1d8] sm:$0xff]
    %v5770 = vld [vmem:[%s5709 + $0x1e0] sm:$0xff]
    %v5771 = vld [vmem:[%s5709 + $0x1e8] sm:$0xff]
    %v5772 = vld [vmem:[%s5709 + $0x1f0] sm:$0xff]
    %v5773 = vld [vmem:[%s5709 + $0x1f8] sm:$0xff]
    %v5774 = vld [vmem:[%s5709 + $0x200] sm:$0xff]
    %v5775 = vld [vmem:[%s5709 + $0x208] sm:$0xff]
    %v5776 = vld [vmem:[%s5709 + $0x210] sm:$0xff]
    %v5777 = vld [vmem:[%s5709 + $0x218] sm:$0xff]
    %v5778 = vld [vmem:[%s5709 + $0x220] sm:$0xff]
    %v5779 = vld [vmem:[%s5709 + $0x228] sm:$0xff]
    %v5780 = vld [vmem:[%s5709 + $0x230] sm:$0xff]
    %v5781 = vld [vmem:[%s5709 + $0x238] sm:$0xff]
    %v5782 = vld [vmem:[%s5709 + $0x240] sm:$0xff]
    %v5783 = vld [vmem:[%s5709 + $0x248] sm:$0xff]
    %v5784 = vld [vmem:[%s5709 + $0x250] sm:$0xff]
    %v5785 = vld [vmem:[%s5709 + $0x258] sm:$0xff]
    %v5786 = vld [vmem:[%s5709 + $0x260] sm:$0xff]
    %v5787 = vld [vmem:[%s5709 + $0x268] sm:$0xff]
    %v5788 = vld [vmem:[%s5709 + $0x270] sm:$0xff]
    %v5789 = vld [vmem:[%s5709 + $0x278] sm:$0xff]
    %v5790 = vld [vmem:[%s5709 + $0x280] sm:$0xff]
    %v5791 = vld [vmem:[%s5709 + $0x288] sm:$0xff]
    %v5792 = vld [vmem:[%s5709 + $0x290] sm:$0xff]
    %v5793 = vld [vmem:[%s5709 + $0x298] sm:$0xff]
    %v5794 = vld [vmem:[%s5709 + $0x2a0] sm:$0xff]
    %v5795 = vld [vmem:[%s5709 + $0x2a8] sm:$0xff]
    %v5796 = vld [vmem:[%s5709 + $0x2b0] sm:$0xff]
    %v5797 = vld [vmem:[%s5709 + $0x2b8] sm:$0xff]
    %v5798 = vld [vmem:[%s5709 + $0x2c0] sm:$0xff]
    %v5799 = vld [vmem:[%s5709 + $0x2c8] sm:$0xff]
    %v5800 = vld [vmem:[%s5709 + $0x2d0] sm:$0xff]
    %v5801 = vld [vmem:[%s5709 + $0x2d8] sm:$0xff]
    %v5802 = vld [vmem:[%s5709 + $0x2e0] sm:$0xff]
    %v5803 = vld [vmem:[%s5709 + $0x2e8] sm:$0xff]
    %v5804 = vld [vmem:[%s5709 + $0x2f0] sm:$0xff]
    %v5805 = vld [vmem:[%s5709 + $0x2f8] sm:$0xff]
    %v5806 = vld [vmem:[%s5709 + $0x300] sm:$0xff]
    %v5807 = vld [vmem:[%s5709 + $0x308] sm:$0xff]
    %v5808 = vld [vmem:[%s5709 + $0x310] sm:$0xff]
    %v5809 = vld [vmem:[%s5709 + $0x318] sm:$0xff]
    %v5810 = vld [vmem:[%s5709 + $0x320] sm:$0xff]
    %v5811 = vld [vmem:[%s5709 + $0x328] sm:$0xff]
    %v5812 = vld [vmem:[%s5709 + $0x330] sm:$0xff]
    %v5813 = vld [vmem:[%s5709 + $0x338] sm:$0xff]
    %v5814 = vld [vmem:[%s5709 + $0x340] sm:$0xff]
    %v5815 = vld [vmem:[%s5709 + $0x348] sm:$0xff]
    %v5816 = vld [vmem:[%s5709 + $0x350] sm:$0xff]
    %v5817 = vld [vmem:[%s5709 + $0x358] sm:$0xff]
    %v5818 = vld [vmem:[%s5709 + $0x360] sm:$0xff]
    %v5819 = vld [vmem:[%s5709 + $0x368] sm:$0xff]
    %v5820 = vld [vmem:[%s5709 + $0x370] sm:$0xff]
    %v5821 = vld [vmem:[%s5709 + $0x378] sm:$0xff]
    %v5822 = vld [vmem:[%s5709 + $0x380] sm:$0xff]
    %v5823 = vld [vmem:[%s5709 + $0x388] sm:$0xff]
    %v5824 = vld [vmem:[%s5709 + $0x390] sm:$0xff]
    %v5825 = vld [vmem:[%s5709 + $0x398] sm:$0xff]
    %v5826 = vld [vmem:[%s5709 + $0x3a0] sm:$0xff]
    %v5827 = vld [vmem:[%s5709 + $0x3a8] sm:$0xff]
    %v5828 = vld [vmem:[%s5709 + $0x3b0] sm:$0xff]
    %v5829 = vld [vmem:[%s5709 + $0x3b8] sm:$0xff]
    %v5830 = vld [vmem:[%s5709 + $0x3c0] sm:$0xff]
    %v5831 = vld [vmem:[%s5709 + $0x3c8] sm:$0xff]
    %v5832 = vld [vmem:[%s5709 + $0x3d0] sm:$0xff]
    %v5833 = vld [vmem:[%s5709 + $0x3d8] sm:$0xff]
    %v5834 = vld [vmem:[%s5709 + $0x3e0] sm:$0xff]
    %v5835 = vld [vmem:[%s5709 + $0x3e8] sm:$0xff]
    %v5836 = vld [vmem:[%s5709 + $0x3f0] sm:$0xff]
    %v5837 = vld [vmem:[%s5709 + $0x3f8] sm:$0xff]
    %v5838 = vld [vmem:[%s5709 + $0x400] sm:$0xff]
    %v5839 = vld [vmem:[%s5709 + $0x408] sm:$0xff]
    %v5840 = vld [vmem:[%s5709 + $0x410] sm:$0xff]
    %v5841 = vld [vmem:[%s5709 + $0x418] sm:$0xff]
    %v5842 = vld [vmem:[%s5709 + $0x420] sm:$0xff]
    %v5843 = vld [vmem:[%s5709 + $0x428] sm:$0xff]
    %v5844 = vld [vmem:[%s5709 + $0x430] sm:$0xff]
    %v5845 = vld [vmem:[%s5709 + $0x438] sm:$0xff]
    %v5846 = vld [vmem:[%s5709 + $0x440] sm:$0xff]
    %v5847 = vld [vmem:[%s5709 + $0x448] sm:$0xff]
    %v5848 = vld [vmem:[%s5709 + $0x450] sm:$0xff]
    %v5849 = vld [vmem:[%s5709 + $0x458] sm:$0xff]
    %v5850 = vld [vmem:[%s5709 + $0x460] sm:$0xff]
    %v5851 = vld [vmem:[%s5709 + $0x468] sm:$0xff]
    %v5852 = vld [vmem:[%s5709 + $0x470] sm:$0xff]
    %v5853 = vld [vmem:[%s5709 + $0x478] sm:$0xff]
    %v5854 = vld [vmem:[%s5709 + $0x480] sm:$0xff]
    %v5855 = vld [vmem:[%s5709 + $0x488] sm:$0xff]
    %v5856 = vld [vmem:[%s5709 + $0x490] sm:$0xff]
    %v5857 = vld [vmem:[%s5709 + $0x498] sm:$0xff]
    %v5858 = vld [vmem:[%s5709 + $0x4a0] sm:$0xff]
    %v5859 = vld [vmem:[%s5709 + $0x4a8] sm:$0xff]
    %v5860 = vld [vmem:[%s5709 + $0x4b0] sm:$0xff]
    %v5861 = vld [vmem:[%s5709 + $0x4b8] sm:$0xff]
    %v5862 = vld [vmem:[%s5709 + $0x4c0] sm:$0xff]
    %v5863 = vld [vmem:[%s5709 + $0x4c8] sm:$0xff]
    %v5864 = vld [vmem:[%s5709 + $0x4d0] sm:$0xff]
    %v5865 = vld [vmem:[%s5709 + $0x4d8] sm:$0xff]
    %v5866 = vld [vmem:[%s5709 + $0x4e0] sm:$0xff]
    %v5867 = vld [vmem:[%s5709 + $0x4e8] sm:$0xff]
    %v5868 = vld [vmem:[%s5709 + $0x4f0] sm:$0xff]
    %v5869 = vld [vmem:[%s5709 + $0x4f8] sm:$0xff]
    %v5870 = vld [vmem:[%s5709 + $0x500] sm:$0xff]
    %v5871 = vld [vmem:[%s5709 + $0x508] sm:$0xff]
    %v5872 = vld [vmem:[%s5709 + $0x510] sm:$0xff]
    %v5873 = vld [vmem:[%s5709 + $0x518] sm:$0xff]
    %v5874 = vld [vmem:[%s5709 + $0x520] sm:$0xff]
    %v5875 = vld [vmem:[%s5709 + $0x528] sm:$0xff]
    %v5876 = vld [vmem:[%s5709 + $0x530] sm:$0xff]
    %v5877 = vld [vmem:[%s5709 + $0x538] sm:$0xff]
    %v5878 = vld [vmem:[%s5709 + $0x540] sm:$0xff]
    %v5879 = vld [vmem:[%s5709 + $0x548] sm:$0xff]
    %v5880 = vld [vmem:[%s5709 + $0x550] sm:$0xff]
    %v5881 = vld [vmem:[%s5709 + $0x558] sm:$0xff]
    %v5882 = vld [vmem:[%s5709 + $0x560] sm:$0xff]
    %v5883 = vld [vmem:[%s5709 + $0x568] sm:$0xff]
    %v5884 = vld [vmem:[%s5709 + $0x570] sm:$0xff]
    %v5885 = vld [vmem:[%s5709 + $0x578] sm:$0xff]
    %v5886 = vld [vmem:[%s5709 + $0x580] sm:$0xff]
    %v5887 = vld [vmem:[%s5709 + $0x588] sm:$0xff]
    %v5888 = vld [vmem:[%s5709 + $0x590] sm:$0xff]
    %v5889 = vld [vmem:[%s5709 + $0x598] sm:$0xff]
    %v5890 = vld [vmem:[%s5709 + $0x5a0] sm:$0xff]
    %v5891 = vld [vmem:[%s5709 + $0x5a8] sm:$0xff]
    %v5892 = vld [vmem:[%s5709 + $0x5b0] sm:$0xff]
    %v5893 = vld [vmem:[%s5709 + $0x5b8] sm:$0xff]
    %v5894 = vld [vmem:[%s5709 + $0x5c0] sm:$0xff]
    %v5895 = vld [vmem:[%s5709 + $0x5c8] sm:$0xff]
    %v5896 = vld [vmem:[%s5709 + $0x5d0] sm:$0xff]
    %v5897 = vld [vmem:[%s5709 + $0x5d8] sm:$0xff]
    %v5898 = vld [vmem:[%s5709 + $0x5e0] sm:$0xff]
    %v5899 = vld [vmem:[%s5709 + $0x5e8] sm:$0xff]
    %v5900 = vld [vmem:[%s5709 + $0x5f0] sm:$0xff]
    %v5901 = vld [vmem:[%s5709 + $0x5f8] sm:$0xff]
    %v5902 = vld [vmem:[%s5709 + $0x600] sm:$0xff]
    %v5903 = vld [vmem:[%s5709 + $0x608] sm:$0xff]
    %v5904 = vld [vmem:[%s5709 + $0x610] sm:$0xff]
    %v5905 = vld [vmem:[%s5709 + $0x618] sm:$0xff]
    %v5906 = vld [vmem:[%s5709 + $0x620] sm:$0xff]
    %v5907 = vld [vmem:[%s5709 + $0x628] sm:$0xff]
    %v5908 = vld [vmem:[%s5709 + $0x630] sm:$0xff]
    %v5909 = vld [vmem:[%s5709 + $0x638] sm:$0xff]
    %v5910 = vld [vmem:[%s5709 + $0x640] sm:$0xff]
    %v5911 = vld [vmem:[%s5709 + $0x648] sm:$0xff]
    %v5912 = vld [vmem:[%s5709 + $0x650] sm:$0xff]
    %v5913 = vld [vmem:[%s5709 + $0x658] sm:$0xff]
    %v5914 = vld [vmem:[%s5709 + $0x660] sm:$0xff]
    %v5915 = vld [vmem:[%s5709 + $0x668] sm:$0xff]
    %v5916 = vld [vmem:[%s5709 + $0x670] sm:$0xff]
    %v5917 = vld [vmem:[%s5709 + $0x678] sm:$0xff]
    %v5918 = vld [vmem:[%s5709 + $0x680] sm:$0xff]
    %v5919 = vld [vmem:[%s5709 + $0x688] sm:$0xff]
    %v5920 = vld [vmem:[%s5709 + $0x690] sm:$0xff]
    %v5921 = vld [vmem:[%s5709 + $0x698] sm:$0xff]
    %v5922 = vld [vmem:[%s5709 + $0x6a0] sm:$0xff]
    %v5923 = vld [vmem:[%s5709 + $0x6a8] sm:$0xff]
    %v5924 = vld [vmem:[%s5709 + $0x6b0] sm:$0xff]
    %v5925 = vld [vmem:[%s5709 + $0x6b8] sm:$0xff]
    %v5926 = vld [vmem:[%s5709 + $0x6c0] sm:$0xff]
    %v5927 = vld [vmem:[%s5709 + $0x6c8] sm:$0xff]
    %v5928 = vld [vmem:[%s5709 + $0x6d0] sm:$0xff]
    %v5929 = vld [vmem:[%s5709 + $0x6d8] sm:$0xff]
    %v5930 = vld [vmem:[%s5709 + $0x6e0] sm:$0xff]
    %v5931 = vld [vmem:[%s5709 + $0x6e8] sm:$0xff]
    %v5932 = vld [vmem:[%s5709 + $0x6f0] sm:$0xff]
    %v5933 = vld [vmem:[%s5709 + $0x6f8] sm:$0xff]
    %v5934 = vld [vmem:[%s5709 + $0x700] sm:$0xff]
    %v5935 = vld [vmem:[%s5709 + $0x708] sm:$0xff]
    %v5936 = vld [vmem:[%s5709 + $0x710] sm:$0xff]
    %v5937 = vld [vmem:[%s5709 + $0x718] sm:$0xff]
    %v5938 = vld [vmem:[%s5709 + $0x720] sm:$0xff]
    %v5939 = vld [vmem:[%s5709 + $0x728] sm:$0xff]
    %v5940 = vld [vmem:[%s5709 + $0x730] sm:$0xff]
    %v5941 = vld [vmem:[%s5709 + $0x738] sm:$0xff]
    %v5942 = vld [vmem:[%s5709 + $0x740] sm:$0xff]
    %v5943 = vld [vmem:[%s5709 + $0x748] sm:$0xff]
    %v5944 = vld [vmem:[%s5709 + $0x750] sm:$0xff]
    %v5945 = vld [vmem:[%s5709 + $0x758] sm:$0xff]
    %v5946 = vld [vmem:[%s5709 + $0x760] sm:$0xff]
    %v5947 = vld [vmem:[%s5709 + $0x768] sm:$0xff]
    %v5948 = vld [vmem:[%s5709 + $0x770] sm:$0xff]
    %v5949 = vld [vmem:[%s5709 + $0x778] sm:$0xff]
    %v5950 = vld [vmem:[%s5709 + $0x780] sm:$0xff]
    %v5951 = vld [vmem:[%s5709 + $0x788] sm:$0xff]
    %v5952 = vld [vmem:[%s5709 + $0x790] sm:$0xff]
    %v5953 = vld [vmem:[%s5709 + $0x798] sm:$0xff]
    %v5954 = vld [vmem:[%s5709 + $0x7a0] sm:$0xff]
    %v5955 = vld [vmem:[%s5709 + $0x7a8] sm:$0xff]
    %v5956 = vld [vmem:[%s5709 + $0x7b0] sm:$0xff]
    %v5957 = vld [vmem:[%s5709 + $0x7b8] sm:$0xff]
    %v5958 = vld [vmem:[%s5709 + $0x7c0] sm:$0xff]
    %v5959 = vld [vmem:[%s5709 + $0x7c8] sm:$0xff]
    %v5960 = vld [vmem:[%s5709 + $0x7d0] sm:$0xff]
    %v5961 = vld [vmem:[%s5709 + $0x7d8] sm:$0xff]
    %v5962 = vld [vmem:[%s5709 + $0x7e0] sm:$0xff]
    %v5963 = vld [vmem:[%s5709 + $0x7e8] sm:$0xff]
    %v5964 = vld [vmem:[%s5709 + $0x7f0] sm:$0xff]
    %v5965 = vld [vmem:[%s5709 + $0x7f8] sm:$0xff]
    %v5966 = vld [vmem:[%s5709 + $0x800] sm:$0xff]
    %v5967 = vld [vmem:[%s5709 + $0x808] sm:$0xff]
    %v5968 = vld [vmem:[%s5709 + $0x810] sm:$0xff]
    %v5969 = vld [vmem:[%s5709 + $0x818] sm:$0xff]
    %v5970 = vld [vmem:[%s5709 + $0x820] sm:$0xff]
    %v5971 = vld [vmem:[%s5709 + $0x828] sm:$0xff]
    %v5972 = vld [vmem:[%s5709 + $0x830] sm:$0xff]
    %v5973 = vld [vmem:[%s5709 + $0x838] sm:$0xff]
    %v5974 = vld [vmem:[%s5709 + $0x840] sm:$0xff]
    %v5975 = vld [vmem:[%s5709 + $0x848] sm:$0xff]
    %v5976 = vld [vmem:[%s5709 + $0x850] sm:$0xff]
    %v5977 = vld [vmem:[%s5709 + $0x858] sm:$0xff]
    %v5978 = vld [vmem:[%s5709 + $0x860] sm:$0xff]
    %v5979 = vld [vmem:[%s5709 + $0x868] sm:$0xff]
    %v5980 = vld [vmem:[%s5709 + $0x870] sm:$0xff]
    %v5981 = vld [vmem:[%s5709 + $0x878] sm:$0xff]
    %v5982 = vld [vmem:[%s5709 + $0x880] sm:$0xff]
    %v5983 = vld [vmem:[%s5709 + $0x888] sm:$0xff]
    %v5984 = vld [vmem:[%s5709 + $0x890] sm:$0xff]
    %v5985 = vld [vmem:[%s5709 + $0x898] sm:$0xff]
    %v5986 = vld [vmem:[%s5709 + $0x8a0] sm:$0xff]
    %v5987 = vld [vmem:[%s5709 + $0x8a8] sm:$0xff]
    %v5988 = vld [vmem:[%s5709 + $0x8b0] sm:$0xff]
    %v5989 = vld [vmem:[%s5709 + $0x8b8] sm:$0xff]
    %v5990 = vld [vmem:[%s5709 + $0x8c0] sm:$0xff]
    %v5991 = vld [vmem:[%s5709 + $0x8c8] sm:$0xff]
    %v5992 = vld [vmem:[%s5709 + $0x8d0] sm:$0xff]
    %v5993 = vld [vmem:[%s5709 + $0x8d8] sm:$0xff]
    %v5994 = vld [vmem:[%s5709 + $0x8e0] sm:$0xff]
    %v5995 = vld [vmem:[%s5709 + $0x8e8] sm:$0xff]
    %v5996 = vld [vmem:[%s5709 + $0x8f0] sm:$0xff]
    %v5997 = vld [vmem:[%s5709 + $0x8f8] sm:$0xff]
    %5998 = vmatprep.subr.mxu0 %v5711
    %5999 = vmatpush1.msra.mxu0 %v5710
    %6000 = vmatprep.subr.mxu0 %v5717
    %6001 = vmatpush1.msra.mxu0 %v5716
    %6002 = vmatprep.subr.mxu0 %v5723
    %6003 = vmatpush1.msra.mxu0 %v5722
    %6004 = vmatprep.subr.mxu0 %v5729
    %6005 = vmatpush1.msra.mxu0 %v5728
    %6006 = vmatprep.subr.mxu0 %v5735
    %6007 = vmatpush1.msra.mxu0 %v5734
    %6008 = vmatprep.subr.mxu0 %v5741
    %6009 = vmatpush1.msra.mxu0 %v5740
    %6010 = vmatprep.subr.mxu0 %v5747
    %6011 = vmatpush1.msra.mxu0 %v5746
    %6012 = vmatprep.subr.mxu0 %v5753
    %6013 = vmatpush1.msra.mxu0 %v5752
    %6014 = vmatprep.subr.mxu0 %v5759
    %6015 = vmatpush1.msra.mxu0 %v5758
    %6016 = vmatprep.subr.mxu0 %v5765
    %6017 = vmatpush1.msra.mxu0 %v5764
    %6018 = vmatprep.subr.mxu0 %v5771
    %6019 = vmatpush1.msra.mxu0 %v5770
    %6020 = vmatprep.subr.mxu0 %v5777
    %6021 = vmatpush1.msra.mxu0 %v5776
    %6022 = vmatprep.subr.mxu0 %v5783
    %6023 = vmatpush1.msra.mxu0 %v5782
    %6024 = vmatprep.subr.mxu0 %v5789
    %6025 = vmatpush1.msra.mxu0 %v5788
    %6026 = vmatprep.subr.mxu0 %v5795
    %6027 = vmatpush1.msra.mxu0 %v5794
    %6028 = vmatprep.subr.mxu0 %v5801
    %6029 = vmatpush1.msra.mxu0 %v5800
    %6030 = vmatprep.subr.mxu0 %v5807
    %6031 = vmatpush1.msra.mxu0 %v5806
    %6032 = vmatprep.subr.mxu0 %v5813
    %6033 = vmatpush1.msra.mxu0 %v5812
    %6034 = vmatprep.subr.mxu0 %v5819
    %6035 = vmatpush1.msra.mxu0 %v5818
    %6036 = vmatprep.subr.mxu0 %v5825
    %6037 = vmatpush1.msra.mxu0 %v5824
    %6038 = vmatprep.subr.mxu0 %v5831
    %6039 = vmatpush1.msra.mxu0 %v5830
    %6040 = vmatprep.subr.mxu0 %v5837
    %6041 = vmatpush1.msra.mxu0 %v5836
    %6042 = vmatprep.subr.mxu0 %v5843
    %6043 = vmatpush1.msra.mxu0 %v5842
    %6044 = vmatprep.subr.mxu0 %v5849
    %6045 = vmatpush1.msra.mxu0 %v5848
    %6046 = vmatprep.subr.mxu0 %v5855
    %6047 = vmatpush1.msra.mxu0 %v5854
    %6048 = vmatprep.subr.mxu0 %v5861
    %6049 = vmatpush1.msra.mxu0 %v5860
    %6050 = vmatprep.subr.mxu0 %v5867
    %6051 = vmatpush1.msra.mxu0 %v5866
    %6052 = vmatprep.subr.mxu0 %v5873
    %6053 = vmatpush1.msra.mxu0 %v5872
    %6054 = vmatprep.subr.mxu0 %v5879
    %6055 = vmatpush1.msra.mxu0 %v5878
    %6056 = vmatprep.subr.mxu0 %v5885
    %6057 = vmatpush1.msra.mxu0 %v5884
    %6058 = vmatprep.subr.mxu0 %v5891
    %6059 = vmatpush1.msra.mxu0 %v5890
    %6060 = vmatprep.subr.mxu0 %v5897
    %6061 = vmatpush1.msra.mxu0 %v5896
    %6062 = vmatprep.mubr.f32.mxu0 %v5626
    %6063 = vmatmul.mubr.f32.gmra.mrb[0].mxu0 %v5624
    %v6064 = vpop.f32.mrb[0].mxu0
    %v6065 = vadd.f32 0.0, %v6064
    %v6066 = vpop.f32.mrb[0].mxu0
    %v6067 = vadd.f32 0.0, %v6066
    %6068 = vmatprep.mubr.f32.mxu0 %v5632
    %6069 = vmatmul.mubr.f32.gmra.mrb[0].mxu0 %v5630
    %v6070 = vpop.f32.mrb[0].mxu0
    %v6071 = vadd.f32 0.0, %v6070
    %v6072 = vpop.f32.mrb[0].mxu0
    %v6073 = vadd.f32 0.0, %v6072
    %6074 = vdwg.mxu0
    %6075 = vmatprep.subr.mxu0 %v5903
    %6076 = vmatpush1.msra.mxu0 %v5902
    %6077 = vmatprep.subr.mxu0 %v5909
    %6078 = vmatpush1.msra.mxu0 %v5908
    %6079 = vmatprep.subr.mxu0 %v5915
    %6080 = vmatpush1.msra.mxu0 %v5914
    %6081 = vmatprep.subr.mxu0 %v5921
    %6082 = vmatpush1.msra.mxu0 %v5920
    %6083 = vmatprep.subr.mxu0 %v5927
    %6084 = vmatpush1.msra.mxu0 %v5926
    %6085 = vmatprep.subr.mxu0 %v5933
    %6086 = vmatpush1.msra.mxu0 %v5932
    %6087 = vmatprep.subr.mxu0 %v5939
    %6088 = vmatpush1.msra.mxu0 %v5938
    %6089 = vmatprep.subr.mxu0 %v5945
    %6090 = vmatpush1.msra.mxu0 %v5944
    %6091 = vmatprep.subr.mxu0 %v5951
    %6092 = vmatpush1.msra.mxu0 %v5950
    %6093 = vmatprep.subr.mxu0 %v5957
    %6094 = vmatpush1.msra.mxu0 %v5956
    %6095 = vmatprep.subr.mxu0 %v5963
    %6096 = vmatpush1.msra.mxu0 %v5962
    %6097 = vmatprep.subr.mxu0 %v5969
    %6098 = vmatpush1.msra.mxu0 %v5968
    %6099 = vmatprep.subr.mxu0 %v5975
    %6100 = vmatpush1.msra.mxu0 %v5974
    %6101 = vmatprep.subr.mxu0 %v5981
    %6102 = vmatpush1.msra.mxu0 %v5980
    %6103 = vmatprep.subr.mxu0 %v5987
    %6104 = vmatpush1.msra.mxu0 %v5986
    %6105 = vmatprep.subr.mxu0 %v5993
    %6106 = vmatpush1.msra.mxu0 %v5992
    %6107 = vmatprep.subr.mxu0 0.0
    %6108 = vmatpush1.msra.mxu0 0.0
    %6109 = vmatprep.subr.mxu0 0.0
    %6110 = vmatpush1.msra.mxu0 0.0
    %6111 = vmatprep.subr.mxu0 0.0
    %6112 = vmatpush1.msra.mxu0 0.0
    %6113 = vmatprep.subr.mxu0 0.0
    %6114 = vmatpush1.msra.mxu0 0.0
    %6115 = vmatprep.subr.mxu0 0.0
    %6116 = vmatpush1.msra.mxu0 0.0
    %6117 = vmatprep.subr.mxu0 0.0
    %6118 = vmatpush1.msra.mxu0 0.0
    %6119 = vmatprep.subr.mxu0 0.0
    %6120 = vmatpush1.msra.mxu0 0.0
    %6121 = vmatprep.subr.mxu0 0.0
    %6122 = vmatpush1.msra.mxu0 0.0
    %6123 = vmatprep.subr.mxu0 0.0
    %6124 = vmatpush1.msra.mxu0 0.0
    %6125 = vmatprep.subr.mxu0 0.0
    %6126 = vmatpush1.msra.mxu0 0.0
    %6127 = vmatprep.subr.mxu0 0.0
    %6128 = vmatpush1.msra.mxu0 0.0
    %6129 = vmatprep.subr.mxu0 0.0
    %6130 = vmatpush1.msra.mxu0 0.0
    %6131 = vmatprep.subr.mxu0 0.0
    %6132 = vmatpush1.msra.mxu0 0.0
    %6133 = vmatprep.subr.mxu0 0.0
    %6134 = vmatpush1.msra.mxu0 0.0
    %6135 = vmatprep.subr.mxu0 0.0
    %6136 = vmatpush1.msra.mxu0 0.0
    %6137 = vmatprep.subr.mxu0 0.0
    %6138 = vmatpush1.msra.mxu0 0.0
    %6139 = vmatprep.mubr.f32.mxu0 0.0
    %6140 = vmatmul.mubr.f32.gmra.mrb[0].mxu0 %v5701
    %v6141 = vpop.f32.mrb[0].mxu0
    %v6142 = vadd.f32 %v6065, %v6141
    %v6143 = vpop.f32.mrb[0].mxu0
    %v6144 = vadd.f32 %v6067, %v6143
    %6145 = vmatprep.mubr.f32.mxu0 0.0
    %6146 = vmatmul.mubr.f32.gmra.mrb[0].mxu0 %v5706
    %v6147 = vpop.f32.mrb[0].mxu0
    %v6148 = vadd.f32 %v6071, %v6147
    %v6149 = vpop.f32.mrb[0].mxu0
    %v6150 = vadd.f32 %v6073, %v6149
    %6151 = vdwg.mxu0
    %6152 = vmatprep.subr.mxu0 %v5713
    %6153 = vmatpush1.msra.mxu0 %v5712
    %6154 = vmatprep.subr.mxu0 %v5719
    %6155 = vmatpush1.msra.mxu0 %v5718
    %6156 = vmatprep.subr.mxu0 %v5725
    %6157 = vmatpush1.msra.mxu0 %v5724
    %6158 = vmatprep.subr.mxu0 %v5731
    %6159 = vmatpush1.msra.mxu0 %v5730
    %6160 = vmatprep.subr.mxu0 %v5737
    %6161 = vmatpush1.msra.mxu0 %v5736
    %6162 = vmatprep.subr.mxu0 %v5743
    %6163 = vmatpush1.msra.mxu0 %v5742
    %6164 = vmatprep.subr.mxu0 %v5749
    %6165 = vmatpush1.msra.mxu0 %v5748
    %6166 = vmatprep.subr.mxu0 %v5755
    %6167 = vmatpush1.msra.mxu0 %v5754
    %6168 = vmatprep.subr.mxu0 %v5761
    %6169 = vmatpush1.msra.mxu0 %v5760
    %6170 = vmatprep.subr.mxu0 %v5767
    %6171 = vmatpush1.msra.mxu0 %v5766
    %6172 = vmatprep.subr.mxu0 %v5773
    %6173 = vmatpush1.msra.mxu0 %v5772
    %6174 = vmatprep.subr.mxu0 %v5779
    %6175 = vmatpush1.msra.mxu0 %v5778
    %6176 = vmatprep.subr.mxu0 %v5785
    %6177 = vmatpush1.msra.mxu0 %v5784
    %6178 = vmatprep.subr.mxu0 %v5791
    %6179 = vmatpush1.msra.mxu0 %v5790
    %6180 = vmatprep.subr.mxu0 %v5797
    %6181 = vmatpush1.msra.mxu0 %v5796
    %6182 = vmatprep.subr.mxu0 %v5803
    %6183 = vmatpush1.msra.mxu0 %v5802
    %6184 = vmatprep.subr.mxu0 %v5809
    %6185 = vmatpush1.msra.mxu0 %v5808
    %6186 = vmatprep.subr.mxu0 %v5815
    %6187 = vmatpush1.msra.mxu0 %v5814
    %6188 = vmatprep.subr.mxu0 %v5821
    %6189 = vmatpush1.msra.mxu0 %v5820
    %6190 = vmatprep.subr.mxu0 %v5827
    %6191 = vmatpush1.msra.mxu0 %v5826
    %6192 = vmatprep.subr.mxu0 %v5833
    %6193 = vmatpush1.msra.mxu0 %v5832
    %6194 = vmatprep.subr.mxu0 %v5839
    %6195 = vmatpush1.msra.mxu0 %v5838
    %6196 = vmatprep.subr.mxu0 %v5845
    %6197 = vmatpush1.msra.mxu0 %v5844
    %6198 = vmatprep.subr.mxu0 %v5851
    %6199 = vmatpush1.msra.mxu0 %v5850
    %6200 = vmatprep.subr.mxu0 %v5857
    %6201 = vmatpush1.msra.mxu0 %v5856
    %6202 = vmatprep.subr.mxu0 %v5863
    %6203 = vmatpush1.msra.mxu0 %v5862
    %6204 = vmatprep.subr.mxu0 %v5869
    %6205 = vmatpush1.msra.mxu0 %v5868
    %6206 = vmatprep.subr.mxu0 %v5875
    %6207 = vmatpush1.msra.mxu0 %v5874
    %6208 = vmatprep.subr.mxu0 %v5881
    %6209 = vmatpush1.msra.mxu0 %v5880
    %6210 = vmatprep.subr.mxu0 %v5887
    %6211 = vmatpush1.msra.mxu0 %v5886
    %6212 = vmatprep.subr.mxu0 %v5893
    %6213 = vmatpush1.msra.mxu0 %v5892
    %6214 = vmatprep.subr.mxu0 %v5899
    %6215 = vmatpush1.msra.mxu0 %v5898
    %6216 = vmatprep.mubr.f32.mxu0 %v5626
    %6217 = vmatmul.mubr.f32.gmra.mrb[0].mxu0 %v5624
    %v6218 = vpop.f32.mrb[0].mxu0
    %v6219 = vadd.f32 0.0, %v6218
    %v6220 = vpop.f32.mrb[0].mxu0
    %v6221 = vadd.f32 0.0, %v6220
    %6222 = vmatprep.mubr.f32.mxu0 %v5632
    %6223 = vmatmul.mubr.f32.gmra.mrb[0].mxu0 %v5630
    %v6224 = vpop.f32.mrb[0].mxu0
    %v6225 = vadd.f32 0.0, %v6224
    %v6226 = vpop.f32.mrb[0].mxu0
    %v6227 = vadd.f32 0.0, %v6226
    %6228 = vdwg.mxu0
    %6229 = vmatprep.subr.mxu0 %v5905
    %6230 = vmatpush1.msra.mxu0 %v5904
    %6231 = vmatprep.subr.mxu0 %v5911
    %6232 = vmatpush1.msra.mxu0 %v5910
    %6233 = vmatprep.subr.mxu0 %v5917
    %6234 = vmatpush1.msra.mxu0 %v5916
    %6235 = vmatprep.subr.mxu0 %v5923
    %6236 = vmatpush1.msra.mxu0 %v5922
    %6237 = vmatprep.subr.mxu0 %v5929
    %6238 = vmatpush1.msra.mxu0 %v5928
    %6239 = vmatprep.subr.mxu0 %v5935
    %6240 = vmatpush1.msra.mxu0 %v5934
    %6241 = vmatprep.subr.mxu0 %v5941
    %6242 = vmatpush1.msra.mxu0 %v5940
    %6243 = vmatprep.subr.mxu0 %v5947
    %6244 = vmatpush1.msra.mxu0 %v5946
    %6245 = vmatprep.subr.mxu0 %v5953
    %6246 = vmatpush1.msra.mxu0 %v5952
    %6247 = vmatprep.subr.mxu0 %v5959
    %6248 = vmatpush1.msra.mxu0 %v5958
    %6249 = vmatprep.subr.mxu0 %v5965
    %6250 = vmatpush1.msra.mxu0 %v5964
    %6251 = vmatprep.subr.mxu0 %v5971
    %6252 = vmatpush1.msra.mxu0 %v5970
    %6253 = vmatprep.subr.mxu0 %v5977
    %6254 = vmatpush1.msra.mxu0 %v5976
    %6255 = vmatprep.subr.mxu0 %v5983
    %6256 = vmatpush1.msra.mxu0 %v5982
    %6257 = vmatprep.subr.mxu0 %v5989
    %6258 = vmatpush1.msra.mxu0 %v5988
    %6259 = vmatprep.subr.mxu0 %v5995
    %6260 = vmatpush1.msra.mxu0 %v5994
    %6261 = vmatprep.subr.mxu0 0.0
    %6262 = vmatpush1.msra.mxu0 0.0
    %6263 = vmatprep.subr.mxu0 0.0
    %6264 = vmatpush1.msra.mxu0 0.0
    %6265 = vmatprep.subr.mxu0 0.0
    %6266 = vmatpush1.msra.mxu0 0.0
    %6267 = vmatprep.subr.mxu0 0.0
    %6268 = vmatpush1.msra.mxu0 0.0
    %6269 = vmatprep.subr.mxu0 0.0
    %6270 = vmatpush1.msra.mxu0 0.0
    %6271 = vmatprep.subr.mxu0 0.0
    %6272 = vmatpush1.msra.mxu0 0.0
    %6273 = vmatprep.subr.mxu0 0.0
    %6274 = vmatpush1.msra.mxu0 0.0
    %6275 = vmatprep.subr.mxu0 0.0
    %6276 = vmatpush1.msra.mxu0 0.0
    %6277 = vmatprep.subr.mxu0 0.0
    %6278 = vmatpush1.msra.mxu0 0.0
    %6279 = vmatprep.subr.mxu0 0.0
    %6280 = vmatpush1.msra.mxu0 0.0
    %6281 = vmatprep.subr.mxu0 0.0
    %6282 = vmatpush1.msra.mxu0 0.0
    %6283 = vmatprep.subr.mxu0 0.0
    %6284 = vmatpush1.msra.mxu0 0.0
    %6285 = vmatprep.subr.mxu0 0.0
    %6286 = vmatpush1.msra.mxu0 0.0
    %6287 = vmatprep.subr.mxu0 0.0
    %6288 = vmatpush1.msra.mxu0 0.0
    %6289 = vmatprep.subr.mxu0 0.0
    %6290 = vmatpush1.msra.mxu0 0.0
    %6291 = vmatprep.subr.mxu0 0.0
    %6292 = vmatpush1.msra.mxu0 0.0
    %6293 = vmatprep.mubr.f32.mxu0 0.0
    %6294 = vmatmul.mubr.f32.gmra.mrb[0].mxu0 %v5701
    %v6295 = vpop.f32.mrb[0].mxu0
    %v6296 = vadd.f32 %v6219, %v6295
    %v6297 = vpop.f32.mrb[0].mxu0
    %v6298 = vadd.f32 %v6221, %v6297
    %6299 = vmatprep.mubr.f32.mxu0 0.0
    %6300 = vmatmul.mubr.f32.gmra.mrb[0].mxu0 %v5706
    %v6301 = vpop.f32.mrb[0].mxu0
    %v6302 = vadd.f32 %v6225, %v6301
    %v6303 = vpop.f32.mrb[0].mxu0
    %v6304 = vadd.f32 %v6227, %v6303
    %6305 = vdwg.mxu0
    %6306 = vmatprep.subr.mxu0 %v5715
    %6307 = vmatpush1.msra.mxu0 %v5714
    %6308 = vmatprep.subr.mxu0 %v5721
    %6309 = vmatpush1.msra.mxu0 %v5720
    %6310 = vmatprep.subr.mxu0 %v5727
    %6311 = vmatpush1.msra.mxu0 %v5726
    %6312 = vmatprep.subr.mxu0 %v5733
    %6313 = vmatpush1.msra.mxu0 %v5732
    %6314 = vmatprep.subr.mxu0 %v5739
    %6315 = vmatpush1.msra.mxu0 %v5738
    %6316 = vmatprep.subr.mxu0 %v5745
    %6317 = vmatpush1.msra.mxu0 %v5744
    %6318 = vmatprep.subr.mxu0 %v5751
    %6319 = vmatpush1.msra.mxu0 %v5750
    %6320 = vmatprep.subr.mxu0 %v5757
    %6321 = vmatpush1.msra.mxu0 %v5756
    %6322 = vmatprep.subr.mxu0 %v5763
    %6323 = vmatpush1.msra.mxu0 %v5762
    %6324 = vmatprep.subr.mxu0 %v5769
    %6325 = vmatpush1.msra.mxu0 %v5768
    %6326 = vmatprep.subr.mxu0 %v5775
    %6327 = vmatpush1.msra.mxu0 %v5774
    %6328 = vmatprep.subr.mxu0 %v5781
    %6329 = vmatpush1.msra.mxu0 %v5780
    %6330 = vmatprep.subr.mxu0 %v5787
    %6331 = vmatpush1.msra.mxu0 %v5786
    %6332 = vmatprep.subr.mxu0 %v5793
    %6333 = vmatpush1.msra.mxu0 %v5792
    %6334 = vmatprep.subr.mxu0 %v5799
    %6335 = vmatpush1.msra.mxu0 %v5798
    %6336 = vmatprep.subr.mxu0 %v5805
    %6337 = vmatpush1.msra.mxu0 %v5804
    %6338 = vmatprep.subr.mxu0 %v5811
    %6339 = vmatpush1.msra.mxu0 %v5810
    %6340 = vmatprep.subr.mxu0 %v5817
    %6341 = vmatpush1.msra.mxu0 %v5816
    %6342 = vmatprep.subr.mxu0 %v5823
    %6343 = vmatpush1.msra.mxu0 %v5822
    %6344 = vmatprep.subr.mxu0 %v5829
    %6345 = vmatpush1.msra.mxu0 %v5828
    %6346 = vmatprep.subr.mxu0 %v5835
    %6347 = vmatpush1.msra.mxu0 %v5834
    %6348 = vmatprep.subr.mxu0 %v5841
    %6349 = vmatpush1.msra.mxu0 %v5840
    %6350 = vmatprep.subr.mxu0 %v5847
    %6351 = vmatpush1.msra.mxu0 %v5846
    %6352 = vmatprep.subr.mxu0 %v5853
    %6353 = vmatpush1.msra.mxu0 %v5852
    %6354 = vmatprep.subr.mxu0 %v5859
    %6355 = vmatpush1.msra.mxu0 %v5858
    %6356 = vmatprep.subr.mxu0 %v5865
    %6357 = vmatpush1.msra.mxu0 %v5864
    %6358 = vmatprep.subr.mxu0 %v5871
    %6359 = vmatpush1.msra.mxu0 %v5870
    %6360 = vmatprep.subr.mxu0 %v5877
    %6361 = vmatpush1.msra.mxu0 %v5876
    %6362 = vmatprep.subr.mxu0 %v5883
    %6363 = vmatpush1.msra.mxu0 %v5882
    %6364 = vmatprep.subr.mxu0 %v5889
    %6365 = vmatpush1.msra.mxu0 %v5888
    %6366 = vmatprep.subr.mxu0 %v5895
    %6367 = vmatpush1.msra.mxu0 %v5894
    %6368 = vmatprep.subr.mxu0 %v5901
    %6369 = vmatpush1.msra.mxu0 %v5900
    %6370 = vmatprep.mubr.f32.mxu0 %v5626
    %6371 = vmatmul.mubr.f32.gmra.mrb[0].mxu0 %v5624
    %v6372 = vpop.f32.mrb[0].mxu0
    %v6373 = vadd.f32 0.0, %v6372
    %v6374 = vpop.f32.mrb[0].mxu0
    %v6375 = vadd.f32 0.0, %v6374
    %6376 = vmatprep.mubr.f32.mxu0 %v5632
    %6377 = vmatmul.mubr.f32.gmra.mrb[0].mxu0 %v5630
    %v6378 = vpop.f32.mrb[0].mxu0
    %v6379 = vadd.f32 0.0, %v6378
    %v6380 = vpop.f32.mrb[0].mxu0
    %v6381 = vadd.f32 0.0, %v6380
    %6382 = vdwg.mxu0
    %6383 = vmatprep.subr.mxu0 %v5907
    %6384 = vmatpush1.msra.mxu0 %v5906
    %6385 = vmatprep.subr.mxu0 %v5913
    %6386 = vmatpush1.msra.mxu0 %v5912
    %6387 = vmatprep.subr.mxu0 %v5919
    %6388 = vmatpush1.msra.mxu0 %v5918
    %6389 = vmatprep.subr.mxu0 %v5925
    %6390 = vmatpush1.msra.mxu0 %v5924
    %6391 = vmatprep.subr.mxu0 %v5931
    %6392 = vmatpush1.msra.mxu0 %v5930
    %6393 = vmatprep.subr.mxu0 %v5937
    %6394 = vmatpush1.msra.mxu0 %v5936
    %6395 = vmatprep.subr.mxu0 %v5943
    %6396 = vmatpush1.msra.mxu0 %v5942
    %6397 = vmatprep.subr.mxu0 %v5949
    %6398 = vmatpush1.msra.mxu0 %v5948
    %6399 = vmatprep.subr.mxu0 %v5955
    %6400 = vmatpush1.msra.mxu0 %v5954
    %6401 = vmatprep.subr.mxu0 %v5961
    %6402 = vmatpush1.msra.mxu0 %v5960
    %6403 = vmatprep.subr.mxu0 %v5967
    %6404 = vmatpush1.msra.mxu0 %v5966
    %6405 = vmatprep.subr.mxu0 %v5973
    %6406 = vmatpush1.msra.mxu0 %v5972
    %6407 = vmatprep.subr.mxu0 %v5979
    %6408 = vmatpush1.msra.mxu0 %v5978
    %6409 = vmatprep.subr.mxu0 %v5985
    %6410 = vmatpush1.msra.mxu0 %v5984
    %6411 = vmatprep.subr.mxu0 %v5991
    %6412 = vmatpush1.msra.mxu0 %v5990
    %6413 = vmatprep.subr.mxu0 %v5997
    %6414 = vmatpush1.msra.mxu0 %v5996
    %6415 = vmatprep.subr.mxu0 0.0
    %6416 = vmatpush1.msra.mxu0 0.0
    %6417 = vmatprep.subr.mxu0 0.0
    %6418 = vmatpush1.msra.mxu0 0.0
    %6419 = vmatprep.subr.mxu0 0.0
    %6420 = vmatpush1.msra.mxu0 0.0
    %6421 = vmatprep.subr.mxu0 0.0
    %6422 = vmatpush1.msra.mxu0 0.0
    %6423 = vmatprep.subr.mxu0 0.0
    %6424 = vmatpush1.msra.mxu0 0.0
    %6425 = vmatprep.subr.mxu0 0.0
    %6426 = vmatpush1.msra.mxu0 0.0
    %6427 = vmatprep.subr.mxu0 0.0
    %6428 = vmatpush1.msra.mxu0 0.0
    %6429 = vmatprep.subr.mxu0 0.0
    %6430 = vmatpush1.msra.mxu0 0.0
    %6431 = vmatprep.subr.mxu0 0.0
    %6432 = vmatpush1.msra.mxu0 0.0
    %6433 = vmatprep.subr.mxu0 0.0
    %6434 = vmatpush1.msra.mxu0 0.0
    %6435 = vmatprep.subr.mxu0 0.0
    %6436 = vmatpush1.msra.mxu0 0.0
    %6437 = vmatprep.subr.mxu0 0.0
    %6438 = vmatpush1.msra.mxu0 0.0
    %6439 = vmatprep.subr.mxu0 0.0
    %6440 = vmatpush1.msra.mxu0 0.0
    %6441 = vmatprep.subr.mxu0 0.0
    %6442 = vmatpush1.msra.mxu0 0.0
    %6443 = vmatprep.subr.mxu0 0.0
    %6444 = vmatpush1.msra.mxu0 0.0
    %6445 = vmatprep.subr.mxu0 0.0
    %6446 = vmatpush1.msra.mxu0 0.0
    %6447 = vmatprep.mubr.f32.mxu0 0.0
    %6448 = vmatmul.mubr.f32.gmra.mrb[0].mxu0 %v5701
    %v6449 = vpop.f32.mrb[0].mxu0
    %v6450 = vadd.f32 %v6373, %v6449
    %v6451 = vpop.f32.mrb[0].mxu0
    %v6452 = vadd.f32 %v6375, %v6451
    %6453 = vmatprep.mubr.f32.mxu0 0.0
    %6454 = vmatmul.mubr.f32.gmra.mrb[0].mxu0 %v5706
    %v6455 = vpop.f32.mrb[0].mxu0
    %v6456 = vadd.f32 %v6379, %v6455
    %v6457 = vpop.f32.mrb[0].mxu0
    %v6458 = vadd.f32 %v6381, %v6457
    %6459 = vdwg.mxu0
    %v6460 = vadd.f32 %v5230, %v6142
    %v6461 = vadd.f32 %v5232, %v6144
    %v6462 = vadd.f32 %v5384, %v6296
    %v6463 = vadd.f32 %v5386, %v6298
    %v6464 = vadd.f32 %v5538, %v6450
    %v6465 = vadd.f32 %v5540, %v6452
    %v6466 = vadd.f32 %v5236, %v6148
    %v6467 = vadd.f32 %v5238, %v6150
    %v6468 = vadd.f32 %v5390, %v6302
    %v6469 = vadd.f32 %v5392, %v6304
    %v6470 = vadd.f32 %v5544, %v6456
    %v6471 = vadd.f32 %v5546, %v6458
    %v6472 = vld [vmem:[%s12] sm:$0x3f]
    %v6474 = vlaneseq
    %v6475 = vshrl.u32 %v6474, 7
    %v6476 = vsub.s32 0, %v6475
    %v6477 = vrot.slane %v6472, %v6476
    %v6478 = vlaneseq
    %v6479 = vshrl.u32 %v6478, 7
    %v6480 = vsub.s32 1, %v6479
    %v6481 = vrot.slane %v6472, %v6480
    %v6482 = vlaneseq
    %v6483 = vshrl.u32 %v6482, 7
    %v6484 = vsub.s32 2, %v6483
    %v6485 = vrot.slane %v6472, %v6484
    %v6486 = vlaneseq
    %v6487 = vshrl.u32 %v6486, 7
    %v6488 = vsub.s32 3, %v6487
    %v6489 = vrot.slane %v6472, %v6488
    %v6490 = vlaneseq
    %v6491 = vshrl.u32 %v6490, 7
    %v6492 = vsub.s32 4, %v6491
    %v6493 = vrot.slane %v6472, %v6492
    %v6494 = vlaneseq
    %v6495 = vshrl.u32 %v6494, 7
    %v6496 = vsub.s32 5, %v6495
    %v6497 = vrot.slane %v6472, %v6496
    %v6504 = vadd.f32 %v6460, %v6477
    %v6505 = vadd.f32 %v6461, %v6481
    %v6506 = vadd.f32 %v6462, %v6485
    %v6507 = vadd.f32 %v6463, %v6489
    %v6508 = vadd.f32 %v6464, %v6493
    %v6509 = vadd.f32 %v6465, %v6497
    %v6510 = vadd.f32 %v6466, %v6477
    %v6511 = vadd.f32 %v6467, %v6481
    %v6512 = vadd.f32 %v6468, %v6485
    %v6513 = vadd.f32 %v6469, %v6489
    %v6514 = vadd.f32 %v6470, %v6493
    %v6515 = vadd.f32 %v6471, %v6497
    %vm6516 = vcmp.ge.f32.partialorder %v6504, 0.0
    %vm6517 = vcmp.ge.f32.partialorder %v6505, 0.0
    %vm6518 = vcmp.ge.f32.partialorder %v6506, 0.0
    %vm6519 = vcmp.ge.f32.partialorder %v6507, 0.0
    %vm6520 = vcmp.ge.f32.partialorder %v6508, 0.0
    %vm6521 = vcmp.ge.f32.partialorder %v6509, 0.0
    %vm6522 = vcmp.ge.f32.partialorder %v6510, 0.0
    %vm6523 = vcmp.ge.f32.partialorder %v6511, 0.0
    %vm6524 = vcmp.ge.f32.partialorder %v6512, 0.0
    %vm6525 = vcmp.ge.f32.partialorder %v6513, 0.0
    %vm6526 = vcmp.ge.f32.partialorder %v6514, 0.0
    %vm6527 = vcmp.ge.f32.partialorder %v6515, 0.0
    %v6528 = vmul.f32 %v6504, 0.2
    %v6529 = vmul.f32 %v6505, 0.2
    %v6530 = vmul.f32 %v6506, 0.2
    %v6531 = vmul.f32 %v6507, 0.2
    %v6532 = vmul.f32 %v6508, 0.2
    %v6533 = vmul.f32 %v6509, 0.2
    %v6534 = vmul.f32 %v6510, 0.2
    %v6535 = vmul.f32 %v6511, 0.2
    %v6536 = vmul.f32 %v6512, 0.2
    %v6537 = vmul.f32 %v6513, 0.2
    %v6538 = vmul.f32 %v6514, 0.2
    %v6539 = vmul.f32 %v6515, 0.2
    %v6540 = vsel %vm6516, %v6504, %v6528
    %v6541 = vsel %vm6517, %v6505, %v6529
    %v6542 = vsel %vm6518, %v6506, %v6530
    %v6543 = vsel %vm6519, %v6507, %v6531
    %v6544 = vsel %vm6520, %v6508, %v6532
    %v6545 = vsel %vm6521, %v6509, %v6533
    %v6546 = vsel %vm6522, %v6510, %v6534
    %v6547 = vsel %vm6523, %v6511, %v6535
    %v6548 = vsel %vm6524, %v6512, %v6536
    %v6549 = vsel %vm6525, %v6513, %v6537
    %v6550 = vsel %vm6526, %v6514, %v6538
    %v6551 = vsel %vm6527, %v6515, %v6539
    %v6552 = vld [vmem:[%s13] sm:$0x3]
    %v6554 = vsel %vm3718, %v6552, 0
    %v6557 = vsel %vm753, %v6546, 0
    %v6560 = vsel %vm753, %v6547, 0
    %v6563 = vsel %vm753, %v6548, 0
    %v6566 = vsel %vm753, %v6549, 0
    %v6569 = vsel %vm753, %v6550, 0
    %v6572 = vsel %vm753, %v6551, 0
    %6574 = vmatprep.subr.mxu0 %v6541
    %6575 = vmatpush1.msra.mxu0 %v6540
    %6576 = vmatprep.subr.mxu0 %v6560
    %6577 = vmatpush1.msra.mxu0 %v6557
    %6578 = vmatprep.subr.mxu0 0.0
    %6579 = vmatpush1.msra.mxu0 0.0
    %6580 = vmatprep.subr.mxu0 0.0
    %6581 = vmatpush1.msra.mxu0 0.0
    %6582 = vmatprep.subr.mxu0 0.0
    %6583 = vmatpush1.msra.mxu0 0.0
    %6584 = vmatprep.subr.mxu0 0.0
    %6585 = vmatpush1.msra.mxu0 0.0
    %6586 = vmatprep.subr.mxu0 0.0
    %6587 = vmatpush1.msra.mxu0 0.0
    %6588 = vmatprep.subr.mxu0 0.0
    %6589 = vmatpush1.msra.mxu0 0.0
    %6590 = vmatprep.subr.mxu0 0.0
    %6591 = vmatpush1.msra.mxu0 0.0
    %6592 = vmatprep.subr.mxu0 0.0
    %6593 = vmatpush1.msra.mxu0 0.0
    %6594 = vmatprep.subr.mxu0 0.0
    %6595 = vmatpush1.msra.mxu0 0.0
    %6596 = vmatprep.subr.mxu0 0.0
    %6597 = vmatpush1.msra.mxu0 0.0
    %6598 = vmatprep.subr.mxu0 0.0
    %6599 = vmatpush1.msra.mxu0 0.0
    %6600 = vmatprep.subr.mxu0 0.0
    %6601 = vmatpush1.msra.mxu0 0.0
    %6602 = vmatprep.subr.mxu0 0.0
    %6603 = vmatpush1.msra.mxu0 0.0
    %6604 = vmatprep.subr.mxu0 0.0
    %6605 = vmatpush1.msra.mxu0 0.0
    %6606 = vmatprep.subr.mxu0 0.0
    %6607 = vmatpush1.msra.mxu0 0.0
    %6608 = vmatprep.subr.mxu0 0.0
    %6609 = vmatpush1.msra.mxu0 0.0
    %6610 = vmatprep.subr.mxu0 0.0
    %6611 = vmatpush1.msra.mxu0 0.0
    %6612 = vmatprep.subr.mxu0 0.0
    %6613 = vmatpush1.msra.mxu0 0.0
    %6614 = vmatprep.subr.mxu0 0.0
    %6615 = vmatpush1.msra.mxu0 0.0
    %6616 = vmatprep.subr.mxu0 0.0
    %6617 = vmatpush1.msra.mxu0 0.0
    %6618 = vmatprep.subr.mxu0 0.0
    %6619 = vmatpush1.msra.mxu0 0.0
    %6620 = vmatprep.subr.mxu0 0.0
    %6621 = vmatpush1.msra.mxu0 0.0
    %6622 = vmatprep.subr.mxu0 0.0
    %6623 = vmatpush1.msra.mxu0 0.0
    %6624 = vmatprep.subr.mxu0 0.0
    %6625 = vmatpush1.msra.mxu0 0.0
    %6626 = vmatprep.subr.mxu0 0.0
    %6627 = vmatpush1.msra.mxu0 0.0
    %6628 = vmatprep.subr.mxu0 0.0
    %6629 = vmatpush1.msra.mxu0 0.0
    %6630 = vmatprep.subr.mxu0 0.0
    %6631 = vmatpush1.msra.mxu0 0.0
    %6632 = vmatprep.subr.mxu0 0.0
    %6633 = vmatpush1.msra.mxu0 0.0
    %6634 = vmatprep.subr.mxu0 0.0
    %6635 = vmatpush1.msra.mxu0 0.0
    %6636 = vmatprep.subr.mxu0 0.0
    %6637 = vmatpush1.msra.mxu0 0.0
    %6638 = vmatprep.mubr.f32.mxu0 0.0
    %6639 = vmatmul.mubr.f32.gmra.mrb[0].mxu0 %v6554
    %v6640 = vpop.f32.mrb[0].mxu0
    %v6641 = vadd.f32 0.0, %v6640
    %v6642 = vpop.f32.mrb[0].mxu0
    %v6643 = vadd.f32 0.0, %v6642
    %6644 = vdwg.mxu0
    %6645 = vmatprep.subr.mxu0 %v6543
    %6646 = vmatpush1.msra.mxu0 %v6542
    %6647 = vmatprep.subr.mxu0 %v6566
    %6648 = vmatpush1.msra.mxu0 %v6563
    %6649 = vmatprep.subr.mxu0 0.0
    %6650 = vmatpush1.msra.mxu0 0.0
    %6651 = vmatprep.subr.mxu0 0.0
    %6652 = vmatpush1.msra.mxu0 0.0
    %6653 = vmatprep.subr.mxu0 0.0
    %6654 = vmatpush1.msra.mxu0 0.0
    %6655 = vmatprep.subr.mxu0 0.0
    %6656 = vmatpush1.msra.mxu0 0.0
    %6657 = vmatprep.subr.mxu0 0.0
    %6658 = vmatpush1.msra.mxu0 0.0
    %6659 = vmatprep.subr.mxu0 0.0
    %6660 = vmatpush1.msra.mxu0 0.0
    %6661 = vmatprep.subr.mxu0 0.0
    %6662 = vmatpush1.msra.mxu0 0.0
    %6663 = vmatprep.subr.mxu0 0.0
    %6664 = vmatpush1.msra.mxu0 0.0
    %6665 = vmatprep.subr.mxu0 0.0
    %6666 = vmatpush1.msra.mxu0 0.0
    %6667 = vmatprep.subr.mxu0 0.0
    %6668 = vmatpush1.msra.mxu0 0.0
    %6669 = vmatprep.subr.mxu0 0.0
    %6670 = vmatpush1.msra.mxu0 0.0
    %6671 = vmatprep.subr.mxu0 0.0
    %6672 = vmatpush1.msra.mxu0 0.0
    %6673 = vmatprep.subr.mxu0 0.0
    %6674 = vmatpush1.msra.mxu0 0.0
    %6675 = vmatprep.subr.mxu0 0.0
    %6676 = vmatpush1.msra.mxu0 0.0
    %6677 = vmatprep.subr.mxu0 0.0
    %6678 = vmatpush1.msra.mxu0 0.0
    %6679 = vmatprep.subr.mxu0 0.0
    %6680 = vmatpush1.msra.mxu0 0.0
    %6681 = vmatprep.subr.mxu0 0.0
    %6682 = vmatpush1.msra.mxu0 0.0
    %6683 = vmatprep.subr.mxu0 0.0
    %6684 = vmatpush1.msra.mxu0 0.0
    %6685 = vmatprep.subr.mxu0 0.0
    %6686 = vmatpush1.msra.mxu0 0.0
    %6687 = vmatprep.subr.mxu0 0.0
    %6688 = vmatpush1.msra.mxu0 0.0
    %6689 = vmatprep.subr.mxu0 0.0
    %6690 = vmatpush1.msra.mxu0 0.0
    %6691 = vmatprep.subr.mxu0 0.0
    %6692 = vmatpush1.msra.mxu0 0.0
    %6693 = vmatprep.subr.mxu0 0.0
    %6694 = vmatpush1.msra.mxu0 0.0
    %6695 = vmatprep.subr.mxu0 0.0
    %6696 = vmatpush1.msra.mxu0 0.0
    %6697 = vmatprep.subr.mxu0 0.0
    %6698 = vmatpush1.msra.mxu0 0.0
    %6699 = vmatprep.subr.mxu0 0.0
    %6700 = vmatpush1.msra.mxu0 0.0
    %6701 = vmatprep.subr.mxu0 0.0
    %6702 = vmatpush1.msra.mxu0 0.0
    %6703 = vmatprep.subr.mxu0 0.0
    %6704 = vmatpush1.msra.mxu0 0.0
    %6705 = vmatprep.subr.mxu0 0.0
    %6706 = vmatpush1.msra.mxu0 0.0
    %6707 = vmatprep.subr.mxu0 0.0
    %6708 = vmatpush1.msra.mxu0 0.0
    %6709 = vmatprep.mubr.f32.mxu0 0.0
    %6710 = vmatmul.mubr.f32.gmra.mrb[0].mxu0 %v6554
    %v6711 = vpop.f32.mrb[0].mxu0
    %v6712 = vadd.f32 0.0, %v6711
    %v6713 = vpop.f32.mrb[0].mxu0
    %v6714 = vadd.f32 0.0, %v6713
    %6715 = vdwg.mxu0
    %6716 = vmatprep.subr.mxu0 %v6545
    %6717 = vmatpush1.msra.mxu0 %v6544
    %6718 = vmatprep.subr.mxu0 %v6572
    %6719 = vmatpush1.msra.mxu0 %v6569
    %6720 = vmatprep.subr.mxu0 0.0
    %6721 = vmatpush1.msra.mxu0 0.0
    %6722 = vmatprep.subr.mxu0 0.0
    %6723 = vmatpush1.msra.mxu0 0.0
    %6724 = vmatprep.subr.mxu0 0.0
    %6725 = vmatpush1.msra.mxu0 0.0
    %6726 = vmatprep.subr.mxu0 0.0
    %6727 = vmatpush1.msra.mxu0 0.0
    %6728 = vmatprep.subr.mxu0 0.0
    %6729 = vmatpush1.msra.mxu0 0.0
    %6730 = vmatprep.subr.mxu0 0.0
    %6731 = vmatpush1.msra.mxu0 0.0
    %6732 = vmatprep.subr.mxu0 0.0
    %6733 = vmatpush1.msra.mxu0 0.0
    %6734 = vmatprep.subr.mxu0 0.0
    %6735 = vmatpush1.msra.mxu0 0.0
    %6736 = vmatprep.subr.mxu0 0.0
    %6737 = vmatpush1.msra.mxu0 0.0
    %6738 = vmatprep.subr.mxu0 0.0
    %6739 = vmatpush1.msra.mxu0 0.0
    %6740 = vmatprep.subr.mxu0 0.0
    %6741 = vmatpush1.msra.mxu0 0.0
    %6742 = vmatprep.subr.mxu0 0.0
    %6743 = vmatpush1.msra.mxu0 0.0
    %6744 = vmatprep.subr.mxu0 0.0
    %6745 = vmatpush1.msra.mxu0 0.0
    %6746 = vmatprep.subr.mxu0 0.0
    %6747 = vmatpush1.msra.mxu0 0.0
    %6748 = vmatprep.subr.mxu0 0.0
    %6749 = vmatpush1.msra.mxu0 0.0
    %6750 = vmatprep.subr.mxu0 0.0
    %6751 = vmatpush1.msra.mxu0 0.0
    %6752 = vmatprep.subr.mxu0 0.0
    %6753 = vmatpush1.msra.mxu0 0.0
    %6754 = vmatprep.subr.mxu0 0.0
    %6755 = vmatpush1.msra.mxu0 0.0
    %6756 = vmatprep.subr.mxu0 0.0
    %6757 = vmatpush1.msra.mxu0 0.0
    %6758 = vmatprep.subr.mxu0 0.0
    %6759 = vmatpush1.msra.mxu0 0.0
    %6760 = vmatprep.subr.mxu0 0.0
    %6761 = vmatpush1.msra.mxu0 0.0
    %6762 = vmatprep.subr.mxu0 0.0
    %6763 = vmatpush1.msra.mxu0 0.0
    %6764 = vmatprep.subr.mxu0 0.0
    %6765 = vmatpush1.msra.mxu0 0.0
    %6766 = vmatprep.subr.mxu0 0.0
    %6767 = vmatpush1.msra.mxu0 0.0
    %6768 = vmatprep.subr.mxu0 0.0
    %6769 = vmatpush1.msra.mxu0 0.0
    %6770 = vmatprep.subr.mxu0 0.0
    %6771 = vmatpush1.msra.mxu0 0.0
    %6772 = vmatprep.subr.mxu0 0.0
    %6773 = vmatpush1.msra.mxu0 0.0
    %6774 = vmatprep.subr.mxu0 0.0
    %6775 = vmatpush1.msra.mxu0 0.0
    %6776 = vmatprep.subr.mxu0 0.0
    %6777 = vmatpush1.msra.mxu0 0.0
    %6778 = vmatprep.subr.mxu0 0.0
    %6779 = vmatpush1.msra.mxu0 0.0
    %6780 = vmatprep.mubr.f32.mxu0 0.0
    %6781 = vmatmul.mubr.f32.gmra.mrb[0].mxu0 %v6554
    %v6782 = vpop.f32.mrb[0].mxu0
    %v6783 = vadd.f32 0.0, %v6782
    %v6784 = vpop.f32.mrb[0].mxu0
    %v6785 = vadd.f32 0.0, %v6784
    %6786 = vdwg.mxu0
    %v6787 = vld [vmem:[%s14] sm:$0xff]
    %v6788 = vld [vmem:[%s14 + $0x8] sm:$0xff]
    %v6789 = vld [vmem:[%s14 + $0x10] sm:$0xff]
    %v6790 = vld [vmem:[%s14 + $0x18] sm:$0xff]
    %v6791 = vld [vmem:[%s14 + $0x20] sm:$0xff]
    %v6792 = vld [vmem:[%s14 + $0x28] sm:$0xff]
    %v6793 = vld [vmem:[%s14 + $0x30] sm:$0xff]
    %v6794 = vld [vmem:[%s14 + $0x38] sm:$0xff]
    %v6795 = vld [vmem:[%s14 + $0x40] sm:$0xff]
    %v6796 = vld [vmem:[%s14 + $0x48] sm:$0xff]
    %v6797 = vld [vmem:[%s14 + $0x50] sm:$0xff]
    %v6798 = vld [vmem:[%s14 + $0x58] sm:$0xff]
    %v6799 = vld [vmem:[%s14 + $0x60] sm:$0xff]
    %v6800 = vld [vmem:[%s14 + $0x68] sm:$0xff]
    %v6801 = vld [vmem:[%s14 + $0x70] sm:$0xff]
    %v6802 = vld [vmem:[%s14 + $0x78] sm:$0xff]
    %v6803 = vld [vmem:[%s14 + $0x80] sm:$0xff]
    %v6804 = vld [vmem:[%s14 + $0x88] sm:$0xff]
    %v6805 = vld [vmem:[%s14 + $0x90] sm:$0xff]
    %v6806 = vld [vmem:[%s14 + $0x98] sm:$0xff]
    %v6807 = vld [vmem:[%s14 + $0xa0] sm:$0xff]
    %v6808 = vld [vmem:[%s14 + $0xa8] sm:$0xff]
    %v6809 = vld [vmem:[%s14 + $0xb0] sm:$0xff]
    %v6810 = vld [vmem:[%s14 + $0xb8] sm:$0xff]
    %v6811 = vld [vmem:[%s14 + $0xc0] sm:$0xff]
    %v6812 = vld [vmem:[%s14 + $0xc8] sm:$0xff]
    %v6813 = vld [vmem:[%s14 + $0xd0] sm:$0xff]
    %v6814 = vld [vmem:[%s14 + $0xd8] sm:$0xff]
    %v6815 = vld [vmem:[%s14 + $0xe0] sm:$0xff]
    %v6816 = vld [vmem:[%s14 + $0xe8] sm:$0xff]
    %v6817 = vld [vmem:[%s14 + $0xf0] sm:$0xff]
    %v6818 = vld [vmem:[%s14 + $0xf8] sm:$0xff]
    %v6819 = vld [vmem:[%s14 + $0x100] sm:$0xff]
    %v6820 = vld [vmem:[%s14 + $0x108] sm:$0xff]
    %v6821 = vld [vmem:[%s14 + $0x110] sm:$0xff]
    %v6822 = vld [vmem:[%s14 + $0x118] sm:$0xff]
    %v6823 = vld [vmem:[%s14 + $0x120] sm:$0xff]
    %v6824 = vld [vmem:[%s14 + $0x128] sm:$0xff]
    %v6825 = vld [vmem:[%s14 + $0x130] sm:$0xff]
    %v6826 = vld [vmem:[%s14 + $0x138] sm:$0xff]
    %v6827 = vld [vmem:[%s14 + $0x140] sm:$0xff]
    %v6828 = vld [vmem:[%s14 + $0x148] sm:$0xff]
    %v6829 = vld [vmem:[%s14 + $0x150] sm:$0xff]
    %v6830 = vld [vmem:[%s14 + $0x158] sm:$0xff]
    %v6831 = vld [vmem:[%s14 + $0x160] sm:$0xff]
    %v6832 = vld [vmem:[%s14 + $0x168] sm:$0xff]
    %v6833 = vld [vmem:[%s14 + $0x170] sm:$0xff]
    %v6834 = vld [vmem:[%s14 + $0x178] sm:$0xff]
    %v6835 = vld [vmem:[%s14 + $0x180] sm:$0xff]
    %v6836 = vld [vmem:[%s14 + $0x188] sm:$0xff]
    %v6837 = vld [vmem:[%s14 + $0x190] sm:$0xff]
    %v6838 = vld [vmem:[%s14 + $0x198] sm:$0xff]
    %v6839 = vld [vmem:[%s14 + $0x1a0] sm:$0xff]
    %v6840 = vld [vmem:[%s14 + $0x1a8] sm:$0xff]
    %v6841 = vld [vmem:[%s14 + $0x1b0] sm:$0xff]
    %v6842 = vld [vmem:[%s14 + $0x1b8] sm:$0xff]
    %v6843 = vld [vmem:[%s14 + $0x1c0] sm:$0xff]
    %v6844 = vld [vmem:[%s14 + $0x1c8] sm:$0xff]
    %v6845 = vld [vmem:[%s14 + $0x1d0] sm:$0xff]
    %v6846 = vld [vmem:[%s14 + $0x1d8] sm:$0xff]
    %v6847 = vld [vmem:[%s14 + $0x1e0] sm:$0xff]
    %v6848 = vld [vmem:[%s14 + $0x1e8] sm:$0xff]
    %v6849 = vld [vmem:[%s14 + $0x1f0] sm:$0xff]
    %v6850 = vld [vmem:[%s14 + $0x1f8] sm:$0xff]
    %v6851 = vld [vmem:[%s14 + $0x200] sm:$0xff]
    %v6852 = vld [vmem:[%s14 + $0x208] sm:$0xff]
    %v6853 = vld [vmem:[%s14 + $0x210] sm:$0xff]
    %v6854 = vld [vmem:[%s14 + $0x218] sm:$0xff]
    %v6855 = vld [vmem:[%s14 + $0x220] sm:$0xff]
    %v6856 = vld [vmem:[%s14 + $0x228] sm:$0xff]
    %v6857 = vld [vmem:[%s14 + $0x230] sm:$0xff]
    %v6858 = vld [vmem:[%s14 + $0x238] sm:$0xff]
    %v6859 = vld [vmem:[%s14 + $0x240] sm:$0xff]
    %v6860 = vld [vmem:[%s14 + $0x248] sm:$0xff]
    %v6861 = vld [vmem:[%s14 + $0x250] sm:$0xff]
    %v6862 = vld [vmem:[%s14 + $0x258] sm:$0xff]
    %v6863 = vld [vmem:[%s14 + $0x260] sm:$0xff]
    %v6864 = vld [vmem:[%s14 + $0x268] sm:$0xff]
    %v6865 = vld [vmem:[%s14 + $0x270] sm:$0xff]
    %v6866 = vld [vmem:[%s14 + $0x278] sm:$0xff]
    %v6867 = vld [vmem:[%s14 + $0x280] sm:$0xff]
    %v6868 = vld [vmem:[%s14 + $0x288] sm:$0xff]
    %v6869 = vld [vmem:[%s14 + $0x290] sm:$0xff]
    %v6870 = vld [vmem:[%s14 + $0x298] sm:$0xff]
    %v6871 = vld [vmem:[%s14 + $0x2a0] sm:$0xff]
    %v6872 = vld [vmem:[%s14 + $0x2a8] sm:$0xff]
    %v6873 = vld [vmem:[%s14 + $0x2b0] sm:$0xff]
    %v6874 = vld [vmem:[%s14 + $0x2b8] sm:$0xff]
    %v6875 = vld [vmem:[%s14 + $0x2c0] sm:$0xff]
    %v6876 = vld [vmem:[%s14 + $0x2c8] sm:$0xff]
    %v6877 = vld [vmem:[%s14 + $0x2d0] sm:$0xff]
    %v6878 = vld [vmem:[%s14 + $0x2d8] sm:$0xff]
    %v6879 = vld [vmem:[%s14 + $0x2e0] sm:$0xff]
    %v6880 = vld [vmem:[%s14 + $0x2e8] sm:$0xff]
    %v6881 = vld [vmem:[%s14 + $0x2f0] sm:$0xff]
    %v6882 = vld [vmem:[%s14 + $0x2f8] sm:$0xff]
    %s6883 = scalar_lea.vmem %s13, 2
    %v6884 = vld [vmem:[%s6883] sm:$0x3]
    %v6886 = vsel %vm3718, %v6884, 0
    %6888 = vmatprep.subr.mxu0 %v6541
    %6889 = vmatpush1.msra.mxu0 %v6540
    %6890 = vmatprep.subr.mxu0 %v6560
    %6891 = vmatpush1.msra.mxu0 %v6557
    %6892 = vmatprep.subr.mxu0 0.0
    %6893 = vmatpush1.msra.mxu0 0.0
    %6894 = vmatprep.subr.mxu0 0.0
    %6895 = vmatpush1.msra.mxu0 0.0
    %6896 = vmatprep.subr.mxu0 0.0
    %6897 = vmatpush1.msra.mxu0 0.0
    %6898 = vmatprep.subr.mxu0 0.0
    %6899 = vmatpush1.msra.mxu0 0.0
    %6900 = vmatprep.subr.mxu0 0.0
    %6901 = vmatpush1.msra.mxu0 0.0
    %6902 = vmatprep.subr.mxu0 0.0
    %6903 = vmatpush1.msra.mxu0 0.0
    %6904 = vmatprep.subr.mxu0 0.0
    %6905 = vmatpush1.msra.mxu0 0.0
    %6906 = vmatprep.subr.mxu0 0.0
    %6907 = vmatpush1.msra.mxu0 0.0
    %6908 = vmatprep.subr.mxu0 0.0
    %6909 = vmatpush1.msra.mxu0 0.0
    %6910 = vmatprep.subr.mxu0 0.0
    %6911 = vmatpush1.msra.mxu0 0.0
    %6912 = vmatprep.subr.mxu0 0.0
    %6913 = vmatpush1.msra.mxu0 0.0
    %6914 = vmatprep.subr.mxu0 0.0
    %6915 = vmatpush1.msra.mxu0 0.0
    %6916 = vmatprep.subr.mxu0 0.0
    %6917 = vmatpush1.msra.mxu0 0.0
    %6918 = vmatprep.subr.mxu0 0.0
    %6919 = vmatpush1.msra.mxu0 0.0
    %6920 = vmatprep.subr.mxu0 0.0
    %6921 = vmatpush1.msra.mxu0 0.0
    %6922 = vmatprep.subr.mxu0 0.0
    %6923 = vmatpush1.msra.mxu0 0.0
    %6924 = vmatprep.subr.mxu0 0.0
    %6925 = vmatpush1.msra.mxu0 0.0
    %6926 = vmatprep.subr.mxu0 0.0
    %6927 = vmatpush1.msra.mxu0 0.0
    %6928 = vmatprep.subr.mxu0 0.0
    %6929 = vmatpush1.msra.mxu0 0.0
    %6930 = vmatprep.subr.mxu0 0.0
    %6931 = vmatpush1.msra.mxu0 0.0
    %6932 = vmatprep.subr.mxu0 0.0
    %6933 = vmatpush1.msra.mxu0 0.0
    %6934 = vmatprep.subr.mxu0 0.0
    %6935 = vmatpush1.msra.mxu0 0.0
    %6936 = vmatprep.subr.mxu0 0.0
    %6937 = vmatpush1.msra.mxu0 0.0
    %6938 = vmatprep.subr.mxu0 0.0
    %6939 = vmatpush1.msra.mxu0 0.0
    %6940 = vmatprep.subr.mxu0 0.0
    %6941 = vmatpush1.msra.mxu0 0.0
    %6942 = vmatprep.subr.mxu0 0.0
    %6943 = vmatpush1.msra.mxu0 0.0
    %6944 = vmatprep.subr.mxu0 0.0
    %6945 = vmatpush1.msra.mxu0 0.0
    %6946 = vmatprep.subr.mxu0 0.0
    %6947 = vmatpush1.msra.mxu0 0.0
    %6948 = vmatprep.subr.mxu0 0.0
    %6949 = vmatpush1.msra.mxu0 0.0
    %6950 = vmatprep.subr.mxu0 0.0
    %6951 = vmatpush1.msra.mxu0 0.0
    %6952 = vmatprep.mubr.f32.mxu0 0.0
    %6953 = vmatmul.mubr.f32.gmra.mrb[0].mxu0 %v6886
    %v6954 = vpop.f32.mrb[0].mxu0
    %v6955 = vadd.f32 0.0, %v6954
    %v6956 = vpop.f32.mrb[0].mxu0
    %v6957 = vadd.f32 0.0, %v6956
    %6958 = vdwg.mxu0
    %6959 = vmatprep.subr.mxu0 %v6543
    %6960 = vmatpush1.msra.mxu0 %v6542
    %6961 = vmatprep.subr.mxu0 %v6566
    %6962 = vmatpush1.msra.mxu0 %v6563
    %6963 = vmatprep.subr.mxu0 0.0
    %6964 = vmatpush1.msra.mxu0 0.0
    %6965 = vmatprep.subr.mxu0 0.0
    %6966 = vmatpush1.msra.mxu0 0.0
    %6967 = vmatprep.subr.mxu0 0.0
    %6968 = vmatpush1.msra.mxu0 0.0
    %6969 = vmatprep.subr.mxu0 0.0
    %6970 = vmatpush1.msra.mxu0 0.0
    %6971 = vmatprep.subr.mxu0 0.0
    %6972 = vmatpush1.msra.mxu0 0.0
    %6973 = vmatprep.subr.mxu0 0.0
    %6974 = vmatpush1.msra.mxu0 0.0
    %6975 = vmatprep.subr.mxu0 0.0
    %6976 = vmatpush1.msra.mxu0 0.0
    %6977 = vmatprep.subr.mxu0 0.0
    %6978 = vmatpush1.msra.mxu0 0.0
    %6979 = vmatprep.subr.mxu0 0.0
    %6980 = vmatpush1.msra.mxu0 0.0
    %6981 = vmatprep.subr.mxu0 0.0
    %6982 = vmatpush1.msra.mxu0 0.0
    %6983 = vmatprep.subr.mxu0 0.0
    %6984 = vmatpush1.msra.mxu0 0.0
    %6985 = vmatprep.subr.mxu0 0.0
    %6986 = vmatpush1.msra.mxu0 0.0
    %6987 = vmatprep.subr.mxu0 0.0
    %6988 = vmatpush1.msra.mxu0 0.0
    %6989 = vmatprep.subr.mxu0 0.0
    %6990 = vmatpush1.msra.mxu0 0.0
    %6991 = vmatprep.subr.mxu0 0.0
    %6992 = vmatpush1.msra.mxu0 0.0
    %6993 = vmatprep.subr.mxu0 0.0
    %6994 = vmatpush1.msra.mxu0 0.0
    %6995 = vmatprep.subr.mxu0 0.0
    %6996 = vmatpush1.msra.mxu0 0.0
    %6997 = vmatprep.subr.mxu0 0.0
    %6998 = vmatpush1.msra.mxu0 0.0
    %6999 = vmatprep.subr.mxu0 0.0
    %7000 = vmatpush1.msra.mxu0 0.0
    %7001 = vmatprep.subr.mxu0 0.0
    %7002 = vmatpush1.msra.mxu0 0.0
    %7003 = vmatprep.subr.mxu0 0.0
    %7004 = vmatpush1.msra.mxu0 0.0
    %7005 = vmatprep.subr.mxu0 0.0
    %7006 = vmatpush1.msra.mxu0 0.0
    %7007 = vmatprep.subr.mxu0 0.0
    %7008 = vmatpush1.msra.mxu0 0.0
    %7009 = vmatprep.subr.mxu0 0.0
    %7010 = vmatpush1.msra.mxu0 0.0
    %7011 = vmatprep.subr.mxu0 0.0
    %7012 = vmatpush1.msra.mxu0 0.0
    %7013 = vmatprep.subr.mxu0 0.0
    %7014 = vmatpush1.msra.mxu0 0.0
    %7015 = vmatprep.subr.mxu0 0.0
    %7016 = vmatpush1.msra.mxu0 0.0
    %7017 = vmatprep.subr.mxu0 0.0
    %7018 = vmatpush1.msra.mxu0 0.0
    %7019 = vmatprep.subr.mxu0 0.0
    %7020 = vmatpush1.msra.mxu0 0.0
    %7021 = vmatprep.subr.mxu0 0.0
    %7022 = vmatpush1.msra.mxu0 0.0
    %7023 = vmatprep.mubr.f32.mxu0 0.0
    %7024 = vmatmul.mubr.f32.gmra.mrb[0].mxu0 %v6886
    %v7025 = vpop.f32.mrb[0].mxu0
    %v7026 = vadd.f32 0.0, %v7025
    %v7027 = vpop.f32.mrb[0].mxu0
    %v7028 = vadd.f32 0.0, %v7027
    %7029 = vdwg.mxu0
    %7030 = vmatprep.subr.mxu0 %v6545
    %7031 = vmatpush1.msra.mxu0 %v6544
    %7032 = vmatprep.subr.mxu0 %v6572
    %7033 = vmatpush1.msra.mxu0 %v6569
    %7034 = vmatprep.subr.mxu0 0.0
    %7035 = vmatpush1.msra.mxu0 0.0
    %7036 = vmatprep.subr.mxu0 0.0
    %7037 = vmatpush1.msra.mxu0 0.0
    %7038 = vmatprep.subr.mxu0 0.0
    %7039 = vmatpush1.msra.mxu0 0.0
    %7040 = vmatprep.subr.mxu0 0.0
    %7041 = vmatpush1.msra.mxu0 0.0
    %7042 = vmatprep.subr.mxu0 0.0
    %7043 = vmatpush1.msra.mxu0 0.0
    %7044 = vmatprep.subr.mxu0 0.0
    %7045 = vmatpush1.msra.mxu0 0.0
    %7046 = vmatprep.subr.mxu0 0.0
    %7047 = vmatpush1.msra.mxu0 0.0
    %7048 = vmatprep.subr.mxu0 0.0
    %7049 = vmatpush1.msra.mxu0 0.0
    %7050 = vmatprep.subr.mxu0 0.0
    %7051 = vmatpush1.msra.mxu0 0.0
    %7052 = vmatprep.subr.mxu0 0.0
    %7053 = vmatpush1.msra.mxu0 0.0
    %7054 = vmatprep.subr.mxu0 0.0
    %7055 = vmatpush1.msra.mxu0 0.0
    %7056 = vmatprep.subr.mxu0 0.0
    %7057 = vmatpush1.msra.mxu0 0.0
    %7058 = vmatprep.subr.mxu0 0.0
    %7059 = vmatpush1.msra.mxu0 0.0
    %7060 = vmatprep.subr.mxu0 0.0
    %7061 = vmatpush1.msra.mxu0 0.0
    %7062 = vmatprep.subr.mxu0 0.0
    %7063 = vmatpush1.msra.mxu0 0.0
    %7064 = vmatprep.subr.mxu0 0.0
    %7065 = vmatpush1.msra.mxu0 0.0
    %7066 = vmatprep.subr.mxu0 0.0
    %7067 = vmatpush1.msra.mxu0 0.0
    %7068 = vmatprep.subr.mxu0 0.0
    %7069 = vmatpush1.msra.mxu0 0.0
    %7070 = vmatprep.subr.mxu0 0.0
    %7071 = vmatpush1.msra.mxu0 0.0
    %7072 = vmatprep.subr.mxu0 0.0
    %7073 = vmatpush1.msra.mxu0 0.0
    %7074 = vmatprep.subr.mxu0 0.0
    %7075 = vmatpush1.msra.mxu0 0.0
    %7076 = vmatprep.subr.mxu0 0.0
    %7077 = vmatpush1.msra.mxu0 0.0
    %7078 = vmatprep.subr.mxu0 0.0
    %7079 = vmatpush1.msra.mxu0 0.0
    %7080 = vmatprep.subr.mxu0 0.0
    %7081 = vmatpush1.msra.mxu0 0.0
    %7082 = vmatprep.subr.mxu0 0.0
    %7083 = vmatpush1.msra.mxu0 0.0
    %7084 = vmatprep.subr.mxu0 0.0
    %7085 = vmatpush1.msra.mxu0 0.0
    %7086 = vmatprep.subr.mxu0 0.0
    %7087 = vmatpush1.msra.mxu0 0.0
    %7088 = vmatprep.subr.mxu0 0.0
    %7089 = vmatpush1.msra.mxu0 0.0
    %7090 = vmatprep.subr.mxu0 0.0
    %7091 = vmatpush1.msra.mxu0 0.0
    %7092 = vmatprep.subr.mxu0 0.0
    %7093 = vmatpush1.msra.mxu0 0.0
    %7094 = vmatprep.mubr.f32.mxu0 0.0
    %7095 = vmatmul.mubr.f32.gmra.mrb[0].mxu0 %v6886
    %v7096 = vpop.f32.mrb[0].mxu0
    %v7097 = vadd.f32 0.0, %v7096
    %v7098 = vpop.f32.mrb[0].mxu0
    %v7099 = vadd.f32 0.0, %v7098
    %7100 = vdwg.mxu0
    %s7101 = scalar_lea.vmem %s14, 768
    %v7102 = vld [vmem:[%s7101] sm:$0xff]
    %v7103 = vld [vmem:[%s7101 + $0x8] sm:$0xff]
    %v7104 = vld [vmem:[%s7101 + $0x10] sm:$0xff]
    %v7105 = vld [vmem:[%s7101 + $0x18] sm:$0xff]
    %v7106 = vld [vmem:[%s7101 + $0x20] sm:$0xff]
    %v7107 = vld [vmem:[%s7101 + $0x28] sm:$0xff]
    %v7108 = vld [vmem:[%s7101 + $0x30] sm:$0xff]
    %v7109 = vld [vmem:[%s7101 + $0x38] sm:$0xff]
    %v7110 = vld [vmem:[%s7101 + $0x40] sm:$0xff]
    %v7111 = vld [vmem:[%s7101 + $0x48] sm:$0xff]
    %v7112 = vld [vmem:[%s7101 + $0x50] sm:$0xff]
    %v7113 = vld [vmem:[%s7101 + $0x58] sm:$0xff]
    %v7114 = vld [vmem:[%s7101 + $0x60] sm:$0xff]
    %v7115 = vld [vmem:[%s7101 + $0x68] sm:$0xff]
    %v7116 = vld [vmem:[%s7101 + $0x70] sm:$0xff]
    %v7117 = vld [vmem:[%s7101 + $0x78] sm:$0xff]
    %v7118 = vld [vmem:[%s7101 + $0x80] sm:$0xff]
    %v7119 = vld [vmem:[%s7101 + $0x88] sm:$0xff]
    %v7120 = vld [vmem:[%s7101 + $0x90] sm:$0xff]
    %v7121 = vld [vmem:[%s7101 + $0x98] sm:$0xff]
    %v7122 = vld [vmem:[%s7101 + $0xa0] sm:$0xff]
    %v7123 = vld [vmem:[%s7101 + $0xa8] sm:$0xff]
    %v7124 = vld [vmem:[%s7101 + $0xb0] sm:$0xff]
    %v7125 = vld [vmem:[%s7101 + $0xb8] sm:$0xff]
    %v7126 = vld [vmem:[%s7101 + $0xc0] sm:$0xff]
    %v7127 = vld [vmem:[%s7101 + $0xc8] sm:$0xff]
    %v7128 = vld [vmem:[%s7101 + $0xd0] sm:$0xff]
    %v7129 = vld [vmem:[%s7101 + $0xd8] sm:$0xff]
    %v7130 = vld [vmem:[%s7101 + $0xe0] sm:$0xff]
    %v7131 = vld [vmem:[%s7101 + $0xe8] sm:$0xff]
    %v7132 = vld [vmem:[%s7101 + $0xf0] sm:$0xff]
    %v7133 = vld [vmem:[%s7101 + $0xf8] sm:$0xff]
    %v7134 = vld [vmem:[%s7101 + $0x100] sm:$0xff]
    %v7135 = vld [vmem:[%s7101 + $0x108] sm:$0xff]
    %v7136 = vld [vmem:[%s7101 + $0x110] sm:$0xff]
    %v7137 = vld [vmem:[%s7101 + $0x118] sm:$0xff]
    %v7138 = vld [vmem:[%s7101 + $0x120] sm:$0xff]
    %v7139 = vld [vmem:[%s7101 + $0x128] sm:$0xff]
    %v7140 = vld [vmem:[%s7101 + $0x130] sm:$0xff]
    %v7141 = vld [vmem:[%s7101 + $0x138] sm:$0xff]
    %v7142 = vld [vmem:[%s7101 + $0x140] sm:$0xff]
    %v7143 = vld [vmem:[%s7101 + $0x148] sm:$0xff]
    %v7144 = vld [vmem:[%s7101 + $0x150] sm:$0xff]
    %v7145 = vld [vmem:[%s7101 + $0x158] sm:$0xff]
    %v7146 = vld [vmem:[%s7101 + $0x160] sm:$0xff]
    %v7147 = vld [vmem:[%s7101 + $0x168] sm:$0xff]
    %v7148 = vld [vmem:[%s7101 + $0x170] sm:$0xff]
    %v7149 = vld [vmem:[%s7101 + $0x178] sm:$0xff]
    %v7150 = vld [vmem:[%s7101 + $0x180] sm:$0xff]
    %v7151 = vld [vmem:[%s7101 + $0x188] sm:$0xff]
    %v7152 = vld [vmem:[%s7101 + $0x190] sm:$0xff]
    %v7153 = vld [vmem:[%s7101 + $0x198] sm:$0xff]
    %v7154 = vld [vmem:[%s7101 + $0x1a0] sm:$0xff]
    %v7155 = vld [vmem:[%s7101 + $0x1a8] sm:$0xff]
    %v7156 = vld [vmem:[%s7101 + $0x1b0] sm:$0xff]
    %v7157 = vld [vmem:[%s7101 + $0x1b8] sm:$0xff]
    %v7158 = vld [vmem:[%s7101 + $0x1c0] sm:$0xff]
    %v7159 = vld [vmem:[%s7101 + $0x1c8] sm:$0xff]
    %v7160 = vld [vmem:[%s7101 + $0x1d0] sm:$0xff]
    %v7161 = vld [vmem:[%s7101 + $0x1d8] sm:$0xff]
    %v7162 = vld [vmem:[%s7101 + $0x1e0] sm:$0xff]
    %v7163 = vld [vmem:[%s7101 + $0x1e8] sm:$0xff]
    %v7164 = vld [vmem:[%s7101 + $0x1f0] sm:$0xff]
    %v7165 = vld [vmem:[%s7101 + $0x1f8] sm:$0xff]
    %v7166 = vld [vmem:[%s7101 + $0x200] sm:$0xff]
    %v7167 = vld [vmem:[%s7101 + $0x208] sm:$0xff]
    %v7168 = vld [vmem:[%s7101 + $0x210] sm:$0xff]
    %v7169 = vld [vmem:[%s7101 + $0x218] sm:$0xff]
    %v7170 = vld [vmem:[%s7101 + $0x220] sm:$0xff]
    %v7171 = vld [vmem:[%s7101 + $0x228] sm:$0xff]
    %v7172 = vld [vmem:[%s7101 + $0x230] sm:$0xff]
    %v7173 = vld [vmem:[%s7101 + $0x238] sm:$0xff]
    %v7174 = vld [vmem:[%s7101 + $0x240] sm:$0xff]
    %v7175 = vld [vmem:[%s7101 + $0x248] sm:$0xff]
    %v7176 = vld [vmem:[%s7101 + $0x250] sm:$0xff]
    %v7177 = vld [vmem:[%s7101 + $0x258] sm:$0xff]
    %v7178 = vld [vmem:[%s7101 + $0x260] sm:$0xff]
    %v7179 = vld [vmem:[%s7101 + $0x268] sm:$0xff]
    %v7180 = vld [vmem:[%s7101 + $0x270] sm:$0xff]
    %v7181 = vld [vmem:[%s7101 + $0x278] sm:$0xff]
    %v7182 = vld [vmem:[%s7101 + $0x280] sm:$0xff]
    %v7183 = vld [vmem:[%s7101 + $0x288] sm:$0xff]
    %v7184 = vld [vmem:[%s7101 + $0x290] sm:$0xff]
    %v7185 = vld [vmem:[%s7101 + $0x298] sm:$0xff]
    %v7186 = vld [vmem:[%s7101 + $0x2a0] sm:$0xff]
    %v7187 = vld [vmem:[%s7101 + $0x2a8] sm:$0xff]
    %v7188 = vld [vmem:[%s7101 + $0x2b0] sm:$0xff]
    %v7189 = vld [vmem:[%s7101 + $0x2b8] sm:$0xff]
    %v7190 = vld [vmem:[%s7101 + $0x2c0] sm:$0xff]
    %v7191 = vld [vmem:[%s7101 + $0x2c8] sm:$0xff]
    %v7192 = vld [vmem:[%s7101 + $0x2d0] sm:$0xff]
    %v7193 = vld [vmem:[%s7101 + $0x2d8] sm:$0xff]
    %v7194 = vld [vmem:[%s7101 + $0x2e0] sm:$0xff]
    %v7195 = vld [vmem:[%s7101 + $0x2e8] sm:$0xff]
    %v7196 = vld [vmem:[%s7101 + $0x2f0] sm:$0xff]
    %v7197 = vld [vmem:[%s7101 + $0x2f8] sm:$0xff]
    %7198 = vmatprep.subr.mxu0 0.0
    %7199 = vmatpush1.msra.mxu0 %v7102
    %7200 = vmatprep.subr.mxu0 0.0
    %7201 = vmatpush1.msra.mxu0 %v7103
    %7202 = vmatprep.subr.mxu0 0.0
    %7203 = vmatpush1.msra.mxu0 %v7104
    %7204 = vmatprep.subr.mxu0 0.0
    %7205 = vmatpush1.msra.mxu0 %v7105
    %7206 = vmatprep.subr.mxu0 0.0
    %7207 = vmatpush1.msra.mxu0 %v7106
    %7208 = vmatprep.subr.mxu0 0.0
    %7209 = vmatpush1.msra.mxu0 %v7107
    %7210 = vmatprep.subr.mxu0 0.0
    %7211 = vmatpush1.msra.mxu0 %v7108
    %7212 = vmatprep.subr.mxu0 0.0
    %7213 = vmatpush1.msra.mxu0 %v7109
    %7214 = vmatprep.subr.mxu0 0.0
    %7215 = vmatpush1.msra.mxu0 %v7110
    %7216 = vmatprep.subr.mxu0 0.0
    %7217 = vmatpush1.msra.mxu0 %v7111
    %7218 = vmatprep.subr.mxu0 0.0
    %7219 = vmatpush1.msra.mxu0 %v7112
    %7220 = vmatprep.subr.mxu0 0.0
    %7221 = vmatpush1.msra.mxu0 %v7113
    %7222 = vmatprep.subr.mxu0 0.0
    %7223 = vmatpush1.msra.mxu0 %v7114
    %7224 = vmatprep.subr.mxu0 0.0
    %7225 = vmatpush1.msra.mxu0 %v7115
    %7226 = vmatprep.subr.mxu0 0.0
    %7227 = vmatpush1.msra.mxu0 %v7116
    %7228 = vmatprep.subr.mxu0 0.0
    %7229 = vmatpush1.msra.mxu0 %v7117
    %7230 = vmatprep.subr.mxu0 0.0
    %7231 = vmatpush1.msra.mxu0 %v7118
    %7232 = vmatprep.subr.mxu0 0.0
    %7233 = vmatpush1.msra.mxu0 %v7119
    %7234 = vmatprep.subr.mxu0 0.0
    %7235 = vmatpush1.msra.mxu0 %v7120
    %7236 = vmatprep.subr.mxu0 0.0
    %7237 = vmatpush1.msra.mxu0 %v7121
    %7238 = vmatprep.subr.mxu0 0.0
    %7239 = vmatpush1.msra.mxu0 %v7122
    %7240 = vmatprep.subr.mxu0 0.0
    %7241 = vmatpush1.msra.mxu0 %v7123
    %7242 = vmatprep.subr.mxu0 0.0
    %7243 = vmatpush1.msra.mxu0 %v7124
    %7244 = vmatprep.subr.mxu0 0.0
    %7245 = vmatpush1.msra.mxu0 %v7125
    %7246 = vmatprep.subr.mxu0 0.0
    %7247 = vmatpush1.msra.mxu0 %v7126
    %7248 = vmatprep.subr.mxu0 0.0
    %7249 = vmatpush1.msra.mxu0 %v7127
    %7250 = vmatprep.subr.mxu0 0.0
    %7251 = vmatpush1.msra.mxu0 %v7128
    %7252 = vmatprep.subr.mxu0 0.0
    %7253 = vmatpush1.msra.mxu0 %v7129
    %7254 = vmatprep.subr.mxu0 0.0
    %7255 = vmatpush1.msra.mxu0 %v7130
    %7256 = vmatprep.subr.mxu0 0.0
    %7257 = vmatpush1.msra.mxu0 %v7131
    %7258 = vmatprep.subr.mxu0 0.0
    %7259 = vmatpush1.msra.mxu0 %v7132
    %7260 = vmatprep.subr.mxu0 0.0
    %7261 = vmatpush1.msra.mxu0 %v7133
    %7262 = vmatprep.mubr.f32.mxu0 %v6957
    %7263 = vmatmul.mubr.f32.gmra.mrb[0].mxu0 %v6955
    %v7264 = vpop.f32.mrb[0].mxu0
    %v7265 = vadd.f32 0.0, %v7264
    %v7266 = vpop.f32.mrb[0].mxu0
    %7267 = vdwg.mxu0
    %7268 = vmatprep.subr.mxu0 0.0
    %7269 = vmatpush1.msra.mxu0 %v7134
    %7270 = vmatprep.subr.mxu0 0.0
    %7271 = vmatpush1.msra.mxu0 %v7135
    %7272 = vmatprep.subr.mxu0 0.0
    %7273 = vmatpush1.msra.mxu0 %v7136
    %7274 = vmatprep.subr.mxu0 0.0
    %7275 = vmatpush1.msra.mxu0 %v7137
    %7276 = vmatprep.subr.mxu0 0.0
    %7277 = vmatpush1.msra.mxu0 %v7138
    %7278 = vmatprep.subr.mxu0 0.0
    %7279 = vmatpush1.msra.mxu0 %v7139
    %7280 = vmatprep.subr.mxu0 0.0
    %7281 = vmatpush1.msra.mxu0 %v7140
    %7282 = vmatprep.subr.mxu0 0.0
    %7283 = vmatpush1.msra.mxu0 %v7141
    %7284 = vmatprep.subr.mxu0 0.0
    %7285 = vmatpush1.msra.mxu0 %v7142
    %7286 = vmatprep.subr.mxu0 0.0
    %7287 = vmatpush1.msra.mxu0 %v7143
    %7288 = vmatprep.subr.mxu0 0.0
    %7289 = vmatpush1.msra.mxu0 %v7144
    %7290 = vmatprep.subr.mxu0 0.0
    %7291 = vmatpush1.msra.mxu0 %v7145
    %7292 = vmatprep.subr.mxu0 0.0
    %7293 = vmatpush1.msra.mxu0 %v7146
    %7294 = vmatprep.subr.mxu0 0.0
    %7295 = vmatpush1.msra.mxu0 %v7147
    %7296 = vmatprep.subr.mxu0 0.0
    %7297 = vmatpush1.msra.mxu0 %v7148
    %7298 = vmatprep.subr.mxu0 0.0
    %7299 = vmatpush1.msra.mxu0 %v7149
    %7300 = vmatprep.subr.mxu0 0.0
    %7301 = vmatpush1.msra.mxu0 %v7150
    %7302 = vmatprep.subr.mxu0 0.0
    %7303 = vmatpush1.msra.mxu0 %v7151
    %7304 = vmatprep.subr.mxu0 0.0
    %7305 = vmatpush1.msra.mxu0 %v7152
    %7306 = vmatprep.subr.mxu0 0.0
    %7307 = vmatpush1.msra.mxu0 %v7153
    %7308 = vmatprep.subr.mxu0 0.0
    %7309 = vmatpush1.msra.mxu0 %v7154
    %7310 = vmatprep.subr.mxu0 0.0
    %7311 = vmatpush1.msra.mxu0 %v7155
    %7312 = vmatprep.subr.mxu0 0.0
    %7313 = vmatpush1.msra.mxu0 %v7156
    %7314 = vmatprep.subr.mxu0 0.0
    %7315 = vmatpush1.msra.mxu0 %v7157
    %7316 = vmatprep.subr.mxu0 0.0
    %7317 = vmatpush1.msra.mxu0 %v7158
    %7318 = vmatprep.subr.mxu0 0.0
    %7319 = vmatpush1.msra.mxu0 %v7159
    %7320 = vmatprep.subr.mxu0 0.0
    %7321 = vmatpush1.msra.mxu0 %v7160
    %7322 = vmatprep.subr.mxu0 0.0
    %7323 = vmatpush1.msra.mxu0 %v7161
    %7324 = vmatprep.subr.mxu0 0.0
    %7325 = vmatpush1.msra.mxu0 %v7162
    %7326 = vmatprep.subr.mxu0 0.0
    %7327 = vmatpush1.msra.mxu0 %v7163
    %7328 = vmatprep.subr.mxu0 0.0
    %7329 = vmatpush1.msra.mxu0 %v7164
    %7330 = vmatprep.subr.mxu0 0.0
    %7331 = vmatpush1.msra.mxu0 %v7165
    %7332 = vmatprep.mubr.f32.mxu0 %v7028
    %7333 = vmatmul.mubr.f32.gmra.mrb[0].mxu0 %v7026
    %v7334 = vpop.f32.mrb[0].mxu0
    %v7335 = vadd.f32 %v7265, %v7334
    %v7336 = vpop.f32.mrb[0].mxu0
    %7337 = vdwg.mxu0
    %7338 = vmatprep.subr.mxu0 0.0
    %7339 = vmatpush1.msra.mxu0 %v7166
    %7340 = vmatprep.subr.mxu0 0.0
    %7341 = vmatpush1.msra.mxu0 %v7167
    %7342 = vmatprep.subr.mxu0 0.0
    %7343 = vmatpush1.msra.mxu0 %v7168
    %7344 = vmatprep.subr.mxu0 0.0
    %7345 = vmatpush1.msra.mxu0 %v7169
    %7346 = vmatprep.subr.mxu0 0.0
    %7347 = vmatpush1.msra.mxu0 %v7170
    %7348 = vmatprep.subr.mxu0 0.0
    %7349 = vmatpush1.msra.mxu0 %v7171
    %7350 = vmatprep.subr.mxu0 0.0
    %7351 = vmatpush1.msra.mxu0 %v7172
    %7352 = vmatprep.subr.mxu0 0.0
    %7353 = vmatpush1.msra.mxu0 %v7173
    %7354 = vmatprep.subr.mxu0 0.0
    %7355 = vmatpush1.msra.mxu0 %v7174
    %7356 = vmatprep.subr.mxu0 0.0
    %7357 = vmatpush1.msra.mxu0 %v7175
    %7358 = vmatprep.subr.mxu0 0.0
    %7359 = vmatpush1.msra.mxu0 %v7176
    %7360 = vmatprep.subr.mxu0 0.0
    %7361 = vmatpush1.msra.mxu0 %v7177
    %7362 = vmatprep.subr.mxu0 0.0
    %7363 = vmatpush1.msra.mxu0 %v7178
    %7364 = vmatprep.subr.mxu0 0.0
    %7365 = vmatpush1.msra.mxu0 %v7179
    %7366 = vmatprep.subr.mxu0 0.0
    %7367 = vmatpush1.msra.mxu0 %v7180
    %7368 = vmatprep.subr.mxu0 0.0
    %7369 = vmatpush1.msra.mxu0 %v7181
    %7370 = vmatprep.subr.mxu0 0.0
    %7371 = vmatpush1.msra.mxu0 %v7182
    %7372 = vmatprep.subr.mxu0 0.0
    %7373 = vmatpush1.msra.mxu0 %v7183
    %7374 = vmatprep.subr.mxu0 0.0
    %7375 = vmatpush1.msra.mxu0 %v7184
    %7376 = vmatprep.subr.mxu0 0.0
    %7377 = vmatpush1.msra.mxu0 %v7185
    %7378 = vmatprep.subr.mxu0 0.0
    %7379 = vmatpush1.msra.mxu0 %v7186
    %7380 = vmatprep.subr.mxu0 0.0
    %7381 = vmatpush1.msra.mxu0 %v7187
    %7382 = vmatprep.subr.mxu0 0.0
    %7383 = vmatpush1.msra.mxu0 %v7188
    %7384 = vmatprep.subr.mxu0 0.0
    %7385 = vmatpush1.msra.mxu0 %v7189
    %7386 = vmatprep.subr.mxu0 0.0
    %7387 = vmatpush1.msra.mxu0 %v7190
    %7388 = vmatprep.subr.mxu0 0.0
    %7389 = vmatpush1.msra.mxu0 %v7191
    %7390 = vmatprep.subr.mxu0 0.0
    %7391 = vmatpush1.msra.mxu0 %v7192
    %7392 = vmatprep.subr.mxu0 0.0
    %7393 = vmatpush1.msra.mxu0 %v7193
    %7394 = vmatprep.subr.mxu0 0.0
    %7395 = vmatpush1.msra.mxu0 %v7194
    %7396 = vmatprep.subr.mxu0 0.0
    %7397 = vmatpush1.msra.mxu0 %v7195
    %7398 = vmatprep.subr.mxu0 0.0
    %7399 = vmatpush1.msra.mxu0 %v7196
    %7400 = vmatprep.subr.mxu0 0.0
    %7401 = vmatpush1.msra.mxu0 %v7197
    %7402 = vmatprep.mubr.f32.mxu0 %v7099
    %7403 = vmatmul.mubr.f32.gmra.mrb[0].mxu0 %v7097
    %v7404 = vpop.f32.mrb[0].mxu0
    %v7405 = vadd.f32 %v7335, %v7404
    %v7406 = vpop.f32.mrb[0].mxu0
    %7407 = vdwg.mxu0
    %7408 = vmatprep.subr.mxu0 0.0
    %7409 = vmatpush1.msra.mxu0 %v6787
    %7410 = vmatprep.subr.mxu0 0.0
    %7411 = vmatpush1.msra.mxu0 %v6788
    %7412 = vmatprep.subr.mxu0 0.0
    %7413 = vmatpush1.msra.mxu0 %v6789
    %7414 = vmatprep.subr.mxu0 0.0
    %7415 = vmatpush1.msra.mxu0 %v6790
    %7416 = vmatprep.subr.mxu0 0.0
    %7417 = vmatpush1.msra.mxu0 %v6791
    %7418 = vmatprep.subr.mxu0 0.0
    %7419 = vmatpush1.msra.mxu0 %v6792
    %7420 = vmatprep.subr.mxu0 0.0
    %7421 = vmatpush1.msra.mxu0 %v6793
    %7422 = vmatprep.subr.mxu0 0.0
    %7423 = vmatpush1.msra.mxu0 %v6794
    %7424 = vmatprep.subr.mxu0 0.0
    %7425 = vmatpush1.msra.mxu0 %v6795
    %7426 = vmatprep.subr.mxu0 0.0
    %7427 = vmatpush1.msra.mxu0 %v6796
    %7428 = vmatprep.subr.mxu0 0.0
    %7429 = vmatpush1.msra.mxu0 %v6797
    %7430 = vmatprep.subr.mxu0 0.0
    %7431 = vmatpush1.msra.mxu0 %v6798
    %7432 = vmatprep.subr.mxu0 0.0
    %7433 = vmatpush1.msra.mxu0 %v6799
    %7434 = vmatprep.subr.mxu0 0.0
    %7435 = vmatpush1.msra.mxu0 %v6800
    %7436 = vmatprep.subr.mxu0 0.0
    %7437 = vmatpush1.msra.mxu0 %v6801
    %7438 = vmatprep.subr.mxu0 0.0
    %7439 = vmatpush1.msra.mxu0 %v6802
    %7440 = vmatprep.subr.mxu0 0.0
    %7441 = vmatpush1.msra.mxu0 %v6803
    %7442 = vmatprep.subr.mxu0 0.0
    %7443 = vmatpush1.msra.mxu0 %v6804
    %7444 = vmatprep.subr.mxu0 0.0
    %7445 = vmatpush1.msra.mxu0 %v6805
    %7446 = vmatprep.subr.mxu0 0.0
    %7447 = vmatpush1.msra.mxu0 %v6806
    %7448 = vmatprep.subr.mxu0 0.0
    %7449 = vmatpush1.msra.mxu0 %v6807
    %7450 = vmatprep.subr.mxu0 0.0
    %7451 = vmatpush1.msra.mxu0 %v6808
    %7452 = vmatprep.subr.mxu0 0.0
    %7453 = vmatpush1.msra.mxu0 %v6809
    %7454 = vmatprep.subr.mxu0 0.0
    %7455 = vmatpush1.msra.mxu0 %v6810
    %7456 = vmatprep.subr.mxu0 0.0
    %7457 = vmatpush1.msra.mxu0 %v6811
    %7458 = vmatprep.subr.mxu0 0.0
    %7459 = vmatpush1.msra.mxu0 %v6812
    %7460 = vmatprep.subr.mxu0 0.0
    %7461 = vmatpush1.msra.mxu0 %v6813
    %7462 = vmatprep.subr.mxu0 0.0
    %7463 = vmatpush1.msra.mxu0 %v6814
    %7464 = vmatprep.subr.mxu0 0.0
    %7465 = vmatpush1.msra.mxu0 %v6815
    %7466 = vmatprep.subr.mxu0 0.0
    %7467 = vmatpush1.msra.mxu0 %v6816
    %7468 = vmatprep.subr.mxu0 0.0
    %7469 = vmatpush1.msra.mxu0 %v6817
    %7470 = vmatprep.subr.mxu0 0.0
    %7471 = vmatpush1.msra.mxu0 %v6818
    %7472 = vmatprep.mubr.f32.mxu0 %v6643
    %7473 = vmatmul.mubr.f32.gmra.mrb[0].mxu0 %v6641
    %v7474 = vpop.f32.mrb[0].mxu0
    %v7475 = vadd.f32 %v7405, %v7474
    %v7476 = vpop.f32.mrb[0].mxu0
    %7477 = vdwg.mxu0
    %7478 = vmatprep.subr.mxu0 0.0
    %7479 = vmatpush1.msra.mxu0 %v6819
    %7480 = vmatprep.subr.mxu0 0.0
    %7481 = vmatpush1.msra.mxu0 %v6820
    %7482 = vmatprep.subr.mxu0 0.0
    %7483 = vmatpush1.msra.mxu0 %v6821
    %7484 = vmatprep.subr.mxu0 0.0
    %7485 = vmatpush1.msra.mxu0 %v6822
    %7486 = vmatprep.subr.mxu0 0.0
    %7487 = vmatpush1.msra.mxu0 %v6823
    %7488 = vmatprep.subr.mxu0 0.0
    %7489 = vmatpush1.msra.mxu0 %v6824
    %7490 = vmatprep.subr.mxu0 0.0
    %7491 = vmatpush1.msra.mxu0 %v6825
    %7492 = vmatprep.subr.mxu0 0.0
    %7493 = vmatpush1.msra.mxu0 %v6826
    %7494 = vmatprep.subr.mxu0 0.0
    %7495 = vmatpush1.msra.mxu0 %v6827
    %7496 = vmatprep.subr.mxu0 0.0
    %7497 = vmatpush1.msra.mxu0 %v6828
    %7498 = vmatprep.subr.mxu0 0.0
    %7499 = vmatpush1.msra.mxu0 %v6829
    %7500 = vmatprep.subr.mxu0 0.0
    %7501 = vmatpush1.msra.mxu0 %v6830
    %7502 = vmatprep.subr.mxu0 0.0
    %7503 = vmatpush1.msra.mxu0 %v6831
    %7504 = vmatprep.subr.mxu0 0.0
    %7505 = vmatpush1.msra.mxu0 %v6832
    %7506 = vmatprep.subr.mxu0 0.0
    %7507 = vmatpush1.msra.mxu0 %v6833
    %7508 = vmatprep.subr.mxu0 0.0
    %7509 = vmatpush1.msra.mxu0 %v6834
    %7510 = vmatprep.subr.mxu0 0.0
    %7511 = vmatpush1.msra.mxu0 %v6835
    %7512 = vmatprep.subr.mxu0 0.0
    %7513 = vmatpush1.msra.mxu0 %v6836
    %7514 = vmatprep.subr.mxu0 0.0
    %7515 = vmatpush1.msra.mxu0 %v6837
    %7516 = vmatprep.subr.mxu0 0.0
    %7517 = vmatpush1.msra.mxu0 %v6838
    %7518 = vmatprep.subr.mxu0 0.0
    %7519 = vmatpush1.msra.mxu0 %v6839
    %7520 = vmatprep.subr.mxu0 0.0
    %7521 = vmatpush1.msra.mxu0 %v6840
    %7522 = vmatprep.subr.mxu0 0.0
    %7523 = vmatpush1.msra.mxu0 %v6841
    %7524 = vmatprep.subr.mxu0 0.0
    %7525 = vmatpush1.msra.mxu0 %v6842
    %7526 = vmatprep.subr.mxu0 0.0
    %7527 = vmatpush1.msra.mxu0 %v6843
    %7528 = vmatprep.subr.mxu0 0.0
    %7529 = vmatpush1.msra.mxu0 %v6844
    %7530 = vmatprep.subr.mxu0 0.0
    %7531 = vmatpush1.msra.mxu0 %v6845
    %7532 = vmatprep.subr.mxu0 0.0
    %7533 = vmatpush1.msra.mxu0 %v6846
    %7534 = vmatprep.subr.mxu0 0.0
    %7535 = vmatpush1.msra.mxu0 %v6847
    %7536 = vmatprep.subr.mxu0 0.0
    %7537 = vmatpush1.msra.mxu0 %v6848
    %7538 = vmatprep.subr.mxu0 0.0
    %7539 = vmatpush1.msra.mxu0 %v6849
    %7540 = vmatprep.subr.mxu0 0.0
    %7541 = vmatpush1.msra.mxu0 %v6850
    %7542 = vmatprep.mubr.f32.mxu0 %v6714
    %7543 = vmatmul.mubr.f32.gmra.mrb[0].mxu0 %v6712
    %v7544 = vpop.f32.mrb[0].mxu0
    %v7545 = vadd.f32 %v7475, %v7544
    %v7546 = vpop.f32.mrb[0].mxu0
    %7547 = vdwg.mxu0
    %7548 = vmatprep.subr.mxu0 0.0
    %7549 = vmatpush1.msra.mxu0 %v6851
    %7550 = vmatprep.subr.mxu0 0.0
    %7551 = vmatpush1.msra.mxu0 %v6852
    %7552 = vmatprep.subr.mxu0 0.0
    %7553 = vmatpush1.msra.mxu0 %v6853
    %7554 = vmatprep.subr.mxu0 0.0
    %7555 = vmatpush1.msra.mxu0 %v6854
    %7556 = vmatprep.subr.mxu0 0.0
    %7557 = vmatpush1.msra.mxu0 %v6855
    %7558 = vmatprep.subr.mxu0 0.0
    %7559 = vmatpush1.msra.mxu0 %v6856
    %7560 = vmatprep.subr.mxu0 0.0
    %7561 = vmatpush1.msra.mxu0 %v6857
    %7562 = vmatprep.subr.mxu0 0.0
    %7563 = vmatpush1.msra.mxu0 %v6858
    %7564 = vmatprep.subr.mxu0 0.0
    %7565 = vmatpush1.msra.mxu0 %v6859
    %7566 = vmatprep.subr.mxu0 0.0
    %7567 = vmatpush1.msra.mxu0 %v6860
    %7568 = vmatprep.subr.mxu0 0.0
    %7569 = vmatpush1.msra.mxu0 %v6861
    %7570 = vmatprep.subr.mxu0 0.0
    %7571 = vmatpush1.msra.mxu0 %v6862
    %7572 = vmatprep.subr.mxu0 0.0
    %7573 = vmatpush1.msra.mxu0 %v6863
    %7574 = vmatprep.subr.mxu0 0.0
    %7575 = vmatpush1.msra.mxu0 %v6864
    %7576 = vmatprep.subr.mxu0 0.0
    %7577 = vmatpush1.msra.mxu0 %v6865
    %7578 = vmatprep.subr.mxu0 0.0
    %7579 = vmatpush1.msra.mxu0 %v6866
    %7580 = vmatprep.subr.mxu0 0.0
    %7581 = vmatpush1.msra.mxu0 %v6867
    %7582 = vmatprep.subr.mxu0 0.0
    %7583 = vmatpush1.msra.mxu0 %v6868
    %7584 = vmatprep.subr.mxu0 0.0
    %7585 = vmatpush1.msra.mxu0 %v6869
    %7586 = vmatprep.subr.mxu0 0.0
    %7587 = vmatpush1.msra.mxu0 %v6870
    %7588 = vmatprep.subr.mxu0 0.0
    %7589 = vmatpush1.msra.mxu0 %v6871
    %7590 = vmatprep.subr.mxu0 0.0
    %7591 = vmatpush1.msra.mxu0 %v6872
    %7592 = vmatprep.subr.mxu0 0.0
    %7593 = vmatpush1.msra.mxu0 %v6873
    %7594 = vmatprep.subr.mxu0 0.0
    %7595 = vmatpush1.msra.mxu0 %v6874
    %7596 = vmatprep.subr.mxu0 0.0
    %7597 = vmatpush1.msra.mxu0 %v6875
    %7598 = vmatprep.subr.mxu0 0.0
    %7599 = vmatpush1.msra.mxu0 %v6876
    %7600 = vmatprep.subr.mxu0 0.0
    %7601 = vmatpush1.msra.mxu0 %v6877
    %7602 = vmatprep.subr.mxu0 0.0
    %7603 = vmatpush1.msra.mxu0 %v6878
    %7604 = vmatprep.subr.mxu0 0.0
    %7605 = vmatpush1.msra.mxu0 %v6879
    %7606 = vmatprep.subr.mxu0 0.0
    %7607 = vmatpush1.msra.mxu0 %v6880
    %7608 = vmatprep.subr.mxu0 0.0
    %7609 = vmatpush1.msra.mxu0 %v6881
    %7610 = vmatprep.subr.mxu0 0.0
    %7611 = vmatpush1.msra.mxu0 %v6882
    %7612 = vmatprep.mubr.f32.mxu0 %v6785
    %7613 = vmatmul.mubr.f32.gmra.mrb[0].mxu0 %v6783
    %v7614 = vpop.f32.mrb[0].mxu0
    %v7615 = vadd.f32 %v7545, %v7614
    %v7616 = vpop.f32.mrb[0].mxu0
    %7617 = vdwg.mxu0
    %s7618 = scalar_lea.vmem %s13, 4
    %v7619 = vld [vmem:[%s7618] sm:$0x3]
    %v7621 = vsel %vm3718, %v7619, 0
    %7623 = vmatprep.subr.mxu0 %v6541
    %7624 = vmatpush1.msra.mxu0 %v6540
    %7625 = vmatprep.subr.mxu0 %v6560
    %7626 = vmatpush1.msra.mxu0 %v6557
    %7627 = vmatprep.subr.mxu0 0.0
    %7628 = vmatpush1.msra.mxu0 0.0
    %7629 = vmatprep.subr.mxu0 0.0
    %7630 = vmatpush1.msra.mxu0 0.0
    %7631 = vmatprep.subr.mxu0 0.0
    %7632 = vmatpush1.msra.mxu0 0.0
    %7633 = vmatprep.subr.mxu0 0.0
    %7634 = vmatpush1.msra.mxu0 0.0
    %7635 = vmatprep.subr.mxu0 0.0
    %7636 = vmatpush1.msra.mxu0 0.0
    %7637 = vmatprep.subr.mxu0 0.0
    %7638 = vmatpush1.msra.mxu0 0.0
    %7639 = vmatprep.subr.mxu0 0.0
    %7640 = vmatpush1.msra.mxu0 0.0
    %7641 = vmatprep.subr.mxu0 0.0
    %7642 = vmatpush1.msra.mxu0 0.0
    %7643 = vmatprep.subr.mxu0 0.0
    %7644 = vmatpush1.msra.mxu0 0.0
    %7645 = vmatprep.subr.mxu0 0.0
    %7646 = vmatpush1.msra.mxu0 0.0
    %7647 = vmatprep.subr.mxu0 0.0
    %7648 = vmatpush1.msra.mxu0 0.0
    %7649 = vmatprep.subr.mxu0 0.0
    %7650 = vmatpush1.msra.mxu0 0.0
    %7651 = vmatprep.subr.mxu0 0.0
    %7652 = vmatpush1.msra.mxu0 0.0
    %7653 = vmatprep.subr.mxu0 0.0
    %7654 = vmatpush1.msra.mxu0 0.0
    %7655 = vmatprep.subr.mxu0 0.0
    %7656 = vmatpush1.msra.mxu0 0.0
    %7657 = vmatprep.subr.mxu0 0.0
    %7658 = vmatpush1.msra.mxu0 0.0
    %7659 = vmatprep.subr.mxu0 0.0
    %7660 = vmatpush1.msra.mxu0 0.0
    %7661 = vmatprep.subr.mxu0 0.0
    %7662 = vmatpush1.msra.mxu0 0.0
    %7663 = vmatprep.subr.mxu0 0.0
    %7664 = vmatpush1.msra.mxu0 0.0
    %7665 = vmatprep.subr.mxu0 0.0
    %7666 = vmatpush1.msra.mxu0 0.0
    %7667 = vmatprep.subr.mxu0 0.0
    %7668 = vmatpush1.msra.mxu0 0.0
    %7669 = vmatprep.subr.mxu0 0.0
    %7670 = vmatpush1.msra.mxu0 0.0
    %7671 = vmatprep.subr.mxu0 0.0
    %7672 = vmatpush1.msra.mxu0 0.0
    %7673 = vmatprep.subr.mxu0 0.0
    %7674 = vmatpush1.msra.mxu0 0.0
    %7675 = vmatprep.subr.mxu0 0.0
    %7676 = vmatpush1.msra.mxu0 0.0
    %7677 = vmatprep.subr.mxu0 0.0
    %7678 = vmatpush1.msra.mxu0 0.0
    %7679 = vmatprep.subr.mxu0 0.0
    %7680 = vmatpush1.msra.mxu0 0.0
    %7681 = vmatprep.subr.mxu0 0.0
    %7682 = vmatpush1.msra.mxu0 0.0
    %7683 = vmatprep.subr.mxu0 0.0
    %7684 = vmatpush1.msra.mxu0 0.0
    %7685 = vmatprep.subr.mxu0 0.0
    %7686 = vmatpush1.msra.mxu0 0.0
    %7687 = vmatprep.mubr.f32.mxu0 0.0
    %7688 = vmatmul.mubr.f32.gmra.mrb[0].mxu0 %v7621
    %v7689 = vpop.f32.mrb[0].mxu0
    %v7690 = vadd.f32 0.0, %v7689
    %v7691 = vpop.f32.mrb[0].mxu0
    %v7692 = vadd.f32 0.0, %v7691
    %7693 = vdwg.mxu0
    %7694 = vmatprep.subr.mxu0 %v6543
    %7695 = vmatpush1.msra.mxu0 %v6542
    %7696 = vmatprep.subr.mxu0 %v6566
    %7697 = vmatpush1.msra.mxu0 %v6563
    %7698 = vmatprep.subr.mxu0 0.0
    %7699 = vmatpush1.msra.mxu0 0.0
    %7700 = vmatprep.subr.mxu0 0.0
    %7701 = vmatpush1.msra.mxu0 0.0
    %7702 = vmatprep.subr.mxu0 0.0
    %7703 = vmatpush1.msra.mxu0 0.0
    %7704 = vmatprep.subr.mxu0 0.0
    %7705 = vmatpush1.msra.mxu0 0.0
    %7706 = vmatprep.subr.mxu0 0.0
    %7707 = vmatpush1.msra.mxu0 0.0
    %7708 = vmatprep.subr.mxu0 0.0
    %7709 = vmatpush1.msra.mxu0 0.0
    %7710 = vmatprep.subr.mxu0 0.0
    %7711 = vmatpush1.msra.mxu0 0.0
    %7712 = vmatprep.subr.mxu0 0.0
    %7713 = vmatpush1.msra.mxu0 0.0
    %7714 = vmatprep.subr.mxu0 0.0
    %7715 = vmatpush1.msra.mxu0 0.0
    %7716 = vmatprep.subr.mxu0 0.0
    %7717 = vmatpush1.msra.mxu0 0.0
    %7718 = vmatprep.subr.mxu0 0.0
    %7719 = vmatpush1.msra.mxu0 0.0
    %7720 = vmatprep.subr.mxu0 0.0
    %7721 = vmatpush1.msra.mxu0 0.0
    %7722 = vmatprep.subr.mxu0 0.0
    %7723 = vmatpush1.msra.mxu0 0.0
    %7724 = vmatprep.subr.mxu0 0.0
    %7725 = vmatpush1.msra.mxu0 0.0
    %7726 = vmatprep.subr.mxu0 0.0
    %7727 = vmatpush1.msra.mxu0 0.0
    %7728 = vmatprep.subr.mxu0 0.0
    %7729 = vmatpush1.msra.mxu0 0.0
    %7730 = vmatprep.subr.mxu0 0.0
    %7731 = vmatpush1.msra.mxu0 0.0
    %7732 = vmatprep.subr.mxu0 0.0
    %7733 = vmatpush1.msra.mxu0 0.0
    %7734 = vmatprep.subr.mxu0 0.0
    %7735 = vmatpush1.msra.mxu0 0.0
    %7736 = vmatprep.subr.mxu0 0.0
    %7737 = vmatpush1.msra.mxu0 0.0
    %7738 = vmatprep.subr.mxu0 0.0
    %7739 = vmatpush1.msra.mxu0 0.0
    %7740 = vmatprep.subr.mxu0 0.0
    %7741 = vmatpush1.msra.mxu0 0.0
    %7742 = vmatprep.subr.mxu0 0.0
    %7743 = vmatpush1.msra.mxu0 0.0
    %7744 = vmatprep.subr.mxu0 0.0
    %7745 = vmatpush1.msra.mxu0 0.0
    %7746 = vmatprep.subr.mxu0 0.0
    %7747 = vmatpush1.msra.mxu0 0.0
    %7748 = vmatprep.subr.mxu0 0.0
    %7749 = vmatpush1.msra.mxu0 0.0
    %7750 = vmatprep.subr.mxu0 0.0
    %7751 = vmatpush1.msra.mxu0 0.0
    %7752 = vmatprep.subr.mxu0 0.0
    %7753 = vmatpush1.msra.mxu0 0.0
    %7754 = vmatprep.subr.mxu0 0.0
    %7755 = vmatpush1.msra.mxu0 0.0
    %7756 = vmatprep.subr.mxu0 0.0
    %7757 = vmatpush1.msra.mxu0 0.0
    %7758 = vmatprep.mubr.f32.mxu0 0.0
    %7759 = vmatmul.mubr.f32.gmra.mrb[0].mxu0 %v7621
    %v7760 = vpop.f32.mrb[0].mxu0
    %v7761 = vadd.f32 0.0, %v7760
    %v7762 = vpop.f32.mrb[0].mxu0
    %v7763 = vadd.f32 0.0, %v7762
    %7764 = vdwg.mxu0
    %7765 = vmatprep.subr.mxu0 %v6545
    %7766 = vmatpush1.msra.mxu0 %v6544
    %7767 = vmatprep.subr.mxu0 %v6572
    %7768 = vmatpush1.msra.mxu0 %v6569
    %7769 = vmatprep.subr.mxu0 0.0
    %7770 = vmatpush1.msra.mxu0 0.0
    %7771 = vmatprep.subr.mxu0 0.0
    %7772 = vmatpush1.msra.mxu0 0.0
    %7773 = vmatprep.subr.mxu0 0.0
    %7774 = vmatpush1.msra.mxu0 0.0
    %7775 = vmatprep.subr.mxu0 0.0
    %7776 = vmatpush1.msra.mxu0 0.0
    %7777 = vmatprep.subr.mxu0 0.0
    %7778 = vmatpush1.msra.mxu0 0.0
    %7779 = vmatprep.subr.mxu0 0.0
    %7780 = vmatpush1.msra.mxu0 0.0
    %7781 = vmatprep.subr.mxu0 0.0
    %7782 = vmatpush1.msra.mxu0 0.0
    %7783 = vmatprep.subr.mxu0 0.0
    %7784 = vmatpush1.msra.mxu0 0.0
    %7785 = vmatprep.subr.mxu0 0.0
    %7786 = vmatpush1.msra.mxu0 0.0
    %7787 = vmatprep.subr.mxu0 0.0
    %7788 = vmatpush1.msra.mxu0 0.0
    %7789 = vmatprep.subr.mxu0 0.0
    %7790 = vmatpush1.msra.mxu0 0.0
    %7791 = vmatprep.subr.mxu0 0.0
    %7792 = vmatpush1.msra.mxu0 0.0
    %7793 = vmatprep.subr.mxu0 0.0
    %7794 = vmatpush1.msra.mxu0 0.0
    %7795 = vmatprep.subr.mxu0 0.0
    %7796 = vmatpush1.msra.mxu0 0.0
    %7797 = vmatprep.subr.mxu0 0.0
    %7798 = vmatpush1.msra.mxu0 0.0
    %7799 = vmatprep.subr.mxu0 0.0
    %7800 = vmatpush1.msra.mxu0 0.0
    %7801 = vmatprep.subr.mxu0 0.0
    %7802 = vmatpush1.msra.mxu0 0.0
    %7803 = vmatprep.subr.mxu0 0.0
    %7804 = vmatpush1.msra.mxu0 0.0
    %7805 = vmatprep.subr.mxu0 0.0
    %7806 = vmatpush1.msra.mxu0 0.0
    %7807 = vmatprep.subr.mxu0 0.0
    %7808 = vmatpush1.msra.mxu0 0.0
    %7809 = vmatprep.subr.mxu0 0.0
    %7810 = vmatpush1.msra.mxu0 0.0
    %7811 = vmatprep.subr.mxu0 0.0
    %7812 = vmatpush1.msra.mxu0 0.0
    %7813 = vmatprep.subr.mxu0 0.0
    %7814 = vmatpush1.msra.mxu0 0.0
    %7815 = vmatprep.subr.mxu0 0.0
    %7816 = vmatpush1.msra.mxu0 0.0
    %7817 = vmatprep.subr.mxu0 0.0
    %7818 = vmatpush1.msra.mxu0 0.0
    %7819 = vmatprep.subr.mxu0 0.0
    %7820 = vmatpush1.msra.mxu0 0.0
    %7821 = vmatprep.subr.mxu0 0.0
    %7822 = vmatpush1.msra.mxu0 0.0
    %7823 = vmatprep.subr.mxu0 0.0
    %7824 = vmatpush1.msra.mxu0 0.0
    %7825 = vmatprep.subr.mxu0 0.0
    %7826 = vmatpush1.msra.mxu0 0.0
    %7827 = vmatprep.subr.mxu0 0.0
    %7828 = vmatpush1.msra.mxu0 0.0
    %7829 = vmatprep.mubr.f32.mxu0 0.0
    %7830 = vmatmul.mubr.f32.gmra.mrb[0].mxu0 %v7621
    %v7831 = vpop.f32.mrb[0].mxu0
    %v7832 = vadd.f32 0.0, %v7831
    %v7833 = vpop.f32.mrb[0].mxu0
    %v7834 = vadd.f32 0.0, %v7833
    %7835 = vdwg.mxu0
    %s7836 = scalar_lea.vmem %s14, 1536
    %v7837 = vld [vmem:[%s7836] sm:$0xff]
    %v7838 = vld [vmem:[%s7836 + $0x8] sm:$0xff]
    %v7839 = vld [vmem:[%s7836 + $0x10] sm:$0xff]
    %v7840 = vld [vmem:[%s7836 + $0x18] sm:$0xff]
    %v7841 = vld [vmem:[%s7836 + $0x20] sm:$0xff]
    %v7842 = vld [vmem:[%s7836 + $0x28] sm:$0xff]
    %v7843 = vld [vmem:[%s7836 + $0x30] sm:$0xff]
    %v7844 = vld [vmem:[%s7836 + $0x38] sm:$0xff]
    %v7845 = vld [vmem:[%s7836 + $0x40] sm:$0xff]
    %v7846 = vld [vmem:[%s7836 + $0x48] sm:$0xff]
    %v7847 = vld [vmem:[%s7836 + $0x50] sm:$0xff]
    %v7848 = vld [vmem:[%s7836 + $0x58] sm:$0xff]
    %v7849 = vld [vmem:[%s7836 + $0x60] sm:$0xff]
    %v7850 = vld [vmem:[%s7836 + $0x68] sm:$0xff]
    %v7851 = vld [vmem:[%s7836 + $0x70] sm:$0xff]
    %v7852 = vld [vmem:[%s7836 + $0x78] sm:$0xff]
    %v7853 = vld [vmem:[%s7836 + $0x80] sm:$0xff]
    %v7854 = vld [vmem:[%s7836 + $0x88] sm:$0xff]
    %v7855 = vld [vmem:[%s7836 + $0x90] sm:$0xff]
    %v7856 = vld [vmem:[%s7836 + $0x98] sm:$0xff]
    %v7857 = vld [vmem:[%s7836 + $0xa0] sm:$0xff]
    %v7858 = vld [vmem:[%s7836 + $0xa8] sm:$0xff]
    %v7859 = vld [vmem:[%s7836 + $0xb0] sm:$0xff]
    %v7860 = vld [vmem:[%s7836 + $0xb8] sm:$0xff]
    %v7861 = vld [vmem:[%s7836 + $0xc0] sm:$0xff]
    %v7862 = vld [vmem:[%s7836 + $0xc8] sm:$0xff]
    %v7863 = vld [vmem:[%s7836 + $0xd0] sm:$0xff]
    %v7864 = vld [vmem:[%s7836 + $0xd8] sm:$0xff]
    %v7865 = vld [vmem:[%s7836 + $0xe0] sm:$0xff]
    %v7866 = vld [vmem:[%s7836 + $0xe8] sm:$0xff]
    %v7867 = vld [vmem:[%s7836 + $0xf0] sm:$0xff]
    %v7868 = vld [vmem:[%s7836 + $0xf8] sm:$0xff]
    %v7869 = vld [vmem:[%s7836 + $0x100] sm:$0xff]
    %v7870 = vld [vmem:[%s7836 + $0x108] sm:$0xff]
    %v7871 = vld [vmem:[%s7836 + $0x110] sm:$0xff]
    %v7872 = vld [vmem:[%s7836 + $0x118] sm:$0xff]
    %v7873 = vld [vmem:[%s7836 + $0x120] sm:$0xff]
    %v7874 = vld [vmem:[%s7836 + $0x128] sm:$0xff]
    %v7875 = vld [vmem:[%s7836 + $0x130] sm:$0xff]
    %v7876 = vld [vmem:[%s7836 + $0x138] sm:$0xff]
    %v7877 = vld [vmem:[%s7836 + $0x140] sm:$0xff]
    %v7878 = vld [vmem:[%s7836 + $0x148] sm:$0xff]
    %v7879 = vld [vmem:[%s7836 + $0x150] sm:$0xff]
    %v7880 = vld [vmem:[%s7836 + $0x158] sm:$0xff]
    %v7881 = vld [vmem:[%s7836 + $0x160] sm:$0xff]
    %v7882 = vld [vmem:[%s7836 + $0x168] sm:$0xff]
    %v7883 = vld [vmem:[%s7836 + $0x170] sm:$0xff]
    %v7884 = vld [vmem:[%s7836 + $0x178] sm:$0xff]
    %v7885 = vld [vmem:[%s7836 + $0x180] sm:$0xff]
    %v7886 = vld [vmem:[%s7836 + $0x188] sm:$0xff]
    %v7887 = vld [vmem:[%s7836 + $0x190] sm:$0xff]
    %v7888 = vld [vmem:[%s7836 + $0x198] sm:$0xff]
    %v7889 = vld [vmem:[%s7836 + $0x1a0] sm:$0xff]
    %v7890 = vld [vmem:[%s7836 + $0x1a8] sm:$0xff]
    %v7891 = vld [vmem:[%s7836 + $0x1b0] sm:$0xff]
    %v7892 = vld [vmem:[%s7836 + $0x1b8] sm:$0xff]
    %v7893 = vld [vmem:[%s7836 + $0x1c0] sm:$0xff]
    %v7894 = vld [vmem:[%s7836 + $0x1c8] sm:$0xff]
    %v7895 = vld [vmem:[%s7836 + $0x1d0] sm:$0xff]
    %v7896 = vld [vmem:[%s7836 + $0x1d8] sm:$0xff]
    %v7897 = vld [vmem:[%s7836 + $0x1e0] sm:$0xff]
    %v7898 = vld [vmem:[%s7836 + $0x1e8] sm:$0xff]
    %v7899 = vld [vmem:[%s7836 + $0x1f0] sm:$0xff]
    %v7900 = vld [vmem:[%s7836 + $0x1f8] sm:$0xff]
    %v7901 = vld [vmem:[%s7836 + $0x200] sm:$0xff]
    %v7902 = vld [vmem:[%s7836 + $0x208] sm:$0xff]
    %v7903 = vld [vmem:[%s7836 + $0x210] sm:$0xff]
    %v7904 = vld [vmem:[%s7836 + $0x218] sm:$0xff]
    %v7905 = vld [vmem:[%s7836 + $0x220] sm:$0xff]
    %v7906 = vld [vmem:[%s7836 + $0x228] sm:$0xff]
    %v7907 = vld [vmem:[%s7836 + $0x230] sm:$0xff]
    %v7908 = vld [vmem:[%s7836 + $0x238] sm:$0xff]
    %v7909 = vld [vmem:[%s7836 + $0x240] sm:$0xff]
    %v7910 = vld [vmem:[%s7836 + $0x248] sm:$0xff]
    %v7911 = vld [vmem:[%s7836 + $0x250] sm:$0xff]
    %v7912 = vld [vmem:[%s7836 + $0x258] sm:$0xff]
    %v7913 = vld [vmem:[%s7836 + $0x260] sm:$0xff]
    %v7914 = vld [vmem:[%s7836 + $0x268] sm:$0xff]
    %v7915 = vld [vmem:[%s7836 + $0x270] sm:$0xff]
    %v7916 = vld [vmem:[%s7836 + $0x278] sm:$0xff]
    %v7917 = vld [vmem:[%s7836 + $0x280] sm:$0xff]
    %v7918 = vld [vmem:[%s7836 + $0x288] sm:$0xff]
    %v7919 = vld [vmem:[%s7836 + $0x290] sm:$0xff]
    %v7920 = vld [vmem:[%s7836 + $0x298] sm:$0xff]
    %v7921 = vld [vmem:[%s7836 + $0x2a0] sm:$0xff]
    %v7922 = vld [vmem:[%s7836 + $0x2a8] sm:$0xff]
    %v7923 = vld [vmem:[%s7836 + $0x2b0] sm:$0xff]
    %v7924 = vld [vmem:[%s7836 + $0x2b8] sm:$0xff]
    %v7925 = vld [vmem:[%s7836 + $0x2c0] sm:$0xff]
    %v7926 = vld [vmem:[%s7836 + $0x2c8] sm:$0xff]
    %v7927 = vld [vmem:[%s7836 + $0x2d0] sm:$0xff]
    %v7928 = vld [vmem:[%s7836 + $0x2d8] sm:$0xff]
    %v7929 = vld [vmem:[%s7836 + $0x2e0] sm:$0xff]
    %v7930 = vld [vmem:[%s7836 + $0x2e8] sm:$0xff]
    %v7931 = vld [vmem:[%s7836 + $0x2f0] sm:$0xff]
    %v7932 = vld [vmem:[%s7836 + $0x2f8] sm:$0xff]
    %7933 = vmatprep.subr.mxu0 0.0
    %7934 = vmatpush1.msra.mxu0 %v7837
    %7935 = vmatprep.subr.mxu0 0.0
    %7936 = vmatpush1.msra.mxu0 %v7838
    %7937 = vmatprep.subr.mxu0 0.0
    %7938 = vmatpush1.msra.mxu0 %v7839
    %7939 = vmatprep.subr.mxu0 0.0
    %7940 = vmatpush1.msra.mxu0 %v7840
    %7941 = vmatprep.subr.mxu0 0.0
    %7942 = vmatpush1.msra.mxu0 %v7841
    %7943 = vmatprep.subr.mxu0 0.0
    %7944 = vmatpush1.msra.mxu0 %v7842
    %7945 = vmatprep.subr.mxu0 0.0
    %7946 = vmatpush1.msra.mxu0 %v7843
    %7947 = vmatprep.subr.mxu0 0.0
    %7948 = vmatpush1.msra.mxu0 %v7844
    %7949 = vmatprep.subr.mxu0 0.0
    %7950 = vmatpush1.msra.mxu0 %v7845
    %7951 = vmatprep.subr.mxu0 0.0
    %7952 = vmatpush1.msra.mxu0 %v7846
    %7953 = vmatprep.subr.mxu0 0.0
    %7954 = vmatpush1.msra.mxu0 %v7847
    %7955 = vmatprep.subr.mxu0 0.0
    %7956 = vmatpush1.msra.mxu0 %v7848
    %7957 = vmatprep.subr.mxu0 0.0
    %7958 = vmatpush1.msra.mxu0 %v7849
    %7959 = vmatprep.subr.mxu0 0.0
    %7960 = vmatpush1.msra.mxu0 %v7850
    %7961 = vmatprep.subr.mxu0 0.0
    %7962 = vmatpush1.msra.mxu0 %v7851
    %7963 = vmatprep.subr.mxu0 0.0
    %7964 = vmatpush1.msra.mxu0 %v7852
    %7965 = vmatprep.subr.mxu0 0.0
    %7966 = vmatpush1.msra.mxu0 %v7853
    %7967 = vmatprep.subr.mxu0 0.0
    %7968 = vmatpush1.msra.mxu0 %v7854
    %7969 = vmatprep.subr.mxu0 0.0
    %7970 = vmatpush1.msra.mxu0 %v7855
    %7971 = vmatprep.subr.mxu0 0.0
    %7972 = vmatpush1.msra.mxu0 %v7856
    %7973 = vmatprep.subr.mxu0 0.0
    %7974 = vmatpush1.msra.mxu0 %v7857
    %7975 = vmatprep.subr.mxu0 0.0
    %7976 = vmatpush1.msra.mxu0 %v7858
    %7977 = vmatprep.subr.mxu0 0.0
    %7978 = vmatpush1.msra.mxu0 %v7859
    %7979 = vmatprep.subr.mxu0 0.0
    %7980 = vmatpush1.msra.mxu0 %v7860
    %7981 = vmatprep.subr.mxu0 0.0
    %7982 = vmatpush1.msra.mxu0 %v7861
    %7983 = vmatprep.subr.mxu0 0.0
    %7984 = vmatpush1.msra.mxu0 %v7862
    %7985 = vmatprep.subr.mxu0 0.0
    %7986 = vmatpush1.msra.mxu0 %v7863
    %7987 = vmatprep.subr.mxu0 0.0
    %7988 = vmatpush1.msra.mxu0 %v7864
    %7989 = vmatprep.subr.mxu0 0.0
    %7990 = vmatpush1.msra.mxu0 %v7865
    %7991 = vmatprep.subr.mxu0 0.0
    %7992 = vmatpush1.msra.mxu0 %v7866
    %7993 = vmatprep.subr.mxu0 0.0
    %7994 = vmatpush1.msra.mxu0 %v7867
    %7995 = vmatprep.subr.mxu0 0.0
    %7996 = vmatpush1.msra.mxu0 %v7868
    %7997 = vmatprep.mubr.f32.mxu0 %v7692
    %7998 = vmatmul.mubr.f32.gmra.mrb[0].mxu0 %v7690
    %v7999 = vpop.f32.mrb[0].mxu0
    %v8000 = vadd.f32 0.0, %v7999
    %v8001 = vpop.f32.mrb[0].mxu0
    %8002 = vdwg.mxu0
    %8003 = vmatprep.subr.mxu0 0.0
    %8004 = vmatpush1.msra.mxu0 %v7869
    %8005 = vmatprep.subr.mxu0 0.0
    %8006 = vmatpush1.msra.mxu0 %v7870
    %8007 = vmatprep.subr.mxu0 0.0
    %8008 = vmatpush1.msra.mxu0 %v7871
    %8009 = vmatprep.subr.mxu0 0.0
    %8010 = vmatpush1.msra.mxu0 %v7872
    %8011 = vmatprep.subr.mxu0 0.0
    %8012 = vmatpush1.msra.mxu0 %v7873
    %8013 = vmatprep.subr.mxu0 0.0
    %8014 = vmatpush1.msra.mxu0 %v7874
    %8015 = vmatprep.subr.mxu0 0.0
    %8016 = vmatpush1.msra.mxu0 %v7875
    %8017 = vmatprep.subr.mxu0 0.0
    %8018 = vmatpush1.msra.mxu0 %v7876
    %8019 = vmatprep.subr.mxu0 0.0
    %8020 = vmatpush1.msra.mxu0 %v7877
    %8021 = vmatprep.subr.mxu0 0.0
    %8022 = vmatpush1.msra.mxu0 %v7878
    %8023 = vmatprep.subr.mxu0 0.0
    %8024 = vmatpush1.msra.mxu0 %v7879
    %8025 = vmatprep.subr.mxu0 0.0
    %8026 = vmatpush1.msra.mxu0 %v7880
    %8027 = vmatprep.subr.mxu0 0.0
    %8028 = vmatpush1.msra.mxu0 %v7881
    %8029 = vmatprep.subr.mxu0 0.0
    %8030 = vmatpush1.msra.mxu0 %v7882
    %8031 = vmatprep.subr.mxu0 0.0
    %8032 = vmatpush1.msra.mxu0 %v7883
    %8033 = vmatprep.subr.mxu0 0.0
    %8034 = vmatpush1.msra.mxu0 %v7884
    %8035 = vmatprep.subr.mxu0 0.0
    %8036 = vmatpush1.msra.mxu0 %v7885
    %8037 = vmatprep.subr.mxu0 0.0
    %8038 = vmatpush1.msra.mxu0 %v7886
    %8039 = vmatprep.subr.mxu0 0.0
    %8040 = vmatpush1.msra.mxu0 %v7887
    %8041 = vmatprep.subr.mxu0 0.0
    %8042 = vmatpush1.msra.mxu0 %v7888
    %8043 = vmatprep.subr.mxu0 0.0
    %8044 = vmatpush1.msra.mxu0 %v7889
    %8045 = vmatprep.subr.mxu0 0.0
    %8046 = vmatpush1.msra.mxu0 %v7890
    %8047 = vmatprep.subr.mxu0 0.0
    %8048 = vmatpush1.msra.mxu0 %v7891
    %8049 = vmatprep.subr.mxu0 0.0
    %8050 = vmatpush1.msra.mxu0 %v7892
    %8051 = vmatprep.subr.mxu0 0.0
    %8052 = vmatpush1.msra.mxu0 %v7893
    %8053 = vmatprep.subr.mxu0 0.0
    %8054 = vmatpush1.msra.mxu0 %v7894
    %8055 = vmatprep.subr.mxu0 0.0
    %8056 = vmatpush1.msra.mxu0 %v7895
    %8057 = vmatprep.subr.mxu0 0.0
    %8058 = vmatpush1.msra.mxu0 %v7896
    %8059 = vmatprep.subr.mxu0 0.0
    %8060 = vmatpush1.msra.mxu0 %v7897
    %8061 = vmatprep.subr.mxu0 0.0
    %8062 = vmatpush1.msra.mxu0 %v7898
    %8063 = vmatprep.subr.mxu0 0.0
    %8064 = vmatpush1.msra.mxu0 %v7899
    %8065 = vmatprep.subr.mxu0 0.0
    %8066 = vmatpush1.msra.mxu0 %v7900
    %8067 = vmatprep.mubr.f32.mxu0 %v7763
    %8068 = vmatmul.mubr.f32.gmra.mrb[0].mxu0 %v7761
    %v8069 = vpop.f32.mrb[0].mxu0
    %v8070 = vadd.f32 %v8000, %v8069
    %v8071 = vpop.f32.mrb[0].mxu0
    %8072 = vdwg.mxu0
    %8073 = vmatprep.subr.mxu0 0.0
    %8074 = vmatpush1.msra.mxu0 %v7901
    %8075 = vmatprep.subr.mxu0 0.0
    %8076 = vmatpush1.msra.mxu0 %v7902
    %8077 = vmatprep.subr.mxu0 0.0
    %8078 = vmatpush1.msra.mxu0 %v7903
    %8079 = vmatprep.subr.mxu0 0.0
    %8080 = vmatpush1.msra.mxu0 %v7904
    %8081 = vmatprep.subr.mxu0 0.0
    %8082 = vmatpush1.msra.mxu0 %v7905
    %8083 = vmatprep.subr.mxu0 0.0
    %8084 = vmatpush1.msra.mxu0 %v7906
    %8085 = vmatprep.subr.mxu0 0.0
    %8086 = vmatpush1.msra.mxu0 %v7907
    %8087 = vmatprep.subr.mxu0 0.0
    %8088 = vmatpush1.msra.mxu0 %v7908
    %8089 = vmatprep.subr.mxu0 0.0
    %8090 = vmatpush1.msra.mxu0 %v7909
    %8091 = vmatprep.subr.mxu0 0.0
    %8092 = vmatpush1.msra.mxu0 %v7910
    %8093 = vmatprep.subr.mxu0 0.0
    %8094 = vmatpush1.msra.mxu0 %v7911
    %8095 = vmatprep.subr.mxu0 0.0
    %8096 = vmatpush1.msra.mxu0 %v7912
    %8097 = vmatprep.subr.mxu0 0.0
    %8098 = vmatpush1.msra.mxu0 %v7913
    %8099 = vmatprep.subr.mxu0 0.0
    %8100 = vmatpush1.msra.mxu0 %v7914
    %8101 = vmatprep.subr.mxu0 0.0
    %8102 = vmatpush1.msra.mxu0 %v7915
    %8103 = vmatprep.subr.mxu0 0.0
    %8104 = vmatpush1.msra.mxu0 %v7916
    %8105 = vmatprep.subr.mxu0 0.0
    %8106 = vmatpush1.msra.mxu0 %v7917
    %8107 = vmatprep.subr.mxu0 0.0
    %8108 = vmatpush1.msra.mxu0 %v7918
    %8109 = vmatprep.subr.mxu0 0.0
    %8110 = vmatpush1.msra.mxu0 %v7919
    %8111 = vmatprep.subr.mxu0 0.0
    %8112 = vmatpush1.msra.mxu0 %v7920
    %8113 = vmatprep.subr.mxu0 0.0
    %8114 = vmatpush1.msra.mxu0 %v7921
    %8115 = vmatprep.subr.mxu0 0.0
    %8116 = vmatpush1.msra.mxu0 %v7922
    %8117 = vmatprep.subr.mxu0 0.0
    %8118 = vmatpush1.msra.mxu0 %v7923
    %8119 = vmatprep.subr.mxu0 0.0
    %8120 = vmatpush1.msra.mxu0 %v7924
    %8121 = vmatprep.subr.mxu0 0.0
    %8122 = vmatpush1.msra.mxu0 %v7925
    %8123 = vmatprep.subr.mxu0 0.0
    %8124 = vmatpush1.msra.mxu0 %v7926
    %8125 = vmatprep.subr.mxu0 0.0
    %8126 = vmatpush1.msra.mxu0 %v7927
    %8127 = vmatprep.subr.mxu0 0.0
    %8128 = vmatpush1.msra.mxu0 %v7928
    %8129 = vmatprep.subr.mxu0 0.0
    %8130 = vmatpush1.msra.mxu0 %v7929
    %8131 = vmatprep.subr.mxu0 0.0
    %8132 = vmatpush1.msra.mxu0 %v7930
    %8133 = vmatprep.subr.mxu0 0.0
    %8134 = vmatpush1.msra.mxu0 %v7931
    %8135 = vmatprep.subr.mxu0 0.0
    %8136 = vmatpush1.msra.mxu0 %v7932
    %8137 = vmatprep.mubr.f32.mxu0 %v7834
    %8138 = vmatmul.mubr.f32.gmra.mrb[0].mxu0 %v7832
    %v8139 = vpop.f32.mrb[0].mxu0
    %v8140 = vadd.f32 %v8070, %v8139
    %v8141 = vpop.f32.mrb[0].mxu0
    %8142 = vdwg.mxu0
    %v8143 = vadd.f32 %v7615, %v8140
    %s8144 = scalar_lea.vmem %s13, 6
    %v8145 = vld [vmem:[%s8144] sm:$0x3]
    %v8147 = vsel %vm3718, %v8145, 0
    %8149 = vmatprep.subr.mxu0 %v6541
    %8150 = vmatpush1.msra.mxu0 %v6540
    %8151 = vmatprep.subr.mxu0 %v6560
    %8152 = vmatpush1.msra.mxu0 %v6557
    %8153 = vmatprep.subr.mxu0 0.0
    %8154 = vmatpush1.msra.mxu0 0.0
    %8155 = vmatprep.subr.mxu0 0.0
    %8156 = vmatpush1.msra.mxu0 0.0
    %8157 = vmatprep.subr.mxu0 0.0
    %8158 = vmatpush1.msra.mxu0 0.0
    %8159 = vmatprep.subr.mxu0 0.0
    %8160 = vmatpush1.msra.mxu0 0.0
    %8161 = vmatprep.subr.mxu0 0.0
    %8162 = vmatpush1.msra.mxu0 0.0
    %8163 = vmatprep.subr.mxu0 0.0
    %8164 = vmatpush1.msra.mxu0 0.0
    %8165 = vmatprep.subr.mxu0 0.0
    %8166 = vmatpush1.msra.mxu0 0.0
    %8167 = vmatprep.subr.mxu0 0.0
    %8168 = vmatpush1.msra.mxu0 0.0
    %8169 = vmatprep.subr.mxu0 0.0
    %8170 = vmatpush1.msra.mxu0 0.0
    %8171 = vmatprep.subr.mxu0 0.0
    %8172 = vmatpush1.msra.mxu0 0.0
    %8173 = vmatprep.subr.mxu0 0.0
    %8174 = vmatpush1.msra.mxu0 0.0
    %8175 = vmatprep.subr.mxu0 0.0
    %8176 = vmatpush1.msra.mxu0 0.0
    %8177 = vmatprep.subr.mxu0 0.0
    %8178 = vmatpush1.msra.mxu0 0.0
    %8179 = vmatprep.subr.mxu0 0.0
    %8180 = vmatpush1.msra.mxu0 0.0
    %8181 = vmatprep.subr.mxu0 0.0
    %8182 = vmatpush1.msra.mxu0 0.0
    %8183 = vmatprep.subr.mxu0 0.0
    %8184 = vmatpush1.msra.mxu0 0.0
    %8185 = vmatprep.subr.mxu0 0.0
    %8186 = vmatpush1.msra.mxu0 0.0
    %8187 = vmatprep.subr.mxu0 0.0
    %8188 = vmatpush1.msra.mxu0 0.0
    %8189 = vmatprep.subr.mxu0 0.0
    %8190 = vmatpush1.msra.mxu0 0.0
    %8191 = vmatprep.subr.mxu0 0.0
    %8192 = vmatpush1.msra.mxu0 0.0
    %8193 = vmatprep.subr.mxu0 0.0
    %8194 = vmatpush1.msra.mxu0 0.0
    %8195 = vmatprep.subr.mxu0 0.0
    %8196 = vmatpush1.msra.mxu0 0.0
    %8197 = vmatprep.subr.mxu0 0.0
    %8198 = vmatpush1.msra.mxu0 0.0
    %8199 = vmatprep.subr.mxu0 0.0
    %8200 = vmatpush1.msra.mxu0 0.0
    %8201 = vmatprep.subr.mxu0 0.0
    %8202 = vmatpush1.msra.mxu0 0.0
    %8203 = vmatprep.subr.mxu0 0.0
    %8204 = vmatpush1.msra.mxu0 0.0
    %8205 = vmatprep.subr.mxu0 0.0
    %8206 = vmatpush1.msra.mxu0 0.0
    %8207 = vmatprep.subr.mxu0 0.0
    %8208 = vmatpush1.msra.mxu0 0.0
    %8209 = vmatprep.subr.mxu0 0.0
    %8210 = vmatpush1.msra.mxu0 0.0
    %8211 = vmatprep.subr.mxu0 0.0
    %8212 = vmatpush1.msra.mxu0 0.0
    %8213 = vmatprep.mubr.f32.mxu0 0.0
    %8214 = vmatmul.mubr.f32.gmra.mrb[0].mxu0 %v8147
    %v8215 = vpop.f32.mrb[0].mxu0
    %v8216 = vadd.f32 0.0, %v8215
    %v8217 = vpop.f32.mrb[0].mxu0
    %v8218 = vadd.f32 0.0, %v8217
    %8219 = vdwg.mxu0
    %8220 = vmatprep.subr.mxu0 %v6543
    %8221 = vmatpush1.msra.mxu0 %v6542
    %8222 = vmatprep.subr.mxu0 %v6566
    %8223 = vmatpush1.msra.mxu0 %v6563
    %8224 = vmatprep.subr.mxu0 0.0
    %8225 = vmatpush1.msra.mxu0 0.0
    %8226 = vmatprep.subr.mxu0 0.0
    %8227 = vmatpush1.msra.mxu0 0.0
    %8228 = vmatprep.subr.mxu0 0.0
    %8229 = vmatpush1.msra.mxu0 0.0
    %8230 = vmatprep.subr.mxu0 0.0
    %8231 = vmatpush1.msra.mxu0 0.0
    %8232 = vmatprep.subr.mxu0 0.0
    %8233 = vmatpush1.msra.mxu0 0.0
    %8234 = vmatprep.subr.mxu0 0.0
    %8235 = vmatpush1.msra.mxu0 0.0
    %8236 = vmatprep.subr.mxu0 0.0
    %8237 = vmatpush1.msra.mxu0 0.0
    %8238 = vmatprep.subr.mxu0 0.0
    %8239 = vmatpush1.msra.mxu0 0.0
    %8240 = vmatprep.subr.mxu0 0.0
    %8241 = vmatpush1.msra.mxu0 0.0
    %8242 = vmatprep.subr.mxu0 0.0
    %8243 = vmatpush1.msra.mxu0 0.0
    %8244 = vmatprep.subr.mxu0 0.0
    %8245 = vmatpush1.msra.mxu0 0.0
    %8246 = vmatprep.subr.mxu0 0.0
    %8247 = vmatpush1.msra.mxu0 0.0
    %8248 = vmatprep.subr.mxu0 0.0
    %8249 = vmatpush1.msra.mxu0 0.0
    %8250 = vmatprep.subr.mxu0 0.0
    %8251 = vmatpush1.msra.mxu0 0.0
    %8252 = vmatprep.subr.mxu0 0.0
    %8253 = vmatpush1.msra.mxu0 0.0
    %8254 = vmatprep.subr.mxu0 0.0
    %8255 = vmatpush1.msra.mxu0 0.0
    %8256 = vmatprep.subr.mxu0 0.0
    %8257 = vmatpush1.msra.mxu0 0.0
    %8258 = vmatprep.subr.mxu0 0.0
    %8259 = vmatpush1.msra.mxu0 0.0
    %8260 = vmatprep.subr.mxu0 0.0
    %8261 = vmatpush1.msra.mxu0 0.0
    %8262 = vmatprep.subr.mxu0 0.0
    %8263 = vmatpush1.msra.mxu0 0.0
    %8264 = vmatprep.subr.mxu0 0.0
    %8265 = vmatpush1.msra.mxu0 0.0
    %8266 = vmatprep.subr.mxu0 0.0
    %8267 = vmatpush1.msra.mxu0 0.0
    %8268 = vmatprep.subr.mxu0 0.0
    %8269 = vmatpush1.msra.mxu0 0.0
    %8270 = vmatprep.subr.mxu0 0.0
    %8271 = vmatpush1.msra.mxu0 0.0
    %8272 = vmatprep.subr.mxu0 0.0
    %8273 = vmatpush1.msra.mxu0 0.0
    %8274 = vmatprep.subr.mxu0 0.0
    %8275 = vmatpush1.msra.mxu0 0.0
    %8276 = vmatprep.subr.mxu0 0.0
    %8277 = vmatpush1.msra.mxu0 0.0
    %8278 = vmatprep.subr.mxu0 0.0
    %8279 = vmatpush1.msra.mxu0 0.0
    %8280 = vmatprep.subr.mxu0 0.0
    %8281 = vmatpush1.msra.mxu0 0.0
    %8282 = vmatprep.subr.mxu0 0.0
    %8283 = vmatpush1.msra.mxu0 0.0
    %8284 = vmatprep.mubr.f32.mxu0 0.0
    %8285 = vmatmul.mubr.f32.gmra.mrb[0].mxu0 %v8147
    %v8286 = vpop.f32.mrb[0].mxu0
    %v8287 = vadd.f32 0.0, %v8286
    %v8288 = vpop.f32.mrb[0].mxu0
    %v8289 = vadd.f32 0.0, %v8288
    %8290 = vdwg.mxu0
    %8291 = vmatprep.subr.mxu0 %v6545
    %8292 = vmatpush1.msra.mxu0 %v6544
    %8293 = vmatprep.subr.mxu0 %v6572
    %8294 = vmatpush1.msra.mxu0 %v6569
    %8295 = vmatprep.subr.mxu0 0.0
    %8296 = vmatpush1.msra.mxu0 0.0
    %8297 = vmatprep.subr.mxu0 0.0
    %8298 = vmatpush1.msra.mxu0 0.0
    %8299 = vmatprep.subr.mxu0 0.0
    %8300 = vmatpush1.msra.mxu0 0.0
    %8301 = vmatprep.subr.mxu0 0.0
    %8302 = vmatpush1.msra.mxu0 0.0
    %8303 = vmatprep.subr.mxu0 0.0
    %8304 = vmatpush1.msra.mxu0 0.0
    %8305 = vmatprep.subr.mxu0 0.0
    %8306 = vmatpush1.msra.mxu0 0.0
    %8307 = vmatprep.subr.mxu0 0.0
    %8308 = vmatpush1.msra.mxu0 0.0
    %8309 = vmatprep.subr.mxu0 0.0
    %8310 = vmatpush1.msra.mxu0 0.0
    %8311 = vmatprep.subr.mxu0 0.0
    %8312 = vmatpush1.msra.mxu0 0.0
    %8313 = vmatprep.subr.mxu0 0.0
    %8314 = vmatpush1.msra.mxu0 0.0
    %8315 = vmatprep.subr.mxu0 0.0
    %8316 = vmatpush1.msra.mxu0 0.0
    %8317 = vmatprep.subr.mxu0 0.0
    %8318 = vmatpush1.msra.mxu0 0.0
    %8319 = vmatprep.subr.mxu0 0.0
    %8320 = vmatpush1.msra.mxu0 0.0
    %8321 = vmatprep.subr.mxu0 0.0
    %8322 = vmatpush1.msra.mxu0 0.0
    %8323 = vmatprep.subr.mxu0 0.0
    %8324 = vmatpush1.msra.mxu0 0.0
    %8325 = vmatprep.subr.mxu0 0.0
    %8326 = vmatpush1.msra.mxu0 0.0
    %8327 = vmatprep.subr.mxu0 0.0
    %8328 = vmatpush1.msra.mxu0 0.0
    %8329 = vmatprep.subr.mxu0 0.0
    %8330 = vmatpush1.msra.mxu0 0.0
    %8331 = vmatprep.subr.mxu0 0.0
    %8332 = vmatpush1.msra.mxu0 0.0
    %8333 = vmatprep.subr.mxu0 0.0
    %8334 = vmatpush1.msra.mxu0 0.0
    %8335 = vmatprep.subr.mxu0 0.0
    %8336 = vmatpush1.msra.mxu0 0.0
    %8337 = vmatprep.subr.mxu0 0.0
    %8338 = vmatpush1.msra.mxu0 0.0
    %8339 = vmatprep.subr.mxu0 0.0
    %8340 = vmatpush1.msra.mxu0 0.0
    %8341 = vmatprep.subr.mxu0 0.0
    %8342 = vmatpush1.msra.mxu0 0.0
    %8343 = vmatprep.subr.mxu0 0.0
    %8344 = vmatpush1.msra.mxu0 0.0
    %8345 = vmatprep.subr.mxu0 0.0
    %8346 = vmatpush1.msra.mxu0 0.0
    %8347 = vmatprep.subr.mxu0 0.0
    %8348 = vmatpush1.msra.mxu0 0.0
    %8349 = vmatprep.subr.mxu0 0.0
    %8350 = vmatpush1.msra.mxu0 0.0
    %8351 = vmatprep.subr.mxu0 0.0
    %8352 = vmatpush1.msra.mxu0 0.0
    %8353 = vmatprep.subr.mxu0 0.0
    %8354 = vmatpush1.msra.mxu0 0.0
    %8355 = vmatprep.mubr.f32.mxu0 0.0
    %8356 = vmatmul.mubr.f32.gmra.mrb[0].mxu0 %v8147
    %v8357 = vpop.f32.mrb[0].mxu0
    %v8358 = vadd.f32 0.0, %v8357
    %v8359 = vpop.f32.mrb[0].mxu0
    %v8360 = vadd.f32 0.0, %v8359
    %8361 = vdwg.mxu0
    %s8362 = scalar_lea.vmem %s14, 2304
    %v8363 = vld [vmem:[%s8362] sm:$0xff]
    %v8364 = vld [vmem:[%s8362 + $0x8] sm:$0xff]
    %v8365 = vld [vmem:[%s8362 + $0x10] sm:$0xff]
    %v8366 = vld [vmem:[%s8362 + $0x18] sm:$0xff]
    %v8367 = vld [vmem:[%s8362 + $0x20] sm:$0xff]
    %v8368 = vld [vmem:[%s8362 + $0x28] sm:$0xff]
    %v8369 = vld [vmem:[%s8362 + $0x30] sm:$0xff]
    %v8370 = vld [vmem:[%s8362 + $0x38] sm:$0xff]
    %v8371 = vld [vmem:[%s8362 + $0x40] sm:$0xff]
    %v8372 = vld [vmem:[%s8362 + $0x48] sm:$0xff]
    %v8373 = vld [vmem:[%s8362 + $0x50] sm:$0xff]
    %v8374 = vld [vmem:[%s8362 + $0x58] sm:$0xff]
    %v8375 = vld [vmem:[%s8362 + $0x60] sm:$0xff]
    %v8376 = vld [vmem:[%s8362 + $0x68] sm:$0xff]
    %v8377 = vld [vmem:[%s8362 + $0x70] sm:$0xff]
    %v8378 = vld [vmem:[%s8362 + $0x78] sm:$0xff]
    %v8379 = vld [vmem:[%s8362 + $0x80] sm:$0xff]
    %v8380 = vld [vmem:[%s8362 + $0x88] sm:$0xff]
    %v8381 = vld [vmem:[%s8362 + $0x90] sm:$0xff]
    %v8382 = vld [vmem:[%s8362 + $0x98] sm:$0xff]
    %v8383 = vld [vmem:[%s8362 + $0xa0] sm:$0xff]
    %v8384 = vld [vmem:[%s8362 + $0xa8] sm:$0xff]
    %v8385 = vld [vmem:[%s8362 + $0xb0] sm:$0xff]
    %v8386 = vld [vmem:[%s8362 + $0xb8] sm:$0xff]
    %v8387 = vld [vmem:[%s8362 + $0xc0] sm:$0xff]
    %v8388 = vld [vmem:[%s8362 + $0xc8] sm:$0xff]
    %v8389 = vld [vmem:[%s8362 + $0xd0] sm:$0xff]
    %v8390 = vld [vmem:[%s8362 + $0xd8] sm:$0xff]
    %v8391 = vld [vmem:[%s8362 + $0xe0] sm:$0xff]
    %v8392 = vld [vmem:[%s8362 + $0xe8] sm:$0xff]
    %v8393 = vld [vmem:[%s8362 + $0xf0] sm:$0xff]
    %v8394 = vld [vmem:[%s8362 + $0xf8] sm:$0xff]
    %v8395 = vld [vmem:[%s8362 + $0x100] sm:$0xff]
    %v8396 = vld [vmem:[%s8362 + $0x108] sm:$0xff]
    %v8397 = vld [vmem:[%s8362 + $0x110] sm:$0xff]
    %v8398 = vld [vmem:[%s8362 + $0x118] sm:$0xff]
    %v8399 = vld [vmem:[%s8362 + $0x120] sm:$0xff]
    %v8400 = vld [vmem:[%s8362 + $0x128] sm:$0xff]
    %v8401 = vld [vmem:[%s8362 + $0x130] sm:$0xff]
    %v8402 = vld [vmem:[%s8362 + $0x138] sm:$0xff]
    %v8403 = vld [vmem:[%s8362 + $0x140] sm:$0xff]
    %v8404 = vld [vmem:[%s8362 + $0x148] sm:$0xff]
    %v8405 = vld [vmem:[%s8362 + $0x150] sm:$0xff]
    %v8406 = vld [vmem:[%s8362 + $0x158] sm:$0xff]
    %v8407 = vld [vmem:[%s8362 + $0x160] sm:$0xff]
    %v8408 = vld [vmem:[%s8362 + $0x168] sm:$0xff]
    %v8409 = vld [vmem:[%s8362 + $0x170] sm:$0xff]
    %v8410 = vld [vmem:[%s8362 + $0x178] sm:$0xff]
    %v8411 = vld [vmem:[%s8362 + $0x180] sm:$0xff]
    %v8412 = vld [vmem:[%s8362 + $0x188] sm:$0xff]
    %v8413 = vld [vmem:[%s8362 + $0x190] sm:$0xff]
    %v8414 = vld [vmem:[%s8362 + $0x198] sm:$0xff]
    %v8415 = vld [vmem:[%s8362 + $0x1a0] sm:$0xff]
    %v8416 = vld [vmem:[%s8362 + $0x1a8] sm:$0xff]
    %v8417 = vld [vmem:[%s8362 + $0x1b0] sm:$0xff]
    %v8418 = vld [vmem:[%s8362 + $0x1b8] sm:$0xff]
    %v8419 = vld [vmem:[%s8362 + $0x1c0] sm:$0xff]
    %v8420 = vld [vmem:[%s8362 + $0x1c8] sm:$0xff]
    %v8421 = vld [vmem:[%s8362 + $0x1d0] sm:$0xff]
    %v8422 = vld [vmem:[%s8362 + $0x1d8] sm:$0xff]
    %v8423 = vld [vmem:[%s8362 + $0x1e0] sm:$0xff]
    %v8424 = vld [vmem:[%s8362 + $0x1e8] sm:$0xff]
    %v8425 = vld [vmem:[%s8362 + $0x1f0] sm:$0xff]
    %v8426 = vld [vmem:[%s8362 + $0x1f8] sm:$0xff]
    %v8427 = vld [vmem:[%s8362 + $0x200] sm:$0xff]
    %v8428 = vld [vmem:[%s8362 + $0x208] sm:$0xff]
    %v8429 = vld [vmem:[%s8362 + $0x210] sm:$0xff]
    %v8430 = vld [vmem:[%s8362 + $0x218] sm:$0xff]
    %v8431 = vld [vmem:[%s8362 + $0x220] sm:$0xff]
    %v8432 = vld [vmem:[%s8362 + $0x228] sm:$0xff]
    %v8433 = vld [vmem:[%s8362 + $0x230] sm:$0xff]
    %v8434 = vld [vmem:[%s8362 + $0x238] sm:$0xff]
    %v8435 = vld [vmem:[%s8362 + $0x240] sm:$0xff]
    %v8436 = vld [vmem:[%s8362 + $0x248] sm:$0xff]
    %v8437 = vld [vmem:[%s8362 + $0x250] sm:$0xff]
    %v8438 = vld [vmem:[%s8362 + $0x258] sm:$0xff]
    %v8439 = vld [vmem:[%s8362 + $0x260] sm:$0xff]
    %v8440 = vld [vmem:[%s8362 + $0x268] sm:$0xff]
    %v8441 = vld [vmem:[%s8362 + $0x270] sm:$0xff]
    %v8442 = vld [vmem:[%s8362 + $0x278] sm:$0xff]
    %v8443 = vld [vmem:[%s8362 + $0x280] sm:$0xff]
    %v8444 = vld [vmem:[%s8362 + $0x288] sm:$0xff]
    %v8445 = vld [vmem:[%s8362 + $0x290] sm:$0xff]
    %v8446 = vld [vmem:[%s8362 + $0x298] sm:$0xff]
    %v8447 = vld [vmem:[%s8362 + $0x2a0] sm:$0xff]
    %v8448 = vld [vmem:[%s8362 + $0x2a8] sm:$0xff]
    %v8449 = vld [vmem:[%s8362 + $0x2b0] sm:$0xff]
    %v8450 = vld [vmem:[%s8362 + $0x2b8] sm:$0xff]
    %v8451 = vld [vmem:[%s8362 + $0x2c0] sm:$0xff]
    %v8452 = vld [vmem:[%s8362 + $0x2c8] sm:$0xff]
    %v8453 = vld [vmem:[%s8362 + $0x2d0] sm:$0xff]
    %v8454 = vld [vmem:[%s8362 + $0x2d8] sm:$0xff]
    %v8455 = vld [vmem:[%s8362 + $0x2e0] sm:$0xff]
    %v8456 = vld [vmem:[%s8362 + $0x2e8] sm:$0xff]
    %v8457 = vld [vmem:[%s8362 + $0x2f0] sm:$0xff]
    %v8458 = vld [vmem:[%s8362 + $0x2f8] sm:$0xff]
    %8459 = vmatprep.subr.mxu0 0.0
    %8460 = vmatpush1.msra.mxu0 %v8363
    %8461 = vmatprep.subr.mxu0 0.0
    %8462 = vmatpush1.msra.mxu0 %v8364
    %8463 = vmatprep.subr.mxu0 0.0
    %8464 = vmatpush1.msra.mxu0 %v8365
    %8465 = vmatprep.subr.mxu0 0.0
    %8466 = vmatpush1.msra.mxu0 %v8366
    %8467 = vmatprep.subr.mxu0 0.0
    %8468 = vmatpush1.msra.mxu0 %v8367
    %8469 = vmatprep.subr.mxu0 0.0
    %8470 = vmatpush1.msra.mxu0 %v8368
    %8471 = vmatprep.subr.mxu0 0.0
    %8472 = vmatpush1.msra.mxu0 %v8369
    %8473 = vmatprep.subr.mxu0 0.0
    %8474 = vmatpush1.msra.mxu0 %v8370
    %8475 = vmatprep.subr.mxu0 0.0
    %8476 = vmatpush1.msra.mxu0 %v8371
    %8477 = vmatprep.subr.mxu0 0.0
    %8478 = vmatpush1.msra.mxu0 %v8372
    %8479 = vmatprep.subr.mxu0 0.0
    %8480 = vmatpush1.msra.mxu0 %v8373
    %8481 = vmatprep.subr.mxu0 0.0
    %8482 = vmatpush1.msra.mxu0 %v8374
    %8483 = vmatprep.subr.mxu0 0.0
    %8484 = vmatpush1.msra.mxu0 %v8375
    %8485 = vmatprep.subr.mxu0 0.0
    %8486 = vmatpush1.msra.mxu0 %v8376
    %8487 = vmatprep.subr.mxu0 0.0
    %8488 = vmatpush1.msra.mxu0 %v8377
    %8489 = vmatprep.subr.mxu0 0.0
    %8490 = vmatpush1.msra.mxu0 %v8378
    %8491 = vmatprep.subr.mxu0 0.0
    %8492 = vmatpush1.msra.mxu0 %v8379
    %8493 = vmatprep.subr.mxu0 0.0
    %8494 = vmatpush1.msra.mxu0 %v8380
    %8495 = vmatprep.subr.mxu0 0.0
    %8496 = vmatpush1.msra.mxu0 %v8381
    %8497 = vmatprep.subr.mxu0 0.0
    %8498 = vmatpush1.msra.mxu0 %v8382
    %8499 = vmatprep.subr.mxu0 0.0
    %8500 = vmatpush1.msra.mxu0 %v8383
    %8501 = vmatprep.subr.mxu0 0.0
    %8502 = vmatpush1.msra.mxu0 %v8384
    %8503 = vmatprep.subr.mxu0 0.0
    %8504 = vmatpush1.msra.mxu0 %v8385
    %8505 = vmatprep.subr.mxu0 0.0
    %8506 = vmatpush1.msra.mxu0 %v8386
    %8507 = vmatprep.subr.mxu0 0.0
    %8508 = vmatpush1.msra.mxu0 %v8387
    %8509 = vmatprep.subr.mxu0 0.0
    %8510 = vmatpush1.msra.mxu0 %v8388
    %8511 = vmatprep.subr.mxu0 0.0
    %8512 = vmatpush1.msra.mxu0 %v8389
    %8513 = vmatprep.subr.mxu0 0.0
    %8514 = vmatpush1.msra.mxu0 %v8390
    %8515 = vmatprep.subr.mxu0 0.0
    %8516 = vmatpush1.msra.mxu0 %v8391
    %8517 = vmatprep.subr.mxu0 0.0
    %8518 = vmatpush1.msra.mxu0 %v8392
    %8519 = vmatprep.subr.mxu0 0.0
    %8520 = vmatpush1.msra.mxu0 %v8393
    %8521 = vmatprep.subr.mxu0 0.0
    %8522 = vmatpush1.msra.mxu0 %v8394
    %8523 = vmatprep.mubr.f32.mxu0 %v8218
    %8524 = vmatmul.mubr.f32.gmra.mrb[0].mxu0 %v8216
    %v8525 = vpop.f32.mrb[0].mxu0
    %v8526 = vadd.f32 0.0, %v8525
    %v8527 = vpop.f32.mrb[0].mxu0
    %8528 = vdwg.mxu0
    %8529 = vmatprep.subr.mxu0 0.0
    %8530 = vmatpush1.msra.mxu0 %v8395
    %8531 = vmatprep.subr.mxu0 0.0
    %8532 = vmatpush1.msra.mxu0 %v8396
    %8533 = vmatprep.subr.mxu0 0.0
    %8534 = vmatpush1.msra.mxu0 %v8397
    %8535 = vmatprep.subr.mxu0 0.0
    %8536 = vmatpush1.msra.mxu0 %v8398
    %8537 = vmatprep.subr.mxu0 0.0
    %8538 = vmatpush1.msra.mxu0 %v8399
    %8539 = vmatprep.subr.mxu0 0.0
    %8540 = vmatpush1.msra.mxu0 %v8400
    %8541 = vmatprep.subr.mxu0 0.0
    %8542 = vmatpush1.msra.mxu0 %v8401
    %8543 = vmatprep.subr.mxu0 0.0
    %8544 = vmatpush1.msra.mxu0 %v8402
    %8545 = vmatprep.subr.mxu0 0.0
    %8546 = vmatpush1.msra.mxu0 %v8403
    %8547 = vmatprep.subr.mxu0 0.0
    %8548 = vmatpush1.msra.mxu0 %v8404
    %8549 = vmatprep.subr.mxu0 0.0
    %8550 = vmatpush1.msra.mxu0 %v8405
    %8551 = vmatprep.subr.mxu0 0.0
    %8552 = vmatpush1.msra.mxu0 %v8406
    %8553 = vmatprep.subr.mxu0 0.0
    %8554 = vmatpush1.msra.mxu0 %v8407
    %8555 = vmatprep.subr.mxu0 0.0
    %8556 = vmatpush1.msra.mxu0 %v8408
    %8557 = vmatprep.subr.mxu0 0.0
    %8558 = vmatpush1.msra.mxu0 %v8409
    %8559 = vmatprep.subr.mxu0 0.0
    %8560 = vmatpush1.msra.mxu0 %v8410
    %8561 = vmatprep.subr.mxu0 0.0
    %8562 = vmatpush1.msra.mxu0 %v8411
    %8563 = vmatprep.subr.mxu0 0.0
    %8564 = vmatpush1.msra.mxu0 %v8412
    %8565 = vmatprep.subr.mxu0 0.0
    %8566 = vmatpush1.msra.mxu0 %v8413
    %8567 = vmatprep.subr.mxu0 0.0
    %8568 = vmatpush1.msra.mxu0 %v8414
    %8569 = vmatprep.subr.mxu0 0.0
    %8570 = vmatpush1.msra.mxu0 %v8415
    %8571 = vmatprep.subr.mxu0 0.0
    %8572 = vmatpush1.msra.mxu0 %v8416
    %8573 = vmatprep.subr.mxu0 0.0
    %8574 = vmatpush1.msra.mxu0 %v8417
    %8575 = vmatprep.subr.mxu0 0.0
    %8576 = vmatpush1.msra.mxu0 %v8418
    %8577 = vmatprep.subr.mxu0 0.0
    %8578 = vmatpush1.msra.mxu0 %v8419
    %8579 = vmatprep.subr.mxu0 0.0
    %8580 = vmatpush1.msra.mxu0 %v8420
    %8581 = vmatprep.subr.mxu0 0.0
    %8582 = vmatpush1.msra.mxu0 %v8421
    %8583 = vmatprep.subr.mxu0 0.0
    %8584 = vmatpush1.msra.mxu0 %v8422
    %8585 = vmatprep.subr.mxu0 0.0
    %8586 = vmatpush1.msra.mxu0 %v8423
    %8587 = vmatprep.subr.mxu0 0.0
    %8588 = vmatpush1.msra.mxu0 %v8424
    %8589 = vmatprep.subr.mxu0 0.0
    %8590 = vmatpush1.msra.mxu0 %v8425
    %8591 = vmatprep.subr.mxu0 0.0
    %8592 = vmatpush1.msra.mxu0 %v8426
    %8593 = vmatprep.mubr.f32.mxu0 %v8289
    %8594 = vmatmul.mubr.f32.gmra.mrb[0].mxu0 %v8287
    %v8595 = vpop.f32.mrb[0].mxu0
    %v8596 = vadd.f32 %v8526, %v8595
    %v8597 = vpop.f32.mrb[0].mxu0
    %8598 = vdwg.mxu0
    %8599 = vmatprep.subr.mxu0 0.0
    %8600 = vmatpush1.msra.mxu0 %v8427
    %8601 = vmatprep.subr.mxu0 0.0
    %8602 = vmatpush1.msra.mxu0 %v8428
    %8603 = vmatprep.subr.mxu0 0.0
    %8604 = vmatpush1.msra.mxu0 %v8429
    %8605 = vmatprep.subr.mxu0 0.0
    %8606 = vmatpush1.msra.mxu0 %v8430
    %8607 = vmatprep.subr.mxu0 0.0
    %8608 = vmatpush1.msra.mxu0 %v8431
    %8609 = vmatprep.subr.mxu0 0.0
    %8610 = vmatpush1.msra.mxu0 %v8432
    %8611 = vmatprep.subr.mxu0 0.0
    %8612 = vmatpush1.msra.mxu0 %v8433
    %8613 = vmatprep.subr.mxu0 0.0
    %8614 = vmatpush1.msra.mxu0 %v8434
    %8615 = vmatprep.subr.mxu0 0.0
    %8616 = vmatpush1.msra.mxu0 %v8435
    %8617 = vmatprep.subr.mxu0 0.0
    %8618 = vmatpush1.msra.mxu0 %v8436
    %8619 = vmatprep.subr.mxu0 0.0
    %8620 = vmatpush1.msra.mxu0 %v8437
    %8621 = vmatprep.subr.mxu0 0.0
    %8622 = vmatpush1.msra.mxu0 %v8438
    %8623 = vmatprep.subr.mxu0 0.0
    %8624 = vmatpush1.msra.mxu0 %v8439
    %8625 = vmatprep.subr.mxu0 0.0
    %8626 = vmatpush1.msra.mxu0 %v8440
    %8627 = vmatprep.subr.mxu0 0.0
    %8628 = vmatpush1.msra.mxu0 %v8441
    %8629 = vmatprep.subr.mxu0 0.0
    %8630 = vmatpush1.msra.mxu0 %v8442
    %8631 = vmatprep.subr.mxu0 0.0
    %8632 = vmatpush1.msra.mxu0 %v8443
    %8633 = vmatprep.subr.mxu0 0.0
    %8634 = vmatpush1.msra.mxu0 %v8444
    %8635 = vmatprep.subr.mxu0 0.0
    %8636 = vmatpush1.msra.mxu0 %v8445
    %8637 = vmatprep.subr.mxu0 0.0
    %8638 = vmatpush1.msra.mxu0 %v8446
    %8639 = vmatprep.subr.mxu0 0.0
    %8640 = vmatpush1.msra.mxu0 %v8447
    %8641 = vmatprep.subr.mxu0 0.0
    %8642 = vmatpush1.msra.mxu0 %v8448
    %8643 = vmatprep.subr.mxu0 0.0
    %8644 = vmatpush1.msra.mxu0 %v8449
    %8645 = vmatprep.subr.mxu0 0.0
    %8646 = vmatpush1.msra.mxu0 %v8450
    %8647 = vmatprep.subr.mxu0 0.0
    %8648 = vmatpush1.msra.mxu0 %v8451
    %8649 = vmatprep.subr.mxu0 0.0
    %8650 = vmatpush1.msra.mxu0 %v8452
    %8651 = vmatprep.subr.mxu0 0.0
    %8652 = vmatpush1.msra.mxu0 %v8453
    %8653 = vmatprep.subr.mxu0 0.0
    %8654 = vmatpush1.msra.mxu0 %v8454
    %8655 = vmatprep.subr.mxu0 0.0
    %8656 = vmatpush1.msra.mxu0 %v8455
    %8657 = vmatprep.subr.mxu0 0.0
    %8658 = vmatpush1.msra.mxu0 %v8456
    %8659 = vmatprep.subr.mxu0 0.0
    %8660 = vmatpush1.msra.mxu0 %v8457
    %8661 = vmatprep.subr.mxu0 0.0
    %8662 = vmatpush1.msra.mxu0 %v8458
    %8663 = vmatprep.mubr.f32.mxu0 %v8360
    %8664 = vmatmul.mubr.f32.gmra.mrb[0].mxu0 %v8358
    %v8665 = vpop.f32.mrb[0].mxu0
    %v8666 = vadd.f32 %v8596, %v8665
    %v8667 = vpop.f32.mrb[0].mxu0
    %8668 = vdwg.mxu0
    %v8669 = vadd.f32 %v8143, %v8666
    %s8670 = scalar_lea.vmem %s13, 8
    %v8671 = vld [vmem:[%s8670] sm:$0x3]
    %v8673 = vsel %vm3718, %v8671, 0
    %8675 = vmatprep.subr.mxu0 %v6541
    %8676 = vmatpush1.msra.mxu0 %v6540
    %8677 = vmatprep.subr.mxu0 %v6560
    %8678 = vmatpush1.msra.mxu0 %v6557
    %8679 = vmatprep.subr.mxu0 0.0
    %8680 = vmatpush1.msra.mxu0 0.0
    %8681 = vmatprep.subr.mxu0 0.0
    %8682 = vmatpush1.msra.mxu0 0.0
    %8683 = vmatprep.subr.mxu0 0.0
    %8684 = vmatpush1.msra.mxu0 0.0
    %8685 = vmatprep.subr.mxu0 0.0
    %8686 = vmatpush1.msra.mxu0 0.0
    %8687 = vmatprep.subr.mxu0 0.0
    %8688 = vmatpush1.msra.mxu0 0.0
    %8689 = vmatprep.subr.mxu0 0.0
    %8690 = vmatpush1.msra.mxu0 0.0
    %8691 = vmatprep.subr.mxu0 0.0
    %8692 = vmatpush1.msra.mxu0 0.0
    %8693 = vmatprep.subr.mxu0 0.0
    %8694 = vmatpush1.msra.mxu0 0.0
    %8695 = vmatprep.subr.mxu0 0.0
    %8696 = vmatpush1.msra.mxu0 0.0
    %8697 = vmatprep.subr.mxu0 0.0
    %8698 = vmatpush1.msra.mxu0 0.0
    %8699 = vmatprep.subr.mxu0 0.0
    %8700 = vmatpush1.msra.mxu0 0.0
    %8701 = vmatprep.subr.mxu0 0.0
    %8702 = vmatpush1.msra.mxu0 0.0
    %8703 = vmatprep.subr.mxu0 0.0
    %8704 = vmatpush1.msra.mxu0 0.0
    %8705 = vmatprep.subr.mxu0 0.0
    %8706 = vmatpush1.msra.mxu0 0.0
    %8707 = vmatprep.subr.mxu0 0.0
    %8708 = vmatpush1.msra.mxu0 0.0
    %8709 = vmatprep.subr.mxu0 0.0
    %8710 = vmatpush1.msra.mxu0 0.0
    %8711 = vmatprep.subr.mxu0 0.0
    %8712 = vmatpush1.msra.mxu0 0.0
    %8713 = vmatprep.subr.mxu0 0.0
    %8714 = vmatpush1.msra.mxu0 0.0
    %8715 = vmatprep.subr.mxu0 0.0
    %8716 = vmatpush1.msra.mxu0 0.0
    %8717 = vmatprep.subr.mxu0 0.0
    %8718 = vmatpush1.msra.mxu0 0.0
    %8719 = vmatprep.subr.mxu0 0.0
    %8720 = vmatpush1.msra.mxu0 0.0
    %8721 = vmatprep.subr.mxu0 0.0
    %8722 = vmatpush1.msra.mxu0 0.0
    %8723 = vmatprep.subr.mxu0 0.0
    %8724 = vmatpush1.msra.mxu0 0.0
    %8725 = vmatprep.subr.mxu0 0.0
    %8726 = vmatpush1.msra.mxu0 0.0
    %8727 = vmatprep.subr.mxu0 0.0
    %8728 = vmatpush1.msra.mxu0 0.0
    %8729 = vmatprep.subr.mxu0 0.0
    %8730 = vmatpush1.msra.mxu0 0.0
    %8731 = vmatprep.subr.mxu0 0.0
    %8732 = vmatpush1.msra.mxu0 0.0
    %8733 = vmatprep.subr.mxu0 0.0
    %8734 = vmatpush1.msra.mxu0 0.0
    %8735 = vmatprep.subr.mxu0 0.0
    %8736 = vmatpush1.msra.mxu0 0.0
    %8737 = vmatprep.subr.mxu0 0.0
    %8738 = vmatpush1.msra.mxu0 0.0
    %8739 = vmatprep.mubr.f32.mxu0 0.0
    %8740 = vmatmul.mubr.f32.gmra.mrb[0].mxu0 %v8673
    %v8741 = vpop.f32.mrb[0].mxu0
    %v8742 = vadd.f32 0.0, %v8741
    %v8743 = vpop.f32.mrb[0].mxu0
    %v8744 = vadd.f32 0.0, %v8743
    %8745 = vdwg.mxu0
    %8746 = vmatprep.subr.mxu0 %v6543
    %8747 = vmatpush1.msra.mxu0 %v6542
    %8748 = vmatprep.subr.mxu0 %v6566
    %8749 = vmatpush1.msra.mxu0 %v6563
    %8750 = vmatprep.subr.mxu0 0.0
    %8751 = vmatpush1.msra.mxu0 0.0
    %8752 = vmatprep.subr.mxu0 0.0
    %8753 = vmatpush1.msra.mxu0 0.0
    %8754 = vmatprep.subr.mxu0 0.0
    %8755 = vmatpush1.msra.mxu0 0.0
    %8756 = vmatprep.subr.mxu0 0.0
    %8757 = vmatpush1.msra.mxu0 0.0
    %8758 = vmatprep.subr.mxu0 0.0
    %8759 = vmatpush1.msra.mxu0 0.0
    %8760 = vmatprep.subr.mxu0 0.0
    %8761 = vmatpush1.msra.mxu0 0.0
    %8762 = vmatprep.subr.mxu0 0.0
    %8763 = vmatpush1.msra.mxu0 0.0
    %8764 = vmatprep.subr.mxu0 0.0
    %8765 = vmatpush1.msra.mxu0 0.0
    %8766 = vmatprep.subr.mxu0 0.0
    %8767 = vmatpush1.msra.mxu0 0.0
    %8768 = vmatprep.subr.mxu0 0.0
    %8769 = vmatpush1.msra.mxu0 0.0
    %8770 = vmatprep.subr.mxu0 0.0
    %8771 = vmatpush1.msra.mxu0 0.0
    %8772 = vmatprep.subr.mxu0 0.0
    %8773 = vmatpush1.msra.mxu0 0.0
    %8774 = vmatprep.subr.mxu0 0.0
    %8775 = vmatpush1.msra.mxu0 0.0
    %8776 = vmatprep.subr.mxu0 0.0
    %8777 = vmatpush1.msra.mxu0 0.0
    %8778 = vmatprep.subr.mxu0 0.0
    %8779 = vmatpush1.msra.mxu0 0.0
    %8780 = vmatprep.subr.mxu0 0.0
    %8781 = vmatpush1.msra.mxu0 0.0
    %8782 = vmatprep.subr.mxu0 0.0
    %8783 = vmatpush1.msra.mxu0 0.0
    %8784 = vmatprep.subr.mxu0 0.0
    %8785 = vmatpush1.msra.mxu0 0.0
    %8786 = vmatprep.subr.mxu0 0.0
    %8787 = vmatpush1.msra.mxu0 0.0
    %8788 = vmatprep.subr.mxu0 0.0
    %8789 = vmatpush1.msra.mxu0 0.0
    %8790 = vmatprep.subr.mxu0 0.0
    %8791 = vmatpush1.msra.mxu0 0.0
    %8792 = vmatprep.subr.mxu0 0.0
    %8793 = vmatpush1.msra.mxu0 0.0
    %8794 = vmatprep.subr.mxu0 0.0
    %8795 = vmatpush1.msra.mxu0 0.0
    %8796 = vmatprep.subr.mxu0 0.0
    %8797 = vmatpush1.msra.mxu0 0.0
    %8798 = vmatprep.subr.mxu0 0.0
    %8799 = vmatpush1.msra.mxu0 0.0
    %8800 = vmatprep.subr.mxu0 0.0
    %8801 = vmatpush1.msra.mxu0 0.0
    %8802 = vmatprep.subr.mxu0 0.0
    %8803 = vmatpush1.msra.mxu0 0.0
    %8804 = vmatprep.subr.mxu0 0.0
    %8805 = vmatpush1.msra.mxu0 0.0
    %8806 = vmatprep.subr.mxu0 0.0
    %8807 = vmatpush1.msra.mxu0 0.0
    %8808 = vmatprep.subr.mxu0 0.0
    %8809 = vmatpush1.msra.mxu0 0.0
    %8810 = vmatprep.mubr.f32.mxu0 0.0
    %8811 = vmatmul.mubr.f32.gmra.mrb[0].mxu0 %v8673
    %v8812 = vpop.f32.mrb[0].mxu0
    %v8813 = vadd.f32 0.0, %v8812
    %v8814 = vpop.f32.mrb[0].mxu0
    %v8815 = vadd.f32 0.0, %v8814
    %8816 = vdwg.mxu0
    %8817 = vmatprep.subr.mxu0 %v6545
    %8818 = vmatpush1.msra.mxu0 %v6544
    %8819 = vmatprep.subr.mxu0 %v6572
    %8820 = vmatpush1.msra.mxu0 %v6569
    %8821 = vmatprep.subr.mxu0 0.0
    %8822 = vmatpush1.msra.mxu0 0.0
    %8823 = vmatprep.subr.mxu0 0.0
    %8824 = vmatpush1.msra.mxu0 0.0
    %8825 = vmatprep.subr.mxu0 0.0
    %8826 = vmatpush1.msra.mxu0 0.0
    %8827 = vmatprep.subr.mxu0 0.0
    %8828 = vmatpush1.msra.mxu0 0.0
    %8829 = vmatprep.subr.mxu0 0.0
    %8830 = vmatpush1.msra.mxu0 0.0
    %8831 = vmatprep.subr.mxu0 0.0
    %8832 = vmatpush1.msra.mxu0 0.0
    %8833 = vmatprep.subr.mxu0 0.0
    %8834 = vmatpush1.msra.mxu0 0.0
    %8835 = vmatprep.subr.mxu0 0.0
    %8836 = vmatpush1.msra.mxu0 0.0
    %8837 = vmatprep.subr.mxu0 0.0
    %8838 = vmatpush1.msra.mxu0 0.0
    %8839 = vmatprep.subr.mxu0 0.0
    %8840 = vmatpush1.msra.mxu0 0.0
    %8841 = vmatprep.subr.mxu0 0.0
    %8842 = vmatpush1.msra.mxu0 0.0
    %8843 = vmatprep.subr.mxu0 0.0
    %8844 = vmatpush1.msra.mxu0 0.0
    %8845 = vmatprep.subr.mxu0 0.0
    %8846 = vmatpush1.msra.mxu0 0.0
    %8847 = vmatprep.subr.mxu0 0.0
    %8848 = vmatpush1.msra.mxu0 0.0
    %8849 = vmatprep.subr.mxu0 0.0
    %8850 = vmatpush1.msra.mxu0 0.0
    %8851 = vmatprep.subr.mxu0 0.0
    %8852 = vmatpush1.msra.mxu0 0.0
    %8853 = vmatprep.subr.mxu0 0.0
    %8854 = vmatpush1.msra.mxu0 0.0
    %8855 = vmatprep.subr.mxu0 0.0
    %8856 = vmatpush1.msra.mxu0 0.0
    %8857 = vmatprep.subr.mxu0 0.0
    %8858 = vmatpush1.msra.mxu0 0.0
    %8859 = vmatprep.subr.mxu0 0.0
    %8860 = vmatpush1.msra.mxu0 0.0
    %8861 = vmatprep.subr.mxu0 0.0
    %8862 = vmatpush1.msra.mxu0 0.0
    %8863 = vmatprep.subr.mxu0 0.0
    %8864 = vmatpush1.msra.mxu0 0.0
    %8865 = vmatprep.subr.mxu0 0.0
    %8866 = vmatpush1.msra.mxu0 0.0
    %8867 = vmatprep.subr.mxu0 0.0
    %8868 = vmatpush1.msra.mxu0 0.0
    %8869 = vmatprep.subr.mxu0 0.0
    %8870 = vmatpush1.msra.mxu0 0.0
    %8871 = vmatprep.subr.mxu0 0.0
    %8872 = vmatpush1.msra.mxu0 0.0
    %8873 = vmatprep.subr.mxu0 0.0
    %8874 = vmatpush1.msra.mxu0 0.0
    %8875 = vmatprep.subr.mxu0 0.0
    %8876 = vmatpush1.msra.mxu0 0.0
    %8877 = vmatprep.subr.mxu0 0.0
    %8878 = vmatpush1.msra.mxu0 0.0
    %8879 = vmatprep.subr.mxu0 0.0
    %8880 = vmatpush1.msra.mxu0 0.0
    %8881 = vmatprep.mubr.f32.mxu0 0.0
    %8882 = vmatmul.mubr.f32.gmra.mrb[0].mxu0 %v8673
    %v8883 = vpop.f32.mrb[0].mxu0
    %v8884 = vadd.f32 0.0, %v8883
    %v8885 = vpop.f32.mrb[0].mxu0
    %v8886 = vadd.f32 0.0, %v8885
    %8887 = vdwg.mxu0
    %s8888 = scalar_lea.vmem %s14, 3072
    %v8889 = vld [vmem:[%s8888] sm:$0xff]
    %v8890 = vld [vmem:[%s8888 + $0x8] sm:$0xff]
    %v8891 = vld [vmem:[%s8888 + $0x10] sm:$0xff]
    %v8892 = vld [vmem:[%s8888 + $0x18] sm:$0xff]
    %v8893 = vld [vmem:[%s8888 + $0x20] sm:$0xff]
    %v8894 = vld [vmem:[%s8888 + $0x28] sm:$0xff]
    %v8895 = vld [vmem:[%s8888 + $0x30] sm:$0xff]
    %v8896 = vld [vmem:[%s8888 + $0x38] sm:$0xff]
    %v8897 = vld [vmem:[%s8888 + $0x40] sm:$0xff]
    %v8898 = vld [vmem:[%s8888 + $0x48] sm:$0xff]
    %v8899 = vld [vmem:[%s8888 + $0x50] sm:$0xff]
    %v8900 = vld [vmem:[%s8888 + $0x58] sm:$0xff]
    %v8901 = vld [vmem:[%s8888 + $0x60] sm:$0xff]
    %v8902 = vld [vmem:[%s8888 + $0x68] sm:$0xff]
    %v8903 = vld [vmem:[%s8888 + $0x70] sm:$0xff]
    %v8904 = vld [vmem:[%s8888 + $0x78] sm:$0xff]
    %v8905 = vld [vmem:[%s8888 + $0x80] sm:$0xff]
    %v8906 = vld [vmem:[%s8888 + $0x88] sm:$0xff]
    %v8907 = vld [vmem:[%s8888 + $0x90] sm:$0xff]
    %v8908 = vld [vmem:[%s8888 + $0x98] sm:$0xff]
    %v8909 = vld [vmem:[%s8888 + $0xa0] sm:$0xff]
    %v8910 = vld [vmem:[%s8888 + $0xa8] sm:$0xff]
    %v8911 = vld [vmem:[%s8888 + $0xb0] sm:$0xff]
    %v8912 = vld [vmem:[%s8888 + $0xb8] sm:$0xff]
    %v8913 = vld [vmem:[%s8888 + $0xc0] sm:$0xff]
    %v8914 = vld [vmem:[%s8888 + $0xc8] sm:$0xff]
    %v8915 = vld [vmem:[%s8888 + $0xd0] sm:$0xff]
    %v8916 = vld [vmem:[%s8888 + $0xd8] sm:$0xff]
    %v8917 = vld [vmem:[%s8888 + $0xe0] sm:$0xff]
    %v8918 = vld [vmem:[%s8888 + $0xe8] sm:$0xff]
    %v8919 = vld [vmem:[%s8888 + $0xf0] sm:$0xff]
    %v8920 = vld [vmem:[%s8888 + $0xf8] sm:$0xff]
    %v8921 = vld [vmem:[%s8888 + $0x100] sm:$0xff]
    %v8922 = vld [vmem:[%s8888 + $0x108] sm:$0xff]
    %v8923 = vld [vmem:[%s8888 + $0x110] sm:$0xff]
    %v8924 = vld [vmem:[%s8888 + $0x118] sm:$0xff]
    %v8925 = vld [vmem:[%s8888 + $0x120] sm:$0xff]
    %v8926 = vld [vmem:[%s8888 + $0x128] sm:$0xff]
    %v8927 = vld [vmem:[%s8888 + $0x130] sm:$0xff]
    %v8928 = vld [vmem:[%s8888 + $0x138] sm:$0xff]
    %v8929 = vld [vmem:[%s8888 + $0x140] sm:$0xff]
    %v8930 = vld [vmem:[%s8888 + $0x148] sm:$0xff]
    %v8931 = vld [vmem:[%s8888 + $0x150] sm:$0xff]
    %v8932 = vld [vmem:[%s8888 + $0x158] sm:$0xff]
    %v8933 = vld [vmem:[%s8888 + $0x160] sm:$0xff]
    %v8934 = vld [vmem:[%s8888 + $0x168] sm:$0xff]
    %v8935 = vld [vmem:[%s8888 + $0x170] sm:$0xff]
    %v8936 = vld [vmem:[%s8888 + $0x178] sm:$0xff]
    %v8937 = vld [vmem:[%s8888 + $0x180] sm:$0xff]
    %v8938 = vld [vmem:[%s8888 + $0x188] sm:$0xff]
    %v8939 = vld [vmem:[%s8888 + $0x190] sm:$0xff]
    %v8940 = vld [vmem:[%s8888 + $0x198] sm:$0xff]
    %v8941 = vld [vmem:[%s8888 + $0x1a0] sm:$0xff]
    %v8942 = vld [vmem:[%s8888 + $0x1a8] sm:$0xff]
    %v8943 = vld [vmem:[%s8888 + $0x1b0] sm:$0xff]
    %v8944 = vld [vmem:[%s8888 + $0x1b8] sm:$0xff]
    %v8945 = vld [vmem:[%s8888 + $0x1c0] sm:$0xff]
    %v8946 = vld [vmem:[%s8888 + $0x1c8] sm:$0xff]
    %v8947 = vld [vmem:[%s8888 + $0x1d0] sm:$0xff]
    %v8948 = vld [vmem:[%s8888 + $0x1d8] sm:$0xff]
    %v8949 = vld [vmem:[%s8888 + $0x1e0] sm:$0xff]
    %v8950 = vld [vmem:[%s8888 + $0x1e8] sm:$0xff]
    %v8951 = vld [vmem:[%s8888 + $0x1f0] sm:$0xff]
    %v8952 = vld [vmem:[%s8888 + $0x1f8] sm:$0xff]
    %v8953 = vld [vmem:[%s8888 + $0x200] sm:$0xff]
    %v8954 = vld [vmem:[%s8888 + $0x208] sm:$0xff]
    %v8955 = vld [vmem:[%s8888 + $0x210] sm:$0xff]
    %v8956 = vld [vmem:[%s8888 + $0x218] sm:$0xff]
    %v8957 = vld [vmem:[%s8888 + $0x220] sm:$0xff]
    %v8958 = vld [vmem:[%s8888 + $0x228] sm:$0xff]
    %v8959 = vld [vmem:[%s8888 + $0x230] sm:$0xff]
    %v8960 = vld [vmem:[%s8888 + $0x238] sm:$0xff]
    %v8961 = vld [vmem:[%s8888 + $0x240] sm:$0xff]
    %v8962 = vld [vmem:[%s8888 + $0x248] sm:$0xff]
    %v8963 = vld [vmem:[%s8888 + $0x250] sm:$0xff]
    %v8964 = vld [vmem:[%s8888 + $0x258] sm:$0xff]
    %v8965 = vld [vmem:[%s8888 + $0x260] sm:$0xff]
    %v8966 = vld [vmem:[%s8888 + $0x268] sm:$0xff]
    %v8967 = vld [vmem:[%s8888 + $0x270] sm:$0xff]
    %v8968 = vld [vmem:[%s8888 + $0x278] sm:$0xff]
    %v8969 = vld [vmem:[%s8888 + $0x280] sm:$0xff]
    %v8970 = vld [vmem:[%s8888 + $0x288] sm:$0xff]
    %v8971 = vld [vmem:[%s8888 + $0x290] sm:$0xff]
    %v8972 = vld [vmem:[%s8888 + $0x298] sm:$0xff]
    %v8973 = vld [vmem:[%s8888 + $0x2a0] sm:$0xff]
    %v8974 = vld [vmem:[%s8888 + $0x2a8] sm:$0xff]
    %v8975 = vld [vmem:[%s8888 + $0x2b0] sm:$0xff]
    %v8976 = vld [vmem:[%s8888 + $0x2b8] sm:$0xff]
    %v8977 = vld [vmem:[%s8888 + $0x2c0] sm:$0xff]
    %v8978 = vld [vmem:[%s8888 + $0x2c8] sm:$0xff]
    %v8979 = vld [vmem:[%s8888 + $0x2d0] sm:$0xff]
    %v8980 = vld [vmem:[%s8888 + $0x2d8] sm:$0xff]
    %v8981 = vld [vmem:[%s8888 + $0x2e0] sm:$0xff]
    %v8982 = vld [vmem:[%s8888 + $0x2e8] sm:$0xff]
    %v8983 = vld [vmem:[%s8888 + $0x2f0] sm:$0xff]
    %v8984 = vld [vmem:[%s8888 + $0x2f8] sm:$0xff]
    %8985 = vmatprep.subr.mxu0 0.0
    %8986 = vmatpush1.msra.mxu0 %v8889
    %8987 = vmatprep.subr.mxu0 0.0
    %8988 = vmatpush1.msra.mxu0 %v8890
    %8989 = vmatprep.subr.mxu0 0.0
    %8990 = vmatpush1.msra.mxu0 %v8891
    %8991 = vmatprep.subr.mxu0 0.0
    %8992 = vmatpush1.msra.mxu0 %v8892
    %8993 = vmatprep.subr.mxu0 0.0
    %8994 = vmatpush1.msra.mxu0 %v8893
    %8995 = vmatprep.subr.mxu0 0.0
    %8996 = vmatpush1.msra.mxu0 %v8894
    %8997 = vmatprep.subr.mxu0 0.0
    %8998 = vmatpush1.msra.mxu0 %v8895
    %8999 = vmatprep.subr.mxu0 0.0
    %9000 = vmatpush1.msra.mxu0 %v8896
    %9001 = vmatprep.subr.mxu0 0.0
    %9002 = vmatpush1.msra.mxu0 %v8897
    %9003 = vmatprep.subr.mxu0 0.0
    %9004 = vmatpush1.msra.mxu0 %v8898
    %9005 = vmatprep.subr.mxu0 0.0
    %9006 = vmatpush1.msra.mxu0 %v8899
    %9007 = vmatprep.subr.mxu0 0.0
    %9008 = vmatpush1.msra.mxu0 %v8900
    %9009 = vmatprep.subr.mxu0 0.0
    %9010 = vmatpush1.msra.mxu0 %v8901
    %9011 = vmatprep.subr.mxu0 0.0
    %9012 = vmatpush1.msra.mxu0 %v8902
    %9013 = vmatprep.subr.mxu0 0.0
    %9014 = vmatpush1.msra.mxu0 %v8903
    %9015 = vmatprep.subr.mxu0 0.0
    %9016 = vmatpush1.msra.mxu0 %v8904
    %9017 = vmatprep.subr.mxu0 0.0
    %9018 = vmatpush1.msra.mxu0 %v8905
    %9019 = vmatprep.subr.mxu0 0.0
    %9020 = vmatpush1.msra.mxu0 %v8906
    %9021 = vmatprep.subr.mxu0 0.0
    %9022 = vmatpush1.msra.mxu0 %v8907
    %9023 = vmatprep.subr.mxu0 0.0
    %9024 = vmatpush1.msra.mxu0 %v8908
    %9025 = vmatprep.subr.mxu0 0.0
    %9026 = vmatpush1.msra.mxu0 %v8909
    %9027 = vmatprep.subr.mxu0 0.0
    %9028 = vmatpush1.msra.mxu0 %v8910
    %9029 = vmatprep.subr.mxu0 0.0
    %9030 = vmatpush1.msra.mxu0 %v8911
    %9031 = vmatprep.subr.mxu0 0.0
    %9032 = vmatpush1.msra.mxu0 %v8912
    %9033 = vmatprep.subr.mxu0 0.0
    %9034 = vmatpush1.msra.mxu0 %v8913
    %9035 = vmatprep.subr.mxu0 0.0
    %9036 = vmatpush1.msra.mxu0 %v8914
    %9037 = vmatprep.subr.mxu0 0.0
    %9038 = vmatpush1.msra.mxu0 %v8915
    %9039 = vmatprep.subr.mxu0 0.0
    %9040 = vmatpush1.msra.mxu0 %v8916
    %9041 = vmatprep.subr.mxu0 0.0
    %9042 = vmatpush1.msra.mxu0 %v8917
    %9043 = vmatprep.subr.mxu0 0.0
    %9044 = vmatpush1.msra.mxu0 %v8918
    %9045 = vmatprep.subr.mxu0 0.0
    %9046 = vmatpush1.msra.mxu0 %v8919
    %9047 = vmatprep.subr.mxu0 0.0
    %9048 = vmatpush1.msra.mxu0 %v8920
    %9049 = vmatprep.mubr.f32.mxu0 %v8744
    %9050 = vmatmul.mubr.f32.gmra.mrb[0].mxu0 %v8742
    %v9051 = vpop.f32.mrb[0].mxu0
    %v9052 = vadd.f32 0.0, %v9051
    %v9053 = vpop.f32.mrb[0].mxu0
    %9054 = vdwg.mxu0
    %9055 = vmatprep.subr.mxu0 0.0
    %9056 = vmatpush1.msra.mxu0 %v8921
    %9057 = vmatprep.subr.mxu0 0.0
    %9058 = vmatpush1.msra.mxu0 %v8922
    %9059 = vmatprep.subr.mxu0 0.0
    %9060 = vmatpush1.msra.mxu0 %v8923
    %9061 = vmatprep.subr.mxu0 0.0
    %9062 = vmatpush1.msra.mxu0 %v8924
    %9063 = vmatprep.subr.mxu0 0.0
    %9064 = vmatpush1.msra.mxu0 %v8925
    %9065 = vmatprep.subr.mxu0 0.0
    %9066 = vmatpush1.msra.mxu0 %v8926
    %9067 = vmatprep.subr.mxu0 0.0
    %9068 = vmatpush1.msra.mxu0 %v8927
    %9069 = vmatprep.subr.mxu0 0.0
    %9070 = vmatpush1.msra.mxu0 %v8928
    %9071 = vmatprep.subr.mxu0 0.0
    %9072 = vmatpush1.msra.mxu0 %v8929
    %9073 = vmatprep.subr.mxu0 0.0
    %9074 = vmatpush1.msra.mxu0 %v8930
    %9075 = vmatprep.subr.mxu0 0.0
    %9076 = vmatpush1.msra.mxu0 %v8931
    %9077 = vmatprep.subr.mxu0 0.0
    %9078 = vmatpush1.msra.mxu0 %v8932
    %9079 = vmatprep.subr.mxu0 0.0
    %9080 = vmatpush1.msra.mxu0 %v8933
    %9081 = vmatprep.subr.mxu0 0.0
    %9082 = vmatpush1.msra.mxu0 %v8934
    %9083 = vmatprep.subr.mxu0 0.0
    %9084 = vmatpush1.msra.mxu0 %v8935
    %9085 = vmatprep.subr.mxu0 0.0
    %9086 = vmatpush1.msra.mxu0 %v8936
    %9087 = vmatprep.subr.mxu0 0.0
    %9088 = vmatpush1.msra.mxu0 %v8937
    %9089 = vmatprep.subr.mxu0 0.0
    %9090 = vmatpush1.msra.mxu0 %v8938
    %9091 = vmatprep.subr.mxu0 0.0
    %9092 = vmatpush1.msra.mxu0 %v8939
    %9093 = vmatprep.subr.mxu0 0.0
    %9094 = vmatpush1.msra.mxu0 %v8940
    %9095 = vmatprep.subr.mxu0 0.0
    %9096 = vmatpush1.msra.mxu0 %v8941
    %9097 = vmatprep.subr.mxu0 0.0
    %9098 = vmatpush1.msra.mxu0 %v8942
    %9099 = vmatprep.subr.mxu0 0.0
    %9100 = vmatpush1.msra.mxu0 %v8943
    %9101 = vmatprep.subr.mxu0 0.0
    %9102 = vmatpush1.msra.mxu0 %v8944
    %9103 = vmatprep.subr.mxu0 0.0
    %9104 = vmatpush1.msra.mxu0 %v8945
    %9105 = vmatprep.subr.mxu0 0.0
    %9106 = vmatpush1.msra.mxu0 %v8946
    %9107 = vmatprep.subr.mxu0 0.0
    %9108 = vmatpush1.msra.mxu0 %v8947
    %9109 = vmatprep.subr.mxu0 0.0
    %9110 = vmatpush1.msra.mxu0 %v8948
    %9111 = vmatprep.subr.mxu0 0.0
    %9112 = vmatpush1.msra.mxu0 %v8949
    %9113 = vmatprep.subr.mxu0 0.0
    %9114 = vmatpush1.msra.mxu0 %v8950
    %9115 = vmatprep.subr.mxu0 0.0
    %9116 = vmatpush1.msra.mxu0 %v8951
    %9117 = vmatprep.subr.mxu0 0.0
    %9118 = vmatpush1.msra.mxu0 %v8952
    %9119 = vmatprep.mubr.f32.mxu0 %v8815
    %9120 = vmatmul.mubr.f32.gmra.mrb[0].mxu0 %v8813
    %v9121 = vpop.f32.mrb[0].mxu0
    %v9122 = vadd.f32 %v9052, %v9121
    %v9123 = vpop.f32.mrb[0].mxu0
    %9124 = vdwg.mxu0
    %9125 = vmatprep.subr.mxu0 0.0
    %9126 = vmatpush1.msra.mxu0 %v8953
    %9127 = vmatprep.subr.mxu0 0.0
    %9128 = vmatpush1.msra.mxu0 %v8954
    %9129 = vmatprep.subr.mxu0 0.0
    %9130 = vmatpush1.msra.mxu0 %v8955
    %9131 = vmatprep.subr.mxu0 0.0
    %9132 = vmatpush1.msra.mxu0 %v8956
    %9133 = vmatprep.subr.mxu0 0.0
    %9134 = vmatpush1.msra.mxu0 %v8957
    %9135 = vmatprep.subr.mxu0 0.0
    %9136 = vmatpush1.msra.mxu0 %v8958
    %9137 = vmatprep.subr.mxu0 0.0
    %9138 = vmatpush1.msra.mxu0 %v8959
    %9139 = vmatprep.subr.mxu0 0.0
    %9140 = vmatpush1.msra.mxu0 %v8960
    %9141 = vmatprep.subr.mxu0 0.0
    %9142 = vmatpush1.msra.mxu0 %v8961
    %9143 = vmatprep.subr.mxu0 0.0
    %9144 = vmatpush1.msra.mxu0 %v8962
    %9145 = vmatprep.subr.mxu0 0.0
    %9146 = vmatpush1.msra.mxu0 %v8963
    %9147 = vmatprep.subr.mxu0 0.0
    %9148 = vmatpush1.msra.mxu0 %v8964
    %9149 = vmatprep.subr.mxu0 0.0
    %9150 = vmatpush1.msra.mxu0 %v8965
    %9151 = vmatprep.subr.mxu0 0.0
    %9152 = vmatpush1.msra.mxu0 %v8966
    %9153 = vmatprep.subr.mxu0 0.0
    %9154 = vmatpush1.msra.mxu0 %v8967
    %9155 = vmatprep.subr.mxu0 0.0
    %9156 = vmatpush1.msra.mxu0 %v8968
    %9157 = vmatprep.subr.mxu0 0.0
    %9158 = vmatpush1.msra.mxu0 %v8969
    %9159 = vmatprep.subr.mxu0 0.0
    %9160 = vmatpush1.msra.mxu0 %v8970
    %9161 = vmatprep.subr.mxu0 0.0
    %9162 = vmatpush1.msra.mxu0 %v8971
    %9163 = vmatprep.subr.mxu0 0.0
    %9164 = vmatpush1.msra.mxu0 %v8972
    %9165 = vmatprep.subr.mxu0 0.0
    %9166 = vmatpush1.msra.mxu0 %v8973
    %9167 = vmatprep.subr.mxu0 0.0
    %9168 = vmatpush1.msra.mxu0 %v8974
    %9169 = vmatprep.subr.mxu0 0.0
    %9170 = vmatpush1.msra.mxu0 %v8975
    %9171 = vmatprep.subr.mxu0 0.0
    %9172 = vmatpush1.msra.mxu0 %v8976
    %9173 = vmatprep.subr.mxu0 0.0
    %9174 = vmatpush1.msra.mxu0 %v8977
    %9175 = vmatprep.subr.mxu0 0.0
    %9176 = vmatpush1.msra.mxu0 %v8978
    %9177 = vmatprep.subr.mxu0 0.0
    %9178 = vmatpush1.msra.mxu0 %v8979
    %9179 = vmatprep.subr.mxu0 0.0
    %9180 = vmatpush1.msra.mxu0 %v8980
    %9181 = vmatprep.subr.mxu0 0.0
    %9182 = vmatpush1.msra.mxu0 %v8981
    %9183 = vmatprep.subr.mxu0 0.0
    %9184 = vmatpush1.msra.mxu0 %v8982
    %9185 = vmatprep.subr.mxu0 0.0
    %9186 = vmatpush1.msra.mxu0 %v8983
    %9187 = vmatprep.subr.mxu0 0.0
    %9188 = vmatpush1.msra.mxu0 %v8984
    %9189 = vmatprep.mubr.f32.mxu0 %v8886
    %9190 = vmatmul.mubr.f32.gmra.mrb[0].mxu0 %v8884
    %v9191 = vpop.f32.mrb[0].mxu0
    %v9192 = vadd.f32 %v9122, %v9191
    %v9193 = vpop.f32.mrb[0].mxu0
    %9194 = vdwg.mxu0
    %v9195 = vadd.f32 %v8669, %v9192
    %v9196 = vld [vmem:[%s15] sm:$0x1]
    %v9198 = vlaneseq
    %v9199 = vshrl.u32 %v9198, 7
    %v9200 = vsub.s32 0, %v9199
    %v9201 = vrot.slane %v9196, %v9200
    %v9203 = vadd.f32 %v9195, %v9201
    %v9204 = vsub.f32 0.0, %v9203
    %v9205 = vmul.f32 %v9204, 1.442695
    %v9206 = vpow.pop %v9205
    %v9207 = vadd.f32 %v9206, 1.0
    %v9208 = vrcp.pop %v9207
    %v9209 = vmul.f32 1.0, %v9208
    %vm9210 = vcmask 82944
    %9211 = vst.msk [vmem:[#allocation7] sm:$0x3] %vm9210, %v9209
    // Predicated region
    $region74: #{model_forward.1} parent=1 // pred_check
      _
    $region75: #{model_forward.1} parent=1 // pred_check_branch
      %9213 = sbr.rel (0) target = $region77
    $region76: #{model_forward.1} parent=1 // pred_region
      %s9215 = ssub.s32 32, 32
      %9216 = vsyncadd [#allocation4], %s9215
      %s9218 = sshll.u32 [#allocation7], 4
      %s9219 = int_to_ptr.vmem [resolvable:$true] %s9218
      %9221 = dma.vmem_to_hbm [thread:$0]  %s9219, 32, %s16, [#allocation4]
    $region77: #{model_forward.1} parent=1 // pred_fallthru
      _
    // Predicated region
    $region78: #{model_forward.1} parent=1 // pred_check
      _
    $region79: #{model_forward.1} parent=1 // pred_check_branch
      %9223 = sbr.rel (0) target = $region81
    $region80: #{model_forward.1} parent=1 // pred_region
      %9224 = dma.done [#allocation4], 32
    $region81: #{model_forward.1} parent=1 // pred_fallthru
      _
    %9225 = vsyncpa [#allocation3], 1
    %9226 = vsyncpa [#allocation6], 1
    %9227 = vsyncpa [#allocation4], 1

</llo_original>
